<compile_context>
chip_gen: v5e
topology: v5e:2x2
jax: 0.10.0
libtpu: 0.0.40
codegen_flags: <defaults>
</compile_context>

<pallas_src>
import math

import jax
import jax.numpy as jnp
from jax import lax
from jax.experimental import pallas as pl
from jax.experimental.pallas import tpu as pltpu


# ---------------------------------------------------------------------------
# Pallas kernel: bi-LSTM recurrence + self-attention + fc, fully VMEM resident
# ---------------------------------------------------------------------------
def attn_classifier_kernel(
    emb_ref,       # (S*BP, E)   f32   time-major embedded tokens (batch padded)
    len_ref,       # (BP, 1)     i32   sequence lengths (0 for padded rows)
    wih_ref,       # (E, 8*Hp)   f32   [fwd i|f|g|o | bwd i|f|g|o] input weights
    bih_ref,       # (1, 8*Hp)   f32   combined biases, same layout
    whh_f_ref,     # (Hp, 4*Hp)  f32   forward recurrent weights (zero-padded)
    whh_b_ref,     # (Hp, 4*Hp)  f32   backward recurrent weights
    aw1_ref,       # (Hp, 64)    f32   attention Linear(H,64) (zero-padded rows)
    ab1_ref,       # (1, 64)     f32
    aw2_ref,       # (1, 64)     f32   attention Linear(64,1), transposed
    ab2_ref,       # (1, 1)      f32
    fcw_ref,       # (Hp, 128)   f32   fc Linear(H,1), padded to a lane-dense tile
    fcb_ref,       # (1, 128)    f32
    logits_ref,    # out (BP, 128) f32 (real logit in column 0)
    attn_ref,      # out (BP, S)   f32 softmax attention weights, batch-major
    pre_ref,       # scratch (S, BP, 8*Hp)  hoisted input projections
    hidf_ref,      # scratch (S, BP, Hp)    forward hidden states (masked)
    hidb_ref,      # scratch (S, BP, Hp)    backward hidden states (masked)
):
    S, BP, Hp = hidf_ref.shape
    G = 4 * Hp                                   # gate width per direction
    A2 = aw1_ref.shape[1]                        # attention hidden width (64)

    lengths = len_ref[...]                       # (BP, 1) int32

    # ---- (1) hoisted input projection: one MXU matmul for all steps & both
    # ----     directions (bias folded in) ------------------------------------
    pre = (jnp.dot(emb_ref[...], wih_ref[...],
                   preferred_element_type=jnp.float32)
           + bih_ref[...])                       # (S*BP, 8*Hp)
    pre_ref[...] = pre.reshape(S, BP, 2 * G)

    def cell(pre_t, h, c, whh_ref):
        # PyTorch LSTM gate order i, f, g, o; every slice is a full 128-lane tile.
        gates = pre_t + jnp.dot(h, whh_ref[...],
                                preferred_element_type=jnp.float32)   # (BP, 4Hp)
        i = jax.nn.sigmoid(gates[:, 0 * Hp:1 * Hp])
        f = jax.nn.sigmoid(gates[:, 1 * Hp:2 * Hp])
        g = jnp.tanh(gates[:, 2 * Hp:3 * Hp])
        o = jax.nn.sigmoid(gates[:, 3 * Hp:4 * Hp])
        c_new = f * c + i * g
        h_new = o * jnp.tanh(c_new)
        return h_new, c_new

    zero = jnp.zeros((BP, Hp), jnp.float32)

    # ---- (2) fused fwd + bwd recurrence (packed-sequence semantics:
    # ----     freeze state & zero output at padded steps t >= length[b]) -----
    def step(t, carry):
        hf, cf, hb, cb = carry
        tb = S - 1 - t
        pre_f = pre_ref[t]                       # (BP, 8*Hp)
        pre_b = pre_ref[tb]
        hf2, cf2 = cell(pre_f[:, :G], hf, cf, whh_f_ref)
        hb2, cb2 = cell(pre_b[:, G:], hb, cb, whh_b_ref)
        mf = (t < lengths).astype(jnp.float32)   # (BP, 1)
        mb = (tb < lengths).astype(jnp.float32)
        hidf_ref[t] = mf * hf2                   # dense (8,128) tile store
        hidb_ref[tb] = mb * hb2
        return (mf * hf2 + (1.0 - mf) * hf, mf * cf2 + (1.0 - mf) * cf,
                mb * hb2 + (1.0 - mb) * hb, mb * cb2 + (1.0 - mb) * cb)

    lax.fori_loop(0, S, step, (zero, zero, zero, zero), unroll=True)

    # ---- (3) batched attention MLP: Linear(H,64) -> ReLU -> Linear(64,1) ----
    enc = hidf_ref[...] + hidb_ref[...]          # (S, BP, Hp)  fwd + bwd (sum)
    a_hid = jnp.maximum(
        jnp.dot(enc.reshape(S * BP, Hp), aw1_ref[...],
                preferred_element_type=jnp.float32) + ab1_ref[...],
        0.0)                                     # (S*BP, 64)
    e3 = (jnp.sum(a_hid.reshape(S, BP, A2) * aw2_ref[...][None],
                  axis=-1, keepdims=True)
          + ab2_ref[...])                        # (S, BP, 1)

    # ---- softmax over the sequence axis (includes padded positions,
    # ---- exactly as the PyTorch module does) --------------------------------
    m = jnp.max(e3, axis=0, keepdims=True)
    ex = jnp.exp(e3 - m)
    w3 = ex / jnp.sum(ex, axis=0, keepdims=True)  # (S, BP, 1)

    # ---- weighted pooling + lane-dense fc ------------------------------------
    pooled = jnp.sum(enc * w3, axis=0)            # (BP, Hp)
    logits_ref[...] = (jnp.dot(pooled, fcw_ref[...],
                               preferred_element_type=jnp.float32)
                       + fcb_ref[...])            # (BP, 128)

    # batch-major attention-weight output (BP, S)
    attn_ref[...] = jnp.concatenate([w3[t] for t in range(S)], axis=1)


# ---------------------------------------------------------------------------
# Wrapper: layout plumbing (padding to TPU tiles) + pallas_call
# ---------------------------------------------------------------------------
def _round_up(x, m):
    return (x + m - 1) // m * m


def _pad_gate_cols(w, H, Hp):
    """(rows, 4H) -> (rows, 4Hp): gate k's H columns land at [k*Hp, k*Hp+H)."""
    rows = w.shape[0]
    out = jnp.zeros((rows, 4 * Hp), jnp.float32)
    for k in range(4):
        out = out.at[:, k * Hp:k * Hp + H].set(w[:, k * H:(k + 1) * H])
    return out


def attn_classifier_forward(inputs, lengths, params):
    """inputs: (S, B) int32 token ids (time-major); lengths: (B,) sorted desc."""
    S, B = inputs.shape
    E = params["embedding"].shape[1]
    H = params["whh_f"].shape[0]
    Hp = _round_up(H, 128)            # lane-tile padded hidden size
    BP = _round_up(B, 8)              # sublane padded batch
    G = 4 * Hp
    FOUT = 128                        # lane-dense fc output width

    # Embedding lookup is a gather -> plain JAX glue.
    # TODO(synk): in-kernel DMA gather of embedding rows via scalar prefetch.
    emb = params["embedding"][inputs].astype(jnp.float32)          # (S, B, E)
    emb = jnp.pad(emb, ((0, 0), (0, BP - B), (0, 0)))               # (S, BP, E)
    emb2d = emb.reshape(S * BP, E)

    len_p = jnp.pad(lengths.astype(jnp.int32), (0, BP - B)).reshape(BP, 1)

    # LSTM weights: gate-wise column padding to Hp, fwd/bwd concatenated.
    wih_cat = jnp.concatenate(
        [_pad_gate_cols(params["wih_f"], H, Hp),
         _pad_gate_cols(params["wih_b"], H, Hp)], axis=1)           # (E, 8Hp)
    bih_cat = jnp.concatenate(
        [_pad_gate_cols(params["b_f"], H, Hp),
         _pad_gate_cols(params["b_b"], H, Hp)], axis=1)             # (1, 8Hp)
    whh_f_p = jnp.zeros((Hp, G), jnp.float32).at[:H].set(
        _pad_gate_cols(params["whh_f"], H, Hp))
    whh_b_p = jnp.zeros((Hp, G), jnp.float32).at[:H].set(
        _pad_gate_cols(params["whh_b"], H, Hp))

    # Attention / fc weights, padded to match the Hp hidden layout.
    aw1_p = jnp.zeros((Hp, 64), jnp.float32).at[:H].set(params["aw1"])
    aw2_t = params["aw2"].reshape(1, 64)
    fcw_p = jnp.zeros((Hp, FOUT), jnp.float32).at[:H, :1].set(params["fcw"])
    fcb_p = jnp.zeros((1, FOUT), jnp.float32).at[:, :1].set(params["fcb"])

    vmem = pl.BlockSpec(memory_space=pltpu.MemorySpace.VMEM)
    logits_pad, attn_bs = pl.pallas_call(
        attn_classifier_kernel,
        out_shape=(jax.ShapeDtypeStruct((BP, FOUT), jnp.float32),
                   jax.ShapeDtypeStruct((BP, S), jnp.float32)),
        in_specs=[vmem] * 12,
        out_specs=(vmem, vmem),
        scratch_shapes=[pltpu.VMEM((S, BP, 2 * G), jnp.float32),   # pre-proj
                        pltpu.VMEM((S, BP, Hp), jnp.float32),      # fwd hidden
                        pltpu.VMEM((S, BP, Hp), jnp.float32)],     # bwd hidden
    )(emb2d, len_p, wih_cat, bih_cat, whh_f_p, whh_b_p,
      aw1_p, params["ab1"], aw2_t, params["ab2"], fcw_p, fcb_p)

    return logits_pad[:B, :1], attn_bs[:B, :]


# ---------------------------------------------------------------------------
# Deterministic parameter initialization (shapes from the module __init__)
# ---------------------------------------------------------------------------
def init_params(key, vocab, E, H):
    ks = jax.random.split(key, 14)
    s = 1.0 / math.sqrt(H)

    def u(k, shape, scale):
        return jax.random.uniform(k, shape, jnp.float32, -scale, scale)

    return {
        "embedding": jax.random.normal(ks[0], (vocab, E), jnp.float32),
        # bidirectional LSTM (weights pre-transposed to (in, 4H); bias = b_ih+b_hh)
        "wih_f": u(ks[1], (E, 4 * H), s),
        "whh_f": u(ks[2], (H, 4 * H), s),
        "b_f":   u(ks[3], (1, 4 * H), s),
        "wih_b": u(ks[4], (E, 4 * H), s),
        "whh_b": u(ks[5], (H, 4 * H), s),
        "b_b":   u(ks[6], (1, 4 * H), s),
        # SelfAttention: Linear(H,64) -> ReLU -> Linear(64,1)
        "aw1": u(ks[7], (H, 64), 1.0 / math.sqrt(H)),
        "ab1": u(ks[8], (1, 64), 1.0 / math.sqrt(H)),
        "aw2": u(ks[9], (64, 1), 1.0 / math.sqrt(64)),
        "ab2": u(ks[10], (1, 1), 1.0 / math.sqrt(64)),
        # fc: Linear(H, 1)
        "fcw": u(ks[11], (H, 1), s),
        "fcb": u(ks[12], (1, 1), s),
    }


# ---------------------------------------------------------------------------
# Pure-JAX reference (mirrors pack_padded_sequence / bi-LSTM / attention / fc)
# ---------------------------------------------------------------------------
def reference_forward(inputs, lengths, params):
    emb = params["embedding"][inputs].astype(jnp.float32)   # (S, B, E)
    S, B, _ = emb.shape
    H = params["whh_f"].shape[0]

    def cell(x, h, c, wih, whh, b):
        gates = x @ wih + h @ whh + b
        i = jax.nn.sigmoid(gates[:, :H]); f = jax.nn.sigmoid(gates[:, H:2 * H])
        g = jnp.tanh(gates[:, 2 * H:3 * H]); o = jax.nn.sigmoid(gates[:, 3 * H:])
        c2 = f * c + i * g
        return o * jnp.tanh(c2), c2

    outs = jnp.zeros((S, B, H), jnp.float32)
    h = c = jnp.zeros((B, H), jnp.float32)
    for t in range(S):
        h2, c2 = cell(emb[t], h, c, params["wih_f"], params["whh_f"], params["b_f"])
        mask = (t < lengths)[:, None].astype(jnp.float32)
        h, c = mask * h2 + (1 - mask) * h, mask * c2 + (1 - mask) * c
        outs = outs.at[t].set(mask * h2)
    h = c = jnp.zeros((B, H), jnp.float32)
    for t in range(S - 1, -1, -1):
        h2, c2 = cell(emb[t], h, c, params["wih_b"], params["whh_b"], params["b_b"])
        mask = (t < lengths)[:, None].astype(jnp.float32)
        h, c = mask * h2 + (1 - mask) * h, mask * c2 + (1 - mask) * c
        outs = outs.at[t].add(mask * h2)

    enc = jnp.transpose(outs, (1, 0, 2))                     # (B, S, H)
    energy = jnp.maximum(enc @ params["aw1"] + params["ab1"], 0.0) @ params["aw2"] \
        + params["ab2"]                                      # (B, S, 1)
    w = jax.nn.softmax(energy[..., 0], axis=1)               # (B, S)
    pooled = jnp.sum(enc * w[..., None], axis=1)             # (B, H)
    logits = pooled @ params["fcw"] + params["fcb"]
    return logits, w


if __name__ == "__main__":
    VOCAB, E, H = 20, 16, 32
    S, B = 8, 2

    key = jax.random.PRNGKey(0)
    k_par, k_tok = jax.random.split(key)
    params = init_params(k_par, VOCAB, E, H)

    inputs = jax.random.randint(k_tok, (S, B), 0, VOCAB, dtype=jnp.int32)
    lengths = jnp.array([8, 5], dtype=jnp.int32)   # sorted descending (pack_padded)

    logits, attn_w = attn_classifier_forward(inputs, lengths, params)
    jax.block_until_ready((logits, attn_w))

    ref_logits, ref_attn = reference_forward(inputs, lengths, params)
    assert logits.shape == (B, 1) and attn_w.shape == (B, S)
    assert jnp.allclose(logits, ref_logits, atol=1e-4, rtol=1e-4)
    assert jnp.allclose(attn_w, ref_attn, atol=1e-4, rtol=1e-4)

    print("KERNEL_OK")
</pallas_src>

<mosaic_0001>
module attributes {stable_mosaic.version = 11 : i64} {
  func.func @attn_classifier_kernel(%arg0: memref<64x16xf32, #tpu.memory_space<vmem>>, %arg1: memref<8x1xi32, #tpu.memory_space<vmem>>, %arg2: memref<16x1024xf32, #tpu.memory_space<vmem>>, %arg3: memref<1x1024xf32, #tpu.memory_space<vmem>>, %arg4: memref<128x512xf32, #tpu.memory_space<vmem>>, %arg5: memref<128x512xf32, #tpu.memory_space<vmem>>, %arg6: memref<128x64xf32, #tpu.memory_space<vmem>>, %arg7: memref<1x64xf32, #tpu.memory_space<vmem>>, %arg8: memref<1x64xf32, #tpu.memory_space<vmem>>, %arg9: memref<1x1xf32, #tpu.memory_space<vmem>>, %arg10: memref<128x128xf32, #tpu.memory_space<vmem>>, %arg11: memref<1x128xf32, #tpu.memory_space<vmem>>, %arg12: memref<8x128xf32, #tpu.memory_space<vmem>>, %arg13: memref<8x8xf32, #tpu.memory_space<vmem>>, %arg14: memref<8x8x1024xf32, #tpu.memory_space<vmem>>, %arg15: memref<8x8x128xf32, #tpu.memory_space<vmem>>, %arg16: memref<8x8x128xf32, #tpu.memory_space<vmem>>) attributes {dimension_semantics = [], scalar_prefetch = 0 : i64, scratch_operands = 3 : i64, tpu.core_type = #tpu.core_type<tc>} {
    %c0 = arith.constant 0 : index
    %c0_0 = arith.constant 0 : index
    %0 = vector.load %arg1[%c0, %c0_0] : memref<8x1xi32, #tpu.memory_space<vmem>>, vector<8x1xi32>
    %c0_1 = arith.constant 0 : index
    %c0_2 = arith.constant 0 : index
    %1 = vector.load %arg0[%c0_1, %c0_2] : memref<64x16xf32, #tpu.memory_space<vmem>>, vector<64x16xf32>
    %c0_3 = arith.constant 0 : index
    %c0_4 = arith.constant 0 : index
    %2 = vector.load %arg2[%c0_3, %c0_4] : memref<16x1024xf32, #tpu.memory_space<vmem>>, vector<16x1024xf32>
    %cst = arith.constant dense<0.000000e+00> : vector<64x1024xf32>
    %3 = tpu.matmul %1, %2, %cst {dimension_numbers = #tpu.dot_dimension_numbers<[1], [0], [0], [1], [0, 0, 1, 1], [], []>} : vector<64x16xf32>, vector<16x1024xf32>, vector<64x1024xf32> -> vector<64x1024xf32>
    %c0_5 = arith.constant 0 : index
    %c0_6 = arith.constant 0 : index
    %4 = vector.load %arg3[%c0_5, %c0_6] : memref<1x1024xf32, #tpu.memory_space<vmem>>, vector<1x1024xf32>
    %5 = vector.broadcast %4 : vector<1x1024xf32> to vector<64x1024xf32>
    %6 = arith.addf %3, %5 : vector<64x1024xf32>
    %7 = vector.shape_cast %6 : vector<64x1024xf32> to vector<8x8x1024xf32>
    %c0_7 = arith.constant 0 : index
    %c0_8 = arith.constant 0 : index
    %c0_9 = arith.constant 0 : index
    %8 = vector.load %arg14[%c0_7, %c0_8, %c0_9] : memref<8x8x1024xf32, #tpu.memory_space<vmem>>, vector<8x8x1024xf32>
    tpu.vector_store %arg14[%c0_7, %c0_8, %c0_9], %7 {strides = array<i32>} : memref<8x8x1024xf32, #tpu.memory_space<vmem>>, vector<8x8x1024xf32>,
    %cst_10 = arith.constant 0.000000e+00 : f32
    %9 = vector.broadcast %cst_10 : f32 to vector<8x128xf32>
    %c0_i32 = arith.constant 0 : i32
    %c7_i32 = arith.constant 7 : i32
    %10 = arith.subi %c7_i32, %c0_i32 : i32
    %11 = arith.index_cast %c0_i32 : i32 to index
    %c0_11 = arith.constant 0 : index
    %c0_12 = arith.constant 0 : index
    %12 = vector.load %arg14[%11, %c0_11, %c0_12] : memref<8x8x1024xf32, #tpu.memory_space<vmem>>, vector<1x8x1024xf32>
    %13 = vector.shape_cast %12 : vector<1x8x1024xf32> to vector<8x1024xf32>
    %14 = arith.index_cast %10 : i32 to index
    %c0_13 = arith.constant 0 : index
    %c0_14 = arith.constant 0 : index
    %15 = vector.load %arg14[%14, %c0_13, %c0_14] : memref<8x8x1024xf32, #tpu.memory_space<vmem>>, vector<1x8x1024xf32>
    %16 = vector.shape_cast %15 : vector<1x8x1024xf32> to vector<8x1024xf32>
    %17 = vector.extract_strided_slice %13 {offsets = [0, 0], sizes = [8, 512], strides = [1, 1]} : vector<8x1024xf32> to vector<8x512xf32>
    %c0_15 = arith.constant 0 : index
    %c0_16 = arith.constant 0 : index
    %18 = vector.load %arg4[%c0_15, %c0_16] : memref<128x512xf32, #tpu.memory_space<vmem>>, vector<128x512xf32>
    %cst_17 = arith.constant dense<0.000000e+00> : vector<8x512xf32>
    %19 = tpu.matmul %9, %18, %cst_17 {dimension_numbers = #tpu.dot_dimension_numbers<[1], [0], [0], [1], [0, 0, 1, 1], [], []>} : vector<8x128xf32>, vector<128x512xf32>, vector<8x512xf32> -> vector<8x512xf32>
    %20 = arith.addf %17, %19 : vector<8x512xf32>
    %21 = vector.extract_strided_slice %20 {offsets = [0, 0], sizes = [8, 128], strides = [1, 1]} : vector<8x512xf32> to vector<8x128xf32>
    %22 = arith.negf %21 : vector<8x128xf32>
    %23 = math.exp %22 : vector<8x128xf32>
    %cst_18 = arith.constant 1.000000e+00 : f32
    %24 = vector.broadcast %cst_18 : f32 to vector<8x128xf32>
    %25 = arith.addf %24, %23 : vector<8x128xf32>
    %26 = arith.divf %24, %25 : vector<8x128xf32>
    %27 = vector.extract_strided_slice %20 {offsets = [0, 128], sizes = [8, 128], strides = [1, 1]} : vector<8x512xf32> to vector<8x128xf32>
    %28 = arith.negf %27 : vector<8x128xf32>
    %29 = math.exp %28 : vector<8x128xf32>
    %cst_19 = arith.constant 1.000000e+00 : f32
    %30 = vector.broadcast %cst_19 : f32 to vector<8x128xf32>
    %31 = arith.addf %30, %29 : vector<8x128xf32>
    %32 = arith.divf %30, %31 : vector<8x128xf32>
    %33 = vector.extract_strided_slice %20 {offsets = [0, 256], sizes = [8, 128], strides = [1, 1]} : vector<8x512xf32> to vector<8x128xf32>
    %34 = math.tanh %33 : vector<8x128xf32>
    %35 = vector.extract_strided_slice %20 {offsets = [0, 384], sizes = [8, 128], strides = [1, 1]} : vector<8x512xf32> to vector<8x128xf32>
    %36 = arith.negf %35 : vector<8x128xf32>
    %37 = math.exp %36 : vector<8x128xf32>
    %cst_20 = arith.constant 1.000000e+00 : f32
    %38 = vector.broadcast %cst_20 : f32 to vector<8x128xf32>
    %39 = arith.addf %38, %37 : vector<8x128xf32>
    %40 = arith.divf %38, %39 : vector<8x128xf32>
    %41 = arith.mulf %32, %9 : vector<8x128xf32>
    %42 = arith.mulf %26, %34 : vector<8x128xf32>
    %43 = arith.addf %41, %42 : vector<8x128xf32>
    %44 = math.tanh %43 : vector<8x128xf32>
    %45 = arith.mulf %40, %44 : vector<8x128xf32>
    %46 = vector.extract_strided_slice %16 {offsets = [0, 512], sizes = [8, 512], strides = [1, 1]} : vector<8x1024xf32> to vector<8x512xf32>
    %c0_21 = arith.constant 0 : index
    %c0_22 = arith.constant 0 : index
    %47 = vector.load %arg5[%c0_21, %c0_22] : memref<128x512xf32, #tpu.memory_space<vmem>>, vector<128x512xf32>
    %cst_23 = arith.constant dense<0.000000e+00> : vector<8x512xf32>
    %48 = tpu.matmul %9, %47, %cst_23 {dimension_numbers = #tpu.dot_dimension_numbers<[1], [0], [0], [1], [0, 0, 1, 1], [], []>} : vector<8x128xf32>, vector<128x512xf32>, vector<8x512xf32> -> vector<8x512xf32>
    %49 = arith.addf %46, %48 : vector<8x512xf32>
    %50 = vector.extract_strided_slice %49 {offsets = [0, 0], sizes = [8, 128], strides = [1, 1]} : vector<8x512xf32> to vector<8x128xf32>
    %51 = arith.negf %50 : vector<8x128xf32>
    %52 = math.exp %51 : vector<8x128xf32>
    %cst_24 = arith.constant 1.000000e+00 : f32
    %53 = vector.broadcast %cst_24 : f32 to vector<8x128xf32>
    %54 = arith.addf %53, %52 : vector<8x128xf32>
    %55 = arith.divf %53, %54 : vector<8x128xf32>
    %56 = vector.extract_strided_slice %49 {offsets = [0, 128], sizes = [8, 128], strides = [1, 1]} : vector<8x512xf32> to vector<8x128xf32>
    %57 = arith.negf %56 : vector<8x128xf32>
    %58 = math.exp %57 : vector<8x128xf32>
    %cst_25 = arith.constant 1.000000e+00 : f32
    %59 = vector.broadcast %cst_25 : f32 to vector<8x128xf32>
    %60 = arith.addf %59, %58 : vector<8x128xf32>
    %61 = arith.divf %59, %60 : vector<8x128xf32>
    %62 = vector.extract_strided_slice %49 {offsets = [0, 256], sizes = [8, 128], strides = [1, 1]} : vector<8x512xf32> to vector<8x128xf32>
    %63 = math.tanh %62 : vector<8x128xf32>
    %64 = vector.extract_strided_slice %49 {offsets = [0, 384], sizes = [8, 128], strides = [1, 1]} : vector<8x512xf32> to vector<8x128xf32>
    %65 = arith.negf %64 : vector<8x128xf32>
    %66 = math.exp %65 : vector<8x128xf32>
    %cst_26 = arith.constant 1.000000e+00 : f32
    %67 = vector.broadcast %cst_26 : f32 to vector<8x128xf32>
    %68 = arith.addf %67, %66 : vector<8x128xf32>
    %69 = arith.divf %67, %68 : vector<8x128xf32>
    %70 = arith.mulf %61, %9 : vector<8x128xf32>
    %71 = arith.mulf %55, %63 : vector<8x128xf32>
    %72 = arith.addf %70, %71 : vector<8x128xf32>
    %73 = math.tanh %72 : vector<8x128xf32>
    %74 = arith.mulf %69, %73 : vector<8x128xf32>
    %75 = vector.broadcast %c0_i32 : i32 to vector<8x1xi32>
    %76 = arith.cmpi slt, %75, %0 : vector<8x1xi32>
    %77 = arith.extui %76 : vector<8x1xi1> to vector<8x1xi32>
    %78 = arith.sitofp %77 : vector<8x1xi32> to vector<8x1xf32>
    %79 = vector.broadcast %10 : i32 to vector<8x1xi32>
    %80 = arith.cmpi slt, %79, %0 : vector<8x1xi32>
    %81 = arith.extui %80 : vector<8x1xi1> to vector<8x1xi32>
    %82 = arith.sitofp %81 : vector<8x1xi32> to vector<8x1xf32>
    %83 = vector.broadcast %78 : vector<8x1xf32> to vector<8x128xf32>
    %84 = arith.mulf %83, %45 : vector<8x128xf32>
    %85 = arith.index_cast %c0_i32 : i32 to index
    %c0_27 = arith.constant 0 : index
    %c0_28 = arith.constant 0 : index
    %86 = vector.load %arg15[%85, %c0_27, %c0_28] : memref<8x8x128xf32, #tpu.memory_space<vmem>>, vector<1x8x128xf32>
    %87 = vector.shape_cast %86 : vector<1x8x128xf32> to vector<8x128xf32>
    %88 = vector.shape_cast %84 : vector<8x128xf32> to vector<1x8x128xf32>
    tpu.vector_store %arg15[%85, %c0_27, %c0_28], %88 {strides = array<i32>} : memref<8x8x128xf32, #tpu.memory_space<vmem>>, vector<1x8x128xf32>,
    %89 = vector.broadcast %82 : vector<8x1xf32> to vector<8x128xf32>
    %90 = arith.mulf %89, %74 : vector<8x128xf32>
    %91 = arith.index_cast %10 : i32 to index
    %c0_29 = arith.constant 0 : index
    %c0_30 = arith.constant 0 : index
    %92 = vector.load %arg16[%91, %c0_29, %c0_30] : memref<8x8x128xf32, #tpu.memory_space<vmem>>, vector<1x8x128xf32>
    %93 = vector.shape_cast %92 : vector<1x8x128xf32> to vector<8x128xf32>
    %94 = vector.shape_cast %90 : vector<8x128xf32> to vector<1x8x128xf32>
    tpu.vector_store %arg16[%91, %c0_29, %c0_30], %94 {strides = array<i32>} : memref<8x8x128xf32, #tpu.memory_space<vmem>>, vector<1x8x128xf32>,
    %95 = vector.broadcast %78 : vector<8x1xf32> to vector<8x128xf32>
    %96 = arith.mulf %95, %45 : vector<8x128xf32>
    %cst_31 = arith.constant 1.000000e+00 : f32
    %97 = vector.broadcast %cst_31 : f32 to vector<8x1xf32>
    %98 = arith.subf %97, %78 : vector<8x1xf32>
    %99 = vector.broadcast %98 : vector<8x1xf32> to vector<8x128xf32>
    %100 = arith.mulf %99, %9 : vector<8x128xf32>
    %101 = arith.addf %96, %100 : vector<8x128xf32>
    %102 = vector.broadcast %78 : vector<8x1xf32> to vector<8x128xf32>
    %103 = arith.mulf %102, %43 : vector<8x128xf32>
    %cst_32 = arith.constant 1.000000e+00 : f32
    %104 = vector.broadcast %cst_32 : f32 to vector<8x1xf32>
    %105 = arith.subf %104, %78 : vector<8x1xf32>
    %106 = vector.broadcast %105 : vector<8x1xf32> to vector<8x128xf32>
    %107 = arith.mulf %106, %9 : vector<8x128xf32>
    %108 = arith.addf %103, %107 : vector<8x128xf32>
    %109 = vector.broadcast %82 : vector<8x1xf32> to vector<8x128xf32>
    %110 = arith.mulf %109, %74 : vector<8x128xf32>
    %cst_33 = arith.constant 1.000000e+00 : f32
    %111 = vector.broadcast %cst_33 : f32 to vector<8x1xf32>
    %112 = arith.subf %111, %82 : vector<8x1xf32>
    %113 = vector.broadcast %112 : vector<8x1xf32> to vector<8x128xf32>
    %114 = arith.mulf %113, %9 : vector<8x128xf32>
    %115 = arith.addf %110, %114 : vector<8x128xf32>
    %116 = vector.broadcast %82 : vector<8x1xf32> to vector<8x128xf32>
    %117 = arith.mulf %116, %72 : vector<8x128xf32>
    %cst_34 = arith.constant 1.000000e+00 : f32
    %118 = vector.broadcast %cst_34 : f32 to vector<8x1xf32>
    %119 = arith.subf %118, %82 : vector<8x1xf32>
    %120 = vector.broadcast %119 : vector<8x1xf32> to vector<8x128xf32>
    %121 = arith.mulf %120, %9 : vector<8x128xf32>
    %122 = arith.addf %117, %121 : vector<8x128xf32>
    %c1_i32 = arith.constant 1 : i32
    %c7_i32_35 = arith.constant 7 : i32
    %123 = arith.subi %c7_i32_35, %c1_i32 : i32
    %124 = arith.index_cast %c1_i32 : i32 to index
    %c0_36 = arith.constant 0 : index
    %c0_37 = arith.constant 0 : index
    %125 = vector.load %arg14[%124, %c0_36, %c0_37] : memref<8x8x1024xf32, #tpu.memory_space<vmem>>, vector<1x8x1024xf32>
    %126 = vector.shape_cast %125 : vector<1x8x1024xf32> to vector<8x1024xf32>
    %127 = arith.index_cast %123 : i32 to index
    %c0_38 = arith.constant 0 : index
    %c0_39 = arith.constant 0 : index
    %128 = vector.load %arg14[%127, %c0_38, %c0_39] : memref<8x8x1024xf32, #tpu.memory_space<vmem>>, vector<1x8x1024xf32>
    %129 = vector.shape_cast %128 : vector<1x8x1024xf32> to vector<8x1024xf32>
    %130 = vector.extract_strided_slice %126 {offsets = [0, 0], sizes = [8, 512], strides = [1, 1]} : vector<8x1024xf32> to vector<8x512xf32>
    %c0_40 = arith.constant 0 : index
    %c0_41 = arith.constant 0 : index
    %131 = vector.load %arg4[%c0_40, %c0_41] : memref<128x512xf32, #tpu.memory_space<vmem>>, vector<128x512xf32>
    %cst_42 = arith.constant dense<0.000000e+00> : vector<8x512xf32>
    %132 = tpu.matmul %101, %131, %cst_42 {dimension_numbers = #tpu.dot_dimension_numbers<[1], [0], [0], [1], [0, 0, 1, 1], [], []>} : vector<8x128xf32>, vector<128x512xf32>, vector<8x512xf32> -> vector<8x512xf32>
    %133 = arith.addf %130, %132 : vector<8x512xf32>
    %134 = vector.extract_strided_slice %133 {offsets = [0, 0], sizes = [8, 128], strides = [1, 1]} : vector<8x512xf32> to vector<8x128xf32>
    %135 = arith.negf %134 : vector<8x128xf32>
    %136 = math.exp %135 : vector<8x128xf32>
    %cst_43 = arith.constant 1.000000e+00 : f32
    %137 = vector.broadcast %cst_43 : f32 to vector<8x128xf32>
    %138 = arith.addf %137, %136 : vector<8x128xf32>
    %139 = arith.divf %137, %138 : vector<8x128xf32>
    %140 = vector.extract_strided_slice %133 {offsets = [0, 128], sizes = [8, 128], strides = [1, 1]} : vector<8x512xf32> to vector<8x128xf32>
    %141 = arith.negf %140 : vector<8x128xf32>
    %142 = math.exp %141 : vector<8x128xf32>
    %cst_44 = arith.constant 1.000000e+00 : f32
    %143 = vector.broadcast %cst_44 : f32 to vector<8x128xf32>
    %144 = arith.addf %143, %142 : vector<8x128xf32>
    %145 = arith.divf %143, %144 : vector<8x128xf32>
    %146 = vector.extract_strided_slice %133 {offsets = [0, 256], sizes = [8, 128], strides = [1, 1]} : vector<8x512xf32> to vector<8x128xf32>
    %147 = math.tanh %146 : vector<8x128xf32>
    %148 = vector.extract_strided_slice %133 {offsets = [0, 384], sizes = [8, 128], strides = [1, 1]} : vector<8x512xf32> to vector<8x128xf32>
    %149 = arith.negf %148 : vector<8x128xf32>
    %150 = math.exp %149 : vector<8x128xf32>
    %cst_45 = arith.constant 1.000000e+00 : f32
    %151 = vector.broadcast %cst_45 : f32 to vector<8x128xf32>
    %152 = arith.addf %151, %150 : vector<8x128xf32>
    %153 = arith.divf %151, %152 : vector<8x128xf32>
    %154 = arith.mulf %145, %108 : vector<8x128xf32>
    %155 = arith.mulf %139, %147 : vector<8x128xf32>
    %156 = arith.addf %154, %155 : vector<8x128xf32>
    %157 = math.tanh %156 : vector<8x128xf32>
    %158 = arith.mulf %153, %157 : vector<8x128xf32>
    %159 = vector.extract_strided_slice %129 {offsets = [0, 512], sizes = [8, 512], strides = [1, 1]} : vector<8x1024xf32> to vector<8x512xf32>
    %c0_46 = arith.constant 0 : index
    %c0_47 = arith.constant 0 : index
    %160 = vector.load %arg5[%c0_46, %c0_47] : memref<128x512xf32, #tpu.memory_space<vmem>>, vector<128x512xf32>
    %cst_48 = arith.constant dense<0.000000e+00> : vector<8x512xf32>
    %161 = tpu.matmul %115, %160, %cst_48 {dimension_numbers = #tpu.dot_dimension_numbers<[1], [0], [0], [1], [0, 0, 1, 1], [], []>} : vector<8x128xf32>, vector<128x512xf32>, vector<8x512xf32> -> vector<8x512xf32>
    %162 = arith.addf %159, %161 : vector<8x512xf32>
    %163 = vector.extract_strided_slice %162 {offsets = [0, 0], sizes = [8, 128], strides = [1, 1]} : vector<8x512xf32> to vector<8x128xf32>
    %164 = arith.negf %163 : vector<8x128xf32>
    %165 = math.exp %164 : vector<8x128xf32>
    %cst_49 = arith.constant 1.000000e+00 : f32
    %166 = vector.broadcast %cst_49 : f32 to vector<8x128xf32>
    %167 = arith.addf %166, %165 : vector<8x128xf32>
    %168 = arith.divf %166, %167 : vector<8x128xf32>
    %169 = vector.extract_strided_slice %162 {offsets = [0, 128], sizes = [8, 128], strides = [1, 1]} : vector<8x512xf32> to vector<8x128xf32>
    %170 = arith.negf %169 : vector<8x128xf32>
    %171 = math.exp %170 : vector<8x128xf32>
    %cst_50 = arith.constant 1.000000e+00 : f32
    %172 = vector.broadcast %cst_50 : f32 to vector<8x128xf32>
    %173 = arith.addf %172, %171 : vector<8x128xf32>
    %174 = arith.divf %172, %173 : vector<8x128xf32>
    %175 = vector.extract_strided_slice %162 {offsets = [0, 256], sizes = [8, 128], strides = [1, 1]} : vector<8x512xf32> to vector<8x128xf32>
    %176 = math.tanh %175 : vector<8x128xf32>
    %177 = vector.extract_strided_slice %162 {offsets = [0, 384], sizes = [8, 128], strides = [1, 1]} : vector<8x512xf32> to vector<8x128xf32>
    %178 = arith.negf %177 : vector<8x128xf32>
    %179 = math.exp %178 : vector<8x128xf32>
    %cst_51 = arith.constant 1.000000e+00 : f32
    %180 = vector.broadcast %cst_51 : f32 to vector<8x128xf32>
    %181 = arith.addf %180, %179 : vector<8x128xf32>
    %182 = arith.divf %180, %181 : vector<8x128xf32>
    %183 = arith.mulf %174, %122 : vector<8x128xf32>
    %184 = arith.mulf %168, %176 : vector<8x128xf32>
    %185 = arith.addf %183, %184 : vector<8x128xf32>
    %186 = math.tanh %185 : vector<8x128xf32>
    %187 = arith.mulf %182, %186 : vector<8x128xf32>
    %188 = vector.broadcast %c1_i32 : i32 to vector<8x1xi32>
    %189 = arith.cmpi slt, %188, %0 : vector<8x1xi32>
    %190 = arith.extui %189 : vector<8x1xi1> to vector<8x1xi32>
    %191 = arith.sitofp %190 : vector<8x1xi32> to vector<8x1xf32>
    %192 = vector.broadcast %123 : i32 to vector<8x1xi32>
    %193 = arith.cmpi slt, %192, %0 : vector<8x1xi32>
    %194 = arith.extui %193 : vector<8x1xi1> to vector<8x1xi32>
    %195 = arith.sitofp %194 : vector<8x1xi32> to vector<8x1xf32>
    %196 = vector.broadcast %191 : vector<8x1xf32> to vector<8x128xf32>
    %197 = arith.mulf %196, %158 : vector<8x128xf32>
    %198 = arith.index_cast %c1_i32 : i32 to index
    %c0_52 = arith.constant 0 : index
    %c0_53 = arith.constant 0 : index
    %199 = vector.load %arg15[%198, %c0_52, %c0_53] : memref<8x8x128xf32, #tpu.memory_space<vmem>>, vector<1x8x128xf32>
    %200 = vector.shape_cast %199 : vector<1x8x128xf32> to vector<8x128xf32>
    %201 = vector.shape_cast %197 : vector<8x128xf32> to vector<1x8x128xf32>
    tpu.vector_store %arg15[%198, %c0_52, %c0_53], %201 {strides = array<i32>} : memref<8x8x128xf32, #tpu.memory_space<vmem>>, vector<1x8x128xf32>,
    %202 = vector.broadcast %195 : vector<8x1xf32> to vector<8x128xf32>
    %203 = arith.mulf %202, %187 : vector<8x128xf32>
    %204 = arith.index_cast %123 : i32 to index
    %c0_54 = arith.constant 0 : index
    %c0_55 = arith.constant 0 : index
    %205 = vector.load %arg16[%204, %c0_54, %c0_55] : memref<8x8x128xf32, #tpu.memory_space<vmem>>, vector<1x8x128xf32>
    %206 = vector.shape_cast %205 : vector<1x8x128xf32> to vector<8x128xf32>
    %207 = vector.shape_cast %203 : vector<8x128xf32> to vector<1x8x128xf32>
    tpu.vector_store %arg16[%204, %c0_54, %c0_55], %207 {strides = array<i32>} : memref<8x8x128xf32, #tpu.memory_space<vmem>>, vector<1x8x128xf32>,
    %208 = vector.broadcast %191 : vector<8x1xf32> to vector<8x128xf32>
    %209 = arith.mulf %208, %158 : vector<8x128xf32>
    %cst_56 = arith.constant 1.000000e+00 : f32
    %210 = vector.broadcast %cst_56 : f32 to vector<8x1xf32>
    %211 = arith.subf %210, %191 : vector<8x1xf32>
    %212 = vector.broadcast %211 : vector<8x1xf32> to vector<8x128xf32>
    %213 = arith.mulf %212, %101 : vector<8x128xf32>
    %214 = arith.addf %209, %213 : vector<8x128xf32>
    %215 = vector.broadcast %191 : vector<8x1xf32> to vector<8x128xf32>
    %216 = arith.mulf %215, %156 : vector<8x128xf32>
    %cst_57 = arith.constant 1.000000e+00 : f32
    %217 = vector.broadcast %cst_57 : f32 to vector<8x1xf32>
    %218 = arith.subf %217, %191 : vector<8x1xf32>
    %219 = vector.broadcast %218 : vector<8x1xf32> to vector<8x128xf32>
    %220 = arith.mulf %219, %108 : vector<8x128xf32>
    %221 = arith.addf %216, %220 : vector<8x128xf32>
    %222 = vector.broadcast %195 : vector<8x1xf32> to vector<8x128xf32>
    %223 = arith.mulf %222, %187 : vector<8x128xf32>
    %cst_58 = arith.constant 1.000000e+00 : f32
    %224 = vector.broadcast %cst_58 : f32 to vector<8x1xf32>
    %225 = arith.subf %224, %195 : vector<8x1xf32>
    %226 = vector.broadcast %225 : vector<8x1xf32> to vector<8x128xf32>
    %227 = arith.mulf %226, %115 : vector<8x128xf32>
    %228 = arith.addf %223, %227 : vector<8x128xf32>
    %229 = vector.broadcast %195 : vector<8x1xf32> to vector<8x128xf32>
    %230 = arith.mulf %229, %185 : vector<8x128xf32>
    %cst_59 = arith.constant 1.000000e+00 : f32
    %231 = vector.broadcast %cst_59 : f32 to vector<8x1xf32>
    %232 = arith.subf %231, %195 : vector<8x1xf32>
    %233 = vector.broadcast %232 : vector<8x1xf32> to vector<8x128xf32>
    %234 = arith.mulf %233, %122 : vector<8x128xf32>
    %235 = arith.addf %230, %234 : vector<8x128xf32>
    %c2_i32 = arith.constant 2 : i32
    %c7_i32_60 = arith.constant 7 : i32
    %236 = arith.subi %c7_i32_60, %c2_i32 : i32
    %237 = arith.index_cast %c2_i32 : i32 to index
    %c0_61 = arith.constant 0 : index
    %c0_62 = arith.constant 0 : index
    %238 = vector.load %arg14[%237, %c0_61, %c0_62] : memref<8x8x1024xf32, #tpu.memory_space<vmem>>, vector<1x8x1024xf32>
    %239 = vector.shape_cast %238 : vector<1x8x1024xf32> to vector<8x1024xf32>
    %240 = arith.index_cast %236 : i32 to index
    %c0_63 = arith.constant 0 : index
    %c0_64 = arith.constant 0 : index
    %241 = vector.load %arg14[%240, %c0_63, %c0_64] : memref<8x8x1024xf32, #tpu.memory_space<vmem>>, vector<1x8x1024xf32>
    %242 = vector.shape_cast %241 : vector<1x8x1024xf32> to vector<8x1024xf32>
    %243 = vector.extract_strided_slice %239 {offsets = [0, 0], sizes = [8, 512], strides = [1, 1]} : vector<8x1024xf32> to vector<8x512xf32>
    %c0_65 = arith.constant 0 : index
    %c0_66 = arith.constant 0 : index
    %244 = vector.load %arg4[%c0_65, %c0_66] : memref<128x512xf32, #tpu.memory_space<vmem>>, vector<128x512xf32>
    %cst_67 = arith.constant dense<0.000000e+00> : vector<8x512xf32>
    %245 = tpu.matmul %214, %244, %cst_67 {dimension_numbers = #tpu.dot_dimension_numbers<[1], [0], [0], [1], [0, 0, 1, 1], [], []>} : vector<8x128xf32>, vector<128x512xf32>, vector<8x512xf32> -> vector<8x512xf32>
    %246 = arith.addf %243, %245 : vector<8x512xf32>
    %247 = vector.extract_strided_slice %246 {offsets = [0, 0], sizes = [8, 128], strides = [1, 1]} : vector<8x512xf32> to vector<8x128xf32>
    %248 = arith.negf %247 : vector<8x128xf32>
    %249 = math.exp %248 : vector<8x128xf32>
    %cst_68 = arith.constant 1.000000e+00 : f32
    %250 = vector.broadcast %cst_68 : f32 to vector<8x128xf32>
    %251 = arith.addf %250, %249 : vector<8x128xf32>
    %252 = arith.divf %250, %251 : vector<8x128xf32>
    %253 = vector.extract_strided_slice %246 {offsets = [0, 128], sizes = [8, 128], strides = [1, 1]} : vector<8x512xf32> to vector<8x128xf32>
    %254 = arith.negf %253 : vector<8x128xf32>
    %255 = math.exp %254 : vector<8x128xf32>
    %cst_69 = arith.constant 1.000000e+00 : f32
    %256 = vector.broadcast %cst_69 : f32 to vector<8x128xf32>
    %257 = arith.addf %256, %255 : vector<8x128xf32>
    %258 = arith.divf %256, %257 : vector<8x128xf32>
    %259 = vector.extract_strided_slice %246 {offsets = [0, 256], sizes = [8, 128], strides = [1, 1]} : vector<8x512xf32> to vector<8x128xf32>
    %260 = math.tanh %259 : vector<8x128xf32>
    %261 = vector.extract_strided_slice %246 {offsets = [0, 384], sizes = [8, 128], strides = [1, 1]} : vector<8x512xf32> to vector<8x128xf32>
    %262 = arith.negf %261 : vector<8x128xf32>
    %263 = math.exp %262 : vector<8x128xf32>
    %cst_70 = arith.constant 1.000000e+00 : f32
    %264 = vector.broadcast %cst_70 : f32 to vector<8x128xf32>
    %265 = arith.addf %264, %263 : vector<8x128xf32>
    %266 = arith.divf %264, %265 : vector<8x128xf32>
    %267 = arith.mulf %258, %221 : vector<8x128xf32>
    %268 = arith.mulf %252, %260 : vector<8x128xf32>
    %269 = arith.addf %267, %268 : vector<8x128xf32>
    %270 = math.tanh %269 : vector<8x128xf32>
    %271 = arith.mulf %266, %270 : vector<8x128xf32>
    %272 = vector.extract_strided_slice %242 {offsets = [0, 512], sizes = [8, 512], strides = [1, 1]} : vector<8x1024xf32> to vector<8x512xf32>
    %c0_71 = arith.constant 0 : index
    %c0_72 = arith.constant 0 : index
    %273 = vector.load %arg5[%c0_71, %c0_72] : memref<128x512xf32, #tpu.memory_space<vmem>>, vector<128x512xf32>
    %cst_73 = arith.constant dense<0.000000e+00> : vector<8x512xf32>
    %274 = tpu.matmul %228, %273, %cst_73 {dimension_numbers = #tpu.dot_dimension_numbers<[1], [0], [0], [1], [0, 0, 1, 1], [], []>} : vector<8x128xf32>, vector<128x512xf32>, vector<8x512xf32> -> vector<8x512xf32>
    %275 = arith.addf %272, %274 : vector<8x512xf32>
    %276 = vector.extract_strided_slice %275 {offsets = [0, 0], sizes = [8, 128], strides = [1, 1]} : vector<8x512xf32> to vector<8x128xf32>
    %277 = arith.negf %276 : vector<8x128xf32>
    %278 = math.exp %277 : vector<8x128xf32>
    %cst_74 = arith.constant 1.000000e+00 : f32
    %279 = vector.broadcast %cst_74 : f32 to vector<8x128xf32>
    %280 = arith.addf %279, %278 : vector<8x128xf32>
    %281 = arith.divf %279, %280 : vector<8x128xf32>
    %282 = vector.extract_strided_slice %275 {offsets = [0, 128], sizes = [8, 128], strides = [1, 1]} : vector<8x512xf32> to vector<8x128xf32>
    %283 = arith.negf %282 : vector<8x128xf32>
    %284 = math.exp %283 : vector<8x128xf32>
    %cst_75 = arith.constant 1.000000e+00 : f32
    %285 = vector.broadcast %cst_75 : f32 to vector<8x128xf32>
    %286 = arith.addf %285, %284 : vector<8x128xf32>
    %287 = arith.divf %285, %286 : vector<8x128xf32>
    %288 = vector.extract_strided_slice %275 {offsets = [0, 256], sizes = [8, 128], strides = [1, 1]} : vector<8x512xf32> to vector<8x128xf32>
    %289 = math.tanh %288 : vector<8x128xf32>
    %290 = vector.extract_strided_slice %275 {offsets = [0, 384], sizes = [8, 128], strides = [1, 1]} : vector<8x512xf32> to vector<8x128xf32>
    %291 = arith.negf %290 : vector<8x128xf32>
    %292 = math.exp %291 : vector<8x128xf32>
    %cst_76 = arith.constant 1.000000e+00 : f32
    %293 = vector.broadcast %cst_76 : f32 to vector<8x128xf32>
    %294 = arith.addf %293, %292 : vector<8x128xf32>
    %295 = arith.divf %293, %294 : vector<8x128xf32>
    %296 = arith.mulf %287, %235 : vector<8x128xf32>
    %297 = arith.mulf %281, %289 : vector<8x128xf32>
    %298 = arith.addf %296, %297 : vector<8x128xf32>
    %299 = math.tanh %298 : vector<8x128xf32>
    %300 = arith.mulf %295, %299 : vector<8x128xf32>
    %301 = vector.broadcast %c2_i32 : i32 to vector<8x1xi32>
    %302 = arith.cmpi slt, %301, %0 : vector<8x1xi32>
    %303 = arith.extui %302 : vector<8x1xi1> to vector<8x1xi32>
    %304 = arith.sitofp %303 : vector<8x1xi32> to vector<8x1xf32>
    %305 = vector.broadcast %236 : i32 to vector<8x1xi32>
    %306 = arith.cmpi slt, %305, %0 : vector<8x1xi32>
    %307 = arith.extui %306 : vector<8x1xi1> to vector<8x1xi32>
    %308 = arith.sitofp %307 : vector<8x1xi32> to vector<8x1xf32>
    %309 = vector.broadcast %304 : vector<8x1xf32> to vector<8x128xf32>
    %310 = arith.mulf %309, %271 : vector<8x128xf32>
    %311 = arith.index_cast %c2_i32 : i32 to index
    %c0_77 = arith.constant 0 : index
    %c0_78 = arith.constant 0 : index
    %312 = vector.load %arg15[%311, %c0_77, %c0_78] : memref<8x8x128xf32, #tpu.memory_space<vmem>>, vector<1x8x128xf32>
    %313 = vector.shape_cast %312 : vector<1x8x128xf32> to vector<8x128xf32>
    %314 = vector.shape_cast %310 : vector<8x128xf32> to vector<1x8x128xf32>
    tpu.vector_store %arg15[%311, %c0_77, %c0_78], %314 {strides = array<i32>} : memref<8x8x128xf32, #tpu.memory_space<vmem>>, vector<1x8x128xf32>,
    %315 = vector.broadcast %308 : vector<8x1xf32> to vector<8x128xf32>
    %316 = arith.mulf %315, %300 : vector<8x128xf32>
    %317 = arith.index_cast %236 : i32 to index
    %c0_79 = arith.constant 0 : index
    %c0_80 = arith.constant 0 : index
    %318 = vector.load %arg16[%317, %c0_79, %c0_80] : memref<8x8x128xf32, #tpu.memory_space<vmem>>, vector<1x8x128xf32>
    %319 = vector.shape_cast %318 : vector<1x8x128xf32> to vector<8x128xf32>
    %320 = vector.shape_cast %316 : vector<8x128xf32> to vector<1x8x128xf32>
    tpu.vector_store %arg16[%317, %c0_79, %c0_80], %320 {strides = array<i32>} : memref<8x8x128xf32, #tpu.memory_space<vmem>>, vector<1x8x128xf32>,
    %321 = vector.broadcast %304 : vector<8x1xf32> to vector<8x128xf32>
    %322 = arith.mulf %321, %271 : vector<8x128xf32>
    %cst_81 = arith.constant 1.000000e+00 : f32
    %323 = vector.broadcast %cst_81 : f32 to vector<8x1xf32>
    %324 = arith.subf %323, %304 : vector<8x1xf32>
    %325 = vector.broadcast %324 : vector<8x1xf32> to vector<8x128xf32>
    %326 = arith.mulf %325, %214 : vector<8x128xf32>
    %327 = arith.addf %322, %326 : vector<8x128xf32>
    %328 = vector.broadcast %304 : vector<8x1xf32> to vector<8x128xf32>
    %329 = arith.mulf %328, %269 : vector<8x128xf32>
    %cst_82 = arith.constant 1.000000e+00 : f32
    %330 = vector.broadcast %cst_82 : f32 to vector<8x1xf32>
    %331 = arith.subf %330, %304 : vector<8x1xf32>
    %332 = vector.broadcast %331 : vector<8x1xf32> to vector<8x128xf32>
    %333 = arith.mulf %332, %221 : vector<8x128xf32>
    %334 = arith.addf %329, %333 : vector<8x128xf32>
    %335 = vector.broadcast %308 : vector<8x1xf32> to vector<8x128xf32>
    %336 = arith.mulf %335, %300 : vector<8x128xf32>
    %cst_83 = arith.constant 1.000000e+00 : f32
    %337 = vector.broadcast %cst_83 : f32 to vector<8x1xf32>
    %338 = arith.subf %337, %308 : vector<8x1xf32>
    %339 = vector.broadcast %338 : vector<8x1xf32> to vector<8x128xf32>
    %340 = arith.mulf %339, %228 : vector<8x128xf32>
    %341 = arith.addf %336, %340 : vector<8x128xf32>
    %342 = vector.broadcast %308 : vector<8x1xf32> to vector<8x128xf32>
    %343 = arith.mulf %342, %298 : vector<8x128xf32>
    %cst_84 = arith.constant 1.000000e+00 : f32
    %344 = vector.broadcast %cst_84 : f32 to vector<8x1xf32>
    %345 = arith.subf %344, %308 : vector<8x1xf32>
    %346 = vector.broadcast %345 : vector<8x1xf32> to vector<8x128xf32>
    %347 = arith.mulf %346, %235 : vector<8x128xf32>
    %348 = arith.addf %343, %347 : vector<8x128xf32>
    %c3_i32 = arith.constant 3 : i32
    %c7_i32_85 = arith.constant 7 : i32
    %349 = arith.subi %c7_i32_85, %c3_i32 : i32
    %350 = arith.index_cast %c3_i32 : i32 to index
    %c0_86 = arith.constant 0 : index
    %c0_87 = arith.constant 0 : index
    %351 = vector.load %arg14[%350, %c0_86, %c0_87] : memref<8x8x1024xf32, #tpu.memory_space<vmem>>, vector<1x8x1024xf32>
    %352 = vector.shape_cast %351 : vector<1x8x1024xf32> to vector<8x1024xf32>
    %353 = arith.index_cast %349 : i32 to index
    %c0_88 = arith.constant 0 : index
    %c0_89 = arith.constant 0 : index
    %354 = vector.load %arg14[%353, %c0_88, %c0_89] : memref<8x8x1024xf32, #tpu.memory_space<vmem>>, vector<1x8x1024xf32>
    %355 = vector.shape_cast %354 : vector<1x8x1024xf32> to vector<8x1024xf32>
    %356 = vector.extract_strided_slice %352 {offsets = [0, 0], sizes = [8, 512], strides = [1, 1]} : vector<8x1024xf32> to vector<8x512xf32>
    %c0_90 = arith.constant 0 : index
    %c0_91 = arith.constant 0 : index
    %357 = vector.load %arg4[%c0_90, %c0_91] : memref<128x512xf32, #tpu.memory_space<vmem>>, vector<128x512xf32>
    %cst_92 = arith.constant dense<0.000000e+00> : vector<8x512xf32>
    %358 = tpu.matmul %327, %357, %cst_92 {dimension_numbers = #tpu.dot_dimension_numbers<[1], [0], [0], [1], [0, 0, 1, 1], [], []>} : vector<8x128xf32>, vector<128x512xf32>, vector<8x512xf32> -> vector<8x512xf32>
    %359 = arith.addf %356, %358 : vector<8x512xf32>
    %360 = vector.extract_strided_slice %359 {offsets = [0, 0], sizes = [8, 128], strides = [1, 1]} : vector<8x512xf32> to vector<8x128xf32>
    %361 = arith.negf %360 : vector<8x128xf32>
    %362 = math.exp %361 : vector<8x128xf32>
    %cst_93 = arith.constant 1.000000e+00 : f32
    %363 = vector.broadcast %cst_93 : f32 to vector<8x128xf32>
    %364 = arith.addf %363, %362 : vector<8x128xf32>
    %365 = arith.divf %363, %364 : vector<8x128xf32>
    %366 = vector.extract_strided_slice %359 {offsets = [0, 128], sizes = [8, 128], strides = [1, 1]} : vector<8x512xf32> to vector<8x128xf32>
    %367 = arith.negf %366 : vector<8x128xf32>
    %368 = math.exp %367 : vector<8x128xf32>
    %cst_94 = arith.constant 1.000000e+00 : f32
    %369 = vector.broadcast %cst_94 : f32 to vector<8x128xf32>
    %370 = arith.addf %369, %368 : vector<8x128xf32>
    %371 = arith.divf %369, %370 : vector<8x128xf32>
    %372 = vector.extract_strided_slice %359 {offsets = [0, 256], sizes = [8, 128], strides = [1, 1]} : vector<8x512xf32> to vector<8x128xf32>
    %373 = math.tanh %372 : vector<8x128xf32>
    %374 = vector.extract_strided_slice %359 {offsets = [0, 384], sizes = [8, 128], strides = [1, 1]} : vector<8x512xf32> to vector<8x128xf32>
    %375 = arith.negf %374 : vector<8x128xf32>
    %376 = math.exp %375 : vector<8x128xf32>
    %cst_95 = arith.constant 1.000000e+00 : f32
    %377 = vector.broadcast %cst_95 : f32 to vector<8x128xf32>
    %378 = arith.addf %377, %376 : vector<8x128xf32>
    %379 = arith.divf %377, %378 : vector<8x128xf32>
    %380 = arith.mulf %371, %334 : vector<8x128xf32>
    %381 = arith.mulf %365, %373 : vector<8x128xf32>
    %382 = arith.addf %380, %381 : vector<8x128xf32>
    %383 = math.tanh %382 : vector<8x128xf32>
    %384 = arith.mulf %379, %383 : vector<8x128xf32>
    %385 = vector.extract_strided_slice %355 {offsets = [0, 512], sizes = [8, 512], strides = [1, 1]} : vector<8x1024xf32> to vector<8x512xf32>
    %c0_96 = arith.constant 0 : index
    %c0_97 = arith.constant 0 : index
    %386 = vector.load %arg5[%c0_96, %c0_97] : memref<128x512xf32, #tpu.memory_space<vmem>>, vector<128x512xf32>
    %cst_98 = arith.constant dense<0.000000e+00> : vector<8x512xf32>
    %387 = tpu.matmul %341, %386, %cst_98 {dimension_numbers = #tpu.dot_dimension_numbers<[1], [0], [0], [1], [0, 0, 1, 1], [], []>} : vector<8x128xf32>, vector<128x512xf32>, vector<8x512xf32> -> vector<8x512xf32>
    %388 = arith.addf %385, %387 : vector<8x512xf32>
    %389 = vector.extract_strided_slice %388 {offsets = [0, 0], sizes = [8, 128], strides = [1, 1]} : vector<8x512xf32> to vector<8x128xf32>
    %390 = arith.negf %389 : vector<8x128xf32>
    %391 = math.exp %390 : vector<8x128xf32>
    %cst_99 = arith.constant 1.000000e+00 : f32
    %392 = vector.broadcast %cst_99 : f32 to vector<8x128xf32>
    %393 = arith.addf %392, %391 : vector<8x128xf32>
    %394 = arith.divf %392, %393 : vector<8x128xf32>
    %395 = vector.extract_strided_slice %388 {offsets = [0, 128], sizes = [8, 128], strides = [1, 1]} : vector<8x512xf32> to vector<8x128xf32>
    %396 = arith.negf %395 : vector<8x128xf32>
    %397 = math.exp %396 : vector<8x128xf32>
    %cst_100 = arith.constant 1.000000e+00 : f32
    %398 = vector.broadcast %cst_100 : f32 to vector<8x128xf32>
    %399 = arith.addf %398, %397 : vector<8x128xf32>
    %400 = arith.divf %398, %399 : vector<8x128xf32>
    %401 = vector.extract_strided_slice %388 {offsets = [0, 256], sizes = [8, 128], strides = [1, 1]} : vector<8x512xf32> to vector<8x128xf32>
    %402 = math.tanh %401 : vector<8x128xf32>
    %403 = vector.extract_strided_slice %388 {offsets = [0, 384], sizes = [8, 128], strides = [1, 1]} : vector<8x512xf32> to vector<8x128xf32>
    %404 = arith.negf %403 : vector<8x128xf32>
    %405 = math.exp %404 : vector<8x128xf32>
    %cst_101 = arith.constant 1.000000e+00 : f32
    %406 = vector.broadcast %cst_101 : f32 to vector<8x128xf32>
    %407 = arith.addf %406, %405 : vector<8x128xf32>
    %408 = arith.divf %406, %407 : vector<8x128xf32>
    %409 = arith.mulf %400, %348 : vector<8x128xf32>
    %410 = arith.mulf %394, %402 : vector<8x128xf32>
    %411 = arith.addf %409, %410 : vector<8x128xf32>
    %412 = math.tanh %411 : vector<8x128xf32>
    %413 = arith.mulf %408, %412 : vector<8x128xf32>
    %414 = vector.broadcast %c3_i32 : i32 to vector<8x1xi32>
    %415 = arith.cmpi slt, %414, %0 : vector<8x1xi32>
    %416 = arith.extui %415 : vector<8x1xi1> to vector<8x1xi32>
    %417 = arith.sitofp %416 : vector<8x1xi32> to vector<8x1xf32>
    %418 = vector.broadcast %349 : i32 to vector<8x1xi32>
    %419 = arith.cmpi slt, %418, %0 : vector<8x1xi32>
    %420 = arith.extui %419 : vector<8x1xi1> to vector<8x1xi32>
    %421 = arith.sitofp %420 : vector<8x1xi32> to vector<8x1xf32>
    %422 = vector.broadcast %417 : vector<8x1xf32> to vector<8x128xf32>
    %423 = arith.mulf %422, %384 : vector<8x128xf32>
    %424 = arith.index_cast %c3_i32 : i32 to index
    %c0_102 = arith.constant 0 : index
    %c0_103 = arith.constant 0 : index
    %425 = vector.load %arg15[%424, %c0_102, %c0_103] : memref<8x8x128xf32, #tpu.memory_space<vmem>>, vector<1x8x128xf32>
    %426 = vector.shape_cast %425 : vector<1x8x128xf32> to vector<8x128xf32>
    %427 = vector.shape_cast %423 : vector<8x128xf32> to vector<1x8x128xf32>
    tpu.vector_store %arg15[%424, %c0_102, %c0_103], %427 {strides = array<i32>} : memref<8x8x128xf32, #tpu.memory_space<vmem>>, vector<1x8x128xf32>,
    %428 = vector.broadcast %421 : vector<8x1xf32> to vector<8x128xf32>
    %429 = arith.mulf %428, %413 : vector<8x128xf32>
    %430 = arith.index_cast %349 : i32 to index
    %c0_104 = arith.constant 0 : index
    %c0_105 = arith.constant 0 : index
    %431 = vector.load %arg16[%430, %c0_104, %c0_105] : memref<8x8x128xf32, #tpu.memory_space<vmem>>, vector<1x8x128xf32>
    %432 = vector.shape_cast %431 : vector<1x8x128xf32> to vector<8x128xf32>
    %433 = vector.shape_cast %429 : vector<8x128xf32> to vector<1x8x128xf32>
    tpu.vector_store %arg16[%430, %c0_104, %c0_105], %433 {strides = array<i32>} : memref<8x8x128xf32, #tpu.memory_space<vmem>>, vector<1x8x128xf32>,
    %434 = vector.broadcast %417 : vector<8x1xf32> to vector<8x128xf32>
    %435 = arith.mulf %434, %384 : vector<8x128xf32>
    %cst_106 = arith.constant 1.000000e+00 : f32
    %436 = vector.broadcast %cst_106 : f32 to vector<8x1xf32>
    %437 = arith.subf %436, %417 : vector<8x1xf32>
    %438 = vector.broadcast %437 : vector<8x1xf32> to vector<8x128xf32>
    %439 = arith.mulf %438, %327 : vector<8x128xf32>
    %440 = arith.addf %435, %439 : vector<8x128xf32>
    %441 = vector.broadcast %417 : vector<8x1xf32> to vector<8x128xf32>
    %442 = arith.mulf %441, %382 : vector<8x128xf32>
    %cst_107 = arith.constant 1.000000e+00 : f32
    %443 = vector.broadcast %cst_107 : f32 to vector<8x1xf32>
    %444 = arith.subf %443, %417 : vector<8x1xf32>
    %445 = vector.broadcast %444 : vector<8x1xf32> to vector<8x128xf32>
    %446 = arith.mulf %445, %334 : vector<8x128xf32>
    %447 = arith.addf %442, %446 : vector<8x128xf32>
    %448 = vector.broadcast %421 : vector<8x1xf32> to vector<8x128xf32>
    %449 = arith.mulf %448, %413 : vector<8x128xf32>
    %cst_108 = arith.constant 1.000000e+00 : f32
    %450 = vector.broadcast %cst_108 : f32 to vector<8x1xf32>
    %451 = arith.subf %450, %421 : vector<8x1xf32>
    %452 = vector.broadcast %451 : vector<8x1xf32> to vector<8x128xf32>
    %453 = arith.mulf %452, %341 : vector<8x128xf32>
    %454 = arith.addf %449, %453 : vector<8x128xf32>
    %455 = vector.broadcast %421 : vector<8x1xf32> to vector<8x128xf32>
    %456 = arith.mulf %455, %411 : vector<8x128xf32>
    %cst_109 = arith.constant 1.000000e+00 : f32
    %457 = vector.broadcast %cst_109 : f32 to vector<8x1xf32>
    %458 = arith.subf %457, %421 : vector<8x1xf32>
    %459 = vector.broadcast %458 : vector<8x1xf32> to vector<8x128xf32>
    %460 = arith.mulf %459, %348 : vector<8x128xf32>
    %461 = arith.addf %456, %460 : vector<8x128xf32>
    %c4_i32 = arith.constant 4 : i32
    %c7_i32_110 = arith.constant 7 : i32
    %462 = arith.subi %c7_i32_110, %c4_i32 : i32
    %463 = arith.index_cast %c4_i32 : i32 to index
    %c0_111 = arith.constant 0 : index
    %c0_112 = arith.constant 0 : index
    %464 = vector.load %arg14[%463, %c0_111, %c0_112] : memref<8x8x1024xf32, #tpu.memory_space<vmem>>, vector<1x8x1024xf32>
    %465 = vector.shape_cast %464 : vector<1x8x1024xf32> to vector<8x1024xf32>
    %466 = arith.index_cast %462 : i32 to index
    %c0_113 = arith.constant 0 : index
    %c0_114 = arith.constant 0 : index
    %467 = vector.load %arg14[%466, %c0_113, %c0_114] : memref<8x8x1024xf32, #tpu.memory_space<vmem>>, vector<1x8x1024xf32>
    %468 = vector.shape_cast %467 : vector<1x8x1024xf32> to vector<8x1024xf32>
    %469 = vector.extract_strided_slice %465 {offsets = [0, 0], sizes = [8, 512], strides = [1, 1]} : vector<8x1024xf32> to vector<8x512xf32>
    %c0_115 = arith.constant 0 : index
    %c0_116 = arith.constant 0 : index
    %470 = vector.load %arg4[%c0_115, %c0_116] : memref<128x512xf32, #tpu.memory_space<vmem>>, vector<128x512xf32>
    %cst_117 = arith.constant dense<0.000000e+00> : vector<8x512xf32>
    %471 = tpu.matmul %440, %470, %cst_117 {dimension_numbers = #tpu.dot_dimension_numbers<[1], [0], [0], [1], [0, 0, 1, 1], [], []>} : vector<8x128xf32>, vector<128x512xf32>, vector<8x512xf32> -> vector<8x512xf32>
    %472 = arith.addf %469, %471 : vector<8x512xf32>
    %473 = vector.extract_strided_slice %472 {offsets = [0, 0], sizes = [8, 128], strides = [1, 1]} : vector<8x512xf32> to vector<8x128xf32>
    %474 = arith.negf %473 : vector<8x128xf32>
    %475 = math.exp %474 : vector<8x128xf32>
    %cst_118 = arith.constant 1.000000e+00 : f32
    %476 = vector.broadcast %cst_118 : f32 to vector<8x128xf32>
    %477 = arith.addf %476, %475 : vector<8x128xf32>
    %478 = arith.divf %476, %477 : vector<8x128xf32>
    %479 = vector.extract_strided_slice %472 {offsets = [0, 128], sizes = [8, 128], strides = [1, 1]} : vector<8x512xf32> to vector<8x128xf32>
    %480 = arith.negf %479 : vector<8x128xf32>
    %481 = math.exp %480 : vector<8x128xf32>
    %cst_119 = arith.constant 1.000000e+00 : f32
    %482 = vector.broadcast %cst_119 : f32 to vector<8x128xf32>
    %483 = arith.addf %482, %481 : vector<8x128xf32>
    %484 = arith.divf %482, %483 : vector<8x128xf32>
    %485 = vector.extract_strided_slice %472 {offsets = [0, 256], sizes = [8, 128], strides = [1, 1]} : vector<8x512xf32> to vector<8x128xf32>
    %486 = math.tanh %485 : vector<8x128xf32>
    %487 = vector.extract_strided_slice %472 {offsets = [0, 384], sizes = [8, 128], strides = [1, 1]} : vector<8x512xf32> to vector<8x128xf32>
    %488 = arith.negf %487 : vector<8x128xf32>
    %489 = math.exp %488 : vector<8x128xf32>
    %cst_120 = arith.constant 1.000000e+00 : f32
    %490 = vector.broadcast %cst_120 : f32 to vector<8x128xf32>
    %491 = arith.addf %490, %489 : vector<8x128xf32>
    %492 = arith.divf %490, %491 : vector<8x128xf32>
    %493 = arith.mulf %484, %447 : vector<8x128xf32>
    %494 = arith.mulf %478, %486 : vector<8x128xf32>
    %495 = arith.addf %493, %494 : vector<8x128xf32>
    %496 = math.tanh %495 : vector<8x128xf32>
    %497 = arith.mulf %492, %496 : vector<8x128xf32>
    %498 = vector.extract_strided_slice %468 {offsets = [0, 512], sizes = [8, 512], strides = [1, 1]} : vector<8x1024xf32> to vector<8x512xf32>
    %c0_121 = arith.constant 0 : index
    %c0_122 = arith.constant 0 : index
    %499 = vector.load %arg5[%c0_121, %c0_122] : memref<128x512xf32, #tpu.memory_space<vmem>>, vector<128x512xf32>
    %cst_123 = arith.constant dense<0.000000e+00> : vector<8x512xf32>
    %500 = tpu.matmul %454, %499, %cst_123 {dimension_numbers = #tpu.dot_dimension_numbers<[1], [0], [0], [1], [0, 0, 1, 1], [], []>} : vector<8x128xf32>, vector<128x512xf32>, vector<8x512xf32> -> vector<8x512xf32>
    %501 = arith.addf %498, %500 : vector<8x512xf32>
    %502 = vector.extract_strided_slice %501 {offsets = [0, 0], sizes = [8, 128], strides = [1, 1]} : vector<8x512xf32> to vector<8x128xf32>
    %503 = arith.negf %502 : vector<8x128xf32>
    %504 = math.exp %503 : vector<8x128xf32>
    %cst_124 = arith.constant 1.000000e+00 : f32
    %505 = vector.broadcast %cst_124 : f32 to vector<8x128xf32>
    %506 = arith.addf %505, %504 : vector<8x128xf32>
    %507 = arith.divf %505, %506 : vector<8x128xf32>
    %508 = vector.extract_strided_slice %501 {offsets = [0, 128], sizes = [8, 128], strides = [1, 1]} : vector<8x512xf32> to vector<8x128xf32>
    %509 = arith.negf %508 : vector<8x128xf32>
    %510 = math.exp %509 : vector<8x128xf32>
    %cst_125 = arith.constant 1.000000e+00 : f32
    %511 = vector.broadcast %cst_125 : f32 to vector<8x128xf32>
    %512 = arith.addf %511, %510 : vector<8x128xf32>
    %513 = arith.divf %511, %512 : vector<8x128xf32>
    %514 = vector.extract_strided_slice %501 {offsets = [0, 256], sizes = [8, 128], strides = [1, 1]} : vector<8x512xf32> to vector<8x128xf32>
    %515 = math.tanh %514 : vector<8x128xf32>
    %516 = vector.extract_strided_slice %501 {offsets = [0, 384], sizes = [8, 128], strides = [1, 1]} : vector<8x512xf32> to vector<8x128xf32>
    %517 = arith.negf %516 : vector<8x128xf32>
    %518 = math.exp %517 : vector<8x128xf32>
    %cst_126 = arith.constant 1.000000e+00 : f32
    %519 = vector.broadcast %cst_126 : f32 to vector<8x128xf32>
    %520 = arith.addf %519, %518 : vector<8x128xf32>
    %521 = arith.divf %519, %520 : vector<8x128xf32>
    %522 = arith.mulf %513, %461 : vector<8x128xf32>
    %523 = arith.mulf %507, %515 : vector<8x128xf32>
    %524 = arith.addf %522, %523 : vector<8x128xf32>
    %525 = math.tanh %524 : vector<8x128xf32>
    %526 = arith.mulf %521, %525 : vector<8x128xf32>
    %527 = vector.broadcast %c4_i32 : i32 to vector<8x1xi32>
    %528 = arith.cmpi slt, %527, %0 : vector<8x1xi32>
    %529 = arith.extui %528 : vector<8x1xi1> to vector<8x1xi32>
    %530 = arith.sitofp %529 : vector<8x1xi32> to vector<8x1xf32>
    %531 = vector.broadcast %462 : i32 to vector<8x1xi32>
    %532 = arith.cmpi slt, %531, %0 : vector<8x1xi32>
    %533 = arith.extui %532 : vector<8x1xi1> to vector<8x1xi32>
    %534 = arith.sitofp %533 : vector<8x1xi32> to vector<8x1xf32>
    %535 = vector.broadcast %530 : vector<8x1xf32> to vector<8x128xf32>
    %536 = arith.mulf %535, %497 : vector<8x128xf32>
    %537 = arith.index_cast %c4_i32 : i32 to index
    %c0_127 = arith.constant 0 : index
    %c0_128 = arith.constant 0 : index
    %538 = vector.load %arg15[%537, %c0_127, %c0_128] : memref<8x8x128xf32, #tpu.memory_space<vmem>>, vector<1x8x128xf32>
    %539 = vector.shape_cast %538 : vector<1x8x128xf32> to vector<8x128xf32>
    %540 = vector.shape_cast %536 : vector<8x128xf32> to vector<1x8x128xf32>
    tpu.vector_store %arg15[%537, %c0_127, %c0_128], %540 {strides = array<i32>} : memref<8x8x128xf32, #tpu.memory_space<vmem>>, vector<1x8x128xf32>,
    %541 = vector.broadcast %534 : vector<8x1xf32> to vector<8x128xf32>
    %542 = arith.mulf %541, %526 : vector<8x128xf32>
    %543 = arith.index_cast %462 : i32 to index
    %c0_129 = arith.constant 0 : index
    %c0_130 = arith.constant 0 : index
    %544 = vector.load %arg16[%543, %c0_129, %c0_130] : memref<8x8x128xf32, #tpu.memory_space<vmem>>, vector<1x8x128xf32>
    %545 = vector.shape_cast %544 : vector<1x8x128xf32> to vector<8x128xf32>
    %546 = vector.shape_cast %542 : vector<8x128xf32> to vector<1x8x128xf32>
    tpu.vector_store %arg16[%543, %c0_129, %c0_130], %546 {strides = array<i32>} : memref<8x8x128xf32, #tpu.memory_space<vmem>>, vector<1x8x128xf32>,
    %547 = vector.broadcast %530 : vector<8x1xf32> to vector<8x128xf32>
    %548 = arith.mulf %547, %497 : vector<8x128xf32>
    %cst_131 = arith.constant 1.000000e+00 : f32
    %549 = vector.broadcast %cst_131 : f32 to vector<8x1xf32>
    %550 = arith.subf %549, %530 : vector<8x1xf32>
    %551 = vector.broadcast %550 : vector<8x1xf32> to vector<8x128xf32>
    %552 = arith.mulf %551, %440 : vector<8x128xf32>
    %553 = arith.addf %548, %552 : vector<8x128xf32>
    %554 = vector.broadcast %530 : vector<8x1xf32> to vector<8x128xf32>
    %555 = arith.mulf %554, %495 : vector<8x128xf32>
    %cst_132 = arith.constant 1.000000e+00 : f32
    %556 = vector.broadcast %cst_132 : f32 to vector<8x1xf32>
    %557 = arith.subf %556, %530 : vector<8x1xf32>
    %558 = vector.broadcast %557 : vector<8x1xf32> to vector<8x128xf32>
    %559 = arith.mulf %558, %447 : vector<8x128xf32>
    %560 = arith.addf %555, %559 : vector<8x128xf32>
    %561 = vector.broadcast %534 : vector<8x1xf32> to vector<8x128xf32>
    %562 = arith.mulf %561, %526 : vector<8x128xf32>
    %cst_133 = arith.constant 1.000000e+00 : f32
    %563 = vector.broadcast %cst_133 : f32 to vector<8x1xf32>
    %564 = arith.subf %563, %534 : vector<8x1xf32>
    %565 = vector.broadcast %564 : vector<8x1xf32> to vector<8x128xf32>
    %566 = arith.mulf %565, %454 : vector<8x128xf32>
    %567 = arith.addf %562, %566 : vector<8x128xf32>
    %568 = vector.broadcast %534 : vector<8x1xf32> to vector<8x128xf32>
    %569 = arith.mulf %568, %524 : vector<8x128xf32>
    %cst_134 = arith.constant 1.000000e+00 : f32
    %570 = vector.broadcast %cst_134 : f32 to vector<8x1xf32>
    %571 = arith.subf %570, %534 : vector<8x1xf32>
    %572 = vector.broadcast %571 : vector<8x1xf32> to vector<8x128xf32>
    %573 = arith.mulf %572, %461 : vector<8x128xf32>
    %574 = arith.addf %569, %573 : vector<8x128xf32>
    %c5_i32 = arith.constant 5 : i32
    %c7_i32_135 = arith.constant 7 : i32
    %575 = arith.subi %c7_i32_135, %c5_i32 : i32
    %576 = arith.index_cast %c5_i32 : i32 to index
    %c0_136 = arith.constant 0 : index
    %c0_137 = arith.constant 0 : index
    %577 = vector.load %arg14[%576, %c0_136, %c0_137] : memref<8x8x1024xf32, #tpu.memory_space<vmem>>, vector<1x8x1024xf32>
    %578 = vector.shape_cast %577 : vector<1x8x1024xf32> to vector<8x1024xf32>
    %579 = arith.index_cast %575 : i32 to index
    %c0_138 = arith.constant 0 : index
    %c0_139 = arith.constant 0 : index
    %580 = vector.load %arg14[%579, %c0_138, %c0_139] : memref<8x8x1024xf32, #tpu.memory_space<vmem>>, vector<1x8x1024xf32>
    %581 = vector.shape_cast %580 : vector<1x8x1024xf32> to vector<8x1024xf32>
    %582 = vector.extract_strided_slice %578 {offsets = [0, 0], sizes = [8, 512], strides = [1, 1]} : vector<8x1024xf32> to vector<8x512xf32>
    %c0_140 = arith.constant 0 : index
    %c0_141 = arith.constant 0 : index
    %583 = vector.load %arg4[%c0_140, %c0_141] : memref<128x512xf32, #tpu.memory_space<vmem>>, vector<128x512xf32>
    %cst_142 = arith.constant dense<0.000000e+00> : vector<8x512xf32>
    %584 = tpu.matmul %553, %583, %cst_142 {dimension_numbers = #tpu.dot_dimension_numbers<[1], [0], [0], [1], [0, 0, 1, 1], [], []>} : vector<8x128xf32>, vector<128x512xf32>, vector<8x512xf32> -> vector<8x512xf32>
    %585 = arith.addf %582, %584 : vector<8x512xf32>
    %586 = vector.extract_strided_slice %585 {offsets = [0, 0], sizes = [8, 128], strides = [1, 1]} : vector<8x512xf32> to vector<8x128xf32>
    %587 = arith.negf %586 : vector<8x128xf32>
    %588 = math.exp %587 : vector<8x128xf32>
    %cst_143 = arith.constant 1.000000e+00 : f32
    %589 = vector.broadcast %cst_143 : f32 to vector<8x128xf32>
    %590 = arith.addf %589, %588 : vector<8x128xf32>
    %591 = arith.divf %589, %590 : vector<8x128xf32>
    %592 = vector.extract_strided_slice %585 {offsets = [0, 128], sizes = [8, 128], strides = [1, 1]} : vector<8x512xf32> to vector<8x128xf32>
    %593 = arith.negf %592 : vector<8x128xf32>
    %594 = math.exp %593 : vector<8x128xf32>
    %cst_144 = arith.constant 1.000000e+00 : f32
    %595 = vector.broadcast %cst_144 : f32 to vector<8x128xf32>
    %596 = arith.addf %595, %594 : vector<8x128xf32>
    %597 = arith.divf %595, %596 : vector<8x128xf32>
    %598 = vector.extract_strided_slice %585 {offsets = [0, 256], sizes = [8, 128], strides = [1, 1]} : vector<8x512xf32> to vector<8x128xf32>
    %599 = math.tanh %598 : vector<8x128xf32>
    %600 = vector.extract_strided_slice %585 {offsets = [0, 384], sizes = [8, 128], strides = [1, 1]} : vector<8x512xf32> to vector<8x128xf32>
    %601 = arith.negf %600 : vector<8x128xf32>
    %602 = math.exp %601 : vector<8x128xf32>
    %cst_145 = arith.constant 1.000000e+00 : f32
    %603 = vector.broadcast %cst_145 : f32 to vector<8x128xf32>
    %604 = arith.addf %603, %602 : vector<8x128xf32>
    %605 = arith.divf %603, %604 : vector<8x128xf32>
    %606 = arith.mulf %597, %560 : vector<8x128xf32>
    %607 = arith.mulf %591, %599 : vector<8x128xf32>
    %608 = arith.addf %606, %607 : vector<8x128xf32>
    %609 = math.tanh %608 : vector<8x128xf32>
    %610 = arith.mulf %605, %609 : vector<8x128xf32>
    %611 = vector.extract_strided_slice %581 {offsets = [0, 512], sizes = [8, 512], strides = [1, 1]} : vector<8x1024xf32> to vector<8x512xf32>
    %c0_146 = arith.constant 0 : index
    %c0_147 = arith.constant 0 : index
    %612 = vector.load %arg5[%c0_146, %c0_147] : memref<128x512xf32, #tpu.memory_space<vmem>>, vector<128x512xf32>
    %cst_148 = arith.constant dense<0.000000e+00> : vector<8x512xf32>
    %613 = tpu.matmul %567, %612, %cst_148 {dimension_numbers = #tpu.dot_dimension_numbers<[1], [0], [0], [1], [0, 0, 1, 1], [], []>} : vector<8x128xf32>, vector<128x512xf32>, vector<8x512xf32> -> vector<8x512xf32>
    %614 = arith.addf %611, %613 : vector<8x512xf32>
    %615 = vector.extract_strided_slice %614 {offsets = [0, 0], sizes = [8, 128], strides = [1, 1]} : vector<8x512xf32> to vector<8x128xf32>
    %616 = arith.negf %615 : vector<8x128xf32>
    %617 = math.exp %616 : vector<8x128xf32>
    %cst_149 = arith.constant 1.000000e+00 : f32
    %618 = vector.broadcast %cst_149 : f32 to vector<8x128xf32>
    %619 = arith.addf %618, %617 : vector<8x128xf32>
    %620 = arith.divf %618, %619 : vector<8x128xf32>
    %621 = vector.extract_strided_slice %614 {offsets = [0, 128], sizes = [8, 128], strides = [1, 1]} : vector<8x512xf32> to vector<8x128xf32>
    %622 = arith.negf %621 : vector<8x128xf32>
    %623 = math.exp %622 : vector<8x128xf32>
    %cst_150 = arith.constant 1.000000e+00 : f32
    %624 = vector.broadcast %cst_150 : f32 to vector<8x128xf32>
    %625 = arith.addf %624, %623 : vector<8x128xf32>
    %626 = arith.divf %624, %625 : vector<8x128xf32>
    %627 = vector.extract_strided_slice %614 {offsets = [0, 256], sizes = [8, 128], strides = [1, 1]} : vector<8x512xf32> to vector<8x128xf32>
    %628 = math.tanh %627 : vector<8x128xf32>
    %629 = vector.extract_strided_slice %614 {offsets = [0, 384], sizes = [8, 128], strides = [1, 1]} : vector<8x512xf32> to vector<8x128xf32>
    %630 = arith.negf %629 : vector<8x128xf32>
    %631 = math.exp %630 : vector<8x128xf32>
    %cst_151 = arith.constant 1.000000e+00 : f32
    %632 = vector.broadcast %cst_151 : f32 to vector<8x128xf32>
    %633 = arith.addf %632, %631 : vector<8x128xf32>
    %634 = arith.divf %632, %633 : vector<8x128xf32>
    %635 = arith.mulf %626, %574 : vector<8x128xf32>
    %636 = arith.mulf %620, %628 : vector<8x128xf32>
    %637 = arith.addf %635, %636 : vector<8x128xf32>
    %638 = math.tanh %637 : vector<8x128xf32>
    %639 = arith.mulf %634, %638 : vector<8x128xf32>
    %640 = vector.broadcast %c5_i32 : i32 to vector<8x1xi32>
    %641 = arith.cmpi slt, %640, %0 : vector<8x1xi32>
    %642 = arith.extui %641 : vector<8x1xi1> to vector<8x1xi32>
    %643 = arith.sitofp %642 : vector<8x1xi32> to vector<8x1xf32>
    %644 = vector.broadcast %575 : i32 to vector<8x1xi32>
    %645 = arith.cmpi slt, %644, %0 : vector<8x1xi32>
    %646 = arith.extui %645 : vector<8x1xi1> to vector<8x1xi32>
    %647 = arith.sitofp %646 : vector<8x1xi32> to vector<8x1xf32>
    %648 = vector.broadcast %643 : vector<8x1xf32> to vector<8x128xf32>
    %649 = arith.mulf %648, %610 : vector<8x128xf32>
    %650 = arith.index_cast %c5_i32 : i32 to index
    %c0_152 = arith.constant 0 : index
    %c0_153 = arith.constant 0 : index
    %651 = vector.load %arg15[%650, %c0_152, %c0_153] : memref<8x8x128xf32, #tpu.memory_space<vmem>>, vector<1x8x128xf32>
    %652 = vector.shape_cast %651 : vector<1x8x128xf32> to vector<8x128xf32>
    %653 = vector.shape_cast %649 : vector<8x128xf32> to vector<1x8x128xf32>
    tpu.vector_store %arg15[%650, %c0_152, %c0_153], %653 {strides = array<i32>} : memref<8x8x128xf32, #tpu.memory_space<vmem>>, vector<1x8x128xf32>,
    %654 = vector.broadcast %647 : vector<8x1xf32> to vector<8x128xf32>
    %655 = arith.mulf %654, %639 : vector<8x128xf32>
    %656 = arith.index_cast %575 : i32 to index
    %c0_154 = arith.constant 0 : index
    %c0_155 = arith.constant 0 : index
    %657 = vector.load %arg16[%656, %c0_154, %c0_155] : memref<8x8x128xf32, #tpu.memory_space<vmem>>, vector<1x8x128xf32>
    %658 = vector.shape_cast %657 : vector<1x8x128xf32> to vector<8x128xf32>
    %659 = vector.shape_cast %655 : vector<8x128xf32> to vector<1x8x128xf32>
    tpu.vector_store %arg16[%656, %c0_154, %c0_155], %659 {strides = array<i32>} : memref<8x8x128xf32, #tpu.memory_space<vmem>>, vector<1x8x128xf32>,
    %660 = vector.broadcast %643 : vector<8x1xf32> to vector<8x128xf32>
    %661 = arith.mulf %660, %610 : vector<8x128xf32>
    %cst_156 = arith.constant 1.000000e+00 : f32
    %662 = vector.broadcast %cst_156 : f32 to vector<8x1xf32>
    %663 = arith.subf %662, %643 : vector<8x1xf32>
    %664 = vector.broadcast %663 : vector<8x1xf32> to vector<8x128xf32>
    %665 = arith.mulf %664, %553 : vector<8x128xf32>
    %666 = arith.addf %661, %665 : vector<8x128xf32>
    %667 = vector.broadcast %643 : vector<8x1xf32> to vector<8x128xf32>
    %668 = arith.mulf %667, %608 : vector<8x128xf32>
    %cst_157 = arith.constant 1.000000e+00 : f32
    %669 = vector.broadcast %cst_157 : f32 to vector<8x1xf32>
    %670 = arith.subf %669, %643 : vector<8x1xf32>
    %671 = vector.broadcast %670 : vector<8x1xf32> to vector<8x128xf32>
    %672 = arith.mulf %671, %560 : vector<8x128xf32>
    %673 = arith.addf %668, %672 : vector<8x128xf32>
    %674 = vector.broadcast %647 : vector<8x1xf32> to vector<8x128xf32>
    %675 = arith.mulf %674, %639 : vector<8x128xf32>
    %cst_158 = arith.constant 1.000000e+00 : f32
    %676 = vector.broadcast %cst_158 : f32 to vector<8x1xf32>
    %677 = arith.subf %676, %647 : vector<8x1xf32>
    %678 = vector.broadcast %677 : vector<8x1xf32> to vector<8x128xf32>
    %679 = arith.mulf %678, %567 : vector<8x128xf32>
    %680 = arith.addf %675, %679 : vector<8x128xf32>
    %681 = vector.broadcast %647 : vector<8x1xf32> to vector<8x128xf32>
    %682 = arith.mulf %681, %637 : vector<8x128xf32>
    %cst_159 = arith.constant 1.000000e+00 : f32
    %683 = vector.broadcast %cst_159 : f32 to vector<8x1xf32>
    %684 = arith.subf %683, %647 : vector<8x1xf32>
    %685 = vector.broadcast %684 : vector<8x1xf32> to vector<8x128xf32>
    %686 = arith.mulf %685, %574 : vector<8x128xf32>
    %687 = arith.addf %682, %686 : vector<8x128xf32>
    %c6_i32 = arith.constant 6 : i32
    %c7_i32_160 = arith.constant 7 : i32
    %688 = arith.subi %c7_i32_160, %c6_i32 : i32
    %689 = arith.index_cast %c6_i32 : i32 to index
    %c0_161 = arith.constant 0 : index
    %c0_162 = arith.constant 0 : index
    %690 = vector.load %arg14[%689, %c0_161, %c0_162] : memref<8x8x1024xf32, #tpu.memory_space<vmem>>, vector<1x8x1024xf32>
    %691 = vector.shape_cast %690 : vector<1x8x1024xf32> to vector<8x1024xf32>
    %692 = arith.index_cast %688 : i32 to index
    %c0_163 = arith.constant 0 : index
    %c0_164 = arith.constant 0 : index
    %693 = vector.load %arg14[%692, %c0_163, %c0_164] : memref<8x8x1024xf32, #tpu.memory_space<vmem>>, vector<1x8x1024xf32>
    %694 = vector.shape_cast %693 : vector<1x8x1024xf32> to vector<8x1024xf32>
    %695 = vector.extract_strided_slice %691 {offsets = [0, 0], sizes = [8, 512], strides = [1, 1]} : vector<8x1024xf32> to vector<8x512xf32>
    %c0_165 = arith.constant 0 : index
    %c0_166 = arith.constant 0 : index
    %696 = vector.load %arg4[%c0_165, %c0_166] : memref<128x512xf32, #tpu.memory_space<vmem>>, vector<128x512xf32>
    %cst_167 = arith.constant dense<0.000000e+00> : vector<8x512xf32>
    %697 = tpu.matmul %666, %696, %cst_167 {dimension_numbers = #tpu.dot_dimension_numbers<[1], [0], [0], [1], [0, 0, 1, 1], [], []>} : vector<8x128xf32>, vector<128x512xf32>, vector<8x512xf32> -> vector<8x512xf32>
    %698 = arith.addf %695, %697 : vector<8x512xf32>
    %699 = vector.extract_strided_slice %698 {offsets = [0, 0], sizes = [8, 128], strides = [1, 1]} : vector<8x512xf32> to vector<8x128xf32>
    %700 = arith.negf %699 : vector<8x128xf32>
    %701 = math.exp %700 : vector<8x128xf32>
    %cst_168 = arith.constant 1.000000e+00 : f32
    %702 = vector.broadcast %cst_168 : f32 to vector<8x128xf32>
    %703 = arith.addf %702, %701 : vector<8x128xf32>
    %704 = arith.divf %702, %703 : vector<8x128xf32>
    %705 = vector.extract_strided_slice %698 {offsets = [0, 128], sizes = [8, 128], strides = [1, 1]} : vector<8x512xf32> to vector<8x128xf32>
    %706 = arith.negf %705 : vector<8x128xf32>
    %707 = math.exp %706 : vector<8x128xf32>
    %cst_169 = arith.constant 1.000000e+00 : f32
    %708 = vector.broadcast %cst_169 : f32 to vector<8x128xf32>
    %709 = arith.addf %708, %707 : vector<8x128xf32>
    %710 = arith.divf %708, %709 : vector<8x128xf32>
    %711 = vector.extract_strided_slice %698 {offsets = [0, 256], sizes = [8, 128], strides = [1, 1]} : vector<8x512xf32> to vector<8x128xf32>
    %712 = math.tanh %711 : vector<8x128xf32>
    %713 = vector.extract_strided_slice %698 {offsets = [0, 384], sizes = [8, 128], strides = [1, 1]} : vector<8x512xf32> to vector<8x128xf32>
    %714 = arith.negf %713 : vector<8x128xf32>
    %715 = math.exp %714 : vector<8x128xf32>
    %cst_170 = arith.constant 1.000000e+00 : f32
    %716 = vector.broadcast %cst_170 : f32 to vector<8x128xf32>
    %717 = arith.addf %716, %715 : vector<8x128xf32>
    %718 = arith.divf %716, %717 : vector<8x128xf32>
    %719 = arith.mulf %710, %673 : vector<8x128xf32>
    %720 = arith.mulf %704, %712 : vector<8x128xf32>
    %721 = arith.addf %719, %720 : vector<8x128xf32>
    %722 = math.tanh %721 : vector<8x128xf32>
    %723 = arith.mulf %718, %722 : vector<8x128xf32>
    %724 = vector.extract_strided_slice %694 {offsets = [0, 512], sizes = [8, 512], strides = [1, 1]} : vector<8x1024xf32> to vector<8x512xf32>
    %c0_171 = arith.constant 0 : index
    %c0_172 = arith.constant 0 : index
    %725 = vector.load %arg5[%c0_171, %c0_172] : memref<128x512xf32, #tpu.memory_space<vmem>>, vector<128x512xf32>
    %cst_173 = arith.constant dense<0.000000e+00> : vector<8x512xf32>
    %726 = tpu.matmul %680, %725, %cst_173 {dimension_numbers = #tpu.dot_dimension_numbers<[1], [0], [0], [1], [0, 0, 1, 1], [], []>} : vector<8x128xf32>, vector<128x512xf32>, vector<8x512xf32> -> vector<8x512xf32>
    %727 = arith.addf %724, %726 : vector<8x512xf32>
    %728 = vector.extract_strided_slice %727 {offsets = [0, 0], sizes = [8, 128], strides = [1, 1]} : vector<8x512xf32> to vector<8x128xf32>
    %729 = arith.negf %728 : vector<8x128xf32>
    %730 = math.exp %729 : vector<8x128xf32>
    %cst_174 = arith.constant 1.000000e+00 : f32
    %731 = vector.broadcast %cst_174 : f32 to vector<8x128xf32>
    %732 = arith.addf %731, %730 : vector<8x128xf32>
    %733 = arith.divf %731, %732 : vector<8x128xf32>
    %734 = vector.extract_strided_slice %727 {offsets = [0, 128], sizes = [8, 128], strides = [1, 1]} : vector<8x512xf32> to vector<8x128xf32>
    %735 = arith.negf %734 : vector<8x128xf32>
    %736 = math.exp %735 : vector<8x128xf32>
    %cst_175 = arith.constant 1.000000e+00 : f32
    %737 = vector.broadcast %cst_175 : f32 to vector<8x128xf32>
    %738 = arith.addf %737, %736 : vector<8x128xf32>
    %739 = arith.divf %737, %738 : vector<8x128xf32>
    %740 = vector.extract_strided_slice %727 {offsets = [0, 256], sizes = [8, 128], strides = [1, 1]} : vector<8x512xf32> to vector<8x128xf32>
    %741 = math.tanh %740 : vector<8x128xf32>
    %742 = vector.extract_strided_slice %727 {offsets = [0, 384], sizes = [8, 128], strides = [1, 1]} : vector<8x512xf32> to vector<8x128xf32>
    %743 = arith.negf %742 : vector<8x128xf32>
    %744 = math.exp %743 : vector<8x128xf32>
    %cst_176 = arith.constant 1.000000e+00 : f32
    %745 = vector.broadcast %cst_176 : f32 to vector<8x128xf32>
    %746 = arith.addf %745, %744 : vector<8x128xf32>
    %747 = arith.divf %745, %746 : vector<8x128xf32>
    %748 = arith.mulf %739, %687 : vector<8x128xf32>
    %749 = arith.mulf %733, %741 : vector<8x128xf32>
    %750 = arith.addf %748, %749 : vector<8x128xf32>
    %751 = math.tanh %750 : vector<8x128xf32>
    %752 = arith.mulf %747, %751 : vector<8x128xf32>
    %753 = vector.broadcast %c6_i32 : i32 to vector<8x1xi32>
    %754 = arith.cmpi slt, %753, %0 : vector<8x1xi32>
    %755 = arith.extui %754 : vector<8x1xi1> to vector<8x1xi32>
    %756 = arith.sitofp %755 : vector<8x1xi32> to vector<8x1xf32>
    %757 = vector.broadcast %688 : i32 to vector<8x1xi32>
    %758 = arith.cmpi slt, %757, %0 : vector<8x1xi32>
    %759 = arith.extui %758 : vector<8x1xi1> to vector<8x1xi32>
    %760 = arith.sitofp %759 : vector<8x1xi32> to vector<8x1xf32>
    %761 = vector.broadcast %756 : vector<8x1xf32> to vector<8x128xf32>
    %762 = arith.mulf %761, %723 : vector<8x128xf32>
    %763 = arith.index_cast %c6_i32 : i32 to index
    %c0_177 = arith.constant 0 : index
    %c0_178 = arith.constant 0 : index
    %764 = vector.load %arg15[%763, %c0_177, %c0_178] : memref<8x8x128xf32, #tpu.memory_space<vmem>>, vector<1x8x128xf32>
    %765 = vector.shape_cast %764 : vector<1x8x128xf32> to vector<8x128xf32>
    %766 = vector.shape_cast %762 : vector<8x128xf32> to vector<1x8x128xf32>
    tpu.vector_store %arg15[%763, %c0_177, %c0_178], %766 {strides = array<i32>} : memref<8x8x128xf32, #tpu.memory_space<vmem>>, vector<1x8x128xf32>,
    %767 = vector.broadcast %760 : vector<8x1xf32> to vector<8x128xf32>
    %768 = arith.mulf %767, %752 : vector<8x128xf32>
    %769 = arith.index_cast %688 : i32 to index
    %c0_179 = arith.constant 0 : index
    %c0_180 = arith.constant 0 : index
    %770 = vector.load %arg16[%769, %c0_179, %c0_180] : memref<8x8x128xf32, #tpu.memory_space<vmem>>, vector<1x8x128xf32>
    %771 = vector.shape_cast %770 : vector<1x8x128xf32> to vector<8x128xf32>
    %772 = vector.shape_cast %768 : vector<8x128xf32> to vector<1x8x128xf32>
    tpu.vector_store %arg16[%769, %c0_179, %c0_180], %772 {strides = array<i32>} : memref<8x8x128xf32, #tpu.memory_space<vmem>>, vector<1x8x128xf32>,
    %773 = vector.broadcast %756 : vector<8x1xf32> to vector<8x128xf32>
    %774 = arith.mulf %773, %723 : vector<8x128xf32>
    %cst_181 = arith.constant 1.000000e+00 : f32
    %775 = vector.broadcast %cst_181 : f32 to vector<8x1xf32>
    %776 = arith.subf %775, %756 : vector<8x1xf32>
    %777 = vector.broadcast %776 : vector<8x1xf32> to vector<8x128xf32>
    %778 = arith.mulf %777, %666 : vector<8x128xf32>
    %779 = arith.addf %774, %778 : vector<8x128xf32>
    %780 = vector.broadcast %756 : vector<8x1xf32> to vector<8x128xf32>
    %781 = arith.mulf %780, %721 : vector<8x128xf32>
    %cst_182 = arith.constant 1.000000e+00 : f32
    %782 = vector.broadcast %cst_182 : f32 to vector<8x1xf32>
    %783 = arith.subf %782, %756 : vector<8x1xf32>
    %784 = vector.broadcast %783 : vector<8x1xf32> to vector<8x128xf32>
    %785 = arith.mulf %784, %673 : vector<8x128xf32>
    %786 = arith.addf %781, %785 : vector<8x128xf32>
    %787 = vector.broadcast %760 : vector<8x1xf32> to vector<8x128xf32>
    %788 = arith.mulf %787, %752 : vector<8x128xf32>
    %cst_183 = arith.constant 1.000000e+00 : f32
    %789 = vector.broadcast %cst_183 : f32 to vector<8x1xf32>
    %790 = arith.subf %789, %760 : vector<8x1xf32>
    %791 = vector.broadcast %790 : vector<8x1xf32> to vector<8x128xf32>
    %792 = arith.mulf %791, %680 : vector<8x128xf32>
    %793 = arith.addf %788, %792 : vector<8x128xf32>
    %794 = vector.broadcast %760 : vector<8x1xf32> to vector<8x128xf32>
    %795 = arith.mulf %794, %750 : vector<8x128xf32>
    %cst_184 = arith.constant 1.000000e+00 : f32
    %796 = vector.broadcast %cst_184 : f32 to vector<8x1xf32>
    %797 = arith.subf %796, %760 : vector<8x1xf32>
    %798 = vector.broadcast %797 : vector<8x1xf32> to vector<8x128xf32>
    %799 = arith.mulf %798, %687 : vector<8x128xf32>
    %800 = arith.addf %795, %799 : vector<8x128xf32>
    %c7_i32_185 = arith.constant 7 : i32
    %c7_i32_186 = arith.constant 7 : i32
    %801 = arith.subi %c7_i32_186, %c7_i32_185 : i32
    %802 = arith.index_cast %c7_i32_185 : i32 to index
    %c0_187 = arith.constant 0 : index
    %c0_188 = arith.constant 0 : index
    %803 = vector.load %arg14[%802, %c0_187, %c0_188] : memref<8x8x1024xf32, #tpu.memory_space<vmem>>, vector<1x8x1024xf32>
    %804 = vector.shape_cast %803 : vector<1x8x1024xf32> to vector<8x1024xf32>
    %805 = arith.index_cast %801 : i32 to index
    %c0_189 = arith.constant 0 : index
    %c0_190 = arith.constant 0 : index
    %806 = vector.load %arg14[%805, %c0_189, %c0_190] : memref<8x8x1024xf32, #tpu.memory_space<vmem>>, vector<1x8x1024xf32>
    %807 = vector.shape_cast %806 : vector<1x8x1024xf32> to vector<8x1024xf32>
    %808 = vector.extract_strided_slice %804 {offsets = [0, 0], sizes = [8, 512], strides = [1, 1]} : vector<8x1024xf32> to vector<8x512xf32>
    %c0_191 = arith.constant 0 : index
    %c0_192 = arith.constant 0 : index
    %809 = vector.load %arg4[%c0_191, %c0_192] : memref<128x512xf32, #tpu.memory_space<vmem>>, vector<128x512xf32>
    %cst_193 = arith.constant dense<0.000000e+00> : vector<8x512xf32>
    %810 = tpu.matmul %779, %809, %cst_193 {dimension_numbers = #tpu.dot_dimension_numbers<[1], [0], [0], [1], [0, 0, 1, 1], [], []>} : vector<8x128xf32>, vector<128x512xf32>, vector<8x512xf32> -> vector<8x512xf32>
    %811 = arith.addf %808, %810 : vector<8x512xf32>
    %812 = vector.extract_strided_slice %811 {offsets = [0, 0], sizes = [8, 128], strides = [1, 1]} : vector<8x512xf32> to vector<8x128xf32>
    %813 = arith.negf %812 : vector<8x128xf32>
    %814 = math.exp %813 : vector<8x128xf32>
    %cst_194 = arith.constant 1.000000e+00 : f32
    %815 = vector.broadcast %cst_194 : f32 to vector<8x128xf32>
    %816 = arith.addf %815, %814 : vector<8x128xf32>
    %817 = arith.divf %815, %816 : vector<8x128xf32>
    %818 = vector.extract_strided_slice %811 {offsets = [0, 128], sizes = [8, 128], strides = [1, 1]} : vector<8x512xf32> to vector<8x128xf32>
    %819 = arith.negf %818 : vector<8x128xf32>
    %820 = math.exp %819 : vector<8x128xf32>
    %cst_195 = arith.constant 1.000000e+00 : f32
    %821 = vector.broadcast %cst_195 : f32 to vector<8x128xf32>
    %822 = arith.addf %821, %820 : vector<8x128xf32>
    %823 = arith.divf %821, %822 : vector<8x128xf32>
    %824 = vector.extract_strided_slice %811 {offsets = [0, 256], sizes = [8, 128], strides = [1, 1]} : vector<8x512xf32> to vector<8x128xf32>
    %825 = math.tanh %824 : vector<8x128xf32>
    %826 = vector.extract_strided_slice %811 {offsets = [0, 384], sizes = [8, 128], strides = [1, 1]} : vector<8x512xf32> to vector<8x128xf32>
    %827 = arith.negf %826 : vector<8x128xf32>
    %828 = math.exp %827 : vector<8x128xf32>
    %cst_196 = arith.constant 1.000000e+00 : f32
    %829 = vector.broadcast %cst_196 : f32 to vector<8x128xf32>
    %830 = arith.addf %829, %828 : vector<8x128xf32>
    %831 = arith.divf %829, %830 : vector<8x128xf32>
    %832 = arith.mulf %823, %786 : vector<8x128xf32>
    %833 = arith.mulf %817, %825 : vector<8x128xf32>
    %834 = arith.addf %832, %833 : vector<8x128xf32>
    %835 = math.tanh %834 : vector<8x128xf32>
    %836 = arith.mulf %831, %835 : vector<8x128xf32>
    %837 = vector.extract_strided_slice %807 {offsets = [0, 512], sizes = [8, 512], strides = [1, 1]} : vector<8x1024xf32> to vector<8x512xf32>
    %c0_197 = arith.constant 0 : index
    %c0_198 = arith.constant 0 : index
    %838 = vector.load %arg5[%c0_197, %c0_198] : memref<128x512xf32, #tpu.memory_space<vmem>>, vector<128x512xf32>
    %cst_199 = arith.constant dense<0.000000e+00> : vector<8x512xf32>
    %839 = tpu.matmul %793, %838, %cst_199 {dimension_numbers = #tpu.dot_dimension_numbers<[1], [0], [0], [1], [0, 0, 1, 1], [], []>} : vector<8x128xf32>, vector<128x512xf32>, vector<8x512xf32> -> vector<8x512xf32>
    %840 = arith.addf %837, %839 : vector<8x512xf32>
    %841 = vector.extract_strided_slice %840 {offsets = [0, 0], sizes = [8, 128], strides = [1, 1]} : vector<8x512xf32> to vector<8x128xf32>
    %842 = arith.negf %841 : vector<8x128xf32>
    %843 = math.exp %842 : vector<8x128xf32>
    %cst_200 = arith.constant 1.000000e+00 : f32
    %844 = vector.broadcast %cst_200 : f32 to vector<8x128xf32>
    %845 = arith.addf %844, %843 : vector<8x128xf32>
    %846 = arith.divf %844, %845 : vector<8x128xf32>
    %847 = vector.extract_strided_slice %840 {offsets = [0, 128], sizes = [8, 128], strides = [1, 1]} : vector<8x512xf32> to vector<8x128xf32>
    %848 = arith.negf %847 : vector<8x128xf32>
    %849 = math.exp %848 : vector<8x128xf32>
    %cst_201 = arith.constant 1.000000e+00 : f32
    %850 = vector.broadcast %cst_201 : f32 to vector<8x128xf32>
    %851 = arith.addf %850, %849 : vector<8x128xf32>
    %852 = arith.divf %850, %851 : vector<8x128xf32>
    %853 = vector.extract_strided_slice %840 {offsets = [0, 256], sizes = [8, 128], strides = [1, 1]} : vector<8x512xf32> to vector<8x128xf32>
    %854 = math.tanh %853 : vector<8x128xf32>
    %855 = vector.extract_strided_slice %840 {offsets = [0, 384], sizes = [8, 128], strides = [1, 1]} : vector<8x512xf32> to vector<8x128xf32>
    %856 = arith.negf %855 : vector<8x128xf32>
    %857 = math.exp %856 : vector<8x128xf32>
    %cst_202 = arith.constant 1.000000e+00 : f32
    %858 = vector.broadcast %cst_202 : f32 to vector<8x128xf32>
    %859 = arith.addf %858, %857 : vector<8x128xf32>
    %860 = arith.divf %858, %859 : vector<8x128xf32>
    %861 = arith.mulf %852, %800 : vector<8x128xf32>
    %862 = arith.mulf %846, %854 : vector<8x128xf32>
    %863 = arith.addf %861, %862 : vector<8x128xf32>
    %864 = math.tanh %863 : vector<8x128xf32>
    %865 = arith.mulf %860, %864 : vector<8x128xf32>
    %866 = vector.broadcast %c7_i32_185 : i32 to vector<8x1xi32>
    %867 = arith.cmpi slt, %866, %0 : vector<8x1xi32>
    %868 = arith.extui %867 : vector<8x1xi1> to vector<8x1xi32>
    %869 = arith.sitofp %868 : vector<8x1xi32> to vector<8x1xf32>
    %870 = vector.broadcast %801 : i32 to vector<8x1xi32>
    %871 = arith.cmpi slt, %870, %0 : vector<8x1xi32>
    %872 = arith.extui %871 : vector<8x1xi1> to vector<8x1xi32>
    %873 = arith.sitofp %872 : vector<8x1xi32> to vector<8x1xf32>
    %874 = vector.broadcast %869 : vector<8x1xf32> to vector<8x128xf32>
    %875 = arith.mulf %874, %836 : vector<8x128xf32>
    %876 = arith.index_cast %c7_i32_185 : i32 to index
    %c0_203 = arith.constant 0 : index
    %c0_204 = arith.constant 0 : index
    %877 = vector.load %arg15[%876, %c0_203, %c0_204] : memref<8x8x128xf32, #tpu.memory_space<vmem>>, vector<1x8x128xf32>
    %878 = vector.shape_cast %877 : vector<1x8x128xf32> to vector<8x128xf32>
    %879 = vector.shape_cast %875 : vector<8x128xf32> to vector<1x8x128xf32>
    tpu.vector_store %arg15[%876, %c0_203, %c0_204], %879 {strides = array<i32>} : memref<8x8x128xf32, #tpu.memory_space<vmem>>, vector<1x8x128xf32>,
    %880 = vector.broadcast %873 : vector<8x1xf32> to vector<8x128xf32>
    %881 = arith.mulf %880, %865 : vector<8x128xf32>
    %882 = arith.index_cast %801 : i32 to index
    %c0_205 = arith.constant 0 : index
    %c0_206 = arith.constant 0 : index
    %883 = vector.load %arg16[%882, %c0_205, %c0_206] : memref<8x8x128xf32, #tpu.memory_space<vmem>>, vector<1x8x128xf32>
    %884 = vector.shape_cast %883 : vector<1x8x128xf32> to vector<8x128xf32>
    %885 = vector.shape_cast %881 : vector<8x128xf32> to vector<1x8x128xf32>
    tpu.vector_store %arg16[%882, %c0_205, %c0_206], %885 {strides = array<i32>} : memref<8x8x128xf32, #tpu.memory_space<vmem>>, vector<1x8x128xf32>,
    %886 = vector.broadcast %869 : vector<8x1xf32> to vector<8x128xf32>
    %887 = arith.mulf %886, %836 : vector<8x128xf32>
    %cst_207 = arith.constant 1.000000e+00 : f32
    %888 = vector.broadcast %cst_207 : f32 to vector<8x1xf32>
    %889 = arith.subf %888, %869 : vector<8x1xf32>
    %890 = vector.broadcast %889 : vector<8x1xf32> to vector<8x128xf32>
    %891 = arith.mulf %890, %779 : vector<8x128xf32>
    %892 = arith.addf %887, %891 : vector<8x128xf32>
    %893 = vector.broadcast %869 : vector<8x1xf32> to vector<8x128xf32>
    %894 = arith.mulf %893, %834 : vector<8x128xf32>
    %cst_208 = arith.constant 1.000000e+00 : f32
    %895 = vector.broadcast %cst_208 : f32 to vector<8x1xf32>
    %896 = arith.subf %895, %869 : vector<8x1xf32>
    %897 = vector.broadcast %896 : vector<8x1xf32> to vector<8x128xf32>
    %898 = arith.mulf %897, %786 : vector<8x128xf32>
    %899 = arith.addf %894, %898 : vector<8x128xf32>
    %900 = vector.broadcast %873 : vector<8x1xf32> to vector<8x128xf32>
    %901 = arith.mulf %900, %865 : vector<8x128xf32>
    %cst_209 = arith.constant 1.000000e+00 : f32
    %902 = vector.broadcast %cst_209 : f32 to vector<8x1xf32>
    %903 = arith.subf %902, %873 : vector<8x1xf32>
    %904 = vector.broadcast %903 : vector<8x1xf32> to vector<8x128xf32>
    %905 = arith.mulf %904, %793 : vector<8x128xf32>
    %906 = arith.addf %901, %905 : vector<8x128xf32>
    %907 = vector.broadcast %873 : vector<8x1xf32> to vector<8x128xf32>
    %908 = arith.mulf %907, %863 : vector<8x128xf32>
    %cst_210 = arith.constant 1.000000e+00 : f32
    %909 = vector.broadcast %cst_210 : f32 to vector<8x1xf32>
    %910 = arith.subf %909, %873 : vector<8x1xf32>
    %911 = vector.broadcast %910 : vector<8x1xf32> to vector<8x128xf32>
    %912 = arith.mulf %911, %800 : vector<8x128xf32>
    %913 = arith.addf %908, %912 : vector<8x128xf32>
    %c8_i32 = arith.constant 8 : i32
    %c0_211 = arith.constant 0 : index
    %c0_212 = arith.constant 0 : index
    %c0_213 = arith.constant 0 : index
    %914 = vector.load %arg15[%c0_211, %c0_212, %c0_213] : memref<8x8x128xf32, #tpu.memory_space<vmem>>, vector<8x8x128xf32>
    %c0_214 = arith.constant 0 : index
    %c0_215 = arith.constant 0 : index
    %c0_216 = arith.constant 0 : index
    %915 = vector.load %arg16[%c0_214, %c0_215, %c0_216] : memref<8x8x128xf32, #tpu.memory_space<vmem>>, vector<8x8x128xf32>
    %916 = arith.addf %914, %915 : vector<8x8x128xf32>
    %917 = vector.shape_cast %916 : vector<8x8x128xf32> to vector<64x128xf32>
    %c0_217 = arith.constant 0 : index
    %c0_218 = arith.constant 0 : index
    %918 = vector.load %arg6[%c0_217, %c0_218] : memref<128x64xf32, #tpu.memory_space<vmem>>, vector<128x64xf32>
    %cst_219 = arith.constant dense<0.000000e+00> : vector<64x64xf32>
    %919 = tpu.matmul %917, %918, %cst_219 {dimension_numbers = #tpu.dot_dimension_numbers<[1], [0], [0], [1], [0, 0, 1, 1], [], []>} : vector<64x128xf32>, vector<128x64xf32>, vector<64x64xf32> -> vector<64x64xf32>
    %c0_220 = arith.constant 0 : index
    %c0_221 = arith.constant 0 : index
    %920 = vector.load %arg7[%c0_220, %c0_221] : memref<1x64xf32, #tpu.memory_space<vmem>>, vector<1x64xf32>
    %921 = vector.broadcast %920 : vector<1x64xf32> to vector<64x64xf32>
    %922 = arith.addf %919, %921 : vector<64x64xf32>
    %cst_222 = arith.constant 0.000000e+00 : f32
    %923 = vector.broadcast %cst_222 : f32 to vector<64x64xf32>
    %924 = arith.maximumf %922, %923 : vector<64x64xf32>
    %925 = vector.shape_cast %924 : vector<64x64xf32> to vector<8x8x64xf32>
    %c0_223 = arith.constant 0 : index
    %c0_224 = arith.constant 0 : index
    %926 = vector.load %arg8[%c0_223, %c0_224] : memref<1x64xf32, #tpu.memory_space<vmem>>, vector<1x64xf32>
    %927 = vector.shape_cast %926 : vector<1x64xf32> to vector<1x1x64xf32>
    %928 = vector.broadcast %927 : vector<1x1x64xf32> to vector<8x8x64xf32>
    %929 = arith.mulf %925, %928 : vector<8x8x64xf32>
    %cst_225 = arith.constant dense<0.000000e+00> : vector<8x8xf32>
    %930 = vector.multi_reduction <add>, %929, %cst_225 [2] : vector<8x8x64xf32> to vector<8x8xf32>
    %931 = vector.shape_cast %930 : vector<8x8xf32> to vector<8x8x1xf32>
    %c0_226 = arith.constant 0 : index
    %c0_227 = arith.constant 0 : index
    %932 = vector.load %arg9[%c0_226, %c0_227] : memref<1x1xf32, #tpu.memory_space<vmem>>, vector<1x1xf32>
    %933 = vector.shape_cast %932 : vector<1x1xf32> to vector<1x1x1xf32>
    %934 = vector.broadcast %933 : vector<1x1x1xf32> to vector<8x8x1xf32>
    %935 = arith.addf %931, %934 : vector<8x8x1xf32>
    %cst_228 = arith.constant dense<0xFF800000> : vector<8x1xf32>
    %936 = vector.multi_reduction <maximumf>, %935, %cst_228 [0] : vector<8x8x1xf32> to vector<8x1xf32>
    %937 = vector.shape_cast %936 : vector<8x1xf32> to vector<1x8x1xf32>
    %938 = vector.broadcast %937 : vector<1x8x1xf32> to vector<8x8x1xf32>
    %939 = arith.subf %935, %938 : vector<8x8x1xf32>
    %940 = math.exp %939 : vector<8x8x1xf32>
    %cst_229 = arith.constant dense<0.000000e+00> : vector<8x1xf32>
    %941 = vector.multi_reduction <add>, %940, %cst_229 [0] : vector<8x8x1xf32> to vector<8x1xf32>
    %942 = vector.shape_cast %941 : vector<8x1xf32> to vector<1x8x1xf32>
    %943 = vector.broadcast %942 : vector<1x8x1xf32> to vector<8x8x1xf32>
    %944 = arith.divf %940, %943 : vector<8x8x1xf32>
    %945 = vector.broadcast %944 : vector<8x8x1xf32> to vector<8x8x128xf32>
    %946 = arith.mulf %916, %945 : vector<8x8x128xf32>
    %cst_230 = arith.constant dense<0.000000e+00> : vector<8x128xf32>
    %947 = vector.multi_reduction <add>, %946, %cst_230 [0] : vector<8x8x128xf32> to vector<8x128xf32>
    %c0_231 = arith.constant 0 : index
    %c0_232 = arith.constant 0 : index
    %948 = vector.load %arg10[%c0_231, %c0_232] : memref<128x128xf32, #tpu.memory_space<vmem>>, vector<128x128xf32>
    %cst_233 = arith.constant dense<0.000000e+00> : vector<8x128xf32>
    %949 = tpu.matmul %947, %948, %cst_233 {dimension_numbers = #tpu.dot_dimension_numbers<[1], [0], [0], [1], [0, 0, 1, 1], [], []>} : vector<8x128xf32>, vector<128x128xf32>, vector<8x128xf32> -> vector<8x128xf32>
    %c0_234 = arith.constant 0 : index
    %c0_235 = arith.constant 0 : index
    %950 = vector.load %arg11[%c0_234, %c0_235] : memref<1x128xf32, #tpu.memory_space<vmem>>, vector<1x128xf32>
    %951 = vector.broadcast %950 : vector<1x128xf32> to vector<8x128xf32>
    %952 = arith.addf %949, %951 : vector<8x128xf32>
    %c0_236 = arith.constant 0 : index
    %c0_237 = arith.constant 0 : index
    %953 = vector.load %arg12[%c0_236, %c0_237] : memref<8x128xf32, #tpu.memory_space<vmem>>, vector<8x128xf32>
    tpu.vector_store %arg12[%c0_236, %c0_237], %952 {strides = array<i32>} : memref<8x128xf32, #tpu.memory_space<vmem>>, vector<8x128xf32>,
    %954 = vector.extract_strided_slice %944 {offsets = [0, 0, 0], sizes = [1, 8, 1], strides = [1, 1, 1]} : vector<8x8x1xf32> to vector<1x8x1xf32>
    %955 = vector.shape_cast %954 : vector<1x8x1xf32> to vector<8x1xf32>
    %956 = vector.extract_strided_slice %944 {offsets = [1, 0, 0], sizes = [1, 8, 1], strides = [1, 1, 1]} : vector<8x8x1xf32> to vector<1x8x1xf32>
    %957 = vector.shape_cast %956 : vector<1x8x1xf32> to vector<8x1xf32>
    %958 = vector.extract_strided_slice %944 {offsets = [2, 0, 0], sizes = [1, 8, 1], strides = [1, 1, 1]} : vector<8x8x1xf32> to vector<1x8x1xf32>
    %959 = vector.shape_cast %958 : vector<1x8x1xf32> to vector<8x1xf32>
    %960 = vector.extract_strided_slice %944 {offsets = [3, 0, 0], sizes = [1, 8, 1], strides = [1, 1, 1]} : vector<8x8x1xf32> to vector<1x8x1xf32>
    %961 = vector.shape_cast %960 : vector<1x8x1xf32> to vector<8x1xf32>
    %962 = vector.extract_strided_slice %944 {offsets = [4, 0, 0], sizes = [1, 8, 1], strides = [1, 1, 1]} : vector<8x8x1xf32> to vector<1x8x1xf32>
    %963 = vector.shape_cast %962 : vector<1x8x1xf32> to vector<8x1xf32>
    %964 = vector.extract_strided_slice %944 {offsets = [5, 0, 0], sizes = [1, 8, 1], strides = [1, 1, 1]} : vector<8x8x1xf32> to vector<1x8x1xf32>
    %965 = vector.shape_cast %964 : vector<1x8x1xf32> to vector<8x1xf32>
    %966 = vector.extract_strided_slice %944 {offsets = [6, 0, 0], sizes = [1, 8, 1], strides = [1, 1, 1]} : vector<8x8x1xf32> to vector<1x8x1xf32>
    %967 = vector.shape_cast %966 : vector<1x8x1xf32> to vector<8x1xf32>
    %968 = vector.extract_strided_slice %944 {offsets = [7, 0, 0], sizes = [1, 8, 1], strides = [1, 1, 1]} : vector<8x8x1xf32> to vector<1x8x1xf32>
    %969 = vector.shape_cast %968 : vector<1x8x1xf32> to vector<8x1xf32>
    %970 = tpu.concatenate %955, %957, %959, %961, %963, %965, %967, %969 in 1 : vector<8x1xf32>, vector<8x1xf32>, vector<8x1xf32>, vector<8x1xf32>, vector<8x1xf32>, vector<8x1xf32>, vector<8x1xf32>, vector<8x1xf32> -> vector<8x8xf32>
    %c0_238 = arith.constant 0 : index
    %c0_239 = arith.constant 0 : index
    %971 = vector.load %arg13[%c0_238, %c0_239] : memref<8x8xf32, #tpu.memory_space<vmem>>, vector<8x8xf32>
    tpu.vector_store %arg13[%c0_238, %c0_239], %970 {strides = array<i32>} : memref<8x8xf32, #tpu.memory_space<vmem>>, vector<8x8xf32>,
    return
  }
}

</mosaic_0001>

<llo_original>
// kernel: tpu_custom_call.1
$region0: #{tpu_custom_call.1}
  #allocation0 [shape = 'u32[]', space=smem, size = 0x4, offset = 0x4, fixed_abs, tag = 'smem constant byte address 0x4 - core index']
  #allocation1 [shape = 'u32[72,128]{1,0:T(1,128)}', space=vmem, size = 0x9000, scoped, tag = 'internal scratch']
  #allocation2 [shape = 'f32[8,8,1024]{2,1,0:T(8,128)}', space=vmem, size = 0x40000, scoped, tag = 'scratch operand']
  #allocation3 [shape = 'f32[8,8,128]{2,1,0:T(8,128)}', space=vmem, size = 0x8000, scoped, tag = 'scratch operand']
  #allocation4 [shape = 'f32[8,8,128]{2,1,0:T(8,128)}', space=vmem, size = 0x8000, scoped, tag = 'scratch operand']
  #allocation5 [shape = 'f32[1,1]{1,0:T(1,128)S(1)}', space=vmem, size = 0x200, scoped, tag = 'scoped memory for tpu_custom_call.1']
  %s0 = inlined_call_operand.vmem [shape: f32[64,16], index: 0, kind: input, shape index: {}]
  %s1 = inlined_call_operand.vmem [shape: s32[8,1], index: 1, kind: input, shape index: {}]
  %s2 = inlined_call_operand.vmem [shape: f32[16,1024], index: 2, kind: input, shape index: {}]
  %s3 = inlined_call_operand.vmem [shape: f32[1,1024], index: 3, kind: input, shape index: {}]
  %s4 = inlined_call_operand.hbm [shape: f32[128,512], index: 4, kind: input, shape index: {}]
  %s5 = inlined_call_operand.hbm [shape: f32[128,512], index: 5, kind: input, shape index: {}]
  %s6 = inlined_call_operand.vmem [shape: f32[128,64], index: 6, kind: input, shape index: {}]
  %s7 = inlined_call_operand.vmem [shape: f32[1,64], index: 7, kind: input, shape index: {}]
  %s8 = inlined_call_operand.vmem [shape: f32[1,64], index: 8, kind: input, shape index: {}]
  %s9 = inlined_call_operand.<no memory space> [shape: f32[1,1], index: 9, kind: input, shape index: {}]
  %s10 = inlined_call_operand.hbm [shape: f32[128,128], index: 10, kind: input, shape index: {}]
  %s11 = inlined_call_operand.vmem [shape: f32[1,128], index: 11, kind: input, shape index: {}]
  %s12 = inlined_call_operand.hbm [shape: f32[8,128], index: 12, kind: output, shape index: {0}]
  %s13 = inlined_call_operand.hbm [shape: f32[8,8], index: 13, kind: output, shape index: {1}]
  %14 = xla_tuple %s12, %s13
  %s15 = sld [smem:[#allocation0]]
  $region78: #{tpu_custom_call.1} parent=0
    _
  %s17 = ssub.s32 1, %s15
  %s18 = scalar_select 0, %s17, %s15
  %v19 = vstv %s9
  %20 = vst [vmem:[#allocation5] sm:$0x1] %v19
  $region1: #{tpu_custom_call.1} parent=0
    #allocation6 [shape = 'u8[262144]{0}', space=vmem, size = 0x40000, scoped, tag = 'input window, operand 4, single buffered']
    #allocation7 [shape = 's32[1]{0}', space=sflag, size = 0x4, scoped, tag = 'scoped memory for tpu_custom_call.1']
    #allocation8 [shape = 's32[1]{0}', space=sflag, size = 0x4, scoped, tag = 'scoped memory for tpu_custom_call.1']
    #allocation9 [shape = 'u8[262144]{0}', space=vmem, size = 0x40000, scoped, tag = 'input window, operand 5, single buffered']
    #allocation10 [shape = 's32[1]{0}', space=sflag, size = 0x4, scoped, tag = 'scoped memory for tpu_custom_call.1']
    #allocation11 [shape = 'u8[65536]{0}', space=vmem, size = 0x10000, scoped, tag = 'input window, operand 10, single buffered']
    #allocation12 [shape = 'u8[4096]{0}', space=vmem, size = 0x1000, scoped, tag = 'output window, operand 0, single buffered']
    #allocation13 [shape = 'u8[4096]{0}', space=vmem, size = 0x1000, scoped, tag = 'output window, operand 1, single buffered']
    #allocation14 [shape = 's32[1]{0}', space=sflag, size = 0x4, scoped, tag = 'scoped memory for tpu_custom_call.1']
    %21 = vsyncpa [#allocation7], 0
    %22 = vsyncpa [#allocation10], 0
    %23 = vsyncpa [#allocation8], 0
    %24 = vsyncpa [#allocation14], 0
    // Predicated region
    $region2: #{tpu_custom_call.1} parent=1 // pred_check
      _
    $region3: #{tpu_custom_call.1} parent=1 // pred_check_branch
      %26 = sbr.rel (0) target = $region5
    $region4: #{tpu_custom_call.1} parent=1 // pred_region
      _
    $region5: #{tpu_custom_call.1} parent=1 // pred_fallthru
      _
    // Predicated region
    $region6: #{tpu_custom_call.1} parent=1 // pred_check
      _
    $region7: #{tpu_custom_call.1} parent=1 // pred_check_branch
      %28 = sbr.rel (0) target = $region9
    $region8: #{tpu_custom_call.1} parent=1 // pred_region
      _
    $region9: #{tpu_custom_call.1} parent=1 // pred_fallthru
      _
    // Predicated region
    $region10: #{tpu_custom_call.1} parent=1 // pred_check
      _
    $region11: #{tpu_custom_call.1} parent=1 // pred_check_branch
      %30 = sbr.rel (0) target = $region13
    $region12: #{tpu_custom_call.1} parent=1 // pred_region
      _
    $region13: #{tpu_custom_call.1} parent=1 // pred_fallthru
      _
    // Predicated region
    $region14: #{tpu_custom_call.1} parent=1 // pred_check
      _
    $region15: #{tpu_custom_call.1} parent=1 // pred_check_branch
      %32 = sbr.rel (0) target = $region17
    $region16: #{tpu_custom_call.1} parent=1 // pred_region
      _
    $region17: #{tpu_custom_call.1} parent=1 // pred_fallthru
      _
    // Predicated region
    $region18: #{tpu_custom_call.1} parent=1 // pred_check
      _
    $region19: #{tpu_custom_call.1} parent=1 // pred_check_branch
      %34 = sbr.rel (0) target = $region21
    $region20: #{tpu_custom_call.1} parent=1 // pred_region
      %36 = vsyncadd [#allocation7], 0
      %s37 = sshll.u32 %s4, 4
      %s38 = int_to_ptr.hbm [resolvable:$true] %s37
      %s39 = sshll.u32 [#allocation6], 4
      %s40 = int_to_ptr.vmem [resolvable:$true] %s39
      %45 = dma.hbm_to_vmem [thread:$0]  %s38, 8192, %s40, [#allocation7], 512, 512, 32
    $region21: #{tpu_custom_call.1} parent=1 // pred_fallthru
      _
    // Predicated region
    $region22: #{tpu_custom_call.1} parent=1 // pred_check
      _
    $region23: #{tpu_custom_call.1} parent=1 // pred_check_branch
      %47 = sbr.rel (0) target = $region25
    $region24: #{tpu_custom_call.1} parent=1 // pred_region
      %49 = vsyncadd [#allocation10], 0
      %s50 = sshll.u32 %s5, 4
      %s51 = int_to_ptr.hbm [resolvable:$true] %s50
      %s52 = sshll.u32 [#allocation9], 4
      %s53 = int_to_ptr.vmem [resolvable:$true] %s52
      %58 = dma.hbm_to_vmem [thread:$0]  %s51, 8192, %s53, [#allocation10], 512, 512, 32
    $region25: #{tpu_custom_call.1} parent=1 // pred_fallthru
      _
    // Predicated region
    $region26: #{tpu_custom_call.1} parent=1 // pred_check
      _
    $region27: #{tpu_custom_call.1} parent=1 // pred_check_branch
      %60 = sbr.rel (0) target = $region29
    $region28: #{tpu_custom_call.1} parent=1 // pred_region
      _
    $region29: #{tpu_custom_call.1} parent=1 // pred_fallthru
      _
    // Predicated region
    $region30: #{tpu_custom_call.1} parent=1 // pred_check
      _
    $region31: #{tpu_custom_call.1} parent=1 // pred_check_branch
      %62 = sbr.rel (0) target = $region33
    $region32: #{tpu_custom_call.1} parent=1 // pred_region
      _
    $region33: #{tpu_custom_call.1} parent=1 // pred_fallthru
      _
    // Predicated region
    $region34: #{tpu_custom_call.1} parent=1 // pred_check
      _
    $region35: #{tpu_custom_call.1} parent=1 // pred_check_branch
      %64 = sbr.rel (0) target = $region37
    $region36: #{tpu_custom_call.1} parent=1 // pred_region
      _
    $region37: #{tpu_custom_call.1} parent=1 // pred_fallthru
      _
    // Predicated region
    $region38: #{tpu_custom_call.1} parent=1 // pred_check
      _
    $region39: #{tpu_custom_call.1} parent=1 // pred_check_branch
      %66 = sbr.rel (0) target = $region41
    $region40: #{tpu_custom_call.1} parent=1 // pred_region
      _
    $region41: #{tpu_custom_call.1} parent=1 // pred_fallthru
      _
    // Predicated region
    $region42: #{tpu_custom_call.1} parent=1 // pred_check
      _
    $region43: #{tpu_custom_call.1} parent=1 // pred_check_branch
      %68 = sbr.rel (0) target = $region45
    $region44: #{tpu_custom_call.1} parent=1 // pred_region
      %70 = vsyncadd [#allocation10], 0
      %s71 = sshll.u32 %s10, 4
      %s72 = int_to_ptr.hbm [resolvable:$true] %s71
      %s73 = sshll.u32 [#allocation11], 4
      %s74 = int_to_ptr.vmem [resolvable:$true] %s73
      %79 = dma.hbm_to_vmem [thread:$0]  %s72, 2048, %s74, [#allocation10], 128, 128, 8
    $region45: #{tpu_custom_call.1} parent=1 // pred_fallthru
      _
    // Predicated region
    $region46: #{tpu_custom_call.1} parent=1 // pred_check
      _
    $region47: #{tpu_custom_call.1} parent=1 // pred_check_branch
      %81 = sbr.rel (0) target = $region49
    $region48: #{tpu_custom_call.1} parent=1 // pred_region
      _
    $region49: #{tpu_custom_call.1} parent=1 // pred_fallthru
      _
    // Predicated region
    $region50: #{tpu_custom_call.1} parent=1 // pred_check
      _
    $region51: #{tpu_custom_call.1} parent=1 // pred_check_branch
      %83 = sbr.rel (0) target = $region53
    $region52: #{tpu_custom_call.1} parent=1 // pred_region
      %85 = dma.done [#allocation7], 8192
    $region53: #{tpu_custom_call.1} parent=1 // pred_fallthru
      _
    // Predicated region
    $region54: #{tpu_custom_call.1} parent=1 // pred_check
      _
    $region55: #{tpu_custom_call.1} parent=1 // pred_check_branch
      %87 = sbr.rel (0) target = $region57
    $region56: #{tpu_custom_call.1} parent=1 // pred_region
      %89 = dma.done [#allocation10], 8192
    $region57: #{tpu_custom_call.1} parent=1 // pred_fallthru
      _
    // Predicated region
    $region58: #{tpu_custom_call.1} parent=1 // pred_check
      _
    $region59: #{tpu_custom_call.1} parent=1 // pred_check_branch
      %91 = sbr.rel (0) target = $region61
    $region60: #{tpu_custom_call.1} parent=1 // pred_region
      %93 = dma.done [#allocation10], 2048
    $region61: #{tpu_custom_call.1} parent=1 // pred_fallthru
      _
    %v94 = vld [vmem:[%s1] sm:$0xff]
    %v95 = vld [vmem:[%s0] sm:$0xff]
    %v96 = vld [vmem:[%s0 + $0x8] sm:$0xff]
    %v97 = vld [vmem:[%s0 + $0x10] sm:$0xff]
    %v98 = vld [vmem:[%s0 + $0x18] sm:$0xff]
    %v99 = vld [vmem:[%s0 + $0x20] sm:$0xff]
    %v100 = vld [vmem:[%s0 + $0x28] sm:$0xff]
    %v101 = vld [vmem:[%s0 + $0x30] sm:$0xff]
    %v102 = vld [vmem:[%s0 + $0x38] sm:$0xff]
    %v103 = vld [vmem:[%s2] sm:$0xff]
    %v104 = vld [vmem:[%s2 + $0x8] sm:$0xff]
    %v105 = vld [vmem:[%s2 + $0x10] sm:$0xff]
    %v106 = vld [vmem:[%s2 + $0x18] sm:$0xff]
    %v107 = vld [vmem:[%s2 + $0x20] sm:$0xff]
    %v108 = vld [vmem:[%s2 + $0x28] sm:$0xff]
    %v109 = vld [vmem:[%s2 + $0x30] sm:$0xff]
    %v110 = vld [vmem:[%s2 + $0x38] sm:$0xff]
    %v111 = vld [vmem:[%s2 + $0x40] sm:$0xff]
    %v112 = vld [vmem:[%s2 + $0x48] sm:$0xff]
    %v113 = vld [vmem:[%s2 + $0x50] sm:$0xff]
    %v114 = vld [vmem:[%s2 + $0x58] sm:$0xff]
    %v115 = vld [vmem:[%s2 + $0x60] sm:$0xff]
    %v116 = vld [vmem:[%s2 + $0x68] sm:$0xff]
    %v117 = vld [vmem:[%s2 + $0x70] sm:$0xff]
    %v118 = vld [vmem:[%s2 + $0x78] sm:$0xff]
    %v119 = vld [vmem:[%s3] sm:$0xff]
    %v121 = vperm.slane %v119, 0
    %v122 = vperm.slane %v119, 1
    %v123 = vperm.slane %v119, 2
    %v124 = vperm.slane %v119, 3
    %v125 = vperm.slane %v119, 4
    %v126 = vperm.slane %v119, 5
    %v127 = vperm.slane %v119, 6
    %v128 = vperm.slane %v119, 7
    %vm137 = vcmask 130048
    %v139 = vsel %vm137, %v95, 0
    %v142 = vsel %vm137, %v96, 0
    %v145 = vsel %vm137, %v97, 0
    %v148 = vsel %vm137, %v98, 0
    %v151 = vsel %vm137, %v99, 0
    %v154 = vsel %vm137, %v100, 0
    %v157 = vsel %vm137, %v101, 0
    %v160 = vsel %vm137, %v102, 0
    %162 = vmatpush.msra.mxu0 0.0
    %163 = vmatpush.msra.mxu0 0.0
    %164 = vmatpush.msra.mxu0 0.0
    %165 = vmatpush.msra.mxu0 0.0
    %166 = vmatpush.msra.mxu0 0.0
    %167 = vmatpush.msra.mxu0 0.0
    %168 = vmatpush.msra.mxu0 0.0
    %169 = vmatpush.msra.mxu0 0.0
    %170 = vmatpush.msra.mxu0 0.0
    %171 = vmatpush.msra.mxu0 0.0
    %172 = vmatpush.msra.mxu0 0.0
    %173 = vmatpush.msra.mxu0 0.0
    %174 = vmatpush.msra.mxu0 0.0
    %175 = vmatpush.msra.mxu0 0.0
    %176 = vmatpush.msra.mxu0 %v111
    %177 = vmatpush.msra.mxu0 %v103
    %178 = vmatmul.f32.gmra.mxu0 %v139
    %v179 = vpop.f32.mrf.mxu0
    %v180 = vadd.f32 %v121, %v179
    %181 = vmatmul.f32.gmra.mxu0 %v142
    %v182 = vpop.f32.mrf.mxu0
    %v183 = vadd.f32 %v121, %v182
    %184 = vmatmul.f32.gmra.mxu0 %v145
    %v185 = vpop.f32.mrf.mxu0
    %v186 = vadd.f32 %v121, %v185
    %187 = vmatmul.f32.gmra.mxu0 %v148
    %v188 = vpop.f32.mrf.mxu0
    %v189 = vadd.f32 %v121, %v188
    %190 = vmatmul.f32.gmra.mxu0 %v151
    %v191 = vpop.f32.mrf.mxu0
    %v192 = vadd.f32 %v121, %v191
    %193 = vmatmul.f32.gmra.mxu0 %v154
    %v194 = vpop.f32.mrf.mxu0
    %v195 = vadd.f32 %v121, %v194
    %196 = vmatmul.f32.gmra.mxu0 %v157
    %v197 = vpop.f32.mrf.mxu0
    %v198 = vadd.f32 %v121, %v197
    %199 = vmatmul.f32.gmra.mxu0 %v160
    %v200 = vpop.f32.mrf.mxu0
    %v201 = vadd.f32 %v121, %v200
    %202 = vdwg.mxu0
    %203 = vmatpush.msra.mxu0 0.0
    %204 = vmatpush.msra.mxu0 0.0
    %205 = vmatpush.msra.mxu0 0.0
    %206 = vmatpush.msra.mxu0 0.0
    %207 = vmatpush.msra.mxu0 0.0
    %208 = vmatpush.msra.mxu0 0.0
    %209 = vmatpush.msra.mxu0 0.0
    %210 = vmatpush.msra.mxu0 0.0
    %211 = vmatpush.msra.mxu0 0.0
    %212 = vmatpush.msra.mxu0 0.0
    %213 = vmatpush.msra.mxu0 0.0
    %214 = vmatpush.msra.mxu0 0.0
    %215 = vmatpush.msra.mxu0 0.0
    %216 = vmatpush.msra.mxu0 0.0
    %217 = vmatpush.msra.mxu0 %v112
    %218 = vmatpush.msra.mxu0 %v104
    %219 = vmatmul.f32.gmra.mxu0 %v139
    %v220 = vpop.f32.mrf.mxu0
    %v221 = vadd.f32 %v122, %v220
    %222 = vmatmul.f32.gmra.mxu0 %v142
    %v223 = vpop.f32.mrf.mxu0
    %v224 = vadd.f32 %v122, %v223
    %225 = vmatmul.f32.gmra.mxu0 %v145
    %v226 = vpop.f32.mrf.mxu0
    %v227 = vadd.f32 %v122, %v226
    %228 = vmatmul.f32.gmra.mxu0 %v148
    %v229 = vpop.f32.mrf.mxu0
    %v230 = vadd.f32 %v122, %v229
    %231 = vmatmul.f32.gmra.mxu0 %v151
    %v232 = vpop.f32.mrf.mxu0
    %v233 = vadd.f32 %v122, %v232
    %234 = vmatmul.f32.gmra.mxu0 %v154
    %v235 = vpop.f32.mrf.mxu0
    %v236 = vadd.f32 %v122, %v235
    %237 = vmatmul.f32.gmra.mxu0 %v157
    %v238 = vpop.f32.mrf.mxu0
    %v239 = vadd.f32 %v122, %v238
    %240 = vmatmul.f32.gmra.mxu0 %v160
    %v241 = vpop.f32.mrf.mxu0
    %v242 = vadd.f32 %v122, %v241
    %243 = vdwg.mxu0
    %244 = vmatpush.msra.mxu0 0.0
    %245 = vmatpush.msra.mxu0 0.0
    %246 = vmatpush.msra.mxu0 0.0
    %247 = vmatpush.msra.mxu0 0.0
    %248 = vmatpush.msra.mxu0 0.0
    %249 = vmatpush.msra.mxu0 0.0
    %250 = vmatpush.msra.mxu0 0.0
    %251 = vmatpush.msra.mxu0 0.0
    %252 = vmatpush.msra.mxu0 0.0
    %253 = vmatpush.msra.mxu0 0.0
    %254 = vmatpush.msra.mxu0 0.0
    %255 = vmatpush.msra.mxu0 0.0
    %256 = vmatpush.msra.mxu0 0.0
    %257 = vmatpush.msra.mxu0 0.0
    %258 = vmatpush.msra.mxu0 %v113
    %259 = vmatpush.msra.mxu0 %v105
    %260 = vmatmul.f32.gmra.mxu0 %v139
    %v261 = vpop.f32.mrf.mxu0
    %v262 = vadd.f32 %v123, %v261
    %263 = vmatmul.f32.gmra.mxu0 %v142
    %v264 = vpop.f32.mrf.mxu0
    %v265 = vadd.f32 %v123, %v264
    %266 = vmatmul.f32.gmra.mxu0 %v145
    %v267 = vpop.f32.mrf.mxu0
    %v268 = vadd.f32 %v123, %v267
    %269 = vmatmul.f32.gmra.mxu0 %v148
    %v270 = vpop.f32.mrf.mxu0
    %v271 = vadd.f32 %v123, %v270
    %272 = vmatmul.f32.gmra.mxu0 %v151
    %v273 = vpop.f32.mrf.mxu0
    %v274 = vadd.f32 %v123, %v273
    %275 = vmatmul.f32.gmra.mxu0 %v154
    %v276 = vpop.f32.mrf.mxu0
    %v277 = vadd.f32 %v123, %v276
    %278 = vmatmul.f32.gmra.mxu0 %v157
    %v279 = vpop.f32.mrf.mxu0
    %v280 = vadd.f32 %v123, %v279
    %281 = vmatmul.f32.gmra.mxu0 %v160
    %v282 = vpop.f32.mrf.mxu0
    %v283 = vadd.f32 %v123, %v282
    %284 = vdwg.mxu0
    %285 = vmatpush.msra.mxu0 0.0
    %286 = vmatpush.msra.mxu0 0.0
    %287 = vmatpush.msra.mxu0 0.0
    %288 = vmatpush.msra.mxu0 0.0
    %289 = vmatpush.msra.mxu0 0.0
    %290 = vmatpush.msra.mxu0 0.0
    %291 = vmatpush.msra.mxu0 0.0
    %292 = vmatpush.msra.mxu0 0.0
    %293 = vmatpush.msra.mxu0 0.0
    %294 = vmatpush.msra.mxu0 0.0
    %295 = vmatpush.msra.mxu0 0.0
    %296 = vmatpush.msra.mxu0 0.0
    %297 = vmatpush.msra.mxu0 0.0
    %298 = vmatpush.msra.mxu0 0.0
    %299 = vmatpush.msra.mxu0 %v114
    %300 = vmatpush.msra.mxu0 %v106
    %301 = vmatmul.f32.gmra.mxu0 %v139
    %v302 = vpop.f32.mrf.mxu0
    %v303 = vadd.f32 %v124, %v302
    %304 = vmatmul.f32.gmra.mxu0 %v142
    %v305 = vpop.f32.mrf.mxu0
    %v306 = vadd.f32 %v124, %v305
    %307 = vmatmul.f32.gmra.mxu0 %v145
    %v308 = vpop.f32.mrf.mxu0
    %v309 = vadd.f32 %v124, %v308
    %310 = vmatmul.f32.gmra.mxu0 %v148
    %v311 = vpop.f32.mrf.mxu0
    %v312 = vadd.f32 %v124, %v311
    %313 = vmatmul.f32.gmra.mxu0 %v151
    %v314 = vpop.f32.mrf.mxu0
    %v315 = vadd.f32 %v124, %v314
    %316 = vmatmul.f32.gmra.mxu0 %v154
    %v317 = vpop.f32.mrf.mxu0
    %v318 = vadd.f32 %v124, %v317
    %319 = vmatmul.f32.gmra.mxu0 %v157
    %v320 = vpop.f32.mrf.mxu0
    %v321 = vadd.f32 %v124, %v320
    %322 = vmatmul.f32.gmra.mxu0 %v160
    %v323 = vpop.f32.mrf.mxu0
    %v324 = vadd.f32 %v124, %v323
    %325 = vdwg.mxu0
    %326 = vmatpush.msra.mxu0 0.0
    %327 = vmatpush.msra.mxu0 0.0
    %328 = vmatpush.msra.mxu0 0.0
    %329 = vmatpush.msra.mxu0 0.0
    %330 = vmatpush.msra.mxu0 0.0
    %331 = vmatpush.msra.mxu0 0.0
    %332 = vmatpush.msra.mxu0 0.0
    %333 = vmatpush.msra.mxu0 0.0
    %334 = vmatpush.msra.mxu0 0.0
    %335 = vmatpush.msra.mxu0 0.0
    %336 = vmatpush.msra.mxu0 0.0
    %337 = vmatpush.msra.mxu0 0.0
    %338 = vmatpush.msra.mxu0 0.0
    %339 = vmatpush.msra.mxu0 0.0
    %340 = vmatpush.msra.mxu0 %v115
    %341 = vmatpush.msra.mxu0 %v107
    %342 = vmatmul.f32.gmra.mxu0 %v139
    %v343 = vpop.f32.mrf.mxu0
    %v344 = vadd.f32 %v125, %v343
    %345 = vmatmul.f32.gmra.mxu0 %v142
    %v346 = vpop.f32.mrf.mxu0
    %v347 = vadd.f32 %v125, %v346
    %348 = vmatmul.f32.gmra.mxu0 %v145
    %v349 = vpop.f32.mrf.mxu0
    %v350 = vadd.f32 %v125, %v349
    %351 = vmatmul.f32.gmra.mxu0 %v148
    %v352 = vpop.f32.mrf.mxu0
    %v353 = vadd.f32 %v125, %v352
    %354 = vmatmul.f32.gmra.mxu0 %v151
    %v355 = vpop.f32.mrf.mxu0
    %v356 = vadd.f32 %v125, %v355
    %357 = vmatmul.f32.gmra.mxu0 %v154
    %v358 = vpop.f32.mrf.mxu0
    %v359 = vadd.f32 %v125, %v358
    %360 = vmatmul.f32.gmra.mxu0 %v157
    %v361 = vpop.f32.mrf.mxu0
    %v362 = vadd.f32 %v125, %v361
    %363 = vmatmul.f32.gmra.mxu0 %v160
    %v364 = vpop.f32.mrf.mxu0
    %v365 = vadd.f32 %v125, %v364
    %366 = vdwg.mxu0
    %367 = vmatpush.msra.mxu0 0.0
    %368 = vmatpush.msra.mxu0 0.0
    %369 = vmatpush.msra.mxu0 0.0
    %370 = vmatpush.msra.mxu0 0.0
    %371 = vmatpush.msra.mxu0 0.0
    %372 = vmatpush.msra.mxu0 0.0
    %373 = vmatpush.msra.mxu0 0.0
    %374 = vmatpush.msra.mxu0 0.0
    %375 = vmatpush.msra.mxu0 0.0
    %376 = vmatpush.msra.mxu0 0.0
    %377 = vmatpush.msra.mxu0 0.0
    %378 = vmatpush.msra.mxu0 0.0
    %379 = vmatpush.msra.mxu0 0.0
    %380 = vmatpush.msra.mxu0 0.0
    %381 = vmatpush.msra.mxu0 %v116
    %382 = vmatpush.msra.mxu0 %v108
    %383 = vmatmul.f32.gmra.mxu0 %v139
    %v384 = vpop.f32.mrf.mxu0
    %v385 = vadd.f32 %v126, %v384
    %386 = vmatmul.f32.gmra.mxu0 %v142
    %v387 = vpop.f32.mrf.mxu0
    %v388 = vadd.f32 %v126, %v387
    %389 = vmatmul.f32.gmra.mxu0 %v145
    %v390 = vpop.f32.mrf.mxu0
    %v391 = vadd.f32 %v126, %v390
    %392 = vmatmul.f32.gmra.mxu0 %v148
    %v393 = vpop.f32.mrf.mxu0
    %v394 = vadd.f32 %v126, %v393
    %395 = vmatmul.f32.gmra.mxu0 %v151
    %v396 = vpop.f32.mrf.mxu0
    %v397 = vadd.f32 %v126, %v396
    %398 = vmatmul.f32.gmra.mxu0 %v154
    %v399 = vpop.f32.mrf.mxu0
    %v400 = vadd.f32 %v126, %v399
    %401 = vmatmul.f32.gmra.mxu0 %v157
    %v402 = vpop.f32.mrf.mxu0
    %v403 = vadd.f32 %v126, %v402
    %404 = vmatmul.f32.gmra.mxu0 %v160
    %v405 = vpop.f32.mrf.mxu0
    %v406 = vadd.f32 %v126, %v405
    %407 = vdwg.mxu0
    %408 = vmatpush.msra.mxu0 0.0
    %409 = vmatpush.msra.mxu0 0.0
    %410 = vmatpush.msra.mxu0 0.0
    %411 = vmatpush.msra.mxu0 0.0
    %412 = vmatpush.msra.mxu0 0.0
    %413 = vmatpush.msra.mxu0 0.0
    %414 = vmatpush.msra.mxu0 0.0
    %415 = vmatpush.msra.mxu0 0.0
    %416 = vmatpush.msra.mxu0 0.0
    %417 = vmatpush.msra.mxu0 0.0
    %418 = vmatpush.msra.mxu0 0.0
    %419 = vmatpush.msra.mxu0 0.0
    %420 = vmatpush.msra.mxu0 0.0
    %421 = vmatpush.msra.mxu0 0.0
    %422 = vmatpush.msra.mxu0 %v117
    %423 = vmatpush.msra.mxu0 %v109
    %424 = vmatmul.f32.gmra.mxu0 %v139
    %v425 = vpop.f32.mrf.mxu0
    %v426 = vadd.f32 %v127, %v425
    %427 = vmatmul.f32.gmra.mxu0 %v142
    %v428 = vpop.f32.mrf.mxu0
    %v429 = vadd.f32 %v127, %v428
    %430 = vmatmul.f32.gmra.mxu0 %v145
    %v431 = vpop.f32.mrf.mxu0
    %v432 = vadd.f32 %v127, %v431
    %433 = vmatmul.f32.gmra.mxu0 %v148
    %v434 = vpop.f32.mrf.mxu0
    %v435 = vadd.f32 %v127, %v434
    %436 = vmatmul.f32.gmra.mxu0 %v151
    %v437 = vpop.f32.mrf.mxu0
    %v438 = vadd.f32 %v127, %v437
    %439 = vmatmul.f32.gmra.mxu0 %v154
    %v440 = vpop.f32.mrf.mxu0
    %v441 = vadd.f32 %v127, %v440
    %442 = vmatmul.f32.gmra.mxu0 %v157
    %v443 = vpop.f32.mrf.mxu0
    %v444 = vadd.f32 %v127, %v443
    %445 = vmatmul.f32.gmra.mxu0 %v160
    %v446 = vpop.f32.mrf.mxu0
    %v447 = vadd.f32 %v127, %v446
    %448 = vdwg.mxu0
    %449 = vmatpush.msra.mxu0 0.0
    %450 = vmatpush.msra.mxu0 0.0
    %451 = vmatpush.msra.mxu0 0.0
    %452 = vmatpush.msra.mxu0 0.0
    %453 = vmatpush.msra.mxu0 0.0
    %454 = vmatpush.msra.mxu0 0.0
    %455 = vmatpush.msra.mxu0 0.0
    %456 = vmatpush.msra.mxu0 0.0
    %457 = vmatpush.msra.mxu0 0.0
    %458 = vmatpush.msra.mxu0 0.0
    %459 = vmatpush.msra.mxu0 0.0
    %460 = vmatpush.msra.mxu0 0.0
    %461 = vmatpush.msra.mxu0 0.0
    %462 = vmatpush.msra.mxu0 0.0
    %463 = vmatpush.msra.mxu0 %v118
    %464 = vmatpush.msra.mxu0 %v110
    %465 = vmatmul.f32.gmra.mxu0 %v139
    %v466 = vpop.f32.mrf.mxu0
    %v467 = vadd.f32 %v128, %v466
    %468 = vmatmul.f32.gmra.mxu0 %v142
    %v469 = vpop.f32.mrf.mxu0
    %v470 = vadd.f32 %v128, %v469
    %471 = vmatmul.f32.gmra.mxu0 %v145
    %v472 = vpop.f32.mrf.mxu0
    %v473 = vadd.f32 %v128, %v472
    %474 = vmatmul.f32.gmra.mxu0 %v148
    %v475 = vpop.f32.mrf.mxu0
    %v476 = vadd.f32 %v128, %v475
    %477 = vmatmul.f32.gmra.mxu0 %v151
    %v478 = vpop.f32.mrf.mxu0
    %v479 = vadd.f32 %v128, %v478
    %480 = vmatmul.f32.gmra.mxu0 %v154
    %v481 = vpop.f32.mrf.mxu0
    %v482 = vadd.f32 %v128, %v481
    %483 = vmatmul.f32.gmra.mxu0 %v157
    %v484 = vpop.f32.mrf.mxu0
    %v485 = vadd.f32 %v128, %v484
    %486 = vmatmul.f32.gmra.mxu0 %v160
    %v487 = vpop.f32.mrf.mxu0
    %v488 = vadd.f32 %v128, %v487
    %489 = vdwg.mxu0
    %490 = vst [vmem:[#allocation2] sm:$0xff] %v180
    %491 = vst [vmem:[#allocation2 + $0x8] sm:$0xff] %v221
    %492 = vst [vmem:[#allocation2 + $0x10] sm:$0xff] %v262
    %493 = vst [vmem:[#allocation2 + $0x18] sm:$0xff] %v303
    %494 = vst [vmem:[#allocation2 + $0x20] sm:$0xff] %v344
    %495 = vst [vmem:[#allocation2 + $0x28] sm:$0xff] %v385
    %496 = vst [vmem:[#allocation2 + $0x30] sm:$0xff] %v426
    %497 = vst [vmem:[#allocation2 + $0x38] sm:$0xff] %v467
    %498 = vst [vmem:[#allocation2 + $0x40] sm:$0xff] %v183
    %499 = vst [vmem:[#allocation2 + $0x48] sm:$0xff] %v224
    %500 = vst [vmem:[#allocation2 + $0x50] sm:$0xff] %v265
    %501 = vst [vmem:[#allocation2 + $0x58] sm:$0xff] %v306
    %502 = vst [vmem:[#allocation2 + $0x60] sm:$0xff] %v347
    %503 = vst [vmem:[#allocation2 + $0x68] sm:$0xff] %v388
    %504 = vst [vmem:[#allocation2 + $0x70] sm:$0xff] %v429
    %505 = vst [vmem:[#allocation2 + $0x78] sm:$0xff] %v470
    %506 = vst [vmem:[#allocation2 + $0x80] sm:$0xff] %v186
    %507 = vst [vmem:[#allocation2 + $0x88] sm:$0xff] %v227
    %508 = vst [vmem:[#allocation2 + $0x90] sm:$0xff] %v268
    %509 = vst [vmem:[#allocation2 + $0x98] sm:$0xff] %v309
    %510 = vst [vmem:[#allocation2 + $0xa0] sm:$0xff] %v350
    %511 = vst [vmem:[#allocation2 + $0xa8] sm:$0xff] %v391
    %512 = vst [vmem:[#allocation2 + $0xb0] sm:$0xff] %v432
    %513 = vst [vmem:[#allocation2 + $0xb8] sm:$0xff] %v473
    %514 = vst [vmem:[#allocation2 + $0xc0] sm:$0xff] %v189
    %515 = vst [vmem:[#allocation2 + $0xc8] sm:$0xff] %v230
    %516 = vst [vmem:[#allocation2 + $0xd0] sm:$0xff] %v271
    %517 = vst [vmem:[#allocation2 + $0xd8] sm:$0xff] %v312
    %518 = vst [vmem:[#allocation2 + $0xe0] sm:$0xff] %v353
    %519 = vst [vmem:[#allocation2 + $0xe8] sm:$0xff] %v394
    %520 = vst [vmem:[#allocation2 + $0xf0] sm:$0xff] %v435
    %521 = vst [vmem:[#allocation2 + $0xf8] sm:$0xff] %v476
    %522 = vst [vmem:[#allocation2 + $0x100] sm:$0xff] %v192
    %523 = vst [vmem:[#allocation2 + $0x108] sm:$0xff] %v233
    %524 = vst [vmem:[#allocation2 + $0x110] sm:$0xff] %v274
    %525 = vst [vmem:[#allocation2 + $0x118] sm:$0xff] %v315
    %526 = vst [vmem:[#allocation2 + $0x120] sm:$0xff] %v356
    %527 = vst [vmem:[#allocation2 + $0x128] sm:$0xff] %v397
    %528 = vst [vmem:[#allocation2 + $0x130] sm:$0xff] %v438
    %529 = vst [vmem:[#allocation2 + $0x138] sm:$0xff] %v479
    %530 = vst [vmem:[#allocation2 + $0x140] sm:$0xff] %v195
    %531 = vst [vmem:[#allocation2 + $0x148] sm:$0xff] %v236
    %532 = vst [vmem:[#allocation2 + $0x150] sm:$0xff] %v277
    %533 = vst [vmem:[#allocation2 + $0x158] sm:$0xff] %v318
    %534 = vst [vmem:[#allocation2 + $0x160] sm:$0xff] %v359
    %535 = vst [vmem:[#allocation2 + $0x168] sm:$0xff] %v400
    %536 = vst [vmem:[#allocation2 + $0x170] sm:$0xff] %v441
    %537 = vst [vmem:[#allocation2 + $0x178] sm:$0xff] %v482
    %538 = vst [vmem:[#allocation2 + $0x180] sm:$0xff] %v198
    %539 = vst [vmem:[#allocation2 + $0x188] sm:$0xff] %v239
    %540 = vst [vmem:[#allocation2 + $0x190] sm:$0xff] %v280
    %541 = vst [vmem:[#allocation2 + $0x198] sm:$0xff] %v321
    %542 = vst [vmem:[#allocation2 + $0x1a0] sm:$0xff] %v362
    %543 = vst [vmem:[#allocation2 + $0x1a8] sm:$0xff] %v403
    %544 = vst [vmem:[#allocation2 + $0x1b0] sm:$0xff] %v444
    %545 = vst [vmem:[#allocation2 + $0x1b8] sm:$0xff] %v485
    %546 = vst [vmem:[#allocation2 + $0x1c0] sm:$0xff] %v201
    %547 = vst [vmem:[#allocation2 + $0x1c8] sm:$0xff] %v242
    %548 = vst [vmem:[#allocation2 + $0x1d0] sm:$0xff] %v283
    %549 = vst [vmem:[#allocation2 + $0x1d8] sm:$0xff] %v324
    %550 = vst [vmem:[#allocation2 + $0x1e0] sm:$0xff] %v365
    %551 = vst [vmem:[#allocation2 + $0x1e8] sm:$0xff] %v406
    %552 = vst [vmem:[#allocation2 + $0x1f0] sm:$0xff] %v447
    %553 = vst [vmem:[#allocation2 + $0x1f8] sm:$0xff] %v488
    %v554 = vld [vmem:[#allocation2] sm:$0xff]
    %v555 = vld [vmem:[#allocation2 + $0x8] sm:$0xff]
    %v556 = vld [vmem:[#allocation2 + $0x10] sm:$0xff]
    %v557 = vld [vmem:[#allocation2 + $0x18] sm:$0xff]
    %s558 = scalar_lea.vmem [#allocation2], 448
    %v559 = vld [vmem:[%s558 + $0x20] sm:$0xff]
    %v560 = vld [vmem:[%s558 + $0x28] sm:$0xff]
    %v561 = vld [vmem:[%s558 + $0x30] sm:$0xff]
    %v562 = vld [vmem:[%s558 + $0x38] sm:$0xff]
    %v563 = vld [vmem:[#allocation6] sm:$0xff]
    %v564 = vld [vmem:[#allocation6 + $0x8] sm:$0xff]
    %v565 = vld [vmem:[#allocation6 + $0x10] sm:$0xff]
    %v566 = vld [vmem:[#allocation6 + $0x18] sm:$0xff]
    %v567 = vld [vmem:[#allocation6 + $0x20] sm:$0xff]
    %v568 = vld [vmem:[#allocation6 + $0x28] sm:$0xff]
    %v569 = vld [vmem:[#allocation6 + $0x30] sm:$0xff]
    %v570 = vld [vmem:[#allocation6 + $0x38] sm:$0xff]
    %v571 = vld [vmem:[#allocation6 + $0x40] sm:$0xff]
    %v572 = vld [vmem:[#allocation6 + $0x48] sm:$0xff]
    %v573 = vld [vmem:[#allocation6 + $0x50] sm:$0xff]
    %v574 = vld [vmem:[#allocation6 + $0x58] sm:$0xff]
    %v575 = vld [vmem:[#allocation6 + $0x60] sm:$0xff]
    %v576 = vld [vmem:[#allocation6 + $0x68] sm:$0xff]
    %v577 = vld [vmem:[#allocation6 + $0x70] sm:$0xff]
    %v578 = vld [vmem:[#allocation6 + $0x78] sm:$0xff]
    %v579 = vld [vmem:[#allocation6 + $0x80] sm:$0xff]
    %v580 = vld [vmem:[#allocation6 + $0x88] sm:$0xff]
    %v581 = vld [vmem:[#allocation6 + $0x90] sm:$0xff]
    %v582 = vld [vmem:[#allocation6 + $0x98] sm:$0xff]
    %v583 = vld [vmem:[#allocation6 + $0xa0] sm:$0xff]
    %v584 = vld [vmem:[#allocation6 + $0xa8] sm:$0xff]
    %v585 = vld [vmem:[#allocation6 + $0xb0] sm:$0xff]
    %v586 = vld [vmem:[#allocation6 + $0xb8] sm:$0xff]
    %v587 = vld [vmem:[#allocation6 + $0xc0] sm:$0xff]
    %v588 = vld [vmem:[#allocation6 + $0xc8] sm:$0xff]
    %v589 = vld [vmem:[#allocation6 + $0xd0] sm:$0xff]
    %v590 = vld [vmem:[#allocation6 + $0xd8] sm:$0xff]
    %v591 = vld [vmem:[#allocation6 + $0xe0] sm:$0xff]
    %v592 = vld [vmem:[#allocation6 + $0xe8] sm:$0xff]
    %v593 = vld [vmem:[#allocation6 + $0xf0] sm:$0xff]
    %v594 = vld [vmem:[#allocation6 + $0xf8] sm:$0xff]
    %v595 = vld [vmem:[#allocation6 + $0x100] sm:$0xff]
    %v596 = vld [vmem:[#allocation6 + $0x108] sm:$0xff]
    %v597 = vld [vmem:[#allocation6 + $0x110] sm:$0xff]
    %v598 = vld [vmem:[#allocation6 + $0x118] sm:$0xff]
    %v599 = vld [vmem:[#allocation6 + $0x120] sm:$0xff]
    %v600 = vld [vmem:[#allocation6 + $0x128] sm:$0xff]
    %v601 = vld [vmem:[#allocation6 + $0x130] sm:$0xff]
    %v602 = vld [vmem:[#allocation6 + $0x138] sm:$0xff]
    %v603 = vld [vmem:[#allocation6 + $0x140] sm:$0xff]
    %v604 = vld [vmem:[#allocation6 + $0x148] sm:$0xff]
    %v605 = vld [vmem:[#allocation6 + $0x150] sm:$0xff]
    %v606 = vld [vmem:[#allocation6 + $0x158] sm:$0xff]
    %v607 = vld [vmem:[#allocation6 + $0x160] sm:$0xff]
    %v608 = vld [vmem:[#allocation6 + $0x168] sm:$0xff]
    %v609 = vld [vmem:[#allocation6 + $0x170] sm:$0xff]
    %v610 = vld [vmem:[#allocation6 + $0x178] sm:$0xff]
    %v611 = vld [vmem:[#allocation6 + $0x180] sm:$0xff]
    %v612 = vld [vmem:[#allocation6 + $0x188] sm:$0xff]
    %v613 = vld [vmem:[#allocation6 + $0x190] sm:$0xff]
    %v614 = vld [vmem:[#allocation6 + $0x198] sm:$0xff]
    %v615 = vld [vmem:[#allocation6 + $0x1a0] sm:$0xff]
    %v616 = vld [vmem:[#allocation6 + $0x1a8] sm:$0xff]
    %v617 = vld [vmem:[#allocation6 + $0x1b0] sm:$0xff]
    %v618 = vld [vmem:[#allocation6 + $0x1b8] sm:$0xff]
    %v619 = vld [vmem:[#allocation6 + $0x1c0] sm:$0xff]
    %v620 = vld [vmem:[#allocation6 + $0x1c8] sm:$0xff]
    %v621 = vld [vmem:[#allocation6 + $0x1d0] sm:$0xff]
    %v622 = vld [vmem:[#allocation6 + $0x1d8] sm:$0xff]
    %v623 = vld [vmem:[#allocation6 + $0x1e0] sm:$0xff]
    %v624 = vld [vmem:[#allocation6 + $0x1e8] sm:$0xff]
    %v625 = vld [vmem:[#allocation6 + $0x1f0] sm:$0xff]
    %v626 = vld [vmem:[#allocation6 + $0x1f8] sm:$0xff]
    %627 = vmatpush.msra.mxu0 %v623
    %628 = vmatpush.msra.mxu0 %v619
    %629 = vmatpush.msra.mxu0 %v615
    %630 = vmatpush.msra.mxu0 %v611
    %631 = vmatpush.msra.mxu0 %v607
    %632 = vmatpush.msra.mxu0 %v603
    %633 = vmatpush.msra.mxu0 %v599
    %634 = vmatpush.msra.mxu0 %v595
    %635 = vmatpush.msra.mxu0 %v591
    %636 = vmatpush.msra.mxu0 %v587
    %637 = vmatpush.msra.mxu0 %v583
    %638 = vmatpush.msra.mxu0 %v579
    %639 = vmatpush.msra.mxu0 %v575
    %640 = vmatpush.msra.mxu0 %v571
    %641 = vmatpush.msra.mxu0 %v567
    %642 = vmatpush.msra.mxu0 %v563
    %643 = vmatmul.f32.gmra.mxu0 0.0
    %v644 = vpop.f32.mrf.mxu0
    %v645 = vadd.f32 0.0, %v644
    %646 = vdwg.mxu0
    %647 = vmatpush.msra.mxu0 %v624
    %648 = vmatpush.msra.mxu0 %v620
    %649 = vmatpush.msra.mxu0 %v616
    %650 = vmatpush.msra.mxu0 %v612
    %651 = vmatpush.msra.mxu0 %v608
    %652 = vmatpush.msra.mxu0 %v604
    %653 = vmatpush.msra.mxu0 %v600
    %654 = vmatpush.msra.mxu0 %v596
    %655 = vmatpush.msra.mxu0 %v592
    %656 = vmatpush.msra.mxu0 %v588
    %657 = vmatpush.msra.mxu0 %v584
    %658 = vmatpush.msra.mxu0 %v580
    %659 = vmatpush.msra.mxu0 %v576
    %660 = vmatpush.msra.mxu0 %v572
    %661 = vmatpush.msra.mxu0 %v568
    %662 = vmatpush.msra.mxu0 %v564
    %663 = vmatmul.f32.gmra.mxu0 0.0
    %v664 = vpop.f32.mrf.mxu0
    %v665 = vadd.f32 0.0, %v664
    %666 = vdwg.mxu0
    %667 = vmatpush.msra.mxu0 %v625
    %668 = vmatpush.msra.mxu0 %v621
    %669 = vmatpush.msra.mxu0 %v617
    %670 = vmatpush.msra.mxu0 %v613
    %671 = vmatpush.msra.mxu0 %v609
    %672 = vmatpush.msra.mxu0 %v605
    %673 = vmatpush.msra.mxu0 %v601
    %674 = vmatpush.msra.mxu0 %v597
    %675 = vmatpush.msra.mxu0 %v593
    %676 = vmatpush.msra.mxu0 %v589
    %677 = vmatpush.msra.mxu0 %v585
    %678 = vmatpush.msra.mxu0 %v581
    %679 = vmatpush.msra.mxu0 %v577
    %680 = vmatpush.msra.mxu0 %v573
    %681 = vmatpush.msra.mxu0 %v569
    %682 = vmatpush.msra.mxu0 %v565
    %683 = vmatmul.f32.gmra.mxu0 0.0
    %v684 = vpop.f32.mrf.mxu0
    %v685 = vadd.f32 0.0, %v684
    %686 = vdwg.mxu0
    %687 = vmatpush.msra.mxu0 %v626
    %688 = vmatpush.msra.mxu0 %v622
    %689 = vmatpush.msra.mxu0 %v618
    %690 = vmatpush.msra.mxu0 %v614
    %691 = vmatpush.msra.mxu0 %v610
    %692 = vmatpush.msra.mxu0 %v606
    %693 = vmatpush.msra.mxu0 %v602
    %694 = vmatpush.msra.mxu0 %v598
    %695 = vmatpush.msra.mxu0 %v594
    %696 = vmatpush.msra.mxu0 %v590
    %697 = vmatpush.msra.mxu0 %v586
    %698 = vmatpush.msra.mxu0 %v582
    %699 = vmatpush.msra.mxu0 %v578
    %700 = vmatpush.msra.mxu0 %v574
    %701 = vmatpush.msra.mxu0 %v570
    %702 = vmatpush.msra.mxu0 %v566
    %703 = vmatmul.f32.gmra.mxu0 0.0
    %v704 = vpop.f32.mrf.mxu0
    %v705 = vadd.f32 0.0, %v704
    %706 = vdwg.mxu0
    %v707 = vadd.f32 %v554, %v645
    %v708 = vadd.f32 %v555, %v665
    %v709 = vadd.f32 %v556, %v685
    %v710 = vadd.f32 %v557, %v705
    %v711 = vxor.u32 %v707, 2147483648
    %v712 = vmul.f32 %v711, 1.442695
    %v713 = vpow.pop %v712
    %v714 = vadd.f32 %v713, 1.0
    %v715 = vrcp.pop %v714
    %v716 = vmul.f32 %v714, %v715
    %v717 = vsub.f32 1.0, %v716
    %v718 = vmul.f32 %v715, %v717
    %v719 = vadd.f32 %v715, %v718
    %vm720 = vweird.f32 %v714
    %vm721 = vweird.f32 %v715
    %vm722 = vmor %vm720, %vm721
    %v723 = vsel %vm722, %v715, %v719
    %v724 = vand.u32 2147483647, %v714
    %vm725 = vcmp.eq.f32.partialorder %v724, 8.507059e+37
    %v726 = vand.u32 %v714, 2147483648
    %v727 = vor.u32 1.1754944e-38, %v726
    %v728 = vsel %vm725, %v727, %v723
    %v729 = vmul.f32 1.0, %v728
    %v730 = vxor.u32 %v708, 2147483648
    %v731 = vmul.f32 %v730, 1.442695
    %v732 = vpow.pop %v731
    %v733 = vadd.f32 %v732, 1.0
    %v734 = vrcp.pop %v733
    %v735 = vmul.f32 %v733, %v734
    %v736 = vsub.f32 1.0, %v735
    %v737 = vmul.f32 %v734, %v736
    %v738 = vadd.f32 %v734, %v737
    %vm739 = vweird.f32 %v733
    %vm740 = vweird.f32 %v734
    %vm741 = vmor %vm739, %vm740
    %v742 = vsel %vm741, %v734, %v738
    %v743 = vand.u32 2147483647, %v733
    %vm744 = vcmp.eq.f32.partialorder %v743, 8.507059e+37
    %v745 = vand.u32 %v733, 2147483648
    %v746 = vor.u32 1.1754944e-38, %v745
    %v747 = vsel %vm744, %v746, %v742
    %v748 = vmul.f32 1.0, %v747
    %v749 = vtanh.pop %v709
    %v750 = vxor.u32 %v710, 2147483648
    %v751 = vmul.f32 %v750, 1.442695
    %v752 = vpow.pop %v751
    %v753 = vadd.f32 %v752, 1.0
    %v754 = vrcp.pop %v753
    %v755 = vmul.f32 %v753, %v754
    %v756 = vsub.f32 1.0, %v755
    %v757 = vmul.f32 %v754, %v756
    %v758 = vadd.f32 %v754, %v757
    %vm759 = vweird.f32 %v753
    %vm760 = vweird.f32 %v754
    %vm761 = vmor %vm759, %vm760
    %v762 = vsel %vm761, %v754, %v758
    %v763 = vand.u32 2147483647, %v753
    %vm764 = vcmp.eq.f32.partialorder %v763, 8.507059e+37
    %v765 = vand.u32 %v753, 2147483648
    %v766 = vor.u32 1.1754944e-38, %v765
    %v767 = vsel %vm764, %v766, %v762
    %v768 = vmul.f32 1.0, %v767
    %v769 = vmul.f32 %v748, 0.0
    %v770 = vmul.f32 %v729, %v749
    %v771 = vadd.f32 %v769, %v770
    %v772 = vtanh.pop %v771
    %v773 = vmul.f32 %v768, %v772
    %v774 = vld [vmem:[#allocation9] sm:$0xff]
    %v775 = vld [vmem:[#allocation9 + $0x8] sm:$0xff]
    %v776 = vld [vmem:[#allocation9 + $0x10] sm:$0xff]
    %v777 = vld [vmem:[#allocation9 + $0x18] sm:$0xff]
    %v778 = vld [vmem:[#allocation9 + $0x20] sm:$0xff]
    %v779 = vld [vmem:[#allocation9 + $0x28] sm:$0xff]
    %v780 = vld [vmem:[#allocation9 + $0x30] sm:$0xff]
    %v781 = vld [vmem:[#allocation9 + $0x38] sm:$0xff]
    %v782 = vld [vmem:[#allocation9 + $0x40] sm:$0xff]
    %v783 = vld [vmem:[#allocation9 + $0x48] sm:$0xff]
    %v784 = vld [vmem:[#allocation9 + $0x50] sm:$0xff]
    %v785 = vld [vmem:[#allocation9 + $0x58] sm:$0xff]
    %v786 = vld [vmem:[#allocation9 + $0x60] sm:$0xff]
    %v787 = vld [vmem:[#allocation9 + $0x68] sm:$0xff]
    %v788 = vld [vmem:[#allocation9 + $0x70] sm:$0xff]
    %v789 = vld [vmem:[#allocation9 + $0x78] sm:$0xff]
    %v790 = vld [vmem:[#allocation9 + $0x80] sm:$0xff]
    %v791 = vld [vmem:[#allocation9 + $0x88] sm:$0xff]
    %v792 = vld [vmem:[#allocation9 + $0x90] sm:$0xff]
    %v793 = vld [vmem:[#allocation9 + $0x98] sm:$0xff]
    %v794 = vld [vmem:[#allocation9 + $0xa0] sm:$0xff]
    %v795 = vld [vmem:[#allocation9 + $0xa8] sm:$0xff]
    %v796 = vld [vmem:[#allocation9 + $0xb0] sm:$0xff]
    %v797 = vld [vmem:[#allocation9 + $0xb8] sm:$0xff]
    %v798 = vld [vmem:[#allocation9 + $0xc0] sm:$0xff]
    %v799 = vld [vmem:[#allocation9 + $0xc8] sm:$0xff]
    %v800 = vld [vmem:[#allocation9 + $0xd0] sm:$0xff]
    %v801 = vld [vmem:[#allocation9 + $0xd8] sm:$0xff]
    %v802 = vld [vmem:[#allocation9 + $0xe0] sm:$0xff]
    %v803 = vld [vmem:[#allocation9 + $0xe8] sm:$0xff]
    %v804 = vld [vmem:[#allocation9 + $0xf0] sm:$0xff]
    %v805 = vld [vmem:[#allocation9 + $0xf8] sm:$0xff]
    %v806 = vld [vmem:[#allocation9 + $0x100] sm:$0xff]
    %v807 = vld [vmem:[#allocation9 + $0x108] sm:$0xff]
    %v808 = vld [vmem:[#allocation9 + $0x110] sm:$0xff]
    %v809 = vld [vmem:[#allocation9 + $0x118] sm:$0xff]
    %v810 = vld [vmem:[#allocation9 + $0x120] sm:$0xff]
    %v811 = vld [vmem:[#allocation9 + $0x128] sm:$0xff]
    %v812 = vld [vmem:[#allocation9 + $0x130] sm:$0xff]
    %v813 = vld [vmem:[#allocation9 + $0x138] sm:$0xff]
    %v814 = vld [vmem:[#allocation9 + $0x140] sm:$0xff]
    %v815 = vld [vmem:[#allocation9 + $0x148] sm:$0xff]
    %v816 = vld [vmem:[#allocation9 + $0x150] sm:$0xff]
    %v817 = vld [vmem:[#allocation9 + $0x158] sm:$0xff]
    %v818 = vld [vmem:[#allocation9 + $0x160] sm:$0xff]
    %v819 = vld [vmem:[#allocation9 + $0x168] sm:$0xff]
    %v820 = vld [vmem:[#allocation9 + $0x170] sm:$0xff]
    %v821 = vld [vmem:[#allocation9 + $0x178] sm:$0xff]
    %v822 = vld [vmem:[#allocation9 + $0x180] sm:$0xff]
    %v823 = vld [vmem:[#allocation9 + $0x188] sm:$0xff]
    %v824 = vld [vmem:[#allocation9 + $0x190] sm:$0xff]
    %v825 = vld [vmem:[#allocation9 + $0x198] sm:$0xff]
    %v826 = vld [vmem:[#allocation9 + $0x1a0] sm:$0xff]
    %v827 = vld [vmem:[#allocation9 + $0x1a8] sm:$0xff]
    %v828 = vld [vmem:[#allocation9 + $0x1b0] sm:$0xff]
    %v829 = vld [vmem:[#allocation9 + $0x1b8] sm:$0xff]
    %v830 = vld [vmem:[#allocation9 + $0x1c0] sm:$0xff]
    %v831 = vld [vmem:[#allocation9 + $0x1c8] sm:$0xff]
    %v832 = vld [vmem:[#allocation9 + $0x1d0] sm:$0xff]
    %v833 = vld [vmem:[#allocation9 + $0x1d8] sm:$0xff]
    %v834 = vld [vmem:[#allocation9 + $0x1e0] sm:$0xff]
    %v835 = vld [vmem:[#allocation9 + $0x1e8] sm:$0xff]
    %v836 = vld [vmem:[#allocation9 + $0x1f0] sm:$0xff]
    %v837 = vld [vmem:[#allocation9 + $0x1f8] sm:$0xff]
    %838 = vmatpush.msra.mxu0 %v834
    %839 = vmatpush.msra.mxu0 %v830
    %840 = vmatpush.msra.mxu0 %v826
    %841 = vmatpush.msra.mxu0 %v822
    %842 = vmatpush.msra.mxu0 %v818
    %843 = vmatpush.msra.mxu0 %v814
    %844 = vmatpush.msra.mxu0 %v810
    %845 = vmatpush.msra.mxu0 %v806
    %846 = vmatpush.msra.mxu0 %v802
    %847 = vmatpush.msra.mxu0 %v798
    %848 = vmatpush.msra.mxu0 %v794
    %849 = vmatpush.msra.mxu0 %v790
    %850 = vmatpush.msra.mxu0 %v786
    %851 = vmatpush.msra.mxu0 %v782
    %852 = vmatpush.msra.mxu0 %v778
    %853 = vmatpush.msra.mxu0 %v774
    %854 = vmatmul.f32.gmra.mxu0 0.0
    %v855 = vpop.f32.mrf.mxu0
    %v856 = vadd.f32 0.0, %v855
    %857 = vdwg.mxu0
    %858 = vmatpush.msra.mxu0 %v835
    %859 = vmatpush.msra.mxu0 %v831
    %860 = vmatpush.msra.mxu0 %v827
    %861 = vmatpush.msra.mxu0 %v823
    %862 = vmatpush.msra.mxu0 %v819
    %863 = vmatpush.msra.mxu0 %v815
    %864 = vmatpush.msra.mxu0 %v811
    %865 = vmatpush.msra.mxu0 %v807
    %866 = vmatpush.msra.mxu0 %v803
    %867 = vmatpush.msra.mxu0 %v799
    %868 = vmatpush.msra.mxu0 %v795
    %869 = vmatpush.msra.mxu0 %v791
    %870 = vmatpush.msra.mxu0 %v787
    %871 = vmatpush.msra.mxu0 %v783
    %872 = vmatpush.msra.mxu0 %v779
    %873 = vmatpush.msra.mxu0 %v775
    %874 = vmatmul.f32.gmra.mxu0 0.0
    %v875 = vpop.f32.mrf.mxu0
    %v876 = vadd.f32 0.0, %v875
    %877 = vdwg.mxu0
    %878 = vmatpush.msra.mxu0 %v836
    %879 = vmatpush.msra.mxu0 %v832
    %880 = vmatpush.msra.mxu0 %v828
    %881 = vmatpush.msra.mxu0 %v824
    %882 = vmatpush.msra.mxu0 %v820
    %883 = vmatpush.msra.mxu0 %v816
    %884 = vmatpush.msra.mxu0 %v812
    %885 = vmatpush.msra.mxu0 %v808
    %886 = vmatpush.msra.mxu0 %v804
    %887 = vmatpush.msra.mxu0 %v800
    %888 = vmatpush.msra.mxu0 %v796
    %889 = vmatpush.msra.mxu0 %v792
    %890 = vmatpush.msra.mxu0 %v788
    %891 = vmatpush.msra.mxu0 %v784
    %892 = vmatpush.msra.mxu0 %v780
    %893 = vmatpush.msra.mxu0 %v776
    %894 = vmatmul.f32.gmra.mxu0 0.0
    %v895 = vpop.f32.mrf.mxu0
    %v896 = vadd.f32 0.0, %v895
    %897 = vdwg.mxu0
    %898 = vmatpush.msra.mxu0 %v837
    %899 = vmatpush.msra.mxu0 %v833
    %900 = vmatpush.msra.mxu0 %v829
    %901 = vmatpush.msra.mxu0 %v825
    %902 = vmatpush.msra.mxu0 %v821
    %903 = vmatpush.msra.mxu0 %v817
    %904 = vmatpush.msra.mxu0 %v813
    %905 = vmatpush.msra.mxu0 %v809
    %906 = vmatpush.msra.mxu0 %v805
    %907 = vmatpush.msra.mxu0 %v801
    %908 = vmatpush.msra.mxu0 %v797
    %909 = vmatpush.msra.mxu0 %v793
    %910 = vmatpush.msra.mxu0 %v789
    %911 = vmatpush.msra.mxu0 %v785
    %912 = vmatpush.msra.mxu0 %v781
    %913 = vmatpush.msra.mxu0 %v777
    %914 = vmatmul.f32.gmra.mxu0 0.0
    %v915 = vpop.f32.mrf.mxu0
    %v916 = vadd.f32 0.0, %v915
    %917 = vdwg.mxu0
    %v918 = vadd.f32 %v559, %v856
    %v919 = vadd.f32 %v560, %v876
    %v920 = vadd.f32 %v561, %v896
    %v921 = vadd.f32 %v562, %v916
    %v922 = vxor.u32 %v918, 2147483648
    %v923 = vmul.f32 %v922, 1.442695
    %v924 = vpow.pop %v923
    %v925 = vadd.f32 %v924, 1.0
    %v926 = vrcp.pop %v925
    %v927 = vmul.f32 %v925, %v926
    %v928 = vsub.f32 1.0, %v927
    %v929 = vmul.f32 %v926, %v928
    %v930 = vadd.f32 %v926, %v929
    %vm931 = vweird.f32 %v925
    %vm932 = vweird.f32 %v926
    %vm933 = vmor %vm931, %vm932
    %v934 = vsel %vm933, %v926, %v930
    %v935 = vand.u32 2147483647, %v925
    %vm936 = vcmp.eq.f32.partialorder %v935, 8.507059e+37
    %v937 = vand.u32 %v925, 2147483648
    %v938 = vor.u32 1.1754944e-38, %v937
    %v939 = vsel %vm936, %v938, %v934
    %v940 = vmul.f32 1.0, %v939
    %v941 = vxor.u32 %v919, 2147483648
    %v942 = vmul.f32 %v941, 1.442695
    %v943 = vpow.pop %v942
    %v944 = vadd.f32 %v943, 1.0
    %v945 = vrcp.pop %v944
    %v946 = vmul.f32 %v944, %v945
    %v947 = vsub.f32 1.0, %v946
    %v948 = vmul.f32 %v945, %v947
    %v949 = vadd.f32 %v945, %v948
    %vm950 = vweird.f32 %v944
    %vm951 = vweird.f32 %v945
    %vm952 = vmor %vm950, %vm951
    %v953 = vsel %vm952, %v945, %v949
    %v954 = vand.u32 2147483647, %v944
    %vm955 = vcmp.eq.f32.partialorder %v954, 8.507059e+37
    %v956 = vand.u32 %v944, 2147483648
    %v957 = vor.u32 1.1754944e-38, %v956
    %v958 = vsel %vm955, %v957, %v953
    %v959 = vmul.f32 1.0, %v958
    %v960 = vtanh.pop %v920
    %v961 = vxor.u32 %v921, 2147483648
    %v962 = vmul.f32 %v961, 1.442695
    %v963 = vpow.pop %v962
    %v964 = vadd.f32 %v963, 1.0
    %v965 = vrcp.pop %v964
    %v966 = vmul.f32 %v964, %v965
    %v967 = vsub.f32 1.0, %v966
    %v968 = vmul.f32 %v965, %v967
    %v969 = vadd.f32 %v965, %v968
    %vm970 = vweird.f32 %v964
    %vm971 = vweird.f32 %v965
    %vm972 = vmor %vm970, %vm971
    %v973 = vsel %vm972, %v965, %v969
    %v974 = vand.u32 2147483647, %v964
    %vm975 = vcmp.eq.f32.partialorder %v974, 8.507059e+37
    %v976 = vand.u32 %v964, 2147483648
    %v977 = vor.u32 1.1754944e-38, %v976
    %v978 = vsel %vm975, %v977, %v973
    %v979 = vmul.f32 1.0, %v978
    %v980 = vmul.f32 %v959, 0.0
    %v981 = vmul.f32 %v940, %v960
    %v982 = vadd.f32 %v980, %v981
    %v983 = vtanh.pop %v982
    %v984 = vmul.f32 %v979, %v983
    %vm985 = vcmp.gt.s32.totalorder %v94, 0
    %v986 = vsel %vm985, 1, 0
    %v987 = vcvt.s32.f32 %v986
    %vm988 = vcmp.gt.s32.totalorder %v94, 7
    %v989 = vsel %vm988, 1, 0
    %v990 = vcvt.s32.f32 %v989
    %992 = vset.pattern.permute.xlu0 0
    %993 = vperm.xlu0 %992, %v987
    %v994 = vpop.permute.xlu0 %993
    %v996 = vmul.f32 %v994, %v773
    %997 = vst [vmem:[#allocation3] sm:$0xff] %v996
    %999 = vset.pattern.permute.xlu0 0
    %1000 = vperm.xlu0 %999, %v990
    %v1001 = vpop.permute.xlu0 %1000
    %v1003 = vmul.f32 %v1001, %v984
    %s1004 = scalar_lea.vmem [#allocation4], 56
    %1005 = vst [vmem:[%s1004] sm:$0xff] %v1003
    %v1006 = vsub.f32 1.0, %v987
    %1008 = vset.pattern.permute.xlu0 0
    %1009 = vperm.xlu0 %1008, %v1006
    %v1010 = vpop.permute.xlu0 %1009
    %v1012 = vmul.f32 %v1010, 0.0
    %v1013 = vadd.f32 %v996, %v1012
    %v1014 = vmul.f32 %v994, %v771
    %v1015 = vadd.f32 %v1014, %v1012
    %v1016 = vsub.f32 1.0, %v990
    %1018 = vset.pattern.permute.xlu0 0
    %1019 = vperm.xlu0 %1018, %v1016
    %v1020 = vpop.permute.xlu0 %1019
    %v1022 = vmul.f32 %v1020, 0.0
    %v1023 = vadd.f32 %v1003, %v1022
    %v1024 = vmul.f32 %v1001, %v982
    %v1025 = vadd.f32 %v1024, %v1022
    %s1026 = scalar_lea.vmem [#allocation2], 64
    %v1027 = vld [vmem:[%s1026] sm:$0xff]
    %v1028 = vld [vmem:[%s1026 + $0x8] sm:$0xff]
    %v1029 = vld [vmem:[%s1026 + $0x10] sm:$0xff]
    %v1030 = vld [vmem:[%s1026 + $0x18] sm:$0xff]
    %s1031 = scalar_lea.vmem [#allocation2], 384
    %v1032 = vld [vmem:[%s1031 + $0x20] sm:$0xff]
    %v1033 = vld [vmem:[%s1031 + $0x28] sm:$0xff]
    %v1034 = vld [vmem:[%s1031 + $0x30] sm:$0xff]
    %v1035 = vld [vmem:[%s1031 + $0x38] sm:$0xff]
    %v1036 = vld [vmem:[#allocation6] sm:$0xff]
    %v1037 = vld [vmem:[#allocation6 + $0x8] sm:$0xff]
    %v1038 = vld [vmem:[#allocation6 + $0x10] sm:$0xff]
    %v1039 = vld [vmem:[#allocation6 + $0x18] sm:$0xff]
    %v1040 = vld [vmem:[#allocation6 + $0x20] sm:$0xff]
    %v1041 = vld [vmem:[#allocation6 + $0x28] sm:$0xff]
    %v1042 = vld [vmem:[#allocation6 + $0x30] sm:$0xff]
    %v1043 = vld [vmem:[#allocation6 + $0x38] sm:$0xff]
    %v1044 = vld [vmem:[#allocation6 + $0x40] sm:$0xff]
    %v1045 = vld [vmem:[#allocation6 + $0x48] sm:$0xff]
    %v1046 = vld [vmem:[#allocation6 + $0x50] sm:$0xff]
    %v1047 = vld [vmem:[#allocation6 + $0x58] sm:$0xff]
    %v1048 = vld [vmem:[#allocation6 + $0x60] sm:$0xff]
    %v1049 = vld [vmem:[#allocation6 + $0x68] sm:$0xff]
    %v1050 = vld [vmem:[#allocation6 + $0x70] sm:$0xff]
    %v1051 = vld [vmem:[#allocation6 + $0x78] sm:$0xff]
    %v1052 = vld [vmem:[#allocation6 + $0x80] sm:$0xff]
    %v1053 = vld [vmem:[#allocation6 + $0x88] sm:$0xff]
    %v1054 = vld [vmem:[#allocation6 + $0x90] sm:$0xff]
    %v1055 = vld [vmem:[#allocation6 + $0x98] sm:$0xff]
    %v1056 = vld [vmem:[#allocation6 + $0xa0] sm:$0xff]
    %v1057 = vld [vmem:[#allocation6 + $0xa8] sm:$0xff]
    %v1058 = vld [vmem:[#allocation6 + $0xb0] sm:$0xff]
    %v1059 = vld [vmem:[#allocation6 + $0xb8] sm:$0xff]
    %v1060 = vld [vmem:[#allocation6 + $0xc0] sm:$0xff]
    %v1061 = vld [vmem:[#allocation6 + $0xc8] sm:$0xff]
    %v1062 = vld [vmem:[#allocation6 + $0xd0] sm:$0xff]
    %v1063 = vld [vmem:[#allocation6 + $0xd8] sm:$0xff]
    %v1064 = vld [vmem:[#allocation6 + $0xe0] sm:$0xff]
    %v1065 = vld [vmem:[#allocation6 + $0xe8] sm:$0xff]
    %v1066 = vld [vmem:[#allocation6 + $0xf0] sm:$0xff]
    %v1067 = vld [vmem:[#allocation6 + $0xf8] sm:$0xff]
    %v1068 = vld [vmem:[#allocation6 + $0x100] sm:$0xff]
    %v1069 = vld [vmem:[#allocation6 + $0x108] sm:$0xff]
    %v1070 = vld [vmem:[#allocation6 + $0x110] sm:$0xff]
    %v1071 = vld [vmem:[#allocation6 + $0x118] sm:$0xff]
    %v1072 = vld [vmem:[#allocation6 + $0x120] sm:$0xff]
    %v1073 = vld [vmem:[#allocation6 + $0x128] sm:$0xff]
    %v1074 = vld [vmem:[#allocation6 + $0x130] sm:$0xff]
    %v1075 = vld [vmem:[#allocation6 + $0x138] sm:$0xff]
    %v1076 = vld [vmem:[#allocation6 + $0x140] sm:$0xff]
    %v1077 = vld [vmem:[#allocation6 + $0x148] sm:$0xff]
    %v1078 = vld [vmem:[#allocation6 + $0x150] sm:$0xff]
    %v1079 = vld [vmem:[#allocation6 + $0x158] sm:$0xff]
    %v1080 = vld [vmem:[#allocation6 + $0x160] sm:$0xff]
    %v1081 = vld [vmem:[#allocation6 + $0x168] sm:$0xff]
    %v1082 = vld [vmem:[#allocation6 + $0x170] sm:$0xff]
    %v1083 = vld [vmem:[#allocation6 + $0x178] sm:$0xff]
    %v1084 = vld [vmem:[#allocation6 + $0x180] sm:$0xff]
    %v1085 = vld [vmem:[#allocation6 + $0x188] sm:$0xff]
    %v1086 = vld [vmem:[#allocation6 + $0x190] sm:$0xff]
    %v1087 = vld [vmem:[#allocation6 + $0x198] sm:$0xff]
    %v1088 = vld [vmem:[#allocation6 + $0x1a0] sm:$0xff]
    %v1089 = vld [vmem:[#allocation6 + $0x1a8] sm:$0xff]
    %v1090 = vld [vmem:[#allocation6 + $0x1b0] sm:$0xff]
    %v1091 = vld [vmem:[#allocation6 + $0x1b8] sm:$0xff]
    %v1092 = vld [vmem:[#allocation6 + $0x1c0] sm:$0xff]
    %v1093 = vld [vmem:[#allocation6 + $0x1c8] sm:$0xff]
    %v1094 = vld [vmem:[#allocation6 + $0x1d0] sm:$0xff]
    %v1095 = vld [vmem:[#allocation6 + $0x1d8] sm:$0xff]
    %v1096 = vld [vmem:[#allocation6 + $0x1e0] sm:$0xff]
    %v1097 = vld [vmem:[#allocation6 + $0x1e8] sm:$0xff]
    %v1098 = vld [vmem:[#allocation6 + $0x1f0] sm:$0xff]
    %v1099 = vld [vmem:[#allocation6 + $0x1f8] sm:$0xff]
    %1100 = vmatpush.msra.mxu0 %v1096
    %1101 = vmatpush.msra.mxu0 %v1092
    %1102 = vmatpush.msra.mxu0 %v1088
    %1103 = vmatpush.msra.mxu0 %v1084
    %1104 = vmatpush.msra.mxu0 %v1080
    %1105 = vmatpush.msra.mxu0 %v1076
    %1106 = vmatpush.msra.mxu0 %v1072
    %1107 = vmatpush.msra.mxu0 %v1068
    %1108 = vmatpush.msra.mxu0 %v1064
    %1109 = vmatpush.msra.mxu0 %v1060
    %1110 = vmatpush.msra.mxu0 %v1056
    %1111 = vmatpush.msra.mxu0 %v1052
    %1112 = vmatpush.msra.mxu0 %v1048
    %1113 = vmatpush.msra.mxu0 %v1044
    %1114 = vmatpush.msra.mxu0 %v1040
    %1115 = vmatpush.msra.mxu0 %v1036
    %1116 = vmatmul.f32.gmra.mxu0 %v1013
    %v1117 = vpop.f32.mrf.mxu0
    %v1118 = vadd.f32 0.0, %v1117
    %1119 = vdwg.mxu0
    %1120 = vmatpush.msra.mxu0 %v1097
    %1121 = vmatpush.msra.mxu0 %v1093
    %1122 = vmatpush.msra.mxu0 %v1089
    %1123 = vmatpush.msra.mxu0 %v1085
    %1124 = vmatpush.msra.mxu0 %v1081
    %1125 = vmatpush.msra.mxu0 %v1077
    %1126 = vmatpush.msra.mxu0 %v1073
    %1127 = vmatpush.msra.mxu0 %v1069
    %1128 = vmatpush.msra.mxu0 %v1065
    %1129 = vmatpush.msra.mxu0 %v1061
    %1130 = vmatpush.msra.mxu0 %v1057
    %1131 = vmatpush.msra.mxu0 %v1053
    %1132 = vmatpush.msra.mxu0 %v1049
    %1133 = vmatpush.msra.mxu0 %v1045
    %1134 = vmatpush.msra.mxu0 %v1041
    %1135 = vmatpush.msra.mxu0 %v1037
    %1136 = vmatmul.f32.gmra.mxu0 %v1013
    %v1137 = vpop.f32.mrf.mxu0
    %v1138 = vadd.f32 0.0, %v1137
    %1139 = vdwg.mxu0
    %1140 = vmatpush.msra.mxu0 %v1098
    %1141 = vmatpush.msra.mxu0 %v1094
    %1142 = vmatpush.msra.mxu0 %v1090
    %1143 = vmatpush.msra.mxu0 %v1086
    %1144 = vmatpush.msra.mxu0 %v1082
    %1145 = vmatpush.msra.mxu0 %v1078
    %1146 = vmatpush.msra.mxu0 %v1074
    %1147 = vmatpush.msra.mxu0 %v1070
    %1148 = vmatpush.msra.mxu0 %v1066
    %1149 = vmatpush.msra.mxu0 %v1062
    %1150 = vmatpush.msra.mxu0 %v1058
    %1151 = vmatpush.msra.mxu0 %v1054
    %1152 = vmatpush.msra.mxu0 %v1050
    %1153 = vmatpush.msra.mxu0 %v1046
    %1154 = vmatpush.msra.mxu0 %v1042
    %1155 = vmatpush.msra.mxu0 %v1038
    %1156 = vmatmul.f32.gmra.mxu0 %v1013
    %v1157 = vpop.f32.mrf.mxu0
    %v1158 = vadd.f32 0.0, %v1157
    %1159 = vdwg.mxu0
    %1160 = vmatpush.msra.mxu0 %v1099
    %1161 = vmatpush.msra.mxu0 %v1095
    %1162 = vmatpush.msra.mxu0 %v1091
    %1163 = vmatpush.msra.mxu0 %v1087
    %1164 = vmatpush.msra.mxu0 %v1083
    %1165 = vmatpush.msra.mxu0 %v1079
    %1166 = vmatpush.msra.mxu0 %v1075
    %1167 = vmatpush.msra.mxu0 %v1071
    %1168 = vmatpush.msra.mxu0 %v1067
    %1169 = vmatpush.msra.mxu0 %v1063
    %1170 = vmatpush.msra.mxu0 %v1059
    %1171 = vmatpush.msra.mxu0 %v1055
    %1172 = vmatpush.msra.mxu0 %v1051
    %1173 = vmatpush.msra.mxu0 %v1047
    %1174 = vmatpush.msra.mxu0 %v1043
    %1175 = vmatpush.msra.mxu0 %v1039
    %1176 = vmatmul.f32.gmra.mxu0 %v1013
    %v1177 = vpop.f32.mrf.mxu0
    %v1178 = vadd.f32 0.0, %v1177
    %1179 = vdwg.mxu0
    %v1180 = vadd.f32 %v1027, %v1118
    %v1181 = vadd.f32 %v1028, %v1138
    %v1182 = vadd.f32 %v1029, %v1158
    %v1183 = vadd.f32 %v1030, %v1178
    %v1184 = vxor.u32 %v1180, 2147483648
    %v1185 = vmul.f32 %v1184, 1.442695
    %v1186 = vpow.pop %v1185
    %v1187 = vadd.f32 %v1186, 1.0
    %v1188 = vrcp.pop %v1187
    %v1189 = vmul.f32 %v1187, %v1188
    %v1190 = vsub.f32 1.0, %v1189
    %v1191 = vmul.f32 %v1188, %v1190
    %v1192 = vadd.f32 %v1188, %v1191
    %vm1193 = vweird.f32 %v1187
    %vm1194 = vweird.f32 %v1188
    %vm1195 = vmor %vm1193, %vm1194
    %v1196 = vsel %vm1195, %v1188, %v1192
    %v1197 = vand.u32 2147483647, %v1187
    %vm1198 = vcmp.eq.f32.partialorder %v1197, 8.507059e+37
    %v1199 = vand.u32 %v1187, 2147483648
    %v1200 = vor.u32 1.1754944e-38, %v1199
    %v1201 = vsel %vm1198, %v1200, %v1196
    %v1202 = vmul.f32 1.0, %v1201
    %v1203 = vxor.u32 %v1181, 2147483648
    %v1204 = vmul.f32 %v1203, 1.442695
    %v1205 = vpow.pop %v1204
    %v1206 = vadd.f32 %v1205, 1.0
    %v1207 = vrcp.pop %v1206
    %v1208 = vmul.f32 %v1206, %v1207
    %v1209 = vsub.f32 1.0, %v1208
    %v1210 = vmul.f32 %v1207, %v1209
    %v1211 = vadd.f32 %v1207, %v1210
    %vm1212 = vweird.f32 %v1206
    %vm1213 = vweird.f32 %v1207
    %vm1214 = vmor %vm1212, %vm1213
    %v1215 = vsel %vm1214, %v1207, %v1211
    %v1216 = vand.u32 2147483647, %v1206
    %vm1217 = vcmp.eq.f32.partialorder %v1216, 8.507059e+37
    %v1218 = vand.u32 %v1206, 2147483648
    %v1219 = vor.u32 1.1754944e-38, %v1218
    %v1220 = vsel %vm1217, %v1219, %v1215
    %v1221 = vmul.f32 1.0, %v1220
    %v1222 = vtanh.pop %v1182
    %v1223 = vxor.u32 %v1183, 2147483648
    %v1224 = vmul.f32 %v1223, 1.442695
    %v1225 = vpow.pop %v1224
    %v1226 = vadd.f32 %v1225, 1.0
    %v1227 = vrcp.pop %v1226
    %v1228 = vmul.f32 %v1226, %v1227
    %v1229 = vsub.f32 1.0, %v1228
    %v1230 = vmul.f32 %v1227, %v1229
    %v1231 = vadd.f32 %v1227, %v1230
    %vm1232 = vweird.f32 %v1226
    %vm1233 = vweird.f32 %v1227
    %vm1234 = vmor %vm1232, %vm1233
    %v1235 = vsel %vm1234, %v1227, %v1231
    %v1236 = vand.u32 2147483647, %v1226
    %vm1237 = vcmp.eq.f32.partialorder %v1236, 8.507059e+37
    %v1238 = vand.u32 %v1226, 2147483648
    %v1239 = vor.u32 1.1754944e-38, %v1238
    %v1240 = vsel %vm1237, %v1239, %v1235
    %v1241 = vmul.f32 1.0, %v1240
    %v1242 = vmul.f32 %v1221, %v1015
    %v1243 = vmul.f32 %v1202, %v1222
    %v1244 = vadd.f32 %v1242, %v1243
    %v1245 = vtanh.pop %v1244
    %v1246 = vmul.f32 %v1241, %v1245
    %v1247 = vld [vmem:[#allocation9] sm:$0xff]
    %v1248 = vld [vmem:[#allocation9 + $0x8] sm:$0xff]
    %v1249 = vld [vmem:[#allocation9 + $0x10] sm:$0xff]
    %v1250 = vld [vmem:[#allocation9 + $0x18] sm:$0xff]
    %v1251 = vld [vmem:[#allocation9 + $0x20] sm:$0xff]
    %v1252 = vld [vmem:[#allocation9 + $0x28] sm:$0xff]
    %v1253 = vld [vmem:[#allocation9 + $0x30] sm:$0xff]
    %v1254 = vld [vmem:[#allocation9 + $0x38] sm:$0xff]
    %v1255 = vld [vmem:[#allocation9 + $0x40] sm:$0xff]
    %v1256 = vld [vmem:[#allocation9 + $0x48] sm:$0xff]
    %v1257 = vld [vmem:[#allocation9 + $0x50] sm:$0xff]
    %v1258 = vld [vmem:[#allocation9 + $0x58] sm:$0xff]
    %v1259 = vld [vmem:[#allocation9 + $0x60] sm:$0xff]
    %v1260 = vld [vmem:[#allocation9 + $0x68] sm:$0xff]
    %v1261 = vld [vmem:[#allocation9 + $0x70] sm:$0xff]
    %v1262 = vld [vmem:[#allocation9 + $0x78] sm:$0xff]
    %v1263 = vld [vmem:[#allocation9 + $0x80] sm:$0xff]
    %v1264 = vld [vmem:[#allocation9 + $0x88] sm:$0xff]
    %v1265 = vld [vmem:[#allocation9 + $0x90] sm:$0xff]
    %v1266 = vld [vmem:[#allocation9 + $0x98] sm:$0xff]
    %v1267 = vld [vmem:[#allocation9 + $0xa0] sm:$0xff]
    %v1268 = vld [vmem:[#allocation9 + $0xa8] sm:$0xff]
    %v1269 = vld [vmem:[#allocation9 + $0xb0] sm:$0xff]
    %v1270 = vld [vmem:[#allocation9 + $0xb8] sm:$0xff]
    %v1271 = vld [vmem:[#allocation9 + $0xc0] sm:$0xff]
    %v1272 = vld [vmem:[#allocation9 + $0xc8] sm:$0xff]
    %v1273 = vld [vmem:[#allocation9 + $0xd0] sm:$0xff]
    %v1274 = vld [vmem:[#allocation9 + $0xd8] sm:$0xff]
    %v1275 = vld [vmem:[#allocation9 + $0xe0] sm:$0xff]
    %v1276 = vld [vmem:[#allocation9 + $0xe8] sm:$0xff]
    %v1277 = vld [vmem:[#allocation9 + $0xf0] sm:$0xff]
    %v1278 = vld [vmem:[#allocation9 + $0xf8] sm:$0xff]
    %v1279 = vld [vmem:[#allocation9 + $0x100] sm:$0xff]
    %v1280 = vld [vmem:[#allocation9 + $0x108] sm:$0xff]
    %v1281 = vld [vmem:[#allocation9 + $0x110] sm:$0xff]
    %v1282 = vld [vmem:[#allocation9 + $0x118] sm:$0xff]
    %v1283 = vld [vmem:[#allocation9 + $0x120] sm:$0xff]
    %v1284 = vld [vmem:[#allocation9 + $0x128] sm:$0xff]
    %v1285 = vld [vmem:[#allocation9 + $0x130] sm:$0xff]
    %v1286 = vld [vmem:[#allocation9 + $0x138] sm:$0xff]
    %v1287 = vld [vmem:[#allocation9 + $0x140] sm:$0xff]
    %v1288 = vld [vmem:[#allocation9 + $0x148] sm:$0xff]
    %v1289 = vld [vmem:[#allocation9 + $0x150] sm:$0xff]
    %v1290 = vld [vmem:[#allocation9 + $0x158] sm:$0xff]
    %v1291 = vld [vmem:[#allocation9 + $0x160] sm:$0xff]
    %v1292 = vld [vmem:[#allocation9 + $0x168] sm:$0xff]
    %v1293 = vld [vmem:[#allocation9 + $0x170] sm:$0xff]
    %v1294 = vld [vmem:[#allocation9 + $0x178] sm:$0xff]
    %v1295 = vld [vmem:[#allocation9 + $0x180] sm:$0xff]
    %v1296 = vld [vmem:[#allocation9 + $0x188] sm:$0xff]
    %v1297 = vld [vmem:[#allocation9 + $0x190] sm:$0xff]
    %v1298 = vld [vmem:[#allocation9 + $0x198] sm:$0xff]
    %v1299 = vld [vmem:[#allocation9 + $0x1a0] sm:$0xff]
    %v1300 = vld [vmem:[#allocation9 + $0x1a8] sm:$0xff]
    %v1301 = vld [vmem:[#allocation9 + $0x1b0] sm:$0xff]
    %v1302 = vld [vmem:[#allocation9 + $0x1b8] sm:$0xff]
    %v1303 = vld [vmem:[#allocation9 + $0x1c0] sm:$0xff]
    %v1304 = vld [vmem:[#allocation9 + $0x1c8] sm:$0xff]
    %v1305 = vld [vmem:[#allocation9 + $0x1d0] sm:$0xff]
    %v1306 = vld [vmem:[#allocation9 + $0x1d8] sm:$0xff]
    %v1307 = vld [vmem:[#allocation9 + $0x1e0] sm:$0xff]
    %v1308 = vld [vmem:[#allocation9 + $0x1e8] sm:$0xff]
    %v1309 = vld [vmem:[#allocation9 + $0x1f0] sm:$0xff]
    %v1310 = vld [vmem:[#allocation9 + $0x1f8] sm:$0xff]
    %1311 = vmatpush.msra.mxu0 %v1307
    %1312 = vmatpush.msra.mxu0 %v1303
    %1313 = vmatpush.msra.mxu0 %v1299
    %1314 = vmatpush.msra.mxu0 %v1295
    %1315 = vmatpush.msra.mxu0 %v1291
    %1316 = vmatpush.msra.mxu0 %v1287
    %1317 = vmatpush.msra.mxu0 %v1283
    %1318 = vmatpush.msra.mxu0 %v1279
    %1319 = vmatpush.msra.mxu0 %v1275
    %1320 = vmatpush.msra.mxu0 %v1271
    %1321 = vmatpush.msra.mxu0 %v1267
    %1322 = vmatpush.msra.mxu0 %v1263
    %1323 = vmatpush.msra.mxu0 %v1259
    %1324 = vmatpush.msra.mxu0 %v1255
    %1325 = vmatpush.msra.mxu0 %v1251
    %1326 = vmatpush.msra.mxu0 %v1247
    %1327 = vmatmul.f32.gmra.mxu0 %v1023
    %v1328 = vpop.f32.mrf.mxu0
    %v1329 = vadd.f32 0.0, %v1328
    %1330 = vdwg.mxu0
    %1331 = vmatpush.msra.mxu0 %v1308
    %1332 = vmatpush.msra.mxu0 %v1304
    %1333 = vmatpush.msra.mxu0 %v1300
    %1334 = vmatpush.msra.mxu0 %v1296
    %1335 = vmatpush.msra.mxu0 %v1292
    %1336 = vmatpush.msra.mxu0 %v1288
    %1337 = vmatpush.msra.mxu0 %v1284
    %1338 = vmatpush.msra.mxu0 %v1280
    %1339 = vmatpush.msra.mxu0 %v1276
    %1340 = vmatpush.msra.mxu0 %v1272
    %1341 = vmatpush.msra.mxu0 %v1268
    %1342 = vmatpush.msra.mxu0 %v1264
    %1343 = vmatpush.msra.mxu0 %v1260
    %1344 = vmatpush.msra.mxu0 %v1256
    %1345 = vmatpush.msra.mxu0 %v1252
    %1346 = vmatpush.msra.mxu0 %v1248
    %1347 = vmatmul.f32.gmra.mxu0 %v1023
    %v1348 = vpop.f32.mrf.mxu0
    %v1349 = vadd.f32 0.0, %v1348
    %1350 = vdwg.mxu0
    %1351 = vmatpush.msra.mxu0 %v1309
    %1352 = vmatpush.msra.mxu0 %v1305
    %1353 = vmatpush.msra.mxu0 %v1301
    %1354 = vmatpush.msra.mxu0 %v1297
    %1355 = vmatpush.msra.mxu0 %v1293
    %1356 = vmatpush.msra.mxu0 %v1289
    %1357 = vmatpush.msra.mxu0 %v1285
    %1358 = vmatpush.msra.mxu0 %v1281
    %1359 = vmatpush.msra.mxu0 %v1277
    %1360 = vmatpush.msra.mxu0 %v1273
    %1361 = vmatpush.msra.mxu0 %v1269
    %1362 = vmatpush.msra.mxu0 %v1265
    %1363 = vmatpush.msra.mxu0 %v1261
    %1364 = vmatpush.msra.mxu0 %v1257
    %1365 = vmatpush.msra.mxu0 %v1253
    %1366 = vmatpush.msra.mxu0 %v1249
    %1367 = vmatmul.f32.gmra.mxu0 %v1023
    %v1368 = vpop.f32.mrf.mxu0
    %v1369 = vadd.f32 0.0, %v1368
    %1370 = vdwg.mxu0
    %1371 = vmatpush.msra.mxu0 %v1310
    %1372 = vmatpush.msra.mxu0 %v1306
    %1373 = vmatpush.msra.mxu0 %v1302
    %1374 = vmatpush.msra.mxu0 %v1298
    %1375 = vmatpush.msra.mxu0 %v1294
    %1376 = vmatpush.msra.mxu0 %v1290
    %1377 = vmatpush.msra.mxu0 %v1286
    %1378 = vmatpush.msra.mxu0 %v1282
    %1379 = vmatpush.msra.mxu0 %v1278
    %1380 = vmatpush.msra.mxu0 %v1274
    %1381 = vmatpush.msra.mxu0 %v1270
    %1382 = vmatpush.msra.mxu0 %v1266
    %1383 = vmatpush.msra.mxu0 %v1262
    %1384 = vmatpush.msra.mxu0 %v1258
    %1385 = vmatpush.msra.mxu0 %v1254
    %1386 = vmatpush.msra.mxu0 %v1250
    %1387 = vmatmul.f32.gmra.mxu0 %v1023
    %v1388 = vpop.f32.mrf.mxu0
    %v1389 = vadd.f32 0.0, %v1388
    %1390 = vdwg.mxu0
    %v1391 = vadd.f32 %v1032, %v1329
    %v1392 = vadd.f32 %v1033, %v1349
    %v1393 = vadd.f32 %v1034, %v1369
    %v1394 = vadd.f32 %v1035, %v1389
    %v1395 = vxor.u32 %v1391, 2147483648
    %v1396 = vmul.f32 %v1395, 1.442695
    %v1397 = vpow.pop %v1396
    %v1398 = vadd.f32 %v1397, 1.0
    %v1399 = vrcp.pop %v1398
    %v1400 = vmul.f32 %v1398, %v1399
    %v1401 = vsub.f32 1.0, %v1400
    %v1402 = vmul.f32 %v1399, %v1401
    %v1403 = vadd.f32 %v1399, %v1402
    %vm1404 = vweird.f32 %v1398
    %vm1405 = vweird.f32 %v1399
    %vm1406 = vmor %vm1404, %vm1405
    %v1407 = vsel %vm1406, %v1399, %v1403
    %v1408 = vand.u32 2147483647, %v1398
    %vm1409 = vcmp.eq.f32.partialorder %v1408, 8.507059e+37
    %v1410 = vand.u32 %v1398, 2147483648
    %v1411 = vor.u32 1.1754944e-38, %v1410
    %v1412 = vsel %vm1409, %v1411, %v1407
    %v1413 = vmul.f32 1.0, %v1412
    %v1414 = vxor.u32 %v1392, 2147483648
    %v1415 = vmul.f32 %v1414, 1.442695
    %v1416 = vpow.pop %v1415
    %v1417 = vadd.f32 %v1416, 1.0
    %v1418 = vrcp.pop %v1417
    %v1419 = vmul.f32 %v1417, %v1418
    %v1420 = vsub.f32 1.0, %v1419
    %v1421 = vmul.f32 %v1418, %v1420
    %v1422 = vadd.f32 %v1418, %v1421
    %vm1423 = vweird.f32 %v1417
    %vm1424 = vweird.f32 %v1418
    %vm1425 = vmor %vm1423, %vm1424
    %v1426 = vsel %vm1425, %v1418, %v1422
    %v1427 = vand.u32 2147483647, %v1417
    %vm1428 = vcmp.eq.f32.partialorder %v1427, 8.507059e+37
    %v1429 = vand.u32 %v1417, 2147483648
    %v1430 = vor.u32 1.1754944e-38, %v1429
    %v1431 = vsel %vm1428, %v1430, %v1426
    %v1432 = vmul.f32 1.0, %v1431
    %v1433 = vtanh.pop %v1393
    %v1434 = vxor.u32 %v1394, 2147483648
    %v1435 = vmul.f32 %v1434, 1.442695
    %v1436 = vpow.pop %v1435
    %v1437 = vadd.f32 %v1436, 1.0
    %v1438 = vrcp.pop %v1437
    %v1439 = vmul.f32 %v1437, %v1438
    %v1440 = vsub.f32 1.0, %v1439
    %v1441 = vmul.f32 %v1438, %v1440
    %v1442 = vadd.f32 %v1438, %v1441
    %vm1443 = vweird.f32 %v1437
    %vm1444 = vweird.f32 %v1438
    %vm1445 = vmor %vm1443, %vm1444
    %v1446 = vsel %vm1445, %v1438, %v1442
    %v1447 = vand.u32 2147483647, %v1437
    %vm1448 = vcmp.eq.f32.partialorder %v1447, 8.507059e+37
    %v1449 = vand.u32 %v1437, 2147483648
    %v1450 = vor.u32 1.1754944e-38, %v1449
    %v1451 = vsel %vm1448, %v1450, %v1446
    %v1452 = vmul.f32 1.0, %v1451
    %v1453 = vmul.f32 %v1432, %v1025
    %v1454 = vmul.f32 %v1413, %v1433
    %v1455 = vadd.f32 %v1453, %v1454
    %v1456 = vtanh.pop %v1455
    %v1457 = vmul.f32 %v1452, %v1456
    %vm1458 = vcmp.gt.s32.totalorder %v94, 1
    %v1459 = vsel %vm1458, 1, 0
    %v1460 = vcvt.s32.f32 %v1459
    %vm1461 = vcmp.gt.s32.totalorder %v94, 6
    %v1462 = vsel %vm1461, 1, 0
    %v1463 = vcvt.s32.f32 %v1462
    %1465 = vset.pattern.permute.xlu0 0
    %1466 = vperm.xlu0 %1465, %v1460
    %v1467 = vpop.permute.xlu0 %1466
    %v1469 = vmul.f32 %v1467, %v1246
    %s1470 = scalar_lea.vmem [#allocation3], 8
    %1471 = vst [vmem:[%s1470] sm:$0xff] %v1469
    %1473 = vset.pattern.permute.xlu0 0
    %1474 = vperm.xlu0 %1473, %v1463
    %v1475 = vpop.permute.xlu0 %1474
    %v1477 = vmul.f32 %v1475, %v1457
    %s1478 = scalar_lea.vmem [#allocation4], 48
    %1479 = vst [vmem:[%s1478] sm:$0xff] %v1477
    %v1480 = vsub.f32 1.0, %v1460
    %1482 = vset.pattern.permute.xlu0 0
    %1483 = vperm.xlu0 %1482, %v1480
    %v1484 = vpop.permute.xlu0 %1483
    %v1486 = vmul.f32 %v1484, %v1013
    %v1487 = vadd.f32 %v1469, %v1486
    %v1488 = vmul.f32 %v1467, %v1244
    %v1489 = vmul.f32 %v1484, %v1015
    %v1490 = vadd.f32 %v1488, %v1489
    %v1491 = vsub.f32 1.0, %v1463
    %1493 = vset.pattern.permute.xlu0 0
    %1494 = vperm.xlu0 %1493, %v1491
    %v1495 = vpop.permute.xlu0 %1494
    %v1497 = vmul.f32 %v1495, %v1023
    %v1498 = vadd.f32 %v1477, %v1497
    %v1499 = vmul.f32 %v1475, %v1455
    %v1500 = vmul.f32 %v1495, %v1025
    %v1501 = vadd.f32 %v1499, %v1500
    %s1502 = scalar_lea.vmem [#allocation2], 128
    %v1503 = vld [vmem:[%s1502] sm:$0xff]
    %v1504 = vld [vmem:[%s1502 + $0x8] sm:$0xff]
    %v1505 = vld [vmem:[%s1502 + $0x10] sm:$0xff]
    %v1506 = vld [vmem:[%s1502 + $0x18] sm:$0xff]
    %s1507 = scalar_lea.vmem [#allocation2], 320
    %v1508 = vld [vmem:[%s1507 + $0x20] sm:$0xff]
    %v1509 = vld [vmem:[%s1507 + $0x28] sm:$0xff]
    %v1510 = vld [vmem:[%s1507 + $0x30] sm:$0xff]
    %v1511 = vld [vmem:[%s1507 + $0x38] sm:$0xff]
    %v1512 = vld [vmem:[#allocation6] sm:$0xff]
    %v1513 = vld [vmem:[#allocation6 + $0x8] sm:$0xff]
    %v1514 = vld [vmem:[#allocation6 + $0x10] sm:$0xff]
    %v1515 = vld [vmem:[#allocation6 + $0x18] sm:$0xff]
    %v1516 = vld [vmem:[#allocation6 + $0x20] sm:$0xff]
    %v1517 = vld [vmem:[#allocation6 + $0x28] sm:$0xff]
    %v1518 = vld [vmem:[#allocation6 + $0x30] sm:$0xff]
    %v1519 = vld [vmem:[#allocation6 + $0x38] sm:$0xff]
    %v1520 = vld [vmem:[#allocation6 + $0x40] sm:$0xff]
    %v1521 = vld [vmem:[#allocation6 + $0x48] sm:$0xff]
    %v1522 = vld [vmem:[#allocation6 + $0x50] sm:$0xff]
    %v1523 = vld [vmem:[#allocation6 + $0x58] sm:$0xff]
    %v1524 = vld [vmem:[#allocation6 + $0x60] sm:$0xff]
    %v1525 = vld [vmem:[#allocation6 + $0x68] sm:$0xff]
    %v1526 = vld [vmem:[#allocation6 + $0x70] sm:$0xff]
    %v1527 = vld [vmem:[#allocation6 + $0x78] sm:$0xff]
    %v1528 = vld [vmem:[#allocation6 + $0x80] sm:$0xff]
    %v1529 = vld [vmem:[#allocation6 + $0x88] sm:$0xff]
    %v1530 = vld [vmem:[#allocation6 + $0x90] sm:$0xff]
    %v1531 = vld [vmem:[#allocation6 + $0x98] sm:$0xff]
    %v1532 = vld [vmem:[#allocation6 + $0xa0] sm:$0xff]
    %v1533 = vld [vmem:[#allocation6 + $0xa8] sm:$0xff]
    %v1534 = vld [vmem:[#allocation6 + $0xb0] sm:$0xff]
    %v1535 = vld [vmem:[#allocation6 + $0xb8] sm:$0xff]
    %v1536 = vld [vmem:[#allocation6 + $0xc0] sm:$0xff]
    %v1537 = vld [vmem:[#allocation6 + $0xc8] sm:$0xff]
    %v1538 = vld [vmem:[#allocation6 + $0xd0] sm:$0xff]
    %v1539 = vld [vmem:[#allocation6 + $0xd8] sm:$0xff]
    %v1540 = vld [vmem:[#allocation6 + $0xe0] sm:$0xff]
    %v1541 = vld [vmem:[#allocation6 + $0xe8] sm:$0xff]
    %v1542 = vld [vmem:[#allocation6 + $0xf0] sm:$0xff]
    %v1543 = vld [vmem:[#allocation6 + $0xf8] sm:$0xff]
    %v1544 = vld [vmem:[#allocation6 + $0x100] sm:$0xff]
    %v1545 = vld [vmem:[#allocation6 + $0x108] sm:$0xff]
    %v1546 = vld [vmem:[#allocation6 + $0x110] sm:$0xff]
    %v1547 = vld [vmem:[#allocation6 + $0x118] sm:$0xff]
    %v1548 = vld [vmem:[#allocation6 + $0x120] sm:$0xff]
    %v1549 = vld [vmem:[#allocation6 + $0x128] sm:$0xff]
    %v1550 = vld [vmem:[#allocation6 + $0x130] sm:$0xff]
    %v1551 = vld [vmem:[#allocation6 + $0x138] sm:$0xff]
    %v1552 = vld [vmem:[#allocation6 + $0x140] sm:$0xff]
    %v1553 = vld [vmem:[#allocation6 + $0x148] sm:$0xff]
    %v1554 = vld [vmem:[#allocation6 + $0x150] sm:$0xff]
    %v1555 = vld [vmem:[#allocation6 + $0x158] sm:$0xff]
    %v1556 = vld [vmem:[#allocation6 + $0x160] sm:$0xff]
    %v1557 = vld [vmem:[#allocation6 + $0x168] sm:$0xff]
    %v1558 = vld [vmem:[#allocation6 + $0x170] sm:$0xff]
    %v1559 = vld [vmem:[#allocation6 + $0x178] sm:$0xff]
    %v1560 = vld [vmem:[#allocation6 + $0x180] sm:$0xff]
    %v1561 = vld [vmem:[#allocation6 + $0x188] sm:$0xff]
    %v1562 = vld [vmem:[#allocation6 + $0x190] sm:$0xff]
    %v1563 = vld [vmem:[#allocation6 + $0x198] sm:$0xff]
    %v1564 = vld [vmem:[#allocation6 + $0x1a0] sm:$0xff]
    %v1565 = vld [vmem:[#allocation6 + $0x1a8] sm:$0xff]
    %v1566 = vld [vmem:[#allocation6 + $0x1b0] sm:$0xff]
    %v1567 = vld [vmem:[#allocation6 + $0x1b8] sm:$0xff]
    %v1568 = vld [vmem:[#allocation6 + $0x1c0] sm:$0xff]
    %v1569 = vld [vmem:[#allocation6 + $0x1c8] sm:$0xff]
    %v1570 = vld [vmem:[#allocation6 + $0x1d0] sm:$0xff]
    %v1571 = vld [vmem:[#allocation6 + $0x1d8] sm:$0xff]
    %v1572 = vld [vmem:[#allocation6 + $0x1e0] sm:$0xff]
    %v1573 = vld [vmem:[#allocation6 + $0x1e8] sm:$0xff]
    %v1574 = vld [vmem:[#allocation6 + $0x1f0] sm:$0xff]
    %v1575 = vld [vmem:[#allocation6 + $0x1f8] sm:$0xff]
    %1576 = vmatpush.msra.mxu0 %v1572
    %1577 = vmatpush.msra.mxu0 %v1568
    %1578 = vmatpush.msra.mxu0 %v1564
    %1579 = vmatpush.msra.mxu0 %v1560
    %1580 = vmatpush.msra.mxu0 %v1556
    %1581 = vmatpush.msra.mxu0 %v1552
    %1582 = vmatpush.msra.mxu0 %v1548
    %1583 = vmatpush.msra.mxu0 %v1544
    %1584 = vmatpush.msra.mxu0 %v1540
    %1585 = vmatpush.msra.mxu0 %v1536
    %1586 = vmatpush.msra.mxu0 %v1532
    %1587 = vmatpush.msra.mxu0 %v1528
    %1588 = vmatpush.msra.mxu0 %v1524
    %1589 = vmatpush.msra.mxu0 %v1520
    %1590 = vmatpush.msra.mxu0 %v1516
    %1591 = vmatpush.msra.mxu0 %v1512
    %1592 = vmatmul.f32.gmra.mxu0 %v1487
    %v1593 = vpop.f32.mrf.mxu0
    %v1594 = vadd.f32 0.0, %v1593
    %1595 = vdwg.mxu0
    %1596 = vmatpush.msra.mxu0 %v1573
    %1597 = vmatpush.msra.mxu0 %v1569
    %1598 = vmatpush.msra.mxu0 %v1565
    %1599 = vmatpush.msra.mxu0 %v1561
    %1600 = vmatpush.msra.mxu0 %v1557
    %1601 = vmatpush.msra.mxu0 %v1553
    %1602 = vmatpush.msra.mxu0 %v1549
    %1603 = vmatpush.msra.mxu0 %v1545
    %1604 = vmatpush.msra.mxu0 %v1541
    %1605 = vmatpush.msra.mxu0 %v1537
    %1606 = vmatpush.msra.mxu0 %v1533
    %1607 = vmatpush.msra.mxu0 %v1529
    %1608 = vmatpush.msra.mxu0 %v1525
    %1609 = vmatpush.msra.mxu0 %v1521
    %1610 = vmatpush.msra.mxu0 %v1517
    %1611 = vmatpush.msra.mxu0 %v1513
    %1612 = vmatmul.f32.gmra.mxu0 %v1487
    %v1613 = vpop.f32.mrf.mxu0
    %v1614 = vadd.f32 0.0, %v1613
    %1615 = vdwg.mxu0
    %1616 = vmatpush.msra.mxu0 %v1574
    %1617 = vmatpush.msra.mxu0 %v1570
    %1618 = vmatpush.msra.mxu0 %v1566
    %1619 = vmatpush.msra.mxu0 %v1562
    %1620 = vmatpush.msra.mxu0 %v1558
    %1621 = vmatpush.msra.mxu0 %v1554
    %1622 = vmatpush.msra.mxu0 %v1550
    %1623 = vmatpush.msra.mxu0 %v1546
    %1624 = vmatpush.msra.mxu0 %v1542
    %1625 = vmatpush.msra.mxu0 %v1538
    %1626 = vmatpush.msra.mxu0 %v1534
    %1627 = vmatpush.msra.mxu0 %v1530
    %1628 = vmatpush.msra.mxu0 %v1526
    %1629 = vmatpush.msra.mxu0 %v1522
    %1630 = vmatpush.msra.mxu0 %v1518
    %1631 = vmatpush.msra.mxu0 %v1514
    %1632 = vmatmul.f32.gmra.mxu0 %v1487
    %v1633 = vpop.f32.mrf.mxu0
    %v1634 = vadd.f32 0.0, %v1633
    %1635 = vdwg.mxu0
    %1636 = vmatpush.msra.mxu0 %v1575
    %1637 = vmatpush.msra.mxu0 %v1571
    %1638 = vmatpush.msra.mxu0 %v1567
    %1639 = vmatpush.msra.mxu0 %v1563
    %1640 = vmatpush.msra.mxu0 %v1559
    %1641 = vmatpush.msra.mxu0 %v1555
    %1642 = vmatpush.msra.mxu0 %v1551
    %1643 = vmatpush.msra.mxu0 %v1547
    %1644 = vmatpush.msra.mxu0 %v1543
    %1645 = vmatpush.msra.mxu0 %v1539
    %1646 = vmatpush.msra.mxu0 %v1535
    %1647 = vmatpush.msra.mxu0 %v1531
    %1648 = vmatpush.msra.mxu0 %v1527
    %1649 = vmatpush.msra.mxu0 %v1523
    %1650 = vmatpush.msra.mxu0 %v1519
    %1651 = vmatpush.msra.mxu0 %v1515
    %1652 = vmatmul.f32.gmra.mxu0 %v1487
    %v1653 = vpop.f32.mrf.mxu0
    %v1654 = vadd.f32 0.0, %v1653
    %1655 = vdwg.mxu0
    %v1656 = vadd.f32 %v1503, %v1594
    %v1657 = vadd.f32 %v1504, %v1614
    %v1658 = vadd.f32 %v1505, %v1634
    %v1659 = vadd.f32 %v1506, %v1654
    %v1660 = vxor.u32 %v1656, 2147483648
    %v1661 = vmul.f32 %v1660, 1.442695
    %v1662 = vpow.pop %v1661
    %v1663 = vadd.f32 %v1662, 1.0
    %v1664 = vrcp.pop %v1663
    %v1665 = vmul.f32 %v1663, %v1664
    %v1666 = vsub.f32 1.0, %v1665
    %v1667 = vmul.f32 %v1664, %v1666
    %v1668 = vadd.f32 %v1664, %v1667
    %vm1669 = vweird.f32 %v1663
    %vm1670 = vweird.f32 %v1664
    %vm1671 = vmor %vm1669, %vm1670
    %v1672 = vsel %vm1671, %v1664, %v1668
    %v1673 = vand.u32 2147483647, %v1663
    %vm1674 = vcmp.eq.f32.partialorder %v1673, 8.507059e+37
    %v1675 = vand.u32 %v1663, 2147483648
    %v1676 = vor.u32 1.1754944e-38, %v1675
    %v1677 = vsel %vm1674, %v1676, %v1672
    %v1678 = vmul.f32 1.0, %v1677
    %v1679 = vxor.u32 %v1657, 2147483648
    %v1680 = vmul.f32 %v1679, 1.442695
    %v1681 = vpow.pop %v1680
    %v1682 = vadd.f32 %v1681, 1.0
    %v1683 = vrcp.pop %v1682
    %v1684 = vmul.f32 %v1682, %v1683
    %v1685 = vsub.f32 1.0, %v1684
    %v1686 = vmul.f32 %v1683, %v1685
    %v1687 = vadd.f32 %v1683, %v1686
    %vm1688 = vweird.f32 %v1682
    %vm1689 = vweird.f32 %v1683
    %vm1690 = vmor %vm1688, %vm1689
    %v1691 = vsel %vm1690, %v1683, %v1687
    %v1692 = vand.u32 2147483647, %v1682
    %vm1693 = vcmp.eq.f32.partialorder %v1692, 8.507059e+37
    %v1694 = vand.u32 %v1682, 2147483648
    %v1695 = vor.u32 1.1754944e-38, %v1694
    %v1696 = vsel %vm1693, %v1695, %v1691
    %v1697 = vmul.f32 1.0, %v1696
    %v1698 = vtanh.pop %v1658
    %v1699 = vxor.u32 %v1659, 2147483648
    %v1700 = vmul.f32 %v1699, 1.442695
    %v1701 = vpow.pop %v1700
    %v1702 = vadd.f32 %v1701, 1.0
    %v1703 = vrcp.pop %v1702
    %v1704 = vmul.f32 %v1702, %v1703
    %v1705 = vsub.f32 1.0, %v1704
    %v1706 = vmul.f32 %v1703, %v1705
    %v1707 = vadd.f32 %v1703, %v1706
    %vm1708 = vweird.f32 %v1702
    %vm1709 = vweird.f32 %v1703
    %vm1710 = vmor %vm1708, %vm1709
    %v1711 = vsel %vm1710, %v1703, %v1707
    %v1712 = vand.u32 2147483647, %v1702
    %vm1713 = vcmp.eq.f32.partialorder %v1712, 8.507059e+37
    %v1714 = vand.u32 %v1702, 2147483648
    %v1715 = vor.u32 1.1754944e-38, %v1714
    %v1716 = vsel %vm1713, %v1715, %v1711
    %v1717 = vmul.f32 1.0, %v1716
    %v1718 = vmul.f32 %v1697, %v1490
    %v1719 = vmul.f32 %v1678, %v1698
    %v1720 = vadd.f32 %v1718, %v1719
    %v1721 = vtanh.pop %v1720
    %v1722 = vmul.f32 %v1717, %v1721
    %v1723 = vld [vmem:[#allocation9] sm:$0xff]
    %v1724 = vld [vmem:[#allocation9 + $0x8] sm:$0xff]
    %v1725 = vld [vmem:[#allocation9 + $0x10] sm:$0xff]
    %v1726 = vld [vmem:[#allocation9 + $0x18] sm:$0xff]
    %v1727 = vld [vmem:[#allocation9 + $0x20] sm:$0xff]
    %v1728 = vld [vmem:[#allocation9 + $0x28] sm:$0xff]
    %v1729 = vld [vmem:[#allocation9 + $0x30] sm:$0xff]
    %v1730 = vld [vmem:[#allocation9 + $0x38] sm:$0xff]
    %v1731 = vld [vmem:[#allocation9 + $0x40] sm:$0xff]
    %v1732 = vld [vmem:[#allocation9 + $0x48] sm:$0xff]
    %v1733 = vld [vmem:[#allocation9 + $0x50] sm:$0xff]
    %v1734 = vld [vmem:[#allocation9 + $0x58] sm:$0xff]
    %v1735 = vld [vmem:[#allocation9 + $0x60] sm:$0xff]
    %v1736 = vld [vmem:[#allocation9 + $0x68] sm:$0xff]
    %v1737 = vld [vmem:[#allocation9 + $0x70] sm:$0xff]
    %v1738 = vld [vmem:[#allocation9 + $0x78] sm:$0xff]
    %v1739 = vld [vmem:[#allocation9 + $0x80] sm:$0xff]
    %v1740 = vld [vmem:[#allocation9 + $0x88] sm:$0xff]
    %v1741 = vld [vmem:[#allocation9 + $0x90] sm:$0xff]
    %v1742 = vld [vmem:[#allocation9 + $0x98] sm:$0xff]
    %v1743 = vld [vmem:[#allocation9 + $0xa0] sm:$0xff]
    %v1744 = vld [vmem:[#allocation9 + $0xa8] sm:$0xff]
    %v1745 = vld [vmem:[#allocation9 + $0xb0] sm:$0xff]
    %v1746 = vld [vmem:[#allocation9 + $0xb8] sm:$0xff]
    %v1747 = vld [vmem:[#allocation9 + $0xc0] sm:$0xff]
    %v1748 = vld [vmem:[#allocation9 + $0xc8] sm:$0xff]
    %v1749 = vld [vmem:[#allocation9 + $0xd0] sm:$0xff]
    %v1750 = vld [vmem:[#allocation9 + $0xd8] sm:$0xff]
    %v1751 = vld [vmem:[#allocation9 + $0xe0] sm:$0xff]
    %v1752 = vld [vmem:[#allocation9 + $0xe8] sm:$0xff]
    %v1753 = vld [vmem:[#allocation9 + $0xf0] sm:$0xff]
    %v1754 = vld [vmem:[#allocation9 + $0xf8] sm:$0xff]
    %v1755 = vld [vmem:[#allocation9 + $0x100] sm:$0xff]
    %v1756 = vld [vmem:[#allocation9 + $0x108] sm:$0xff]
    %v1757 = vld [vmem:[#allocation9 + $0x110] sm:$0xff]
    %v1758 = vld [vmem:[#allocation9 + $0x118] sm:$0xff]
    %v1759 = vld [vmem:[#allocation9 + $0x120] sm:$0xff]
    %v1760 = vld [vmem:[#allocation9 + $0x128] sm:$0xff]
    %v1761 = vld [vmem:[#allocation9 + $0x130] sm:$0xff]
    %v1762 = vld [vmem:[#allocation9 + $0x138] sm:$0xff]
    %v1763 = vld [vmem:[#allocation9 + $0x140] sm:$0xff]
    %v1764 = vld [vmem:[#allocation9 + $0x148] sm:$0xff]
    %v1765 = vld [vmem:[#allocation9 + $0x150] sm:$0xff]
    %v1766 = vld [vmem:[#allocation9 + $0x158] sm:$0xff]
    %v1767 = vld [vmem:[#allocation9 + $0x160] sm:$0xff]
    %v1768 = vld [vmem:[#allocation9 + $0x168] sm:$0xff]
    %v1769 = vld [vmem:[#allocation9 + $0x170] sm:$0xff]
    %v1770 = vld [vmem:[#allocation9 + $0x178] sm:$0xff]
    %v1771 = vld [vmem:[#allocation9 + $0x180] sm:$0xff]
    %v1772 = vld [vmem:[#allocation9 + $0x188] sm:$0xff]
    %v1773 = vld [vmem:[#allocation9 + $0x190] sm:$0xff]
    %v1774 = vld [vmem:[#allocation9 + $0x198] sm:$0xff]
    %v1775 = vld [vmem:[#allocation9 + $0x1a0] sm:$0xff]
    %v1776 = vld [vmem:[#allocation9 + $0x1a8] sm:$0xff]
    %v1777 = vld [vmem:[#allocation9 + $0x1b0] sm:$0xff]
    %v1778 = vld [vmem:[#allocation9 + $0x1b8] sm:$0xff]
    %v1779 = vld [vmem:[#allocation9 + $0x1c0] sm:$0xff]
    %v1780 = vld [vmem:[#allocation9 + $0x1c8] sm:$0xff]
    %v1781 = vld [vmem:[#allocation9 + $0x1d0] sm:$0xff]
    %v1782 = vld [vmem:[#allocation9 + $0x1d8] sm:$0xff]
    %v1783 = vld [vmem:[#allocation9 + $0x1e0] sm:$0xff]
    %v1784 = vld [vmem:[#allocation9 + $0x1e8] sm:$0xff]
    %v1785 = vld [vmem:[#allocation9 + $0x1f0] sm:$0xff]
    %v1786 = vld [vmem:[#allocation9 + $0x1f8] sm:$0xff]
    %1787 = vmatpush.msra.mxu0 %v1783
    %1788 = vmatpush.msra.mxu0 %v1779
    %1789 = vmatpush.msra.mxu0 %v1775
    %1790 = vmatpush.msra.mxu0 %v1771
    %1791 = vmatpush.msra.mxu0 %v1767
    %1792 = vmatpush.msra.mxu0 %v1763
    %1793 = vmatpush.msra.mxu0 %v1759
    %1794 = vmatpush.msra.mxu0 %v1755
    %1795 = vmatpush.msra.mxu0 %v1751
    %1796 = vmatpush.msra.mxu0 %v1747
    %1797 = vmatpush.msra.mxu0 %v1743
    %1798 = vmatpush.msra.mxu0 %v1739
    %1799 = vmatpush.msra.mxu0 %v1735
    %1800 = vmatpush.msra.mxu0 %v1731
    %1801 = vmatpush.msra.mxu0 %v1727
    %1802 = vmatpush.msra.mxu0 %v1723
    %1803 = vmatmul.f32.gmra.mxu0 %v1498
    %v1804 = vpop.f32.mrf.mxu0
    %v1805 = vadd.f32 0.0, %v1804
    %1806 = vdwg.mxu0
    %1807 = vmatpush.msra.mxu0 %v1784
    %1808 = vmatpush.msra.mxu0 %v1780
    %1809 = vmatpush.msra.mxu0 %v1776
    %1810 = vmatpush.msra.mxu0 %v1772
    %1811 = vmatpush.msra.mxu0 %v1768
    %1812 = vmatpush.msra.mxu0 %v1764
    %1813 = vmatpush.msra.mxu0 %v1760
    %1814 = vmatpush.msra.mxu0 %v1756
    %1815 = vmatpush.msra.mxu0 %v1752
    %1816 = vmatpush.msra.mxu0 %v1748
    %1817 = vmatpush.msra.mxu0 %v1744
    %1818 = vmatpush.msra.mxu0 %v1740
    %1819 = vmatpush.msra.mxu0 %v1736
    %1820 = vmatpush.msra.mxu0 %v1732
    %1821 = vmatpush.msra.mxu0 %v1728
    %1822 = vmatpush.msra.mxu0 %v1724
    %1823 = vmatmul.f32.gmra.mxu0 %v1498
    %v1824 = vpop.f32.mrf.mxu0
    %v1825 = vadd.f32 0.0, %v1824
    %1826 = vdwg.mxu0
    %1827 = vmatpush.msra.mxu0 %v1785
    %1828 = vmatpush.msra.mxu0 %v1781
    %1829 = vmatpush.msra.mxu0 %v1777
    %1830 = vmatpush.msra.mxu0 %v1773
    %1831 = vmatpush.msra.mxu0 %v1769
    %1832 = vmatpush.msra.mxu0 %v1765
    %1833 = vmatpush.msra.mxu0 %v1761
    %1834 = vmatpush.msra.mxu0 %v1757
    %1835 = vmatpush.msra.mxu0 %v1753
    %1836 = vmatpush.msra.mxu0 %v1749
    %1837 = vmatpush.msra.mxu0 %v1745
    %1838 = vmatpush.msra.mxu0 %v1741
    %1839 = vmatpush.msra.mxu0 %v1737
    %1840 = vmatpush.msra.mxu0 %v1733
    %1841 = vmatpush.msra.mxu0 %v1729
    %1842 = vmatpush.msra.mxu0 %v1725
    %1843 = vmatmul.f32.gmra.mxu0 %v1498
    %v1844 = vpop.f32.mrf.mxu0
    %v1845 = vadd.f32 0.0, %v1844
    %1846 = vdwg.mxu0
    %1847 = vmatpush.msra.mxu0 %v1786
    %1848 = vmatpush.msra.mxu0 %v1782
    %1849 = vmatpush.msra.mxu0 %v1778
    %1850 = vmatpush.msra.mxu0 %v1774
    %1851 = vmatpush.msra.mxu0 %v1770
    %1852 = vmatpush.msra.mxu0 %v1766
    %1853 = vmatpush.msra.mxu0 %v1762
    %1854 = vmatpush.msra.mxu0 %v1758
    %1855 = vmatpush.msra.mxu0 %v1754
    %1856 = vmatpush.msra.mxu0 %v1750
    %1857 = vmatpush.msra.mxu0 %v1746
    %1858 = vmatpush.msra.mxu0 %v1742
    %1859 = vmatpush.msra.mxu0 %v1738
    %1860 = vmatpush.msra.mxu0 %v1734
    %1861 = vmatpush.msra.mxu0 %v1730
    %1862 = vmatpush.msra.mxu0 %v1726
    %1863 = vmatmul.f32.gmra.mxu0 %v1498
    %v1864 = vpop.f32.mrf.mxu0
    %v1865 = vadd.f32 0.0, %v1864
    %1866 = vdwg.mxu0
    %v1867 = vadd.f32 %v1508, %v1805
    %v1868 = vadd.f32 %v1509, %v1825
    %v1869 = vadd.f32 %v1510, %v1845
    %v1870 = vadd.f32 %v1511, %v1865
    %v1871 = vxor.u32 %v1867, 2147483648
    %v1872 = vmul.f32 %v1871, 1.442695
    %v1873 = vpow.pop %v1872
    %v1874 = vadd.f32 %v1873, 1.0
    %v1875 = vrcp.pop %v1874
    %v1876 = vmul.f32 %v1874, %v1875
    %v1877 = vsub.f32 1.0, %v1876
    %v1878 = vmul.f32 %v1875, %v1877
    %v1879 = vadd.f32 %v1875, %v1878
    %vm1880 = vweird.f32 %v1874
    %vm1881 = vweird.f32 %v1875
    %vm1882 = vmor %vm1880, %vm1881
    %v1883 = vsel %vm1882, %v1875, %v1879
    %v1884 = vand.u32 2147483647, %v1874
    %vm1885 = vcmp.eq.f32.partialorder %v1884, 8.507059e+37
    %v1886 = vand.u32 %v1874, 2147483648
    %v1887 = vor.u32 1.1754944e-38, %v1886
    %v1888 = vsel %vm1885, %v1887, %v1883
    %v1889 = vmul.f32 1.0, %v1888
    %v1890 = vxor.u32 %v1868, 2147483648
    %v1891 = vmul.f32 %v1890, 1.442695
    %v1892 = vpow.pop %v1891
    %v1893 = vadd.f32 %v1892, 1.0
    %v1894 = vrcp.pop %v1893
    %v1895 = vmul.f32 %v1893, %v1894
    %v1896 = vsub.f32 1.0, %v1895
    %v1897 = vmul.f32 %v1894, %v1896
    %v1898 = vadd.f32 %v1894, %v1897
    %vm1899 = vweird.f32 %v1893
    %vm1900 = vweird.f32 %v1894
    %vm1901 = vmor %vm1899, %vm1900
    %v1902 = vsel %vm1901, %v1894, %v1898
    %v1903 = vand.u32 2147483647, %v1893
    %vm1904 = vcmp.eq.f32.partialorder %v1903, 8.507059e+37
    %v1905 = vand.u32 %v1893, 2147483648
    %v1906 = vor.u32 1.1754944e-38, %v1905
    %v1907 = vsel %vm1904, %v1906, %v1902
    %v1908 = vmul.f32 1.0, %v1907
    %v1909 = vtanh.pop %v1869
    %v1910 = vxor.u32 %v1870, 2147483648
    %v1911 = vmul.f32 %v1910, 1.442695
    %v1912 = vpow.pop %v1911
    %v1913 = vadd.f32 %v1912, 1.0
    %v1914 = vrcp.pop %v1913
    %v1915 = vmul.f32 %v1913, %v1914
    %v1916 = vsub.f32 1.0, %v1915
    %v1917 = vmul.f32 %v1914, %v1916
    %v1918 = vadd.f32 %v1914, %v1917
    %vm1919 = vweird.f32 %v1913
    %vm1920 = vweird.f32 %v1914
    %vm1921 = vmor %vm1919, %vm1920
    %v1922 = vsel %vm1921, %v1914, %v1918
    %v1923 = vand.u32 2147483647, %v1913
    %vm1924 = vcmp.eq.f32.partialorder %v1923, 8.507059e+37
    %v1925 = vand.u32 %v1913, 2147483648
    %v1926 = vor.u32 1.1754944e-38, %v1925
    %v1927 = vsel %vm1924, %v1926, %v1922
    %v1928 = vmul.f32 1.0, %v1927
    %v1929 = vmul.f32 %v1908, %v1501
    %v1930 = vmul.f32 %v1889, %v1909
    %v1931 = vadd.f32 %v1929, %v1930
    %v1932 = vtanh.pop %v1931
    %v1933 = vmul.f32 %v1928, %v1932
    %vm1934 = vcmp.gt.s32.totalorder %v94, 2
    %v1935 = vsel %vm1934, 1, 0
    %v1936 = vcvt.s32.f32 %v1935
    %vm1937 = vcmp.gt.s32.totalorder %v94, 5
    %v1938 = vsel %vm1937, 1, 0
    %v1939 = vcvt.s32.f32 %v1938
    %1941 = vset.pattern.permute.xlu0 0
    %1942 = vperm.xlu0 %1941, %v1936
    %v1943 = vpop.permute.xlu0 %1942
    %v1945 = vmul.f32 %v1943, %v1722
    %s1946 = scalar_lea.vmem [#allocation3], 16
    %1947 = vst [vmem:[%s1946] sm:$0xff] %v1945
    %1949 = vset.pattern.permute.xlu0 0
    %1950 = vperm.xlu0 %1949, %v1939
    %v1951 = vpop.permute.xlu0 %1950
    %v1953 = vmul.f32 %v1951, %v1933
    %s1954 = scalar_lea.vmem [#allocation4], 40
    %1955 = vst [vmem:[%s1954] sm:$0xff] %v1953
    %v1956 = vsub.f32 1.0, %v1936
    %1958 = vset.pattern.permute.xlu0 0
    %1959 = vperm.xlu0 %1958, %v1956
    %v1960 = vpop.permute.xlu0 %1959
    %v1962 = vmul.f32 %v1960, %v1487
    %v1963 = vadd.f32 %v1945, %v1962
    %v1964 = vmul.f32 %v1943, %v1720
    %v1965 = vmul.f32 %v1960, %v1490
    %v1966 = vadd.f32 %v1964, %v1965
    %v1967 = vsub.f32 1.0, %v1939
    %1969 = vset.pattern.permute.xlu0 0
    %1970 = vperm.xlu0 %1969, %v1967
    %v1971 = vpop.permute.xlu0 %1970
    %v1973 = vmul.f32 %v1971, %v1498
    %v1974 = vadd.f32 %v1953, %v1973
    %v1975 = vmul.f32 %v1951, %v1931
    %v1976 = vmul.f32 %v1971, %v1501
    %v1977 = vadd.f32 %v1975, %v1976
    %s1978 = scalar_lea.vmem [#allocation2], 192
    %v1979 = vld [vmem:[%s1978] sm:$0xff]
    %v1980 = vld [vmem:[%s1978 + $0x8] sm:$0xff]
    %v1981 = vld [vmem:[%s1978 + $0x10] sm:$0xff]
    %v1982 = vld [vmem:[%s1978 + $0x18] sm:$0xff]
    %s1983 = scalar_lea.vmem [#allocation2], 256
    %v1984 = vld [vmem:[%s1983 + $0x20] sm:$0xff]
    %v1985 = vld [vmem:[%s1983 + $0x28] sm:$0xff]
    %v1986 = vld [vmem:[%s1983 + $0x30] sm:$0xff]
    %v1987 = vld [vmem:[%s1983 + $0x38] sm:$0xff]
    %v1988 = vld [vmem:[#allocation6] sm:$0xff]
    %v1989 = vld [vmem:[#allocation6 + $0x8] sm:$0xff]
    %v1990 = vld [vmem:[#allocation6 + $0x10] sm:$0xff]
    %v1991 = vld [vmem:[#allocation6 + $0x18] sm:$0xff]
    %v1992 = vld [vmem:[#allocation6 + $0x20] sm:$0xff]
    %v1993 = vld [vmem:[#allocation6 + $0x28] sm:$0xff]
    %v1994 = vld [vmem:[#allocation6 + $0x30] sm:$0xff]
    %v1995 = vld [vmem:[#allocation6 + $0x38] sm:$0xff]
    %v1996 = vld [vmem:[#allocation6 + $0x40] sm:$0xff]
    %v1997 = vld [vmem:[#allocation6 + $0x48] sm:$0xff]
    %v1998 = vld [vmem:[#allocation6 + $0x50] sm:$0xff]
    %v1999 = vld [vmem:[#allocation6 + $0x58] sm:$0xff]
    %v2000 = vld [vmem:[#allocation6 + $0x60] sm:$0xff]
    %v2001 = vld [vmem:[#allocation6 + $0x68] sm:$0xff]
    %v2002 = vld [vmem:[#allocation6 + $0x70] sm:$0xff]
    %v2003 = vld [vmem:[#allocation6 + $0x78] sm:$0xff]
    %v2004 = vld [vmem:[#allocation6 + $0x80] sm:$0xff]
    %v2005 = vld [vmem:[#allocation6 + $0x88] sm:$0xff]
    %v2006 = vld [vmem:[#allocation6 + $0x90] sm:$0xff]
    %v2007 = vld [vmem:[#allocation6 + $0x98] sm:$0xff]
    %v2008 = vld [vmem:[#allocation6 + $0xa0] sm:$0xff]
    %v2009 = vld [vmem:[#allocation6 + $0xa8] sm:$0xff]
    %v2010 = vld [vmem:[#allocation6 + $0xb0] sm:$0xff]
    %v2011 = vld [vmem:[#allocation6 + $0xb8] sm:$0xff]
    %v2012 = vld [vmem:[#allocation6 + $0xc0] sm:$0xff]
    %v2013 = vld [vmem:[#allocation6 + $0xc8] sm:$0xff]
    %v2014 = vld [vmem:[#allocation6 + $0xd0] sm:$0xff]
    %v2015 = vld [vmem:[#allocation6 + $0xd8] sm:$0xff]
    %v2016 = vld [vmem:[#allocation6 + $0xe0] sm:$0xff]
    %v2017 = vld [vmem:[#allocation6 + $0xe8] sm:$0xff]
    %v2018 = vld [vmem:[#allocation6 + $0xf0] sm:$0xff]
    %v2019 = vld [vmem:[#allocation6 + $0xf8] sm:$0xff]
    %v2020 = vld [vmem:[#allocation6 + $0x100] sm:$0xff]
    %v2021 = vld [vmem:[#allocation6 + $0x108] sm:$0xff]
    %v2022 = vld [vmem:[#allocation6 + $0x110] sm:$0xff]
    %v2023 = vld [vmem:[#allocation6 + $0x118] sm:$0xff]
    %v2024 = vld [vmem:[#allocation6 + $0x120] sm:$0xff]
    %v2025 = vld [vmem:[#allocation6 + $0x128] sm:$0xff]
    %v2026 = vld [vmem:[#allocation6 + $0x130] sm:$0xff]
    %v2027 = vld [vmem:[#allocation6 + $0x138] sm:$0xff]
    %v2028 = vld [vmem:[#allocation6 + $0x140] sm:$0xff]
    %v2029 = vld [vmem:[#allocation6 + $0x148] sm:$0xff]
    %v2030 = vld [vmem:[#allocation6 + $0x150] sm:$0xff]
    %v2031 = vld [vmem:[#allocation6 + $0x158] sm:$0xff]
    %v2032 = vld [vmem:[#allocation6 + $0x160] sm:$0xff]
    %v2033 = vld [vmem:[#allocation6 + $0x168] sm:$0xff]
    %v2034 = vld [vmem:[#allocation6 + $0x170] sm:$0xff]
    %v2035 = vld [vmem:[#allocation6 + $0x178] sm:$0xff]
    %v2036 = vld [vmem:[#allocation6 + $0x180] sm:$0xff]
    %v2037 = vld [vmem:[#allocation6 + $0x188] sm:$0xff]
    %v2038 = vld [vmem:[#allocation6 + $0x190] sm:$0xff]
    %v2039 = vld [vmem:[#allocation6 + $0x198] sm:$0xff]
    %v2040 = vld [vmem:[#allocation6 + $0x1a0] sm:$0xff]
    %v2041 = vld [vmem:[#allocation6 + $0x1a8] sm:$0xff]
    %v2042 = vld [vmem:[#allocation6 + $0x1b0] sm:$0xff]
    %v2043 = vld [vmem:[#allocation6 + $0x1b8] sm:$0xff]
    %v2044 = vld [vmem:[#allocation6 + $0x1c0] sm:$0xff]
    %v2045 = vld [vmem:[#allocation6 + $0x1c8] sm:$0xff]
    %v2046 = vld [vmem:[#allocation6 + $0x1d0] sm:$0xff]
    %v2047 = vld [vmem:[#allocation6 + $0x1d8] sm:$0xff]
    %v2048 = vld [vmem:[#allocation6 + $0x1e0] sm:$0xff]
    %v2049 = vld [vmem:[#allocation6 + $0x1e8] sm:$0xff]
    %v2050 = vld [vmem:[#allocation6 + $0x1f0] sm:$0xff]
    %v2051 = vld [vmem:[#allocation6 + $0x1f8] sm:$0xff]
    %2052 = vmatpush.msra.mxu0 %v2048
    %2053 = vmatpush.msra.mxu0 %v2044
    %2054 = vmatpush.msra.mxu0 %v2040
    %2055 = vmatpush.msra.mxu0 %v2036
    %2056 = vmatpush.msra.mxu0 %v2032
    %2057 = vmatpush.msra.mxu0 %v2028
    %2058 = vmatpush.msra.mxu0 %v2024
    %2059 = vmatpush.msra.mxu0 %v2020
    %2060 = vmatpush.msra.mxu0 %v2016
    %2061 = vmatpush.msra.mxu0 %v2012
    %2062 = vmatpush.msra.mxu0 %v2008
    %2063 = vmatpush.msra.mxu0 %v2004
    %2064 = vmatpush.msra.mxu0 %v2000
    %2065 = vmatpush.msra.mxu0 %v1996
    %2066 = vmatpush.msra.mxu0 %v1992
    %2067 = vmatpush.msra.mxu0 %v1988
    %2068 = vmatmul.f32.gmra.mxu0 %v1963
    %v2069 = vpop.f32.mrf.mxu0
    %v2070 = vadd.f32 0.0, %v2069
    %2071 = vdwg.mxu0
    %2072 = vmatpush.msra.mxu0 %v2049
    %2073 = vmatpush.msra.mxu0 %v2045
    %2074 = vmatpush.msra.mxu0 %v2041
    %2075 = vmatpush.msra.mxu0 %v2037
    %2076 = vmatpush.msra.mxu0 %v2033
    %2077 = vmatpush.msra.mxu0 %v2029
    %2078 = vmatpush.msra.mxu0 %v2025
    %2079 = vmatpush.msra.mxu0 %v2021
    %2080 = vmatpush.msra.mxu0 %v2017
    %2081 = vmatpush.msra.mxu0 %v2013
    %2082 = vmatpush.msra.mxu0 %v2009
    %2083 = vmatpush.msra.mxu0 %v2005
    %2084 = vmatpush.msra.mxu0 %v2001
    %2085 = vmatpush.msra.mxu0 %v1997
    %2086 = vmatpush.msra.mxu0 %v1993
    %2087 = vmatpush.msra.mxu0 %v1989
    %2088 = vmatmul.f32.gmra.mxu0 %v1963
    %v2089 = vpop.f32.mrf.mxu0
    %v2090 = vadd.f32 0.0, %v2089
    %2091 = vdwg.mxu0
    %2092 = vmatpush.msra.mxu0 %v2050
    %2093 = vmatpush.msra.mxu0 %v2046
    %2094 = vmatpush.msra.mxu0 %v2042
    %2095 = vmatpush.msra.mxu0 %v2038
    %2096 = vmatpush.msra.mxu0 %v2034
    %2097 = vmatpush.msra.mxu0 %v2030
    %2098 = vmatpush.msra.mxu0 %v2026
    %2099 = vmatpush.msra.mxu0 %v2022
    %2100 = vmatpush.msra.mxu0 %v2018
    %2101 = vmatpush.msra.mxu0 %v2014
    %2102 = vmatpush.msra.mxu0 %v2010
    %2103 = vmatpush.msra.mxu0 %v2006
    %2104 = vmatpush.msra.mxu0 %v2002
    %2105 = vmatpush.msra.mxu0 %v1998
    %2106 = vmatpush.msra.mxu0 %v1994
    %2107 = vmatpush.msra.mxu0 %v1990
    %2108 = vmatmul.f32.gmra.mxu0 %v1963
    %v2109 = vpop.f32.mrf.mxu0
    %v2110 = vadd.f32 0.0, %v2109
    %2111 = vdwg.mxu0
    %2112 = vmatpush.msra.mxu0 %v2051
    %2113 = vmatpush.msra.mxu0 %v2047
    %2114 = vmatpush.msra.mxu0 %v2043
    %2115 = vmatpush.msra.mxu0 %v2039
    %2116 = vmatpush.msra.mxu0 %v2035
    %2117 = vmatpush.msra.mxu0 %v2031
    %2118 = vmatpush.msra.mxu0 %v2027
    %2119 = vmatpush.msra.mxu0 %v2023
    %2120 = vmatpush.msra.mxu0 %v2019
    %2121 = vmatpush.msra.mxu0 %v2015
    %2122 = vmatpush.msra.mxu0 %v2011
    %2123 = vmatpush.msra.mxu0 %v2007
    %2124 = vmatpush.msra.mxu0 %v2003
    %2125 = vmatpush.msra.mxu0 %v1999
    %2126 = vmatpush.msra.mxu0 %v1995
    %2127 = vmatpush.msra.mxu0 %v1991
    %2128 = vmatmul.f32.gmra.mxu0 %v1963
    %v2129 = vpop.f32.mrf.mxu0
    %v2130 = vadd.f32 0.0, %v2129
    %2131 = vdwg.mxu0
    %v2132 = vadd.f32 %v1979, %v2070
    %v2133 = vadd.f32 %v1980, %v2090
    %v2134 = vadd.f32 %v1981, %v2110
    %v2135 = vadd.f32 %v1982, %v2130
    %v2136 = vxor.u32 %v2132, 2147483648
    %v2137 = vmul.f32 %v2136, 1.442695
    %v2138 = vpow.pop %v2137
    %v2139 = vadd.f32 %v2138, 1.0
    %v2140 = vrcp.pop %v2139
    %v2141 = vmul.f32 %v2139, %v2140
    %v2142 = vsub.f32 1.0, %v2141
    %v2143 = vmul.f32 %v2140, %v2142
    %v2144 = vadd.f32 %v2140, %v2143
    %vm2145 = vweird.f32 %v2139
    %vm2146 = vweird.f32 %v2140
    %vm2147 = vmor %vm2145, %vm2146
    %v2148 = vsel %vm2147, %v2140, %v2144
    %v2149 = vand.u32 2147483647, %v2139
    %vm2150 = vcmp.eq.f32.partialorder %v2149, 8.507059e+37
    %v2151 = vand.u32 %v2139, 2147483648
    %v2152 = vor.u32 1.1754944e-38, %v2151
    %v2153 = vsel %vm2150, %v2152, %v2148
    %v2154 = vmul.f32 1.0, %v2153
    %v2155 = vxor.u32 %v2133, 2147483648
    %v2156 = vmul.f32 %v2155, 1.442695
    %v2157 = vpow.pop %v2156
    %v2158 = vadd.f32 %v2157, 1.0
    %v2159 = vrcp.pop %v2158
    %v2160 = vmul.f32 %v2158, %v2159
    %v2161 = vsub.f32 1.0, %v2160
    %v2162 = vmul.f32 %v2159, %v2161
    %v2163 = vadd.f32 %v2159, %v2162
    %vm2164 = vweird.f32 %v2158
    %vm2165 = vweird.f32 %v2159
    %vm2166 = vmor %vm2164, %vm2165
    %v2167 = vsel %vm2166, %v2159, %v2163
    %v2168 = vand.u32 2147483647, %v2158
    %vm2169 = vcmp.eq.f32.partialorder %v2168, 8.507059e+37
    %v2170 = vand.u32 %v2158, 2147483648
    %v2171 = vor.u32 1.1754944e-38, %v2170
    %v2172 = vsel %vm2169, %v2171, %v2167
    %v2173 = vmul.f32 1.0, %v2172
    %v2174 = vtanh.pop %v2134
    %v2175 = vxor.u32 %v2135, 2147483648
    %v2176 = vmul.f32 %v2175, 1.442695
    %v2177 = vpow.pop %v2176
    %v2178 = vadd.f32 %v2177, 1.0
    %v2179 = vrcp.pop %v2178
    %v2180 = vmul.f32 %v2178, %v2179
    %v2181 = vsub.f32 1.0, %v2180
    %v2182 = vmul.f32 %v2179, %v2181
    %v2183 = vadd.f32 %v2179, %v2182
    %vm2184 = vweird.f32 %v2178
    %vm2185 = vweird.f32 %v2179
    %vm2186 = vmor %vm2184, %vm2185
    %v2187 = vsel %vm2186, %v2179, %v2183
    %v2188 = vand.u32 2147483647, %v2178
    %vm2189 = vcmp.eq.f32.partialorder %v2188, 8.507059e+37
    %v2190 = vand.u32 %v2178, 2147483648
    %v2191 = vor.u32 1.1754944e-38, %v2190
    %v2192 = vsel %vm2189, %v2191, %v2187
    %v2193 = vmul.f32 1.0, %v2192
    %v2194 = vmul.f32 %v2173, %v1966
    %v2195 = vmul.f32 %v2154, %v2174
    %v2196 = vadd.f32 %v2194, %v2195
    %v2197 = vtanh.pop %v2196
    %v2198 = vmul.f32 %v2193, %v2197
    %v2199 = vld [vmem:[#allocation9] sm:$0xff]
    %v2200 = vld [vmem:[#allocation9 + $0x8] sm:$0xff]
    %v2201 = vld [vmem:[#allocation9 + $0x10] sm:$0xff]
    %v2202 = vld [vmem:[#allocation9 + $0x18] sm:$0xff]
    %v2203 = vld [vmem:[#allocation9 + $0x20] sm:$0xff]
    %v2204 = vld [vmem:[#allocation9 + $0x28] sm:$0xff]
    %v2205 = vld [vmem:[#allocation9 + $0x30] sm:$0xff]
    %v2206 = vld [vmem:[#allocation9 + $0x38] sm:$0xff]
    %v2207 = vld [vmem:[#allocation9 + $0x40] sm:$0xff]
    %v2208 = vld [vmem:[#allocation9 + $0x48] sm:$0xff]
    %v2209 = vld [vmem:[#allocation9 + $0x50] sm:$0xff]
    %v2210 = vld [vmem:[#allocation9 + $0x58] sm:$0xff]
    %v2211 = vld [vmem:[#allocation9 + $0x60] sm:$0xff]
    %v2212 = vld [vmem:[#allocation9 + $0x68] sm:$0xff]
    %v2213 = vld [vmem:[#allocation9 + $0x70] sm:$0xff]
    %v2214 = vld [vmem:[#allocation9 + $0x78] sm:$0xff]
    %v2215 = vld [vmem:[#allocation9 + $0x80] sm:$0xff]
    %v2216 = vld [vmem:[#allocation9 + $0x88] sm:$0xff]
    %v2217 = vld [vmem:[#allocation9 + $0x90] sm:$0xff]
    %v2218 = vld [vmem:[#allocation9 + $0x98] sm:$0xff]
    %v2219 = vld [vmem:[#allocation9 + $0xa0] sm:$0xff]
    %v2220 = vld [vmem:[#allocation9 + $0xa8] sm:$0xff]
    %v2221 = vld [vmem:[#allocation9 + $0xb0] sm:$0xff]
    %v2222 = vld [vmem:[#allocation9 + $0xb8] sm:$0xff]
    %v2223 = vld [vmem:[#allocation9 + $0xc0] sm:$0xff]
    %v2224 = vld [vmem:[#allocation9 + $0xc8] sm:$0xff]
    %v2225 = vld [vmem:[#allocation9 + $0xd0] sm:$0xff]
    %v2226 = vld [vmem:[#allocation9 + $0xd8] sm:$0xff]
    %v2227 = vld [vmem:[#allocation9 + $0xe0] sm:$0xff]
    %v2228 = vld [vmem:[#allocation9 + $0xe8] sm:$0xff]
    %v2229 = vld [vmem:[#allocation9 + $0xf0] sm:$0xff]
    %v2230 = vld [vmem:[#allocation9 + $0xf8] sm:$0xff]
    %v2231 = vld [vmem:[#allocation9 + $0x100] sm:$0xff]
    %v2232 = vld [vmem:[#allocation9 + $0x108] sm:$0xff]
    %v2233 = vld [vmem:[#allocation9 + $0x110] sm:$0xff]
    %v2234 = vld [vmem:[#allocation9 + $0x118] sm:$0xff]
    %v2235 = vld [vmem:[#allocation9 + $0x120] sm:$0xff]
    %v2236 = vld [vmem:[#allocation9 + $0x128] sm:$0xff]
    %v2237 = vld [vmem:[#allocation9 + $0x130] sm:$0xff]
    %v2238 = vld [vmem:[#allocation9 + $0x138] sm:$0xff]
    %v2239 = vld [vmem:[#allocation9 + $0x140] sm:$0xff]
    %v2240 = vld [vmem:[#allocation9 + $0x148] sm:$0xff]
    %v2241 = vld [vmem:[#allocation9 + $0x150] sm:$0xff]
    %v2242 = vld [vmem:[#allocation9 + $0x158] sm:$0xff]
    %v2243 = vld [vmem:[#allocation9 + $0x160] sm:$0xff]
    %v2244 = vld [vmem:[#allocation9 + $0x168] sm:$0xff]
    %v2245 = vld [vmem:[#allocation9 + $0x170] sm:$0xff]
    %v2246 = vld [vmem:[#allocation9 + $0x178] sm:$0xff]
    %v2247 = vld [vmem:[#allocation9 + $0x180] sm:$0xff]
    %v2248 = vld [vmem:[#allocation9 + $0x188] sm:$0xff]
    %v2249 = vld [vmem:[#allocation9 + $0x190] sm:$0xff]
    %v2250 = vld [vmem:[#allocation9 + $0x198] sm:$0xff]
    %v2251 = vld [vmem:[#allocation9 + $0x1a0] sm:$0xff]
    %v2252 = vld [vmem:[#allocation9 + $0x1a8] sm:$0xff]
    %v2253 = vld [vmem:[#allocation9 + $0x1b0] sm:$0xff]
    %v2254 = vld [vmem:[#allocation9 + $0x1b8] sm:$0xff]
    %v2255 = vld [vmem:[#allocation9 + $0x1c0] sm:$0xff]
    %v2256 = vld [vmem:[#allocation9 + $0x1c8] sm:$0xff]
    %v2257 = vld [vmem:[#allocation9 + $0x1d0] sm:$0xff]
    %v2258 = vld [vmem:[#allocation9 + $0x1d8] sm:$0xff]
    %v2259 = vld [vmem:[#allocation9 + $0x1e0] sm:$0xff]
    %v2260 = vld [vmem:[#allocation9 + $0x1e8] sm:$0xff]
    %v2261 = vld [vmem:[#allocation9 + $0x1f0] sm:$0xff]
    %v2262 = vld [vmem:[#allocation9 + $0x1f8] sm:$0xff]
    %2263 = vmatpush.msra.mxu0 %v2259
    %2264 = vmatpush.msra.mxu0 %v2255
    %2265 = vmatpush.msra.mxu0 %v2251
    %2266 = vmatpush.msra.mxu0 %v2247
    %2267 = vmatpush.msra.mxu0 %v2243
    %2268 = vmatpush.msra.mxu0 %v2239
    %2269 = vmatpush.msra.mxu0 %v2235
    %2270 = vmatpush.msra.mxu0 %v2231
    %2271 = vmatpush.msra.mxu0 %v2227
    %2272 = vmatpush.msra.mxu0 %v2223
    %2273 = vmatpush.msra.mxu0 %v2219
    %2274 = vmatpush.msra.mxu0 %v2215
    %2275 = vmatpush.msra.mxu0 %v2211
    %2276 = vmatpush.msra.mxu0 %v2207
    %2277 = vmatpush.msra.mxu0 %v2203
    %2278 = vmatpush.msra.mxu0 %v2199
    %2279 = vmatmul.f32.gmra.mxu0 %v1974
    %v2280 = vpop.f32.mrf.mxu0
    %v2281 = vadd.f32 0.0, %v2280
    %2282 = vdwg.mxu0
    %2283 = vmatpush.msra.mxu0 %v2260
    %2284 = vmatpush.msra.mxu0 %v2256
    %2285 = vmatpush.msra.mxu0 %v2252
    %2286 = vmatpush.msra.mxu0 %v2248
    %2287 = vmatpush.msra.mxu0 %v2244
    %2288 = vmatpush.msra.mxu0 %v2240
    %2289 = vmatpush.msra.mxu0 %v2236
    %2290 = vmatpush.msra.mxu0 %v2232
    %2291 = vmatpush.msra.mxu0 %v2228
    %2292 = vmatpush.msra.mxu0 %v2224
    %2293 = vmatpush.msra.mxu0 %v2220
    %2294 = vmatpush.msra.mxu0 %v2216
    %2295 = vmatpush.msra.mxu0 %v2212
    %2296 = vmatpush.msra.mxu0 %v2208
    %2297 = vmatpush.msra.mxu0 %v2204
    %2298 = vmatpush.msra.mxu0 %v2200
    %2299 = vmatmul.f32.gmra.mxu0 %v1974
    %v2300 = vpop.f32.mrf.mxu0
    %v2301 = vadd.f32 0.0, %v2300
    %2302 = vdwg.mxu0
    %2303 = vmatpush.msra.mxu0 %v2261
    %2304 = vmatpush.msra.mxu0 %v2257
    %2305 = vmatpush.msra.mxu0 %v2253
    %2306 = vmatpush.msra.mxu0 %v2249
    %2307 = vmatpush.msra.mxu0 %v2245
    %2308 = vmatpush.msra.mxu0 %v2241
    %2309 = vmatpush.msra.mxu0 %v2237
    %2310 = vmatpush.msra.mxu0 %v2233
    %2311 = vmatpush.msra.mxu0 %v2229
    %2312 = vmatpush.msra.mxu0 %v2225
    %2313 = vmatpush.msra.mxu0 %v2221
    %2314 = vmatpush.msra.mxu0 %v2217
    %2315 = vmatpush.msra.mxu0 %v2213
    %2316 = vmatpush.msra.mxu0 %v2209
    %2317 = vmatpush.msra.mxu0 %v2205
    %2318 = vmatpush.msra.mxu0 %v2201
    %2319 = vmatmul.f32.gmra.mxu0 %v1974
    %v2320 = vpop.f32.mrf.mxu0
    %v2321 = vadd.f32 0.0, %v2320
    %2322 = vdwg.mxu0
    %2323 = vmatpush.msra.mxu0 %v2262
    %2324 = vmatpush.msra.mxu0 %v2258
    %2325 = vmatpush.msra.mxu0 %v2254
    %2326 = vmatpush.msra.mxu0 %v2250
    %2327 = vmatpush.msra.mxu0 %v2246
    %2328 = vmatpush.msra.mxu0 %v2242
    %2329 = vmatpush.msra.mxu0 %v2238
    %2330 = vmatpush.msra.mxu0 %v2234
    %2331 = vmatpush.msra.mxu0 %v2230
    %2332 = vmatpush.msra.mxu0 %v2226
    %2333 = vmatpush.msra.mxu0 %v2222
    %2334 = vmatpush.msra.mxu0 %v2218
    %2335 = vmatpush.msra.mxu0 %v2214
    %2336 = vmatpush.msra.mxu0 %v2210
    %2337 = vmatpush.msra.mxu0 %v2206
    %2338 = vmatpush.msra.mxu0 %v2202
    %2339 = vmatmul.f32.gmra.mxu0 %v1974
    %v2340 = vpop.f32.mrf.mxu0
    %v2341 = vadd.f32 0.0, %v2340
    %2342 = vdwg.mxu0
    %v2343 = vadd.f32 %v1984, %v2281
    %v2344 = vadd.f32 %v1985, %v2301
    %v2345 = vadd.f32 %v1986, %v2321
    %v2346 = vadd.f32 %v1987, %v2341
    %v2347 = vxor.u32 %v2343, 2147483648
    %v2348 = vmul.f32 %v2347, 1.442695
    %v2349 = vpow.pop %v2348
    %v2350 = vadd.f32 %v2349, 1.0
    %v2351 = vrcp.pop %v2350
    %v2352 = vmul.f32 %v2350, %v2351
    %v2353 = vsub.f32 1.0, %v2352
    %v2354 = vmul.f32 %v2351, %v2353
    %v2355 = vadd.f32 %v2351, %v2354
    %vm2356 = vweird.f32 %v2350
    %vm2357 = vweird.f32 %v2351
    %vm2358 = vmor %vm2356, %vm2357
    %v2359 = vsel %vm2358, %v2351, %v2355
    %v2360 = vand.u32 2147483647, %v2350
    %vm2361 = vcmp.eq.f32.partialorder %v2360, 8.507059e+37
    %v2362 = vand.u32 %v2350, 2147483648
    %v2363 = vor.u32 1.1754944e-38, %v2362
    %v2364 = vsel %vm2361, %v2363, %v2359
    %v2365 = vmul.f32 1.0, %v2364
    %v2366 = vxor.u32 %v2344, 2147483648
    %v2367 = vmul.f32 %v2366, 1.442695
    %v2368 = vpow.pop %v2367
    %v2369 = vadd.f32 %v2368, 1.0
    %v2370 = vrcp.pop %v2369
    %v2371 = vmul.f32 %v2369, %v2370
    %v2372 = vsub.f32 1.0, %v2371
    %v2373 = vmul.f32 %v2370, %v2372
    %v2374 = vadd.f32 %v2370, %v2373
    %vm2375 = vweird.f32 %v2369
    %vm2376 = vweird.f32 %v2370
    %vm2377 = vmor %vm2375, %vm2376
    %v2378 = vsel %vm2377, %v2370, %v2374
    %v2379 = vand.u32 2147483647, %v2369
    %vm2380 = vcmp.eq.f32.partialorder %v2379, 8.507059e+37
    %v2381 = vand.u32 %v2369, 2147483648
    %v2382 = vor.u32 1.1754944e-38, %v2381
    %v2383 = vsel %vm2380, %v2382, %v2378
    %v2384 = vmul.f32 1.0, %v2383
    %v2385 = vtanh.pop %v2345
    %v2386 = vxor.u32 %v2346, 2147483648
    %v2387 = vmul.f32 %v2386, 1.442695
    %v2388 = vpow.pop %v2387
    %v2389 = vadd.f32 %v2388, 1.0
    %v2390 = vrcp.pop %v2389
    %v2391 = vmul.f32 %v2389, %v2390
    %v2392 = vsub.f32 1.0, %v2391
    %v2393 = vmul.f32 %v2390, %v2392
    %v2394 = vadd.f32 %v2390, %v2393
    %vm2395 = vweird.f32 %v2389
    %vm2396 = vweird.f32 %v2390
    %vm2397 = vmor %vm2395, %vm2396
    %v2398 = vsel %vm2397, %v2390, %v2394
    %v2399 = vand.u32 2147483647, %v2389
    %vm2400 = vcmp.eq.f32.partialorder %v2399, 8.507059e+37
    %v2401 = vand.u32 %v2389, 2147483648
    %v2402 = vor.u32 1.1754944e-38, %v2401
    %v2403 = vsel %vm2400, %v2402, %v2398
    %v2404 = vmul.f32 1.0, %v2403
    %v2405 = vmul.f32 %v2384, %v1977
    %v2406 = vmul.f32 %v2365, %v2385
    %v2407 = vadd.f32 %v2405, %v2406
    %v2408 = vtanh.pop %v2407
    %v2409 = vmul.f32 %v2404, %v2408
    %vm2410 = vcmp.gt.s32.totalorder %v94, 3
    %v2411 = vsel %vm2410, 1, 0
    %v2412 = vcvt.s32.f32 %v2411
    %vm2413 = vcmp.gt.s32.totalorder %v94, 4
    %v2414 = vsel %vm2413, 1, 0
    %v2415 = vcvt.s32.f32 %v2414
    %2417 = vset.pattern.permute.xlu0 0
    %2418 = vperm.xlu0 %2417, %v2412
    %v2419 = vpop.permute.xlu0 %2418
    %v2421 = vmul.f32 %v2419, %v2198
    %s2422 = scalar_lea.vmem [#allocation3], 24
    %2423 = vst [vmem:[%s2422] sm:$0xff] %v2421
    %2425 = vset.pattern.permute.xlu0 0
    %2426 = vperm.xlu0 %2425, %v2415
    %v2427 = vpop.permute.xlu0 %2426
    %v2429 = vmul.f32 %v2427, %v2409
    %s2430 = scalar_lea.vmem [#allocation4], 32
    %2431 = vst [vmem:[%s2430] sm:$0xff] %v2429
    %v2432 = vsub.f32 1.0, %v2412
    %2434 = vset.pattern.permute.xlu0 0
    %2435 = vperm.xlu0 %2434, %v2432
    %v2436 = vpop.permute.xlu0 %2435
    %v2438 = vmul.f32 %v2436, %v1963
    %v2439 = vadd.f32 %v2421, %v2438
    %v2440 = vmul.f32 %v2419, %v2196
    %v2441 = vmul.f32 %v2436, %v1966
    %v2442 = vadd.f32 %v2440, %v2441
    %v2443 = vsub.f32 1.0, %v2415
    %2445 = vset.pattern.permute.xlu0 0
    %2446 = vperm.xlu0 %2445, %v2443
    %v2447 = vpop.permute.xlu0 %2446
    %v2449 = vmul.f32 %v2447, %v1974
    %v2450 = vadd.f32 %v2429, %v2449
    %v2451 = vmul.f32 %v2427, %v2407
    %v2452 = vmul.f32 %v2447, %v1977
    %v2453 = vadd.f32 %v2451, %v2452
    %v2454 = vld [vmem:[%s1983] sm:$0xff]
    %v2455 = vld [vmem:[%s1983 + $0x8] sm:$0xff]
    %v2456 = vld [vmem:[%s1983 + $0x10] sm:$0xff]
    %v2457 = vld [vmem:[%s1983 + $0x18] sm:$0xff]
    %v2458 = vld [vmem:[%s1978 + $0x20] sm:$0xff]
    %v2459 = vld [vmem:[%s1978 + $0x28] sm:$0xff]
    %v2460 = vld [vmem:[%s1978 + $0x30] sm:$0xff]
    %v2461 = vld [vmem:[%s1978 + $0x38] sm:$0xff]
    %v2462 = vld [vmem:[#allocation6] sm:$0xff]
    %v2463 = vld [vmem:[#allocation6 + $0x8] sm:$0xff]
    %v2464 = vld [vmem:[#allocation6 + $0x10] sm:$0xff]
    %v2465 = vld [vmem:[#allocation6 + $0x18] sm:$0xff]
    %v2466 = vld [vmem:[#allocation6 + $0x20] sm:$0xff]
    %v2467 = vld [vmem:[#allocation6 + $0x28] sm:$0xff]
    %v2468 = vld [vmem:[#allocation6 + $0x30] sm:$0xff]
    %v2469 = vld [vmem:[#allocation6 + $0x38] sm:$0xff]
    %v2470 = vld [vmem:[#allocation6 + $0x40] sm:$0xff]
    %v2471 = vld [vmem:[#allocation6 + $0x48] sm:$0xff]
    %v2472 = vld [vmem:[#allocation6 + $0x50] sm:$0xff]
    %v2473 = vld [vmem:[#allocation6 + $0x58] sm:$0xff]
    %v2474 = vld [vmem:[#allocation6 + $0x60] sm:$0xff]
    %v2475 = vld [vmem:[#allocation6 + $0x68] sm:$0xff]
    %v2476 = vld [vmem:[#allocation6 + $0x70] sm:$0xff]
    %v2477 = vld [vmem:[#allocation6 + $0x78] sm:$0xff]
    %v2478 = vld [vmem:[#allocation6 + $0x80] sm:$0xff]
    %v2479 = vld [vmem:[#allocation6 + $0x88] sm:$0xff]
    %v2480 = vld [vmem:[#allocation6 + $0x90] sm:$0xff]
    %v2481 = vld [vmem:[#allocation6 + $0x98] sm:$0xff]
    %v2482 = vld [vmem:[#allocation6 + $0xa0] sm:$0xff]
    %v2483 = vld [vmem:[#allocation6 + $0xa8] sm:$0xff]
    %v2484 = vld [vmem:[#allocation6 + $0xb0] sm:$0xff]
    %v2485 = vld [vmem:[#allocation6 + $0xb8] sm:$0xff]
    %v2486 = vld [vmem:[#allocation6 + $0xc0] sm:$0xff]
    %v2487 = vld [vmem:[#allocation6 + $0xc8] sm:$0xff]
    %v2488 = vld [vmem:[#allocation6 + $0xd0] sm:$0xff]
    %v2489 = vld [vmem:[#allocation6 + $0xd8] sm:$0xff]
    %v2490 = vld [vmem:[#allocation6 + $0xe0] sm:$0xff]
    %v2491 = vld [vmem:[#allocation6 + $0xe8] sm:$0xff]
    %v2492 = vld [vmem:[#allocation6 + $0xf0] sm:$0xff]
    %v2493 = vld [vmem:[#allocation6 + $0xf8] sm:$0xff]
    %v2494 = vld [vmem:[#allocation6 + $0x100] sm:$0xff]
    %v2495 = vld [vmem:[#allocation6 + $0x108] sm:$0xff]
    %v2496 = vld [vmem:[#allocation6 + $0x110] sm:$0xff]
    %v2497 = vld [vmem:[#allocation6 + $0x118] sm:$0xff]
    %v2498 = vld [vmem:[#allocation6 + $0x120] sm:$0xff]
    %v2499 = vld [vmem:[#allocation6 + $0x128] sm:$0xff]
    %v2500 = vld [vmem:[#allocation6 + $0x130] sm:$0xff]
    %v2501 = vld [vmem:[#allocation6 + $0x138] sm:$0xff]
    %v2502 = vld [vmem:[#allocation6 + $0x140] sm:$0xff]
    %v2503 = vld [vmem:[#allocation6 + $0x148] sm:$0xff]
    %v2504 = vld [vmem:[#allocation6 + $0x150] sm:$0xff]
    %v2505 = vld [vmem:[#allocation6 + $0x158] sm:$0xff]
    %v2506 = vld [vmem:[#allocation6 + $0x160] sm:$0xff]
    %v2507 = vld [vmem:[#allocation6 + $0x168] sm:$0xff]
    %v2508 = vld [vmem:[#allocation6 + $0x170] sm:$0xff]
    %v2509 = vld [vmem:[#allocation6 + $0x178] sm:$0xff]
    %v2510 = vld [vmem:[#allocation6 + $0x180] sm:$0xff]
    %v2511 = vld [vmem:[#allocation6 + $0x188] sm:$0xff]
    %v2512 = vld [vmem:[#allocation6 + $0x190] sm:$0xff]
    %v2513 = vld [vmem:[#allocation6 + $0x198] sm:$0xff]
    %v2514 = vld [vmem:[#allocation6 + $0x1a0] sm:$0xff]
    %v2515 = vld [vmem:[#allocation6 + $0x1a8] sm:$0xff]
    %v2516 = vld [vmem:[#allocation6 + $0x1b0] sm:$0xff]
    %v2517 = vld [vmem:[#allocation6 + $0x1b8] sm:$0xff]
    %v2518 = vld [vmem:[#allocation6 + $0x1c0] sm:$0xff]
    %v2519 = vld [vmem:[#allocation6 + $0x1c8] sm:$0xff]
    %v2520 = vld [vmem:[#allocation6 + $0x1d0] sm:$0xff]
    %v2521 = vld [vmem:[#allocation6 + $0x1d8] sm:$0xff]
    %v2522 = vld [vmem:[#allocation6 + $0x1e0] sm:$0xff]
    %v2523 = vld [vmem:[#allocation6 + $0x1e8] sm:$0xff]
    %v2524 = vld [vmem:[#allocation6 + $0x1f0] sm:$0xff]
    %v2525 = vld [vmem:[#allocation6 + $0x1f8] sm:$0xff]
    %2526 = vmatpush.msra.mxu0 %v2522
    %2527 = vmatpush.msra.mxu0 %v2518
    %2528 = vmatpush.msra.mxu0 %v2514
    %2529 = vmatpush.msra.mxu0 %v2510
    %2530 = vmatpush.msra.mxu0 %v2506
    %2531 = vmatpush.msra.mxu0 %v2502
    %2532 = vmatpush.msra.mxu0 %v2498
    %2533 = vmatpush.msra.mxu0 %v2494
    %2534 = vmatpush.msra.mxu0 %v2490
    %2535 = vmatpush.msra.mxu0 %v2486
    %2536 = vmatpush.msra.mxu0 %v2482
    %2537 = vmatpush.msra.mxu0 %v2478
    %2538 = vmatpush.msra.mxu0 %v2474
    %2539 = vmatpush.msra.mxu0 %v2470
    %2540 = vmatpush.msra.mxu0 %v2466
    %2541 = vmatpush.msra.mxu0 %v2462
    %2542 = vmatmul.f32.gmra.mxu0 %v2439
    %v2543 = vpop.f32.mrf.mxu0
    %v2544 = vadd.f32 0.0, %v2543
    %2545 = vdwg.mxu0
    %2546 = vmatpush.msra.mxu0 %v2523
    %2547 = vmatpush.msra.mxu0 %v2519
    %2548 = vmatpush.msra.mxu0 %v2515
    %2549 = vmatpush.msra.mxu0 %v2511
    %2550 = vmatpush.msra.mxu0 %v2507
    %2551 = vmatpush.msra.mxu0 %v2503
    %2552 = vmatpush.msra.mxu0 %v2499
    %2553 = vmatpush.msra.mxu0 %v2495
    %2554 = vmatpush.msra.mxu0 %v2491
    %2555 = vmatpush.msra.mxu0 %v2487
    %2556 = vmatpush.msra.mxu0 %v2483
    %2557 = vmatpush.msra.mxu0 %v2479
    %2558 = vmatpush.msra.mxu0 %v2475
    %2559 = vmatpush.msra.mxu0 %v2471
    %2560 = vmatpush.msra.mxu0 %v2467
    %2561 = vmatpush.msra.mxu0 %v2463
    %2562 = vmatmul.f32.gmra.mxu0 %v2439
    %v2563 = vpop.f32.mrf.mxu0
    %v2564 = vadd.f32 0.0, %v2563
    %2565 = vdwg.mxu0
    %2566 = vmatpush.msra.mxu0 %v2524
    %2567 = vmatpush.msra.mxu0 %v2520
    %2568 = vmatpush.msra.mxu0 %v2516
    %2569 = vmatpush.msra.mxu0 %v2512
    %2570 = vmatpush.msra.mxu0 %v2508
    %2571 = vmatpush.msra.mxu0 %v2504
    %2572 = vmatpush.msra.mxu0 %v2500
    %2573 = vmatpush.msra.mxu0 %v2496
    %2574 = vmatpush.msra.mxu0 %v2492
    %2575 = vmatpush.msra.mxu0 %v2488
    %2576 = vmatpush.msra.mxu0 %v2484
    %2577 = vmatpush.msra.mxu0 %v2480
    %2578 = vmatpush.msra.mxu0 %v2476
    %2579 = vmatpush.msra.mxu0 %v2472
    %2580 = vmatpush.msra.mxu0 %v2468
    %2581 = vmatpush.msra.mxu0 %v2464
    %2582 = vmatmul.f32.gmra.mxu0 %v2439
    %v2583 = vpop.f32.mrf.mxu0
    %v2584 = vadd.f32 0.0, %v2583
    %2585 = vdwg.mxu0
    %2586 = vmatpush.msra.mxu0 %v2525
    %2587 = vmatpush.msra.mxu0 %v2521
    %2588 = vmatpush.msra.mxu0 %v2517
    %2589 = vmatpush.msra.mxu0 %v2513
    %2590 = vmatpush.msra.mxu0 %v2509
    %2591 = vmatpush.msra.mxu0 %v2505
    %2592 = vmatpush.msra.mxu0 %v2501
    %2593 = vmatpush.msra.mxu0 %v2497
    %2594 = vmatpush.msra.mxu0 %v2493
    %2595 = vmatpush.msra.mxu0 %v2489
    %2596 = vmatpush.msra.mxu0 %v2485
    %2597 = vmatpush.msra.mxu0 %v2481
    %2598 = vmatpush.msra.mxu0 %v2477
    %2599 = vmatpush.msra.mxu0 %v2473
    %2600 = vmatpush.msra.mxu0 %v2469
    %2601 = vmatpush.msra.mxu0 %v2465
    %2602 = vmatmul.f32.gmra.mxu0 %v2439
    %v2603 = vpop.f32.mrf.mxu0
    %v2604 = vadd.f32 0.0, %v2603
    %2605 = vdwg.mxu0
    %v2606 = vadd.f32 %v2454, %v2544
    %v2607 = vadd.f32 %v2455, %v2564
    %v2608 = vadd.f32 %v2456, %v2584
    %v2609 = vadd.f32 %v2457, %v2604
    %v2610 = vxor.u32 %v2606, 2147483648
    %v2611 = vmul.f32 %v2610, 1.442695
    %v2612 = vpow.pop %v2611
    %v2613 = vadd.f32 %v2612, 1.0
    %v2614 = vrcp.pop %v2613
    %v2615 = vmul.f32 %v2613, %v2614
    %v2616 = vsub.f32 1.0, %v2615
    %v2617 = vmul.f32 %v2614, %v2616
    %v2618 = vadd.f32 %v2614, %v2617
    %vm2619 = vweird.f32 %v2613
    %vm2620 = vweird.f32 %v2614
    %vm2621 = vmor %vm2619, %vm2620
    %v2622 = vsel %vm2621, %v2614, %v2618
    %v2623 = vand.u32 2147483647, %v2613
    %vm2624 = vcmp.eq.f32.partialorder %v2623, 8.507059e+37
    %v2625 = vand.u32 %v2613, 2147483648
    %v2626 = vor.u32 1.1754944e-38, %v2625
    %v2627 = vsel %vm2624, %v2626, %v2622
    %v2628 = vmul.f32 1.0, %v2627
    %v2629 = vxor.u32 %v2607, 2147483648
    %v2630 = vmul.f32 %v2629, 1.442695
    %v2631 = vpow.pop %v2630
    %v2632 = vadd.f32 %v2631, 1.0
    %v2633 = vrcp.pop %v2632
    %v2634 = vmul.f32 %v2632, %v2633
    %v2635 = vsub.f32 1.0, %v2634
    %v2636 = vmul.f32 %v2633, %v2635
    %v2637 = vadd.f32 %v2633, %v2636
    %vm2638 = vweird.f32 %v2632
    %vm2639 = vweird.f32 %v2633
    %vm2640 = vmor %vm2638, %vm2639
    %v2641 = vsel %vm2640, %v2633, %v2637
    %v2642 = vand.u32 2147483647, %v2632
    %vm2643 = vcmp.eq.f32.partialorder %v2642, 8.507059e+37
    %v2644 = vand.u32 %v2632, 2147483648
    %v2645 = vor.u32 1.1754944e-38, %v2644
    %v2646 = vsel %vm2643, %v2645, %v2641
    %v2647 = vmul.f32 1.0, %v2646
    %v2648 = vtanh.pop %v2608
    %v2649 = vxor.u32 %v2609, 2147483648
    %v2650 = vmul.f32 %v2649, 1.442695
    %v2651 = vpow.pop %v2650
    %v2652 = vadd.f32 %v2651, 1.0
    %v2653 = vrcp.pop %v2652
    %v2654 = vmul.f32 %v2652, %v2653
    %v2655 = vsub.f32 1.0, %v2654
    %v2656 = vmul.f32 %v2653, %v2655
    %v2657 = vadd.f32 %v2653, %v2656
    %vm2658 = vweird.f32 %v2652
    %vm2659 = vweird.f32 %v2653
    %vm2660 = vmor %vm2658, %vm2659
    %v2661 = vsel %vm2660, %v2653, %v2657
    %v2662 = vand.u32 2147483647, %v2652
    %vm2663 = vcmp.eq.f32.partialorder %v2662, 8.507059e+37
    %v2664 = vand.u32 %v2652, 2147483648
    %v2665 = vor.u32 1.1754944e-38, %v2664
    %v2666 = vsel %vm2663, %v2665, %v2661
    %v2667 = vmul.f32 1.0, %v2666
    %v2668 = vmul.f32 %v2647, %v2442
    %v2669 = vmul.f32 %v2628, %v2648
    %v2670 = vadd.f32 %v2668, %v2669
    %v2671 = vtanh.pop %v2670
    %v2672 = vmul.f32 %v2667, %v2671
    %v2673 = vld [vmem:[#allocation9] sm:$0xff]
    %v2674 = vld [vmem:[#allocation9 + $0x8] sm:$0xff]
    %v2675 = vld [vmem:[#allocation9 + $0x10] sm:$0xff]
    %v2676 = vld [vmem:[#allocation9 + $0x18] sm:$0xff]
    %v2677 = vld [vmem:[#allocation9 + $0x20] sm:$0xff]
    %v2678 = vld [vmem:[#allocation9 + $0x28] sm:$0xff]
    %v2679 = vld [vmem:[#allocation9 + $0x30] sm:$0xff]
    %v2680 = vld [vmem:[#allocation9 + $0x38] sm:$0xff]
    %v2681 = vld [vmem:[#allocation9 + $0x40] sm:$0xff]
    %v2682 = vld [vmem:[#allocation9 + $0x48] sm:$0xff]
    %v2683 = vld [vmem:[#allocation9 + $0x50] sm:$0xff]
    %v2684 = vld [vmem:[#allocation9 + $0x58] sm:$0xff]
    %v2685 = vld [vmem:[#allocation9 + $0x60] sm:$0xff]
    %v2686 = vld [vmem:[#allocation9 + $0x68] sm:$0xff]
    %v2687 = vld [vmem:[#allocation9 + $0x70] sm:$0xff]
    %v2688 = vld [vmem:[#allocation9 + $0x78] sm:$0xff]
    %v2689 = vld [vmem:[#allocation9 + $0x80] sm:$0xff]
    %v2690 = vld [vmem:[#allocation9 + $0x88] sm:$0xff]
    %v2691 = vld [vmem:[#allocation9 + $0x90] sm:$0xff]
    %v2692 = vld [vmem:[#allocation9 + $0x98] sm:$0xff]
    %v2693 = vld [vmem:[#allocation9 + $0xa0] sm:$0xff]
    %v2694 = vld [vmem:[#allocation9 + $0xa8] sm:$0xff]
    %v2695 = vld [vmem:[#allocation9 + $0xb0] sm:$0xff]
    %v2696 = vld [vmem:[#allocation9 + $0xb8] sm:$0xff]
    %v2697 = vld [vmem:[#allocation9 + $0xc0] sm:$0xff]
    %v2698 = vld [vmem:[#allocation9 + $0xc8] sm:$0xff]
    %v2699 = vld [vmem:[#allocation9 + $0xd0] sm:$0xff]
    %v2700 = vld [vmem:[#allocation9 + $0xd8] sm:$0xff]
    %v2701 = vld [vmem:[#allocation9 + $0xe0] sm:$0xff]
    %v2702 = vld [vmem:[#allocation9 + $0xe8] sm:$0xff]
    %v2703 = vld [vmem:[#allocation9 + $0xf0] sm:$0xff]
    %v2704 = vld [vmem:[#allocation9 + $0xf8] sm:$0xff]
    %v2705 = vld [vmem:[#allocation9 + $0x100] sm:$0xff]
    %v2706 = vld [vmem:[#allocation9 + $0x108] sm:$0xff]
    %v2707 = vld [vmem:[#allocation9 + $0x110] sm:$0xff]
    %v2708 = vld [vmem:[#allocation9 + $0x118] sm:$0xff]
    %v2709 = vld [vmem:[#allocation9 + $0x120] sm:$0xff]
    %v2710 = vld [vmem:[#allocation9 + $0x128] sm:$0xff]
    %v2711 = vld [vmem:[#allocation9 + $0x130] sm:$0xff]
    %v2712 = vld [vmem:[#allocation9 + $0x138] sm:$0xff]
    %v2713 = vld [vmem:[#allocation9 + $0x140] sm:$0xff]
    %v2714 = vld [vmem:[#allocation9 + $0x148] sm:$0xff]
    %v2715 = vld [vmem:[#allocation9 + $0x150] sm:$0xff]
    %v2716 = vld [vmem:[#allocation9 + $0x158] sm:$0xff]
    %v2717 = vld [vmem:[#allocation9 + $0x160] sm:$0xff]
    %v2718 = vld [vmem:[#allocation9 + $0x168] sm:$0xff]
    %v2719 = vld [vmem:[#allocation9 + $0x170] sm:$0xff]
    %v2720 = vld [vmem:[#allocation9 + $0x178] sm:$0xff]
    %v2721 = vld [vmem:[#allocation9 + $0x180] sm:$0xff]
    %v2722 = vld [vmem:[#allocation9 + $0x188] sm:$0xff]
    %v2723 = vld [vmem:[#allocation9 + $0x190] sm:$0xff]
    %v2724 = vld [vmem:[#allocation9 + $0x198] sm:$0xff]
    %v2725 = vld [vmem:[#allocation9 + $0x1a0] sm:$0xff]
    %v2726 = vld [vmem:[#allocation9 + $0x1a8] sm:$0xff]
    %v2727 = vld [vmem:[#allocation9 + $0x1b0] sm:$0xff]
    %v2728 = vld [vmem:[#allocation9 + $0x1b8] sm:$0xff]
    %v2729 = vld [vmem:[#allocation9 + $0x1c0] sm:$0xff]
    %v2730 = vld [vmem:[#allocation9 + $0x1c8] sm:$0xff]
    %v2731 = vld [vmem:[#allocation9 + $0x1d0] sm:$0xff]
    %v2732 = vld [vmem:[#allocation9 + $0x1d8] sm:$0xff]
    %v2733 = vld [vmem:[#allocation9 + $0x1e0] sm:$0xff]
    %v2734 = vld [vmem:[#allocation9 + $0x1e8] sm:$0xff]
    %v2735 = vld [vmem:[#allocation9 + $0x1f0] sm:$0xff]
    %v2736 = vld [vmem:[#allocation9 + $0x1f8] sm:$0xff]
    %2737 = vmatpush.msra.mxu0 %v2733
    %2738 = vmatpush.msra.mxu0 %v2729
    %2739 = vmatpush.msra.mxu0 %v2725
    %2740 = vmatpush.msra.mxu0 %v2721
    %2741 = vmatpush.msra.mxu0 %v2717
    %2742 = vmatpush.msra.mxu0 %v2713
    %2743 = vmatpush.msra.mxu0 %v2709
    %2744 = vmatpush.msra.mxu0 %v2705
    %2745 = vmatpush.msra.mxu0 %v2701
    %2746 = vmatpush.msra.mxu0 %v2697
    %2747 = vmatpush.msra.mxu0 %v2693
    %2748 = vmatpush.msra.mxu0 %v2689
    %2749 = vmatpush.msra.mxu0 %v2685
    %2750 = vmatpush.msra.mxu0 %v2681
    %2751 = vmatpush.msra.mxu0 %v2677
    %2752 = vmatpush.msra.mxu0 %v2673
    %2753 = vmatmul.f32.gmra.mxu0 %v2450
    %v2754 = vpop.f32.mrf.mxu0
    %v2755 = vadd.f32 0.0, %v2754
    %2756 = vdwg.mxu0
    %2757 = vmatpush.msra.mxu0 %v2734
    %2758 = vmatpush.msra.mxu0 %v2730
    %2759 = vmatpush.msra.mxu0 %v2726
    %2760 = vmatpush.msra.mxu0 %v2722
    %2761 = vmatpush.msra.mxu0 %v2718
    %2762 = vmatpush.msra.mxu0 %v2714
    %2763 = vmatpush.msra.mxu0 %v2710
    %2764 = vmatpush.msra.mxu0 %v2706
    %2765 = vmatpush.msra.mxu0 %v2702
    %2766 = vmatpush.msra.mxu0 %v2698
    %2767 = vmatpush.msra.mxu0 %v2694
    %2768 = vmatpush.msra.mxu0 %v2690
    %2769 = vmatpush.msra.mxu0 %v2686
    %2770 = vmatpush.msra.mxu0 %v2682
    %2771 = vmatpush.msra.mxu0 %v2678
    %2772 = vmatpush.msra.mxu0 %v2674
    %2773 = vmatmul.f32.gmra.mxu0 %v2450
    %v2774 = vpop.f32.mrf.mxu0
    %v2775 = vadd.f32 0.0, %v2774
    %2776 = vdwg.mxu0
    %2777 = vmatpush.msra.mxu0 %v2735
    %2778 = vmatpush.msra.mxu0 %v2731
    %2779 = vmatpush.msra.mxu0 %v2727
    %2780 = vmatpush.msra.mxu0 %v2723
    %2781 = vmatpush.msra.mxu0 %v2719
    %2782 = vmatpush.msra.mxu0 %v2715
    %2783 = vmatpush.msra.mxu0 %v2711
    %2784 = vmatpush.msra.mxu0 %v2707
    %2785 = vmatpush.msra.mxu0 %v2703
    %2786 = vmatpush.msra.mxu0 %v2699
    %2787 = vmatpush.msra.mxu0 %v2695
    %2788 = vmatpush.msra.mxu0 %v2691
    %2789 = vmatpush.msra.mxu0 %v2687
    %2790 = vmatpush.msra.mxu0 %v2683
    %2791 = vmatpush.msra.mxu0 %v2679
    %2792 = vmatpush.msra.mxu0 %v2675
    %2793 = vmatmul.f32.gmra.mxu0 %v2450
    %v2794 = vpop.f32.mrf.mxu0
    %v2795 = vadd.f32 0.0, %v2794
    %2796 = vdwg.mxu0
    %2797 = vmatpush.msra.mxu0 %v2736
    %2798 = vmatpush.msra.mxu0 %v2732
    %2799 = vmatpush.msra.mxu0 %v2728
    %2800 = vmatpush.msra.mxu0 %v2724
    %2801 = vmatpush.msra.mxu0 %v2720
    %2802 = vmatpush.msra.mxu0 %v2716
    %2803 = vmatpush.msra.mxu0 %v2712
    %2804 = vmatpush.msra.mxu0 %v2708
    %2805 = vmatpush.msra.mxu0 %v2704
    %2806 = vmatpush.msra.mxu0 %v2700
    %2807 = vmatpush.msra.mxu0 %v2696
    %2808 = vmatpush.msra.mxu0 %v2692
    %2809 = vmatpush.msra.mxu0 %v2688
    %2810 = vmatpush.msra.mxu0 %v2684
    %2811 = vmatpush.msra.mxu0 %v2680
    %2812 = vmatpush.msra.mxu0 %v2676
    %2813 = vmatmul.f32.gmra.mxu0 %v2450
    %v2814 = vpop.f32.mrf.mxu0
    %v2815 = vadd.f32 0.0, %v2814
    %2816 = vdwg.mxu0
    %v2817 = vadd.f32 %v2458, %v2755
    %v2818 = vadd.f32 %v2459, %v2775
    %v2819 = vadd.f32 %v2460, %v2795
    %v2820 = vadd.f32 %v2461, %v2815
    %v2821 = vxor.u32 %v2817, 2147483648
    %v2822 = vmul.f32 %v2821, 1.442695
    %v2823 = vpow.pop %v2822
    %v2824 = vadd.f32 %v2823, 1.0
    %v2825 = vrcp.pop %v2824
    %v2826 = vmul.f32 %v2824, %v2825
    %v2827 = vsub.f32 1.0, %v2826
    %v2828 = vmul.f32 %v2825, %v2827
    %v2829 = vadd.f32 %v2825, %v2828
    %vm2830 = vweird.f32 %v2824
    %vm2831 = vweird.f32 %v2825
    %vm2832 = vmor %vm2830, %vm2831
    %v2833 = vsel %vm2832, %v2825, %v2829
    %v2834 = vand.u32 2147483647, %v2824
    %vm2835 = vcmp.eq.f32.partialorder %v2834, 8.507059e+37
    %v2836 = vand.u32 %v2824, 2147483648
    %v2837 = vor.u32 1.1754944e-38, %v2836
    %v2838 = vsel %vm2835, %v2837, %v2833
    %v2839 = vmul.f32 1.0, %v2838
    %v2840 = vxor.u32 %v2818, 2147483648
    %v2841 = vmul.f32 %v2840, 1.442695
    %v2842 = vpow.pop %v2841
    %v2843 = vadd.f32 %v2842, 1.0
    %v2844 = vrcp.pop %v2843
    %v2845 = vmul.f32 %v2843, %v2844
    %v2846 = vsub.f32 1.0, %v2845
    %v2847 = vmul.f32 %v2844, %v2846
    %v2848 = vadd.f32 %v2844, %v2847
    %vm2849 = vweird.f32 %v2843
    %vm2850 = vweird.f32 %v2844
    %vm2851 = vmor %vm2849, %vm2850
    %v2852 = vsel %vm2851, %v2844, %v2848
    %v2853 = vand.u32 2147483647, %v2843
    %vm2854 = vcmp.eq.f32.partialorder %v2853, 8.507059e+37
    %v2855 = vand.u32 %v2843, 2147483648
    %v2856 = vor.u32 1.1754944e-38, %v2855
    %v2857 = vsel %vm2854, %v2856, %v2852
    %v2858 = vmul.f32 1.0, %v2857
    %v2859 = vtanh.pop %v2819
    %v2860 = vxor.u32 %v2820, 2147483648
    %v2861 = vmul.f32 %v2860, 1.442695
    %v2862 = vpow.pop %v2861
    %v2863 = vadd.f32 %v2862, 1.0
    %v2864 = vrcp.pop %v2863
    %v2865 = vmul.f32 %v2863, %v2864
    %v2866 = vsub.f32 1.0, %v2865
    %v2867 = vmul.f32 %v2864, %v2866
    %v2868 = vadd.f32 %v2864, %v2867
    %vm2869 = vweird.f32 %v2863
    %vm2870 = vweird.f32 %v2864
    %vm2871 = vmor %vm2869, %vm2870
    %v2872 = vsel %vm2871, %v2864, %v2868
    %v2873 = vand.u32 2147483647, %v2863
    %vm2874 = vcmp.eq.f32.partialorder %v2873, 8.507059e+37
    %v2875 = vand.u32 %v2863, 2147483648
    %v2876 = vor.u32 1.1754944e-38, %v2875
    %v2877 = vsel %vm2874, %v2876, %v2872
    %v2878 = vmul.f32 1.0, %v2877
    %v2879 = vmul.f32 %v2858, %v2453
    %v2880 = vmul.f32 %v2839, %v2859
    %v2881 = vadd.f32 %v2879, %v2880
    %v2882 = vtanh.pop %v2881
    %v2883 = vmul.f32 %v2878, %v2882
    %v2884 = vmul.f32 %v2427, %v2672
    %s2885 = scalar_lea.vmem [#allocation3], 32
    %2886 = vst [vmem:[%s2885] sm:$0xff] %v2884
    %v2887 = vmul.f32 %v2419, %v2883
    %s2888 = scalar_lea.vmem [#allocation4], 24
    %2889 = vst [vmem:[%s2888] sm:$0xff] %v2887
    %v2890 = vmul.f32 %v2447, %v2439
    %v2891 = vadd.f32 %v2884, %v2890
    %v2892 = vmul.f32 %v2427, %v2670
    %v2893 = vmul.f32 %v2447, %v2442
    %v2894 = vadd.f32 %v2892, %v2893
    %v2895 = vmul.f32 %v2436, %v2450
    %v2896 = vadd.f32 %v2887, %v2895
    %v2897 = vmul.f32 %v2419, %v2881
    %v2898 = vmul.f32 %v2436, %v2453
    %v2899 = vadd.f32 %v2897, %v2898
    %v2900 = vld [vmem:[%s1507] sm:$0xff]
    %v2901 = vld [vmem:[%s1507 + $0x8] sm:$0xff]
    %v2902 = vld [vmem:[%s1507 + $0x10] sm:$0xff]
    %v2903 = vld [vmem:[%s1507 + $0x18] sm:$0xff]
    %v2904 = vld [vmem:[%s1502 + $0x20] sm:$0xff]
    %v2905 = vld [vmem:[%s1502 + $0x28] sm:$0xff]
    %v2906 = vld [vmem:[%s1502 + $0x30] sm:$0xff]
    %v2907 = vld [vmem:[%s1502 + $0x38] sm:$0xff]
    %v2908 = vld [vmem:[#allocation6] sm:$0xff]
    %v2909 = vld [vmem:[#allocation6 + $0x8] sm:$0xff]
    %v2910 = vld [vmem:[#allocation6 + $0x10] sm:$0xff]
    %v2911 = vld [vmem:[#allocation6 + $0x18] sm:$0xff]
    %v2912 = vld [vmem:[#allocation6 + $0x20] sm:$0xff]
    %v2913 = vld [vmem:[#allocation6 + $0x28] sm:$0xff]
    %v2914 = vld [vmem:[#allocation6 + $0x30] sm:$0xff]
    %v2915 = vld [vmem:[#allocation6 + $0x38] sm:$0xff]
    %v2916 = vld [vmem:[#allocation6 + $0x40] sm:$0xff]
    %v2917 = vld [vmem:[#allocation6 + $0x48] sm:$0xff]
    %v2918 = vld [vmem:[#allocation6 + $0x50] sm:$0xff]
    %v2919 = vld [vmem:[#allocation6 + $0x58] sm:$0xff]
    %v2920 = vld [vmem:[#allocation6 + $0x60] sm:$0xff]
    %v2921 = vld [vmem:[#allocation6 + $0x68] sm:$0xff]
    %v2922 = vld [vmem:[#allocation6 + $0x70] sm:$0xff]
    %v2923 = vld [vmem:[#allocation6 + $0x78] sm:$0xff]
    %v2924 = vld [vmem:[#allocation6 + $0x80] sm:$0xff]
    %v2925 = vld [vmem:[#allocation6 + $0x88] sm:$0xff]
    %v2926 = vld [vmem:[#allocation6 + $0x90] sm:$0xff]
    %v2927 = vld [vmem:[#allocation6 + $0x98] sm:$0xff]
    %v2928 = vld [vmem:[#allocation6 + $0xa0] sm:$0xff]
    %v2929 = vld [vmem:[#allocation6 + $0xa8] sm:$0xff]
    %v2930 = vld [vmem:[#allocation6 + $0xb0] sm:$0xff]
    %v2931 = vld [vmem:[#allocation6 + $0xb8] sm:$0xff]
    %v2932 = vld [vmem:[#allocation6 + $0xc0] sm:$0xff]
    %v2933 = vld [vmem:[#allocation6 + $0xc8] sm:$0xff]
    %v2934 = vld [vmem:[#allocation6 + $0xd0] sm:$0xff]
    %v2935 = vld [vmem:[#allocation6 + $0xd8] sm:$0xff]
    %v2936 = vld [vmem:[#allocation6 + $0xe0] sm:$0xff]
    %v2937 = vld [vmem:[#allocation6 + $0xe8] sm:$0xff]
    %v2938 = vld [vmem:[#allocation6 + $0xf0] sm:$0xff]
    %v2939 = vld [vmem:[#allocation6 + $0xf8] sm:$0xff]
    %v2940 = vld [vmem:[#allocation6 + $0x100] sm:$0xff]
    %v2941 = vld [vmem:[#allocation6 + $0x108] sm:$0xff]
    %v2942 = vld [vmem:[#allocation6 + $0x110] sm:$0xff]
    %v2943 = vld [vmem:[#allocation6 + $0x118] sm:$0xff]
    %v2944 = vld [vmem:[#allocation6 + $0x120] sm:$0xff]
    %v2945 = vld [vmem:[#allocation6 + $0x128] sm:$0xff]
    %v2946 = vld [vmem:[#allocation6 + $0x130] sm:$0xff]
    %v2947 = vld [vmem:[#allocation6 + $0x138] sm:$0xff]
    %v2948 = vld [vmem:[#allocation6 + $0x140] sm:$0xff]
    %v2949 = vld [vmem:[#allocation6 + $0x148] sm:$0xff]
    %v2950 = vld [vmem:[#allocation6 + $0x150] sm:$0xff]
    %v2951 = vld [vmem:[#allocation6 + $0x158] sm:$0xff]
    %v2952 = vld [vmem:[#allocation6 + $0x160] sm:$0xff]
    %v2953 = vld [vmem:[#allocation6 + $0x168] sm:$0xff]
    %v2954 = vld [vmem:[#allocation6 + $0x170] sm:$0xff]
    %v2955 = vld [vmem:[#allocation6 + $0x178] sm:$0xff]
    %v2956 = vld [vmem:[#allocation6 + $0x180] sm:$0xff]
    %v2957 = vld [vmem:[#allocation6 + $0x188] sm:$0xff]
    %v2958 = vld [vmem:[#allocation6 + $0x190] sm:$0xff]
    %v2959 = vld [vmem:[#allocation6 + $0x198] sm:$0xff]
    %v2960 = vld [vmem:[#allocation6 + $0x1a0] sm:$0xff]
    %v2961 = vld [vmem:[#allocation6 + $0x1a8] sm:$0xff]
    %v2962 = vld [vmem:[#allocation6 + $0x1b0] sm:$0xff]
    %v2963 = vld [vmem:[#allocation6 + $0x1b8] sm:$0xff]
    %v2964 = vld [vmem:[#allocation6 + $0x1c0] sm:$0xff]
    %v2965 = vld [vmem:[#allocation6 + $0x1c8] sm:$0xff]
    %v2966 = vld [vmem:[#allocation6 + $0x1d0] sm:$0xff]
    %v2967 = vld [vmem:[#allocation6 + $0x1d8] sm:$0xff]
    %v2968 = vld [vmem:[#allocation6 + $0x1e0] sm:$0xff]
    %v2969 = vld [vmem:[#allocation6 + $0x1e8] sm:$0xff]
    %v2970 = vld [vmem:[#allocation6 + $0x1f0] sm:$0xff]
    %v2971 = vld [vmem:[#allocation6 + $0x1f8] sm:$0xff]
    %2972 = vmatpush.msra.mxu0 %v2968
    %2973 = vmatpush.msra.mxu0 %v2964
    %2974 = vmatpush.msra.mxu0 %v2960
    %2975 = vmatpush.msra.mxu0 %v2956
    %2976 = vmatpush.msra.mxu0 %v2952
    %2977 = vmatpush.msra.mxu0 %v2948
    %2978 = vmatpush.msra.mxu0 %v2944
    %2979 = vmatpush.msra.mxu0 %v2940
    %2980 = vmatpush.msra.mxu0 %v2936
    %2981 = vmatpush.msra.mxu0 %v2932
    %2982 = vmatpush.msra.mxu0 %v2928
    %2983 = vmatpush.msra.mxu0 %v2924
    %2984 = vmatpush.msra.mxu0 %v2920
    %2985 = vmatpush.msra.mxu0 %v2916
    %2986 = vmatpush.msra.mxu0 %v2912
    %2987 = vmatpush.msra.mxu0 %v2908
    %2988 = vmatmul.f32.gmra.mxu0 %v2891
    %v2989 = vpop.f32.mrf.mxu0
    %v2990 = vadd.f32 0.0, %v2989
    %2991 = vdwg.mxu0
    %2992 = vmatpush.msra.mxu0 %v2969
    %2993 = vmatpush.msra.mxu0 %v2965
    %2994 = vmatpush.msra.mxu0 %v2961
    %2995 = vmatpush.msra.mxu0 %v2957
    %2996 = vmatpush.msra.mxu0 %v2953
    %2997 = vmatpush.msra.mxu0 %v2949
    %2998 = vmatpush.msra.mxu0 %v2945
    %2999 = vmatpush.msra.mxu0 %v2941
    %3000 = vmatpush.msra.mxu0 %v2937
    %3001 = vmatpush.msra.mxu0 %v2933
    %3002 = vmatpush.msra.mxu0 %v2929
    %3003 = vmatpush.msra.mxu0 %v2925
    %3004 = vmatpush.msra.mxu0 %v2921
    %3005 = vmatpush.msra.mxu0 %v2917
    %3006 = vmatpush.msra.mxu0 %v2913
    %3007 = vmatpush.msra.mxu0 %v2909
    %3008 = vmatmul.f32.gmra.mxu0 %v2891
    %v3009 = vpop.f32.mrf.mxu0
    %v3010 = vadd.f32 0.0, %v3009
    %3011 = vdwg.mxu0
    %3012 = vmatpush.msra.mxu0 %v2970
    %3013 = vmatpush.msra.mxu0 %v2966
    %3014 = vmatpush.msra.mxu0 %v2962
    %3015 = vmatpush.msra.mxu0 %v2958
    %3016 = vmatpush.msra.mxu0 %v2954
    %3017 = vmatpush.msra.mxu0 %v2950
    %3018 = vmatpush.msra.mxu0 %v2946
    %3019 = vmatpush.msra.mxu0 %v2942
    %3020 = vmatpush.msra.mxu0 %v2938
    %3021 = vmatpush.msra.mxu0 %v2934
    %3022 = vmatpush.msra.mxu0 %v2930
    %3023 = vmatpush.msra.mxu0 %v2926
    %3024 = vmatpush.msra.mxu0 %v2922
    %3025 = vmatpush.msra.mxu0 %v2918
    %3026 = vmatpush.msra.mxu0 %v2914
    %3027 = vmatpush.msra.mxu0 %v2910
    %3028 = vmatmul.f32.gmra.mxu0 %v2891
    %v3029 = vpop.f32.mrf.mxu0
    %v3030 = vadd.f32 0.0, %v3029
    %3031 = vdwg.mxu0
    %3032 = vmatpush.msra.mxu0 %v2971
    %3033 = vmatpush.msra.mxu0 %v2967
    %3034 = vmatpush.msra.mxu0 %v2963
    %3035 = vmatpush.msra.mxu0 %v2959
    %3036 = vmatpush.msra.mxu0 %v2955
    %3037 = vmatpush.msra.mxu0 %v2951
    %3038 = vmatpush.msra.mxu0 %v2947
    %3039 = vmatpush.msra.mxu0 %v2943
    %3040 = vmatpush.msra.mxu0 %v2939
    %3041 = vmatpush.msra.mxu0 %v2935
    %3042 = vmatpush.msra.mxu0 %v2931
    %3043 = vmatpush.msra.mxu0 %v2927
    %3044 = vmatpush.msra.mxu0 %v2923
    %3045 = vmatpush.msra.mxu0 %v2919
    %3046 = vmatpush.msra.mxu0 %v2915
    %3047 = vmatpush.msra.mxu0 %v2911
    %3048 = vmatmul.f32.gmra.mxu0 %v2891
    %v3049 = vpop.f32.mrf.mxu0
    %v3050 = vadd.f32 0.0, %v3049
    %3051 = vdwg.mxu0
    %v3052 = vadd.f32 %v2900, %v2990
    %v3053 = vadd.f32 %v2901, %v3010
    %v3054 = vadd.f32 %v2902, %v3030
    %v3055 = vadd.f32 %v2903, %v3050
    %v3056 = vxor.u32 %v3052, 2147483648
    %v3057 = vmul.f32 %v3056, 1.442695
    %v3058 = vpow.pop %v3057
    %v3059 = vadd.f32 %v3058, 1.0
    %v3060 = vrcp.pop %v3059
    %v3061 = vmul.f32 %v3059, %v3060
    %v3062 = vsub.f32 1.0, %v3061
    %v3063 = vmul.f32 %v3060, %v3062
    %v3064 = vadd.f32 %v3060, %v3063
    %vm3065 = vweird.f32 %v3059
    %vm3066 = vweird.f32 %v3060
    %vm3067 = vmor %vm3065, %vm3066
    %v3068 = vsel %vm3067, %v3060, %v3064
    %v3069 = vand.u32 2147483647, %v3059
    %vm3070 = vcmp.eq.f32.partialorder %v3069, 8.507059e+37
    %v3071 = vand.u32 %v3059, 2147483648
    %v3072 = vor.u32 1.1754944e-38, %v3071
    %v3073 = vsel %vm3070, %v3072, %v3068
    %v3074 = vmul.f32 1.0, %v3073
    %v3075 = vxor.u32 %v3053, 2147483648
    %v3076 = vmul.f32 %v3075, 1.442695
    %v3077 = vpow.pop %v3076
    %v3078 = vadd.f32 %v3077, 1.0
    %v3079 = vrcp.pop %v3078
    %v3080 = vmul.f32 %v3078, %v3079
    %v3081 = vsub.f32 1.0, %v3080
    %v3082 = vmul.f32 %v3079, %v3081
    %v3083 = vadd.f32 %v3079, %v3082
    %vm3084 = vweird.f32 %v3078
    %vm3085 = vweird.f32 %v3079
    %vm3086 = vmor %vm3084, %vm3085
    %v3087 = vsel %vm3086, %v3079, %v3083
    %v3088 = vand.u32 2147483647, %v3078
    %vm3089 = vcmp.eq.f32.partialorder %v3088, 8.507059e+37
    %v3090 = vand.u32 %v3078, 2147483648
    %v3091 = vor.u32 1.1754944e-38, %v3090
    %v3092 = vsel %vm3089, %v3091, %v3087
    %v3093 = vmul.f32 1.0, %v3092
    %v3094 = vtanh.pop %v3054
    %v3095 = vxor.u32 %v3055, 2147483648
    %v3096 = vmul.f32 %v3095, 1.442695
    %v3097 = vpow.pop %v3096
    %v3098 = vadd.f32 %v3097, 1.0
    %v3099 = vrcp.pop %v3098
    %v3100 = vmul.f32 %v3098, %v3099
    %v3101 = vsub.f32 1.0, %v3100
    %v3102 = vmul.f32 %v3099, %v3101
    %v3103 = vadd.f32 %v3099, %v3102
    %vm3104 = vweird.f32 %v3098
    %vm3105 = vweird.f32 %v3099
    %vm3106 = vmor %vm3104, %vm3105
    %v3107 = vsel %vm3106, %v3099, %v3103
    %v3108 = vand.u32 2147483647, %v3098
    %vm3109 = vcmp.eq.f32.partialorder %v3108, 8.507059e+37
    %v3110 = vand.u32 %v3098, 2147483648
    %v3111 = vor.u32 1.1754944e-38, %v3110
    %v3112 = vsel %vm3109, %v3111, %v3107
    %v3113 = vmul.f32 1.0, %v3112
    %v3114 = vmul.f32 %v3093, %v2894
    %v3115 = vmul.f32 %v3074, %v3094
    %v3116 = vadd.f32 %v3114, %v3115
    %v3117 = vtanh.pop %v3116
    %v3118 = vmul.f32 %v3113, %v3117
    %v3119 = vld [vmem:[#allocation9] sm:$0xff]
    %v3120 = vld [vmem:[#allocation9 + $0x8] sm:$0xff]
    %v3121 = vld [vmem:[#allocation9 + $0x10] sm:$0xff]
    %v3122 = vld [vmem:[#allocation9 + $0x18] sm:$0xff]
    %v3123 = vld [vmem:[#allocation9 + $0x20] sm:$0xff]
    %v3124 = vld [vmem:[#allocation9 + $0x28] sm:$0xff]
    %v3125 = vld [vmem:[#allocation9 + $0x30] sm:$0xff]
    %v3126 = vld [vmem:[#allocation9 + $0x38] sm:$0xff]
    %v3127 = vld [vmem:[#allocation9 + $0x40] sm:$0xff]
    %v3128 = vld [vmem:[#allocation9 + $0x48] sm:$0xff]
    %v3129 = vld [vmem:[#allocation9 + $0x50] sm:$0xff]
    %v3130 = vld [vmem:[#allocation9 + $0x58] sm:$0xff]
    %v3131 = vld [vmem:[#allocation9 + $0x60] sm:$0xff]
    %v3132 = vld [vmem:[#allocation9 + $0x68] sm:$0xff]
    %v3133 = vld [vmem:[#allocation9 + $0x70] sm:$0xff]
    %v3134 = vld [vmem:[#allocation9 + $0x78] sm:$0xff]
    %v3135 = vld [vmem:[#allocation9 + $0x80] sm:$0xff]
    %v3136 = vld [vmem:[#allocation9 + $0x88] sm:$0xff]
    %v3137 = vld [vmem:[#allocation9 + $0x90] sm:$0xff]
    %v3138 = vld [vmem:[#allocation9 + $0x98] sm:$0xff]
    %v3139 = vld [vmem:[#allocation9 + $0xa0] sm:$0xff]
    %v3140 = vld [vmem:[#allocation9 + $0xa8] sm:$0xff]
    %v3141 = vld [vmem:[#allocation9 + $0xb0] sm:$0xff]
    %v3142 = vld [vmem:[#allocation9 + $0xb8] sm:$0xff]
    %v3143 = vld [vmem:[#allocation9 + $0xc0] sm:$0xff]
    %v3144 = vld [vmem:[#allocation9 + $0xc8] sm:$0xff]
    %v3145 = vld [vmem:[#allocation9 + $0xd0] sm:$0xff]
    %v3146 = vld [vmem:[#allocation9 + $0xd8] sm:$0xff]
    %v3147 = vld [vmem:[#allocation9 + $0xe0] sm:$0xff]
    %v3148 = vld [vmem:[#allocation9 + $0xe8] sm:$0xff]
    %v3149 = vld [vmem:[#allocation9 + $0xf0] sm:$0xff]
    %v3150 = vld [vmem:[#allocation9 + $0xf8] sm:$0xff]
    %v3151 = vld [vmem:[#allocation9 + $0x100] sm:$0xff]
    %v3152 = vld [vmem:[#allocation9 + $0x108] sm:$0xff]
    %v3153 = vld [vmem:[#allocation9 + $0x110] sm:$0xff]
    %v3154 = vld [vmem:[#allocation9 + $0x118] sm:$0xff]
    %v3155 = vld [vmem:[#allocation9 + $0x120] sm:$0xff]
    %v3156 = vld [vmem:[#allocation9 + $0x128] sm:$0xff]
    %v3157 = vld [vmem:[#allocation9 + $0x130] sm:$0xff]
    %v3158 = vld [vmem:[#allocation9 + $0x138] sm:$0xff]
    %v3159 = vld [vmem:[#allocation9 + $0x140] sm:$0xff]
    %v3160 = vld [vmem:[#allocation9 + $0x148] sm:$0xff]
    %v3161 = vld [vmem:[#allocation9 + $0x150] sm:$0xff]
    %v3162 = vld [vmem:[#allocation9 + $0x158] sm:$0xff]
    %v3163 = vld [vmem:[#allocation9 + $0x160] sm:$0xff]
    %v3164 = vld [vmem:[#allocation9 + $0x168] sm:$0xff]
    %v3165 = vld [vmem:[#allocation9 + $0x170] sm:$0xff]
    %v3166 = vld [vmem:[#allocation9 + $0x178] sm:$0xff]
    %v3167 = vld [vmem:[#allocation9 + $0x180] sm:$0xff]
    %v3168 = vld [vmem:[#allocation9 + $0x188] sm:$0xff]
    %v3169 = vld [vmem:[#allocation9 + $0x190] sm:$0xff]
    %v3170 = vld [vmem:[#allocation9 + $0x198] sm:$0xff]
    %v3171 = vld [vmem:[#allocation9 + $0x1a0] sm:$0xff]
    %v3172 = vld [vmem:[#allocation9 + $0x1a8] sm:$0xff]
    %v3173 = vld [vmem:[#allocation9 + $0x1b0] sm:$0xff]
    %v3174 = vld [vmem:[#allocation9 + $0x1b8] sm:$0xff]
    %v3175 = vld [vmem:[#allocation9 + $0x1c0] sm:$0xff]
    %v3176 = vld [vmem:[#allocation9 + $0x1c8] sm:$0xff]
    %v3177 = vld [vmem:[#allocation9 + $0x1d0] sm:$0xff]
    %v3178 = vld [vmem:[#allocation9 + $0x1d8] sm:$0xff]
    %v3179 = vld [vmem:[#allocation9 + $0x1e0] sm:$0xff]
    %v3180 = vld [vmem:[#allocation9 + $0x1e8] sm:$0xff]
    %v3181 = vld [vmem:[#allocation9 + $0x1f0] sm:$0xff]
    %v3182 = vld [vmem:[#allocation9 + $0x1f8] sm:$0xff]
    %3183 = vmatpush.msra.mxu0 %v3179
    %3184 = vmatpush.msra.mxu0 %v3175
    %3185 = vmatpush.msra.mxu0 %v3171
    %3186 = vmatpush.msra.mxu0 %v3167
    %3187 = vmatpush.msra.mxu0 %v3163
    %3188 = vmatpush.msra.mxu0 %v3159
    %3189 = vmatpush.msra.mxu0 %v3155
    %3190 = vmatpush.msra.mxu0 %v3151
    %3191 = vmatpush.msra.mxu0 %v3147
    %3192 = vmatpush.msra.mxu0 %v3143
    %3193 = vmatpush.msra.mxu0 %v3139
    %3194 = vmatpush.msra.mxu0 %v3135
    %3195 = vmatpush.msra.mxu0 %v3131
    %3196 = vmatpush.msra.mxu0 %v3127
    %3197 = vmatpush.msra.mxu0 %v3123
    %3198 = vmatpush.msra.mxu0 %v3119
    %3199 = vmatmul.f32.gmra.mxu0 %v2896
    %v3200 = vpop.f32.mrf.mxu0
    %v3201 = vadd.f32 0.0, %v3200
    %3202 = vdwg.mxu0
    %3203 = vmatpush.msra.mxu0 %v3180
    %3204 = vmatpush.msra.mxu0 %v3176
    %3205 = vmatpush.msra.mxu0 %v3172
    %3206 = vmatpush.msra.mxu0 %v3168
    %3207 = vmatpush.msra.mxu0 %v3164
    %3208 = vmatpush.msra.mxu0 %v3160
    %3209 = vmatpush.msra.mxu0 %v3156
    %3210 = vmatpush.msra.mxu0 %v3152
    %3211 = vmatpush.msra.mxu0 %v3148
    %3212 = vmatpush.msra.mxu0 %v3144
    %3213 = vmatpush.msra.mxu0 %v3140
    %3214 = vmatpush.msra.mxu0 %v3136
    %3215 = vmatpush.msra.mxu0 %v3132
    %3216 = vmatpush.msra.mxu0 %v3128
    %3217 = vmatpush.msra.mxu0 %v3124
    %3218 = vmatpush.msra.mxu0 %v3120
    %3219 = vmatmul.f32.gmra.mxu0 %v2896
    %v3220 = vpop.f32.mrf.mxu0
    %v3221 = vadd.f32 0.0, %v3220
    %3222 = vdwg.mxu0
    %3223 = vmatpush.msra.mxu0 %v3181
    %3224 = vmatpush.msra.mxu0 %v3177
    %3225 = vmatpush.msra.mxu0 %v3173
    %3226 = vmatpush.msra.mxu0 %v3169
    %3227 = vmatpush.msra.mxu0 %v3165
    %3228 = vmatpush.msra.mxu0 %v3161
    %3229 = vmatpush.msra.mxu0 %v3157
    %3230 = vmatpush.msra.mxu0 %v3153
    %3231 = vmatpush.msra.mxu0 %v3149
    %3232 = vmatpush.msra.mxu0 %v3145
    %3233 = vmatpush.msra.mxu0 %v3141
    %3234 = vmatpush.msra.mxu0 %v3137
    %3235 = vmatpush.msra.mxu0 %v3133
    %3236 = vmatpush.msra.mxu0 %v3129
    %3237 = vmatpush.msra.mxu0 %v3125
    %3238 = vmatpush.msra.mxu0 %v3121
    %3239 = vmatmul.f32.gmra.mxu0 %v2896
    %v3240 = vpop.f32.mrf.mxu0
    %v3241 = vadd.f32 0.0, %v3240
    %3242 = vdwg.mxu0
    %3243 = vmatpush.msra.mxu0 %v3182
    %3244 = vmatpush.msra.mxu0 %v3178
    %3245 = vmatpush.msra.mxu0 %v3174
    %3246 = vmatpush.msra.mxu0 %v3170
    %3247 = vmatpush.msra.mxu0 %v3166
    %3248 = vmatpush.msra.mxu0 %v3162
    %3249 = vmatpush.msra.mxu0 %v3158
    %3250 = vmatpush.msra.mxu0 %v3154
    %3251 = vmatpush.msra.mxu0 %v3150
    %3252 = vmatpush.msra.mxu0 %v3146
    %3253 = vmatpush.msra.mxu0 %v3142
    %3254 = vmatpush.msra.mxu0 %v3138
    %3255 = vmatpush.msra.mxu0 %v3134
    %3256 = vmatpush.msra.mxu0 %v3130
    %3257 = vmatpush.msra.mxu0 %v3126
    %3258 = vmatpush.msra.mxu0 %v3122
    %3259 = vmatmul.f32.gmra.mxu0 %v2896
    %v3260 = vpop.f32.mrf.mxu0
    %v3261 = vadd.f32 0.0, %v3260
    %3262 = vdwg.mxu0
    %v3263 = vadd.f32 %v2904, %v3201
    %v3264 = vadd.f32 %v2905, %v3221
    %v3265 = vadd.f32 %v2906, %v3241
    %v3266 = vadd.f32 %v2907, %v3261
    %v3267 = vxor.u32 %v3263, 2147483648
    %v3268 = vmul.f32 %v3267, 1.442695
    %v3269 = vpow.pop %v3268
    %v3270 = vadd.f32 %v3269, 1.0
    %v3271 = vrcp.pop %v3270
    %v3272 = vmul.f32 %v3270, %v3271
    %v3273 = vsub.f32 1.0, %v3272
    %v3274 = vmul.f32 %v3271, %v3273
    %v3275 = vadd.f32 %v3271, %v3274
    %vm3276 = vweird.f32 %v3270
    %vm3277 = vweird.f32 %v3271
    %vm3278 = vmor %vm3276, %vm3277
    %v3279 = vsel %vm3278, %v3271, %v3275
    %v3280 = vand.u32 2147483647, %v3270
    %vm3281 = vcmp.eq.f32.partialorder %v3280, 8.507059e+37
    %v3282 = vand.u32 %v3270, 2147483648
    %v3283 = vor.u32 1.1754944e-38, %v3282
    %v3284 = vsel %vm3281, %v3283, %v3279
    %v3285 = vmul.f32 1.0, %v3284
    %v3286 = vxor.u32 %v3264, 2147483648
    %v3287 = vmul.f32 %v3286, 1.442695
    %v3288 = vpow.pop %v3287
    %v3289 = vadd.f32 %v3288, 1.0
    %v3290 = vrcp.pop %v3289
    %v3291 = vmul.f32 %v3289, %v3290
    %v3292 = vsub.f32 1.0, %v3291
    %v3293 = vmul.f32 %v3290, %v3292
    %v3294 = vadd.f32 %v3290, %v3293
    %vm3295 = vweird.f32 %v3289
    %vm3296 = vweird.f32 %v3290
    %vm3297 = vmor %vm3295, %vm3296
    %v3298 = vsel %vm3297, %v3290, %v3294
    %v3299 = vand.u32 2147483647, %v3289
    %vm3300 = vcmp.eq.f32.partialorder %v3299, 8.507059e+37
    %v3301 = vand.u32 %v3289, 2147483648
    %v3302 = vor.u32 1.1754944e-38, %v3301
    %v3303 = vsel %vm3300, %v3302, %v3298
    %v3304 = vmul.f32 1.0, %v3303
    %v3305 = vtanh.pop %v3265
    %v3306 = vxor.u32 %v3266, 2147483648
    %v3307 = vmul.f32 %v3306, 1.442695
    %v3308 = vpow.pop %v3307
    %v3309 = vadd.f32 %v3308, 1.0
    %v3310 = vrcp.pop %v3309
    %v3311 = vmul.f32 %v3309, %v3310
    %v3312 = vsub.f32 1.0, %v3311
    %v3313 = vmul.f32 %v3310, %v3312
    %v3314 = vadd.f32 %v3310, %v3313
    %vm3315 = vweird.f32 %v3309
    %vm3316 = vweird.f32 %v3310
    %vm3317 = vmor %vm3315, %vm3316
    %v3318 = vsel %vm3317, %v3310, %v3314
    %v3319 = vand.u32 2147483647, %v3309
    %vm3320 = vcmp.eq.f32.partialorder %v3319, 8.507059e+37
    %v3321 = vand.u32 %v3309, 2147483648
    %v3322 = vor.u32 1.1754944e-38, %v3321
    %v3323 = vsel %vm3320, %v3322, %v3318
    %v3324 = vmul.f32 1.0, %v3323
    %v3325 = vmul.f32 %v3304, %v2899
    %v3326 = vmul.f32 %v3285, %v3305
    %v3327 = vadd.f32 %v3325, %v3326
    %v3328 = vtanh.pop %v3327
    %v3329 = vmul.f32 %v3324, %v3328
    %v3330 = vmul.f32 %v1951, %v3118
    %s3331 = scalar_lea.vmem [#allocation3], 40
    %3332 = vst [vmem:[%s3331] sm:$0xff] %v3330
    %v3333 = vmul.f32 %v1943, %v3329
    %s3334 = scalar_lea.vmem [#allocation4], 16
    %3335 = vst [vmem:[%s3334] sm:$0xff] %v3333
    %v3336 = vmul.f32 %v1971, %v2891
    %v3337 = vadd.f32 %v3330, %v3336
    %v3338 = vmul.f32 %v1951, %v3116
    %v3339 = vmul.f32 %v1971, %v2894
    %v3340 = vadd.f32 %v3338, %v3339
    %v3341 = vmul.f32 %v1960, %v2896
    %v3342 = vadd.f32 %v3333, %v3341
    %v3343 = vmul.f32 %v1943, %v3327
    %v3344 = vmul.f32 %v1960, %v2899
    %v3345 = vadd.f32 %v3343, %v3344
    %v3346 = vld [vmem:[%s1031] sm:$0xff]
    %v3347 = vld [vmem:[%s1031 + $0x8] sm:$0xff]
    %v3348 = vld [vmem:[%s1031 + $0x10] sm:$0xff]
    %v3349 = vld [vmem:[%s1031 + $0x18] sm:$0xff]
    %v3350 = vld [vmem:[%s1026 + $0x20] sm:$0xff]
    %v3351 = vld [vmem:[%s1026 + $0x28] sm:$0xff]
    %v3352 = vld [vmem:[%s1026 + $0x30] sm:$0xff]
    %v3353 = vld [vmem:[%s1026 + $0x38] sm:$0xff]
    %v3354 = vld [vmem:[#allocation6] sm:$0xff]
    %v3355 = vld [vmem:[#allocation6 + $0x8] sm:$0xff]
    %v3356 = vld [vmem:[#allocation6 + $0x10] sm:$0xff]
    %v3357 = vld [vmem:[#allocation6 + $0x18] sm:$0xff]
    %v3358 = vld [vmem:[#allocation6 + $0x20] sm:$0xff]
    %v3359 = vld [vmem:[#allocation6 + $0x28] sm:$0xff]
    %v3360 = vld [vmem:[#allocation6 + $0x30] sm:$0xff]
    %v3361 = vld [vmem:[#allocation6 + $0x38] sm:$0xff]
    %v3362 = vld [vmem:[#allocation6 + $0x40] sm:$0xff]
    %v3363 = vld [vmem:[#allocation6 + $0x48] sm:$0xff]
    %v3364 = vld [vmem:[#allocation6 + $0x50] sm:$0xff]
    %v3365 = vld [vmem:[#allocation6 + $0x58] sm:$0xff]
    %v3366 = vld [vmem:[#allocation6 + $0x60] sm:$0xff]
    %v3367 = vld [vmem:[#allocation6 + $0x68] sm:$0xff]
    %v3368 = vld [vmem:[#allocation6 + $0x70] sm:$0xff]
    %v3369 = vld [vmem:[#allocation6 + $0x78] sm:$0xff]
    %v3370 = vld [vmem:[#allocation6 + $0x80] sm:$0xff]
    %v3371 = vld [vmem:[#allocation6 + $0x88] sm:$0xff]
    %v3372 = vld [vmem:[#allocation6 + $0x90] sm:$0xff]
    %v3373 = vld [vmem:[#allocation6 + $0x98] sm:$0xff]
    %v3374 = vld [vmem:[#allocation6 + $0xa0] sm:$0xff]
    %v3375 = vld [vmem:[#allocation6 + $0xa8] sm:$0xff]
    %v3376 = vld [vmem:[#allocation6 + $0xb0] sm:$0xff]
    %v3377 = vld [vmem:[#allocation6 + $0xb8] sm:$0xff]
    %v3378 = vld [vmem:[#allocation6 + $0xc0] sm:$0xff]
    %v3379 = vld [vmem:[#allocation6 + $0xc8] sm:$0xff]
    %v3380 = vld [vmem:[#allocation6 + $0xd0] sm:$0xff]
    %v3381 = vld [vmem:[#allocation6 + $0xd8] sm:$0xff]
    %v3382 = vld [vmem:[#allocation6 + $0xe0] sm:$0xff]
    %v3383 = vld [vmem:[#allocation6 + $0xe8] sm:$0xff]
    %v3384 = vld [vmem:[#allocation6 + $0xf0] sm:$0xff]
    %v3385 = vld [vmem:[#allocation6 + $0xf8] sm:$0xff]
    %v3386 = vld [vmem:[#allocation6 + $0x100] sm:$0xff]
    %v3387 = vld [vmem:[#allocation6 + $0x108] sm:$0xff]
    %v3388 = vld [vmem:[#allocation6 + $0x110] sm:$0xff]
    %v3389 = vld [vmem:[#allocation6 + $0x118] sm:$0xff]
    %v3390 = vld [vmem:[#allocation6 + $0x120] sm:$0xff]
    %v3391 = vld [vmem:[#allocation6 + $0x128] sm:$0xff]
    %v3392 = vld [vmem:[#allocation6 + $0x130] sm:$0xff]
    %v3393 = vld [vmem:[#allocation6 + $0x138] sm:$0xff]
    %v3394 = vld [vmem:[#allocation6 + $0x140] sm:$0xff]
    %v3395 = vld [vmem:[#allocation6 + $0x148] sm:$0xff]
    %v3396 = vld [vmem:[#allocation6 + $0x150] sm:$0xff]
    %v3397 = vld [vmem:[#allocation6 + $0x158] sm:$0xff]
    %v3398 = vld [vmem:[#allocation6 + $0x160] sm:$0xff]
    %v3399 = vld [vmem:[#allocation6 + $0x168] sm:$0xff]
    %v3400 = vld [vmem:[#allocation6 + $0x170] sm:$0xff]
    %v3401 = vld [vmem:[#allocation6 + $0x178] sm:$0xff]
    %v3402 = vld [vmem:[#allocation6 + $0x180] sm:$0xff]
    %v3403 = vld [vmem:[#allocation6 + $0x188] sm:$0xff]
    %v3404 = vld [vmem:[#allocation6 + $0x190] sm:$0xff]
    %v3405 = vld [vmem:[#allocation6 + $0x198] sm:$0xff]
    %v3406 = vld [vmem:[#allocation6 + $0x1a0] sm:$0xff]
    %v3407 = vld [vmem:[#allocation6 + $0x1a8] sm:$0xff]
    %v3408 = vld [vmem:[#allocation6 + $0x1b0] sm:$0xff]
    %v3409 = vld [vmem:[#allocation6 + $0x1b8] sm:$0xff]
    %v3410 = vld [vmem:[#allocation6 + $0x1c0] sm:$0xff]
    %v3411 = vld [vmem:[#allocation6 + $0x1c8] sm:$0xff]
    %v3412 = vld [vmem:[#allocation6 + $0x1d0] sm:$0xff]
    %v3413 = vld [vmem:[#allocation6 + $0x1d8] sm:$0xff]
    %v3414 = vld [vmem:[#allocation6 + $0x1e0] sm:$0xff]
    %v3415 = vld [vmem:[#allocation6 + $0x1e8] sm:$0xff]
    %v3416 = vld [vmem:[#allocation6 + $0x1f0] sm:$0xff]
    %v3417 = vld [vmem:[#allocation6 + $0x1f8] sm:$0xff]
    %3418 = vmatpush.msra.mxu0 %v3414
    %3419 = vmatpush.msra.mxu0 %v3410
    %3420 = vmatpush.msra.mxu0 %v3406
    %3421 = vmatpush.msra.mxu0 %v3402
    %3422 = vmatpush.msra.mxu0 %v3398
    %3423 = vmatpush.msra.mxu0 %v3394
    %3424 = vmatpush.msra.mxu0 %v3390
    %3425 = vmatpush.msra.mxu0 %v3386
    %3426 = vmatpush.msra.mxu0 %v3382
    %3427 = vmatpush.msra.mxu0 %v3378
    %3428 = vmatpush.msra.mxu0 %v3374
    %3429 = vmatpush.msra.mxu0 %v3370
    %3430 = vmatpush.msra.mxu0 %v3366
    %3431 = vmatpush.msra.mxu0 %v3362
    %3432 = vmatpush.msra.mxu0 %v3358
    %3433 = vmatpush.msra.mxu0 %v3354
    %3434 = vmatmul.f32.gmra.mxu0 %v3337
    %v3435 = vpop.f32.mrf.mxu0
    %v3436 = vadd.f32 0.0, %v3435
    %3437 = vdwg.mxu0
    %3438 = vmatpush.msra.mxu0 %v3415
    %3439 = vmatpush.msra.mxu0 %v3411
    %3440 = vmatpush.msra.mxu0 %v3407
    %3441 = vmatpush.msra.mxu0 %v3403
    %3442 = vmatpush.msra.mxu0 %v3399
    %3443 = vmatpush.msra.mxu0 %v3395
    %3444 = vmatpush.msra.mxu0 %v3391
    %3445 = vmatpush.msra.mxu0 %v3387
    %3446 = vmatpush.msra.mxu0 %v3383
    %3447 = vmatpush.msra.mxu0 %v3379
    %3448 = vmatpush.msra.mxu0 %v3375
    %3449 = vmatpush.msra.mxu0 %v3371
    %3450 = vmatpush.msra.mxu0 %v3367
    %3451 = vmatpush.msra.mxu0 %v3363
    %3452 = vmatpush.msra.mxu0 %v3359
    %3453 = vmatpush.msra.mxu0 %v3355
    %3454 = vmatmul.f32.gmra.mxu0 %v3337
    %v3455 = vpop.f32.mrf.mxu0
    %v3456 = vadd.f32 0.0, %v3455
    %3457 = vdwg.mxu0
    %3458 = vmatpush.msra.mxu0 %v3416
    %3459 = vmatpush.msra.mxu0 %v3412
    %3460 = vmatpush.msra.mxu0 %v3408
    %3461 = vmatpush.msra.mxu0 %v3404
    %3462 = vmatpush.msra.mxu0 %v3400
    %3463 = vmatpush.msra.mxu0 %v3396
    %3464 = vmatpush.msra.mxu0 %v3392
    %3465 = vmatpush.msra.mxu0 %v3388
    %3466 = vmatpush.msra.mxu0 %v3384
    %3467 = vmatpush.msra.mxu0 %v3380
    %3468 = vmatpush.msra.mxu0 %v3376
    %3469 = vmatpush.msra.mxu0 %v3372
    %3470 = vmatpush.msra.mxu0 %v3368
    %3471 = vmatpush.msra.mxu0 %v3364
    %3472 = vmatpush.msra.mxu0 %v3360
    %3473 = vmatpush.msra.mxu0 %v3356
    %3474 = vmatmul.f32.gmra.mxu0 %v3337
    %v3475 = vpop.f32.mrf.mxu0
    %v3476 = vadd.f32 0.0, %v3475
    %3477 = vdwg.mxu0
    %3478 = vmatpush.msra.mxu0 %v3417
    %3479 = vmatpush.msra.mxu0 %v3413
    %3480 = vmatpush.msra.mxu0 %v3409
    %3481 = vmatpush.msra.mxu0 %v3405
    %3482 = vmatpush.msra.mxu0 %v3401
    %3483 = vmatpush.msra.mxu0 %v3397
    %3484 = vmatpush.msra.mxu0 %v3393
    %3485 = vmatpush.msra.mxu0 %v3389
    %3486 = vmatpush.msra.mxu0 %v3385
    %3487 = vmatpush.msra.mxu0 %v3381
    %3488 = vmatpush.msra.mxu0 %v3377
    %3489 = vmatpush.msra.mxu0 %v3373
    %3490 = vmatpush.msra.mxu0 %v3369
    %3491 = vmatpush.msra.mxu0 %v3365
    %3492 = vmatpush.msra.mxu0 %v3361
    %3493 = vmatpush.msra.mxu0 %v3357
    %3494 = vmatmul.f32.gmra.mxu0 %v3337
    %v3495 = vpop.f32.mrf.mxu0
    %v3496 = vadd.f32 0.0, %v3495
    %3497 = vdwg.mxu0
    %v3498 = vadd.f32 %v3346, %v3436
    %v3499 = vadd.f32 %v3347, %v3456
    %v3500 = vadd.f32 %v3348, %v3476
    %v3501 = vadd.f32 %v3349, %v3496
    %v3502 = vxor.u32 %v3498, 2147483648
    %v3503 = vmul.f32 %v3502, 1.442695
    %v3504 = vpow.pop %v3503
    %v3505 = vadd.f32 %v3504, 1.0
    %v3506 = vrcp.pop %v3505
    %v3507 = vmul.f32 %v3505, %v3506
    %v3508 = vsub.f32 1.0, %v3507
    %v3509 = vmul.f32 %v3506, %v3508
    %v3510 = vadd.f32 %v3506, %v3509
    %vm3511 = vweird.f32 %v3505
    %vm3512 = vweird.f32 %v3506
    %vm3513 = vmor %vm3511, %vm3512
    %v3514 = vsel %vm3513, %v3506, %v3510
    %v3515 = vand.u32 2147483647, %v3505
    %vm3516 = vcmp.eq.f32.partialorder %v3515, 8.507059e+37
    %v3517 = vand.u32 %v3505, 2147483648
    %v3518 = vor.u32 1.1754944e-38, %v3517
    %v3519 = vsel %vm3516, %v3518, %v3514
    %v3520 = vmul.f32 1.0, %v3519
    %v3521 = vxor.u32 %v3499, 2147483648
    %v3522 = vmul.f32 %v3521, 1.442695
    %v3523 = vpow.pop %v3522
    %v3524 = vadd.f32 %v3523, 1.0
    %v3525 = vrcp.pop %v3524
    %v3526 = vmul.f32 %v3524, %v3525
    %v3527 = vsub.f32 1.0, %v3526
    %v3528 = vmul.f32 %v3525, %v3527
    %v3529 = vadd.f32 %v3525, %v3528
    %vm3530 = vweird.f32 %v3524
    %vm3531 = vweird.f32 %v3525
    %vm3532 = vmor %vm3530, %vm3531
    %v3533 = vsel %vm3532, %v3525, %v3529
    %v3534 = vand.u32 2147483647, %v3524
    %vm3535 = vcmp.eq.f32.partialorder %v3534, 8.507059e+37
    %v3536 = vand.u32 %v3524, 2147483648
    %v3537 = vor.u32 1.1754944e-38, %v3536
    %v3538 = vsel %vm3535, %v3537, %v3533
    %v3539 = vmul.f32 1.0, %v3538
    %v3540 = vtanh.pop %v3500
    %v3541 = vxor.u32 %v3501, 2147483648
    %v3542 = vmul.f32 %v3541, 1.442695
    %v3543 = vpow.pop %v3542
    %v3544 = vadd.f32 %v3543, 1.0
    %v3545 = vrcp.pop %v3544
    %v3546 = vmul.f32 %v3544, %v3545
    %v3547 = vsub.f32 1.0, %v3546
    %v3548 = vmul.f32 %v3545, %v3547
    %v3549 = vadd.f32 %v3545, %v3548
    %vm3550 = vweird.f32 %v3544
    %vm3551 = vweird.f32 %v3545
    %vm3552 = vmor %vm3550, %vm3551
    %v3553 = vsel %vm3552, %v3545, %v3549
    %v3554 = vand.u32 2147483647, %v3544
    %vm3555 = vcmp.eq.f32.partialorder %v3554, 8.507059e+37
    %v3556 = vand.u32 %v3544, 2147483648
    %v3557 = vor.u32 1.1754944e-38, %v3556
    %v3558 = vsel %vm3555, %v3557, %v3553
    %v3559 = vmul.f32 1.0, %v3558
    %v3560 = vmul.f32 %v3539, %v3340
    %v3561 = vmul.f32 %v3520, %v3540
    %v3562 = vadd.f32 %v3560, %v3561
    %v3563 = vtanh.pop %v3562
    %v3564 = vmul.f32 %v3559, %v3563
    %v3565 = vld [vmem:[#allocation9] sm:$0xff]
    %v3566 = vld [vmem:[#allocation9 + $0x8] sm:$0xff]
    %v3567 = vld [vmem:[#allocation9 + $0x10] sm:$0xff]
    %v3568 = vld [vmem:[#allocation9 + $0x18] sm:$0xff]
    %v3569 = vld [vmem:[#allocation9 + $0x20] sm:$0xff]
    %v3570 = vld [vmem:[#allocation9 + $0x28] sm:$0xff]
    %v3571 = vld [vmem:[#allocation9 + $0x30] sm:$0xff]
    %v3572 = vld [vmem:[#allocation9 + $0x38] sm:$0xff]
    %v3573 = vld [vmem:[#allocation9 + $0x40] sm:$0xff]
    %v3574 = vld [vmem:[#allocation9 + $0x48] sm:$0xff]
    %v3575 = vld [vmem:[#allocation9 + $0x50] sm:$0xff]
    %v3576 = vld [vmem:[#allocation9 + $0x58] sm:$0xff]
    %v3577 = vld [vmem:[#allocation9 + $0x60] sm:$0xff]
    %v3578 = vld [vmem:[#allocation9 + $0x68] sm:$0xff]
    %v3579 = vld [vmem:[#allocation9 + $0x70] sm:$0xff]
    %v3580 = vld [vmem:[#allocation9 + $0x78] sm:$0xff]
    %v3581 = vld [vmem:[#allocation9 + $0x80] sm:$0xff]
    %v3582 = vld [vmem:[#allocation9 + $0x88] sm:$0xff]
    %v3583 = vld [vmem:[#allocation9 + $0x90] sm:$0xff]
    %v3584 = vld [vmem:[#allocation9 + $0x98] sm:$0xff]
    %v3585 = vld [vmem:[#allocation9 + $0xa0] sm:$0xff]
    %v3586 = vld [vmem:[#allocation9 + $0xa8] sm:$0xff]
    %v3587 = vld [vmem:[#allocation9 + $0xb0] sm:$0xff]
    %v3588 = vld [vmem:[#allocation9 + $0xb8] sm:$0xff]
    %v3589 = vld [vmem:[#allocation9 + $0xc0] sm:$0xff]
    %v3590 = vld [vmem:[#allocation9 + $0xc8] sm:$0xff]
    %v3591 = vld [vmem:[#allocation9 + $0xd0] sm:$0xff]
    %v3592 = vld [vmem:[#allocation9 + $0xd8] sm:$0xff]
    %v3593 = vld [vmem:[#allocation9 + $0xe0] sm:$0xff]
    %v3594 = vld [vmem:[#allocation9 + $0xe8] sm:$0xff]
    %v3595 = vld [vmem:[#allocation9 + $0xf0] sm:$0xff]
    %v3596 = vld [vmem:[#allocation9 + $0xf8] sm:$0xff]
    %v3597 = vld [vmem:[#allocation9 + $0x100] sm:$0xff]
    %v3598 = vld [vmem:[#allocation9 + $0x108] sm:$0xff]
    %v3599 = vld [vmem:[#allocation9 + $0x110] sm:$0xff]
    %v3600 = vld [vmem:[#allocation9 + $0x118] sm:$0xff]
    %v3601 = vld [vmem:[#allocation9 + $0x120] sm:$0xff]
    %v3602 = vld [vmem:[#allocation9 + $0x128] sm:$0xff]
    %v3603 = vld [vmem:[#allocation9 + $0x130] sm:$0xff]
    %v3604 = vld [vmem:[#allocation9 + $0x138] sm:$0xff]
    %v3605 = vld [vmem:[#allocation9 + $0x140] sm:$0xff]
    %v3606 = vld [vmem:[#allocation9 + $0x148] sm:$0xff]
    %v3607 = vld [vmem:[#allocation9 + $0x150] sm:$0xff]
    %v3608 = vld [vmem:[#allocation9 + $0x158] sm:$0xff]
    %v3609 = vld [vmem:[#allocation9 + $0x160] sm:$0xff]
    %v3610 = vld [vmem:[#allocation9 + $0x168] sm:$0xff]
    %v3611 = vld [vmem:[#allocation9 + $0x170] sm:$0xff]
    %v3612 = vld [vmem:[#allocation9 + $0x178] sm:$0xff]
    %v3613 = vld [vmem:[#allocation9 + $0x180] sm:$0xff]
    %v3614 = vld [vmem:[#allocation9 + $0x188] sm:$0xff]
    %v3615 = vld [vmem:[#allocation9 + $0x190] sm:$0xff]
    %v3616 = vld [vmem:[#allocation9 + $0x198] sm:$0xff]
    %v3617 = vld [vmem:[#allocation9 + $0x1a0] sm:$0xff]
    %v3618 = vld [vmem:[#allocation9 + $0x1a8] sm:$0xff]
    %v3619 = vld [vmem:[#allocation9 + $0x1b0] sm:$0xff]
    %v3620 = vld [vmem:[#allocation9 + $0x1b8] sm:$0xff]
    %v3621 = vld [vmem:[#allocation9 + $0x1c0] sm:$0xff]
    %v3622 = vld [vmem:[#allocation9 + $0x1c8] sm:$0xff]
    %v3623 = vld [vmem:[#allocation9 + $0x1d0] sm:$0xff]
    %v3624 = vld [vmem:[#allocation9 + $0x1d8] sm:$0xff]
    %v3625 = vld [vmem:[#allocation9 + $0x1e0] sm:$0xff]
    %v3626 = vld [vmem:[#allocation9 + $0x1e8] sm:$0xff]
    %v3627 = vld [vmem:[#allocation9 + $0x1f0] sm:$0xff]
    %v3628 = vld [vmem:[#allocation9 + $0x1f8] sm:$0xff]
    %3629 = vmatpush.msra.mxu0 %v3625
    %3630 = vmatpush.msra.mxu0 %v3621
    %3631 = vmatpush.msra.mxu0 %v3617
    %3632 = vmatpush.msra.mxu0 %v3613
    %3633 = vmatpush.msra.mxu0 %v3609
    %3634 = vmatpush.msra.mxu0 %v3605
    %3635 = vmatpush.msra.mxu0 %v3601
    %3636 = vmatpush.msra.mxu0 %v3597
    %3637 = vmatpush.msra.mxu0 %v3593
    %3638 = vmatpush.msra.mxu0 %v3589
    %3639 = vmatpush.msra.mxu0 %v3585
    %3640 = vmatpush.msra.mxu0 %v3581
    %3641 = vmatpush.msra.mxu0 %v3577
    %3642 = vmatpush.msra.mxu0 %v3573
    %3643 = vmatpush.msra.mxu0 %v3569
    %3644 = vmatpush.msra.mxu0 %v3565
    %3645 = vmatmul.f32.gmra.mxu0 %v3342
    %v3646 = vpop.f32.mrf.mxu0
    %v3647 = vadd.f32 0.0, %v3646
    %3648 = vdwg.mxu0
    %3649 = vmatpush.msra.mxu0 %v3626
    %3650 = vmatpush.msra.mxu0 %v3622
    %3651 = vmatpush.msra.mxu0 %v3618
    %3652 = vmatpush.msra.mxu0 %v3614
    %3653 = vmatpush.msra.mxu0 %v3610
    %3654 = vmatpush.msra.mxu0 %v3606
    %3655 = vmatpush.msra.mxu0 %v3602
    %3656 = vmatpush.msra.mxu0 %v3598
    %3657 = vmatpush.msra.mxu0 %v3594
    %3658 = vmatpush.msra.mxu0 %v3590
    %3659 = vmatpush.msra.mxu0 %v3586
    %3660 = vmatpush.msra.mxu0 %v3582
    %3661 = vmatpush.msra.mxu0 %v3578
    %3662 = vmatpush.msra.mxu0 %v3574
    %3663 = vmatpush.msra.mxu0 %v3570
    %3664 = vmatpush.msra.mxu0 %v3566
    %3665 = vmatmul.f32.gmra.mxu0 %v3342
    %v3666 = vpop.f32.mrf.mxu0
    %v3667 = vadd.f32 0.0, %v3666
    %3668 = vdwg.mxu0
    %3669 = vmatpush.msra.mxu0 %v3627
    %3670 = vmatpush.msra.mxu0 %v3623
    %3671 = vmatpush.msra.mxu0 %v3619
    %3672 = vmatpush.msra.mxu0 %v3615
    %3673 = vmatpush.msra.mxu0 %v3611
    %3674 = vmatpush.msra.mxu0 %v3607
    %3675 = vmatpush.msra.mxu0 %v3603
    %3676 = vmatpush.msra.mxu0 %v3599
    %3677 = vmatpush.msra.mxu0 %v3595
    %3678 = vmatpush.msra.mxu0 %v3591
    %3679 = vmatpush.msra.mxu0 %v3587
    %3680 = vmatpush.msra.mxu0 %v3583
    %3681 = vmatpush.msra.mxu0 %v3579
    %3682 = vmatpush.msra.mxu0 %v3575
    %3683 = vmatpush.msra.mxu0 %v3571
    %3684 = vmatpush.msra.mxu0 %v3567
    %3685 = vmatmul.f32.gmra.mxu0 %v3342
    %v3686 = vpop.f32.mrf.mxu0
    %v3687 = vadd.f32 0.0, %v3686
    %3688 = vdwg.mxu0
    %3689 = vmatpush.msra.mxu0 %v3628
    %3690 = vmatpush.msra.mxu0 %v3624
    %3691 = vmatpush.msra.mxu0 %v3620
    %3692 = vmatpush.msra.mxu0 %v3616
    %3693 = vmatpush.msra.mxu0 %v3612
    %3694 = vmatpush.msra.mxu0 %v3608
    %3695 = vmatpush.msra.mxu0 %v3604
    %3696 = vmatpush.msra.mxu0 %v3600
    %3697 = vmatpush.msra.mxu0 %v3596
    %3698 = vmatpush.msra.mxu0 %v3592
    %3699 = vmatpush.msra.mxu0 %v3588
    %3700 = vmatpush.msra.mxu0 %v3584
    %3701 = vmatpush.msra.mxu0 %v3580
    %3702 = vmatpush.msra.mxu0 %v3576
    %3703 = vmatpush.msra.mxu0 %v3572
    %3704 = vmatpush.msra.mxu0 %v3568
    %3705 = vmatmul.f32.gmra.mxu0 %v3342
    %v3706 = vpop.f32.mrf.mxu0
    %v3707 = vadd.f32 0.0, %v3706
    %3708 = vdwg.mxu0
    %v3709 = vadd.f32 %v3350, %v3647
    %v3710 = vadd.f32 %v3351, %v3667
    %v3711 = vadd.f32 %v3352, %v3687
    %v3712 = vadd.f32 %v3353, %v3707
    %v3713 = vxor.u32 %v3709, 2147483648
    %v3714 = vmul.f32 %v3713, 1.442695
    %v3715 = vpow.pop %v3714
    %v3716 = vadd.f32 %v3715, 1.0
    %v3717 = vrcp.pop %v3716
    %v3718 = vmul.f32 %v3716, %v3717
    %v3719 = vsub.f32 1.0, %v3718
    %v3720 = vmul.f32 %v3717, %v3719
    %v3721 = vadd.f32 %v3717, %v3720
    %vm3722 = vweird.f32 %v3716
    %vm3723 = vweird.f32 %v3717
    %vm3724 = vmor %vm3722, %vm3723
    %v3725 = vsel %vm3724, %v3717, %v3721
    %v3726 = vand.u32 2147483647, %v3716
    %vm3727 = vcmp.eq.f32.partialorder %v3726, 8.507059e+37
    %v3728 = vand.u32 %v3716, 2147483648
    %v3729 = vor.u32 1.1754944e-38, %v3728
    %v3730 = vsel %vm3727, %v3729, %v3725
    %v3731 = vmul.f32 1.0, %v3730
    %v3732 = vxor.u32 %v3710, 2147483648
    %v3733 = vmul.f32 %v3732, 1.442695
    %v3734 = vpow.pop %v3733
    %v3735 = vadd.f32 %v3734, 1.0
    %v3736 = vrcp.pop %v3735
    %v3737 = vmul.f32 %v3735, %v3736
    %v3738 = vsub.f32 1.0, %v3737
    %v3739 = vmul.f32 %v3736, %v3738
    %v3740 = vadd.f32 %v3736, %v3739
    %vm3741 = vweird.f32 %v3735
    %vm3742 = vweird.f32 %v3736
    %vm3743 = vmor %vm3741, %vm3742
    %v3744 = vsel %vm3743, %v3736, %v3740
    %v3745 = vand.u32 2147483647, %v3735
    %vm3746 = vcmp.eq.f32.partialorder %v3745, 8.507059e+37
    %v3747 = vand.u32 %v3735, 2147483648
    %v3748 = vor.u32 1.1754944e-38, %v3747
    %v3749 = vsel %vm3746, %v3748, %v3744
    %v3750 = vmul.f32 1.0, %v3749
    %v3751 = vtanh.pop %v3711
    %v3752 = vxor.u32 %v3712, 2147483648
    %v3753 = vmul.f32 %v3752, 1.442695
    %v3754 = vpow.pop %v3753
    %v3755 = vadd.f32 %v3754, 1.0
    %v3756 = vrcp.pop %v3755
    %v3757 = vmul.f32 %v3755, %v3756
    %v3758 = vsub.f32 1.0, %v3757
    %v3759 = vmul.f32 %v3756, %v3758
    %v3760 = vadd.f32 %v3756, %v3759
    %vm3761 = vweird.f32 %v3755
    %vm3762 = vweird.f32 %v3756
    %vm3763 = vmor %vm3761, %vm3762
    %v3764 = vsel %vm3763, %v3756, %v3760
    %v3765 = vand.u32 2147483647, %v3755
    %vm3766 = vcmp.eq.f32.partialorder %v3765, 8.507059e+37
    %v3767 = vand.u32 %v3755, 2147483648
    %v3768 = vor.u32 1.1754944e-38, %v3767
    %v3769 = vsel %vm3766, %v3768, %v3764
    %v3770 = vmul.f32 1.0, %v3769
    %v3771 = vmul.f32 %v3750, %v3345
    %v3772 = vmul.f32 %v3731, %v3751
    %v3773 = vadd.f32 %v3771, %v3772
    %v3774 = vtanh.pop %v3773
    %v3775 = vmul.f32 %v3770, %v3774
    %v3776 = vmul.f32 %v1475, %v3564
    %s3777 = scalar_lea.vmem [#allocation3], 48
    %3778 = vst [vmem:[%s3777] sm:$0xff] %v3776
    %v3779 = vmul.f32 %v1467, %v3775
    %s3780 = scalar_lea.vmem [#allocation4], 8
    %3781 = vst [vmem:[%s3780] sm:$0xff] %v3779
    %v3782 = vmul.f32 %v1495, %v3337
    %v3783 = vadd.f32 %v3776, %v3782
    %v3784 = vmul.f32 %v1475, %v3562
    %v3785 = vmul.f32 %v1495, %v3340
    %v3786 = vadd.f32 %v3784, %v3785
    %v3787 = vmul.f32 %v1484, %v3342
    %v3788 = vadd.f32 %v3779, %v3787
    %v3789 = vmul.f32 %v1467, %v3773
    %v3790 = vmul.f32 %v1484, %v3345
    %v3791 = vadd.f32 %v3789, %v3790
    %v3792 = vld [vmem:[%s558] sm:$0xff]
    %v3793 = vld [vmem:[%s558 + $0x8] sm:$0xff]
    %v3794 = vld [vmem:[%s558 + $0x10] sm:$0xff]
    %v3795 = vld [vmem:[%s558 + $0x18] sm:$0xff]
    %v3796 = vld [vmem:[#allocation2 + $0x20] sm:$0xff]
    %v3797 = vld [vmem:[#allocation2 + $0x28] sm:$0xff]
    %v3798 = vld [vmem:[#allocation2 + $0x30] sm:$0xff]
    %v3799 = vld [vmem:[#allocation2 + $0x38] sm:$0xff]
    %v3800 = vld [vmem:[#allocation6] sm:$0xff]
    %v3801 = vld [vmem:[#allocation6 + $0x8] sm:$0xff]
    %v3802 = vld [vmem:[#allocation6 + $0x10] sm:$0xff]
    %v3803 = vld [vmem:[#allocation6 + $0x18] sm:$0xff]
    %v3804 = vld [vmem:[#allocation6 + $0x20] sm:$0xff]
    %v3805 = vld [vmem:[#allocation6 + $0x28] sm:$0xff]
    %v3806 = vld [vmem:[#allocation6 + $0x30] sm:$0xff]
    %v3807 = vld [vmem:[#allocation6 + $0x38] sm:$0xff]
    %v3808 = vld [vmem:[#allocation6 + $0x40] sm:$0xff]
    %v3809 = vld [vmem:[#allocation6 + $0x48] sm:$0xff]
    %v3810 = vld [vmem:[#allocation6 + $0x50] sm:$0xff]
    %v3811 = vld [vmem:[#allocation6 + $0x58] sm:$0xff]
    %v3812 = vld [vmem:[#allocation6 + $0x60] sm:$0xff]
    %v3813 = vld [vmem:[#allocation6 + $0x68] sm:$0xff]
    %v3814 = vld [vmem:[#allocation6 + $0x70] sm:$0xff]
    %v3815 = vld [vmem:[#allocation6 + $0x78] sm:$0xff]
    %v3816 = vld [vmem:[#allocation6 + $0x80] sm:$0xff]
    %v3817 = vld [vmem:[#allocation6 + $0x88] sm:$0xff]
    %v3818 = vld [vmem:[#allocation6 + $0x90] sm:$0xff]
    %v3819 = vld [vmem:[#allocation6 + $0x98] sm:$0xff]
    %v3820 = vld [vmem:[#allocation6 + $0xa0] sm:$0xff]
    %v3821 = vld [vmem:[#allocation6 + $0xa8] sm:$0xff]
    %v3822 = vld [vmem:[#allocation6 + $0xb0] sm:$0xff]
    %v3823 = vld [vmem:[#allocation6 + $0xb8] sm:$0xff]
    %v3824 = vld [vmem:[#allocation6 + $0xc0] sm:$0xff]
    %v3825 = vld [vmem:[#allocation6 + $0xc8] sm:$0xff]
    %v3826 = vld [vmem:[#allocation6 + $0xd0] sm:$0xff]
    %v3827 = vld [vmem:[#allocation6 + $0xd8] sm:$0xff]
    %v3828 = vld [vmem:[#allocation6 + $0xe0] sm:$0xff]
    %v3829 = vld [vmem:[#allocation6 + $0xe8] sm:$0xff]
    %v3830 = vld [vmem:[#allocation6 + $0xf0] sm:$0xff]
    %v3831 = vld [vmem:[#allocation6 + $0xf8] sm:$0xff]
    %v3832 = vld [vmem:[#allocation6 + $0x100] sm:$0xff]
    %v3833 = vld [vmem:[#allocation6 + $0x108] sm:$0xff]
    %v3834 = vld [vmem:[#allocation6 + $0x110] sm:$0xff]
    %v3835 = vld [vmem:[#allocation6 + $0x118] sm:$0xff]
    %v3836 = vld [vmem:[#allocation6 + $0x120] sm:$0xff]
    %v3837 = vld [vmem:[#allocation6 + $0x128] sm:$0xff]
    %v3838 = vld [vmem:[#allocation6 + $0x130] sm:$0xff]
    %v3839 = vld [vmem:[#allocation6 + $0x138] sm:$0xff]
    %v3840 = vld [vmem:[#allocation6 + $0x140] sm:$0xff]
    %v3841 = vld [vmem:[#allocation6 + $0x148] sm:$0xff]
    %v3842 = vld [vmem:[#allocation6 + $0x150] sm:$0xff]
    %v3843 = vld [vmem:[#allocation6 + $0x158] sm:$0xff]
    %v3844 = vld [vmem:[#allocation6 + $0x160] sm:$0xff]
    %v3845 = vld [vmem:[#allocation6 + $0x168] sm:$0xff]
    %v3846 = vld [vmem:[#allocation6 + $0x170] sm:$0xff]
    %v3847 = vld [vmem:[#allocation6 + $0x178] sm:$0xff]
    %v3848 = vld [vmem:[#allocation6 + $0x180] sm:$0xff]
    %v3849 = vld [vmem:[#allocation6 + $0x188] sm:$0xff]
    %v3850 = vld [vmem:[#allocation6 + $0x190] sm:$0xff]
    %v3851 = vld [vmem:[#allocation6 + $0x198] sm:$0xff]
    %v3852 = vld [vmem:[#allocation6 + $0x1a0] sm:$0xff]
    %v3853 = vld [vmem:[#allocation6 + $0x1a8] sm:$0xff]
    %v3854 = vld [vmem:[#allocation6 + $0x1b0] sm:$0xff]
    %v3855 = vld [vmem:[#allocation6 + $0x1b8] sm:$0xff]
    %v3856 = vld [vmem:[#allocation6 + $0x1c0] sm:$0xff]
    %v3857 = vld [vmem:[#allocation6 + $0x1c8] sm:$0xff]
    %v3858 = vld [vmem:[#allocation6 + $0x1d0] sm:$0xff]
    %v3859 = vld [vmem:[#allocation6 + $0x1d8] sm:$0xff]
    %v3860 = vld [vmem:[#allocation6 + $0x1e0] sm:$0xff]
    %v3861 = vld [vmem:[#allocation6 + $0x1e8] sm:$0xff]
    %v3862 = vld [vmem:[#allocation6 + $0x1f0] sm:$0xff]
    %v3863 = vld [vmem:[#allocation6 + $0x1f8] sm:$0xff]
    %3864 = vmatpush.msra.mxu0 %v3860
    %3865 = vmatpush.msra.mxu0 %v3856
    %3866 = vmatpush.msra.mxu0 %v3852
    %3867 = vmatpush.msra.mxu0 %v3848
    %3868 = vmatpush.msra.mxu0 %v3844
    %3869 = vmatpush.msra.mxu0 %v3840
    %3870 = vmatpush.msra.mxu0 %v3836
    %3871 = vmatpush.msra.mxu0 %v3832
    %3872 = vmatpush.msra.mxu0 %v3828
    %3873 = vmatpush.msra.mxu0 %v3824
    %3874 = vmatpush.msra.mxu0 %v3820
    %3875 = vmatpush.msra.mxu0 %v3816
    %3876 = vmatpush.msra.mxu0 %v3812
    %3877 = vmatpush.msra.mxu0 %v3808
    %3878 = vmatpush.msra.mxu0 %v3804
    %3879 = vmatpush.msra.mxu0 %v3800
    %3880 = vmatmul.f32.gmra.mxu0 %v3783
    %v3881 = vpop.f32.mrf.mxu0
    %v3882 = vadd.f32 0.0, %v3881
    %3883 = vdwg.mxu0
    %3884 = vmatpush.msra.mxu0 %v3861
    %3885 = vmatpush.msra.mxu0 %v3857
    %3886 = vmatpush.msra.mxu0 %v3853
    %3887 = vmatpush.msra.mxu0 %v3849
    %3888 = vmatpush.msra.mxu0 %v3845
    %3889 = vmatpush.msra.mxu0 %v3841
    %3890 = vmatpush.msra.mxu0 %v3837
    %3891 = vmatpush.msra.mxu0 %v3833
    %3892 = vmatpush.msra.mxu0 %v3829
    %3893 = vmatpush.msra.mxu0 %v3825
    %3894 = vmatpush.msra.mxu0 %v3821
    %3895 = vmatpush.msra.mxu0 %v3817
    %3896 = vmatpush.msra.mxu0 %v3813
    %3897 = vmatpush.msra.mxu0 %v3809
    %3898 = vmatpush.msra.mxu0 %v3805
    %3899 = vmatpush.msra.mxu0 %v3801
    %3900 = vmatmul.f32.gmra.mxu0 %v3783
    %v3901 = vpop.f32.mrf.mxu0
    %v3902 = vadd.f32 0.0, %v3901
    %3903 = vdwg.mxu0
    %3904 = vmatpush.msra.mxu0 %v3862
    %3905 = vmatpush.msra.mxu0 %v3858
    %3906 = vmatpush.msra.mxu0 %v3854
    %3907 = vmatpush.msra.mxu0 %v3850
    %3908 = vmatpush.msra.mxu0 %v3846
    %3909 = vmatpush.msra.mxu0 %v3842
    %3910 = vmatpush.msra.mxu0 %v3838
    %3911 = vmatpush.msra.mxu0 %v3834
    %3912 = vmatpush.msra.mxu0 %v3830
    %3913 = vmatpush.msra.mxu0 %v3826
    %3914 = vmatpush.msra.mxu0 %v3822
    %3915 = vmatpush.msra.mxu0 %v3818
    %3916 = vmatpush.msra.mxu0 %v3814
    %3917 = vmatpush.msra.mxu0 %v3810
    %3918 = vmatpush.msra.mxu0 %v3806
    %3919 = vmatpush.msra.mxu0 %v3802
    %3920 = vmatmul.f32.gmra.mxu0 %v3783
    %v3921 = vpop.f32.mrf.mxu0
    %v3922 = vadd.f32 0.0, %v3921
    %3923 = vdwg.mxu0
    %3924 = vmatpush.msra.mxu0 %v3863
    %3925 = vmatpush.msra.mxu0 %v3859
    %3926 = vmatpush.msra.mxu0 %v3855
    %3927 = vmatpush.msra.mxu0 %v3851
    %3928 = vmatpush.msra.mxu0 %v3847
    %3929 = vmatpush.msra.mxu0 %v3843
    %3930 = vmatpush.msra.mxu0 %v3839
    %3931 = vmatpush.msra.mxu0 %v3835
    %3932 = vmatpush.msra.mxu0 %v3831
    %3933 = vmatpush.msra.mxu0 %v3827
    %3934 = vmatpush.msra.mxu0 %v3823
    %3935 = vmatpush.msra.mxu0 %v3819
    %3936 = vmatpush.msra.mxu0 %v3815
    %3937 = vmatpush.msra.mxu0 %v3811
    %3938 = vmatpush.msra.mxu0 %v3807
    %3939 = vmatpush.msra.mxu0 %v3803
    %3940 = vmatmul.f32.gmra.mxu0 %v3783
    %v3941 = vpop.f32.mrf.mxu0
    %v3942 = vadd.f32 0.0, %v3941
    %3943 = vdwg.mxu0
    %v3944 = vadd.f32 %v3792, %v3882
    %v3945 = vadd.f32 %v3793, %v3902
    %v3946 = vadd.f32 %v3794, %v3922
    %v3947 = vadd.f32 %v3795, %v3942
    %v3948 = vxor.u32 %v3944, 2147483648
    %v3949 = vmul.f32 %v3948, 1.442695
    %v3950 = vpow.pop %v3949
    %v3951 = vadd.f32 %v3950, 1.0
    %v3952 = vrcp.pop %v3951
    %v3953 = vmul.f32 %v3951, %v3952
    %v3954 = vsub.f32 1.0, %v3953
    %v3955 = vmul.f32 %v3952, %v3954
    %v3956 = vadd.f32 %v3952, %v3955
    %vm3957 = vweird.f32 %v3951
    %vm3958 = vweird.f32 %v3952
    %vm3959 = vmor %vm3957, %vm3958
    %v3960 = vsel %vm3959, %v3952, %v3956
    %v3961 = vand.u32 2147483647, %v3951
    %vm3962 = vcmp.eq.f32.partialorder %v3961, 8.507059e+37
    %v3963 = vand.u32 %v3951, 2147483648
    %v3964 = vor.u32 1.1754944e-38, %v3963
    %v3965 = vsel %vm3962, %v3964, %v3960
    %v3966 = vmul.f32 1.0, %v3965
    %v3967 = vxor.u32 %v3945, 2147483648
    %v3968 = vmul.f32 %v3967, 1.442695
    %v3969 = vpow.pop %v3968
    %v3970 = vadd.f32 %v3969, 1.0
    %v3971 = vrcp.pop %v3970
    %v3972 = vmul.f32 %v3970, %v3971
    %v3973 = vsub.f32 1.0, %v3972
    %v3974 = vmul.f32 %v3971, %v3973
    %v3975 = vadd.f32 %v3971, %v3974
    %vm3976 = vweird.f32 %v3970
    %vm3977 = vweird.f32 %v3971
    %vm3978 = vmor %vm3976, %vm3977
    %v3979 = vsel %vm3978, %v3971, %v3975
    %v3980 = vand.u32 2147483647, %v3970
    %vm3981 = vcmp.eq.f32.partialorder %v3980, 8.507059e+37
    %v3982 = vand.u32 %v3970, 2147483648
    %v3983 = vor.u32 1.1754944e-38, %v3982
    %v3984 = vsel %vm3981, %v3983, %v3979
    %v3985 = vmul.f32 1.0, %v3984
    %v3986 = vtanh.pop %v3946
    %v3987 = vxor.u32 %v3947, 2147483648
    %v3988 = vmul.f32 %v3987, 1.442695
    %v3989 = vpow.pop %v3988
    %v3990 = vadd.f32 %v3989, 1.0
    %v3991 = vrcp.pop %v3990
    %v3992 = vmul.f32 %v3990, %v3991
    %v3993 = vsub.f32 1.0, %v3992
    %v3994 = vmul.f32 %v3991, %v3993
    %v3995 = vadd.f32 %v3991, %v3994
    %vm3996 = vweird.f32 %v3990
    %vm3997 = vweird.f32 %v3991
    %vm3998 = vmor %vm3996, %vm3997
    %v3999 = vsel %vm3998, %v3991, %v3995
    %v4000 = vand.u32 2147483647, %v3990
    %vm4001 = vcmp.eq.f32.partialorder %v4000, 8.507059e+37
    %v4002 = vand.u32 %v3990, 2147483648
    %v4003 = vor.u32 1.1754944e-38, %v4002
    %v4004 = vsel %vm4001, %v4003, %v3999
    %v4005 = vmul.f32 1.0, %v4004
    %v4006 = vmul.f32 %v3985, %v3786
    %v4007 = vmul.f32 %v3966, %v3986
    %v4008 = vadd.f32 %v4006, %v4007
    %v4009 = vtanh.pop %v4008
    %v4010 = vmul.f32 %v4005, %v4009
    %v4011 = vld [vmem:[#allocation9] sm:$0xff]
    %v4012 = vld [vmem:[#allocation9 + $0x8] sm:$0xff]
    %v4013 = vld [vmem:[#allocation9 + $0x10] sm:$0xff]
    %v4014 = vld [vmem:[#allocation9 + $0x18] sm:$0xff]
    %v4015 = vld [vmem:[#allocation9 + $0x20] sm:$0xff]
    %v4016 = vld [vmem:[#allocation9 + $0x28] sm:$0xff]
    %v4017 = vld [vmem:[#allocation9 + $0x30] sm:$0xff]
    %v4018 = vld [vmem:[#allocation9 + $0x38] sm:$0xff]
    %v4019 = vld [vmem:[#allocation9 + $0x40] sm:$0xff]
    %v4020 = vld [vmem:[#allocation9 + $0x48] sm:$0xff]
    %v4021 = vld [vmem:[#allocation9 + $0x50] sm:$0xff]
    %v4022 = vld [vmem:[#allocation9 + $0x58] sm:$0xff]
    %v4023 = vld [vmem:[#allocation9 + $0x60] sm:$0xff]
    %v4024 = vld [vmem:[#allocation9 + $0x68] sm:$0xff]
    %v4025 = vld [vmem:[#allocation9 + $0x70] sm:$0xff]
    %v4026 = vld [vmem:[#allocation9 + $0x78] sm:$0xff]
    %v4027 = vld [vmem:[#allocation9 + $0x80] sm:$0xff]
    %v4028 = vld [vmem:[#allocation9 + $0x88] sm:$0xff]
    %v4029 = vld [vmem:[#allocation9 + $0x90] sm:$0xff]
    %v4030 = vld [vmem:[#allocation9 + $0x98] sm:$0xff]
    %v4031 = vld [vmem:[#allocation9 + $0xa0] sm:$0xff]
    %v4032 = vld [vmem:[#allocation9 + $0xa8] sm:$0xff]
    %v4033 = vld [vmem:[#allocation9 + $0xb0] sm:$0xff]
    %v4034 = vld [vmem:[#allocation9 + $0xb8] sm:$0xff]
    %v4035 = vld [vmem:[#allocation9 + $0xc0] sm:$0xff]
    %v4036 = vld [vmem:[#allocation9 + $0xc8] sm:$0xff]
    %v4037 = vld [vmem:[#allocation9 + $0xd0] sm:$0xff]
    %v4038 = vld [vmem:[#allocation9 + $0xd8] sm:$0xff]
    %v4039 = vld [vmem:[#allocation9 + $0xe0] sm:$0xff]
    %v4040 = vld [vmem:[#allocation9 + $0xe8] sm:$0xff]
    %v4041 = vld [vmem:[#allocation9 + $0xf0] sm:$0xff]
    %v4042 = vld [vmem:[#allocation9 + $0xf8] sm:$0xff]
    %v4043 = vld [vmem:[#allocation9 + $0x100] sm:$0xff]
    %v4044 = vld [vmem:[#allocation9 + $0x108] sm:$0xff]
    %v4045 = vld [vmem:[#allocation9 + $0x110] sm:$0xff]
    %v4046 = vld [vmem:[#allocation9 + $0x118] sm:$0xff]
    %v4047 = vld [vmem:[#allocation9 + $0x120] sm:$0xff]
    %v4048 = vld [vmem:[#allocation9 + $0x128] sm:$0xff]
    %v4049 = vld [vmem:[#allocation9 + $0x130] sm:$0xff]
    %v4050 = vld [vmem:[#allocation9 + $0x138] sm:$0xff]
    %v4051 = vld [vmem:[#allocation9 + $0x140] sm:$0xff]
    %v4052 = vld [vmem:[#allocation9 + $0x148] sm:$0xff]
    %v4053 = vld [vmem:[#allocation9 + $0x150] sm:$0xff]
    %v4054 = vld [vmem:[#allocation9 + $0x158] sm:$0xff]
    %v4055 = vld [vmem:[#allocation9 + $0x160] sm:$0xff]
    %v4056 = vld [vmem:[#allocation9 + $0x168] sm:$0xff]
    %v4057 = vld [vmem:[#allocation9 + $0x170] sm:$0xff]
    %v4058 = vld [vmem:[#allocation9 + $0x178] sm:$0xff]
    %v4059 = vld [vmem:[#allocation9 + $0x180] sm:$0xff]
    %v4060 = vld [vmem:[#allocation9 + $0x188] sm:$0xff]
    %v4061 = vld [vmem:[#allocation9 + $0x190] sm:$0xff]
    %v4062 = vld [vmem:[#allocation9 + $0x198] sm:$0xff]
    %v4063 = vld [vmem:[#allocation9 + $0x1a0] sm:$0xff]
    %v4064 = vld [vmem:[#allocation9 + $0x1a8] sm:$0xff]
    %v4065 = vld [vmem:[#allocation9 + $0x1b0] sm:$0xff]
    %v4066 = vld [vmem:[#allocation9 + $0x1b8] sm:$0xff]
    %v4067 = vld [vmem:[#allocation9 + $0x1c0] sm:$0xff]
    %v4068 = vld [vmem:[#allocation9 + $0x1c8] sm:$0xff]
    %v4069 = vld [vmem:[#allocation9 + $0x1d0] sm:$0xff]
    %v4070 = vld [vmem:[#allocation9 + $0x1d8] sm:$0xff]
    %v4071 = vld [vmem:[#allocation9 + $0x1e0] sm:$0xff]
    %v4072 = vld [vmem:[#allocation9 + $0x1e8] sm:$0xff]
    %v4073 = vld [vmem:[#allocation9 + $0x1f0] sm:$0xff]
    %v4074 = vld [vmem:[#allocation9 + $0x1f8] sm:$0xff]
    %4075 = vmatpush.msra.mxu0 %v4071
    %4076 = vmatpush.msra.mxu0 %v4067
    %4077 = vmatpush.msra.mxu0 %v4063
    %4078 = vmatpush.msra.mxu0 %v4059
    %4079 = vmatpush.msra.mxu0 %v4055
    %4080 = vmatpush.msra.mxu0 %v4051
    %4081 = vmatpush.msra.mxu0 %v4047
    %4082 = vmatpush.msra.mxu0 %v4043
    %4083 = vmatpush.msra.mxu0 %v4039
    %4084 = vmatpush.msra.mxu0 %v4035
    %4085 = vmatpush.msra.mxu0 %v4031
    %4086 = vmatpush.msra.mxu0 %v4027
    %4087 = vmatpush.msra.mxu0 %v4023
    %4088 = vmatpush.msra.mxu0 %v4019
    %4089 = vmatpush.msra.mxu0 %v4015
    %4090 = vmatpush.msra.mxu0 %v4011
    %4091 = vmatmul.f32.gmra.mxu0 %v3788
    %v4092 = vpop.f32.mrf.mxu0
    %v4093 = vadd.f32 0.0, %v4092
    %4094 = vdwg.mxu0
    %4095 = vmatpush.msra.mxu0 %v4072
    %4096 = vmatpush.msra.mxu0 %v4068
    %4097 = vmatpush.msra.mxu0 %v4064
    %4098 = vmatpush.msra.mxu0 %v4060
    %4099 = vmatpush.msra.mxu0 %v4056
    %4100 = vmatpush.msra.mxu0 %v4052
    %4101 = vmatpush.msra.mxu0 %v4048
    %4102 = vmatpush.msra.mxu0 %v4044
    %4103 = vmatpush.msra.mxu0 %v4040
    %4104 = vmatpush.msra.mxu0 %v4036
    %4105 = vmatpush.msra.mxu0 %v4032
    %4106 = vmatpush.msra.mxu0 %v4028
    %4107 = vmatpush.msra.mxu0 %v4024
    %4108 = vmatpush.msra.mxu0 %v4020
    %4109 = vmatpush.msra.mxu0 %v4016
    %4110 = vmatpush.msra.mxu0 %v4012
    %4111 = vmatmul.f32.gmra.mxu0 %v3788
    %v4112 = vpop.f32.mrf.mxu0
    %v4113 = vadd.f32 0.0, %v4112
    %4114 = vdwg.mxu0
    %4115 = vmatpush.msra.mxu0 %v4073
    %4116 = vmatpush.msra.mxu0 %v4069
    %4117 = vmatpush.msra.mxu0 %v4065
    %4118 = vmatpush.msra.mxu0 %v4061
    %4119 = vmatpush.msra.mxu0 %v4057
    %4120 = vmatpush.msra.mxu0 %v4053
    %4121 = vmatpush.msra.mxu0 %v4049
    %4122 = vmatpush.msra.mxu0 %v4045
    %4123 = vmatpush.msra.mxu0 %v4041
    %4124 = vmatpush.msra.mxu0 %v4037
    %4125 = vmatpush.msra.mxu0 %v4033
    %4126 = vmatpush.msra.mxu0 %v4029
    %4127 = vmatpush.msra.mxu0 %v4025
    %4128 = vmatpush.msra.mxu0 %v4021
    %4129 = vmatpush.msra.mxu0 %v4017
    %4130 = vmatpush.msra.mxu0 %v4013
    %4131 = vmatmul.f32.gmra.mxu0 %v3788
    %v4132 = vpop.f32.mrf.mxu0
    %v4133 = vadd.f32 0.0, %v4132
    %4134 = vdwg.mxu0
    %4135 = vmatpush.msra.mxu0 %v4074
    %4136 = vmatpush.msra.mxu0 %v4070
    %4137 = vmatpush.msra.mxu0 %v4066
    %4138 = vmatpush.msra.mxu0 %v4062
    %4139 = vmatpush.msra.mxu0 %v4058
    %4140 = vmatpush.msra.mxu0 %v4054
    %4141 = vmatpush.msra.mxu0 %v4050
    %4142 = vmatpush.msra.mxu0 %v4046
    %4143 = vmatpush.msra.mxu0 %v4042
    %4144 = vmatpush.msra.mxu0 %v4038
    %4145 = vmatpush.msra.mxu0 %v4034
    %4146 = vmatpush.msra.mxu0 %v4030
    %4147 = vmatpush.msra.mxu0 %v4026
    %4148 = vmatpush.msra.mxu0 %v4022
    %4149 = vmatpush.msra.mxu0 %v4018
    %4150 = vmatpush.msra.mxu0 %v4014
    %4151 = vmatmul.f32.gmra.mxu0 %v3788
    %v4152 = vpop.f32.mrf.mxu0
    %v4153 = vadd.f32 0.0, %v4152
    %4154 = vdwg.mxu0
    %v4155 = vadd.f32 %v3796, %v4093
    %v4156 = vadd.f32 %v3797, %v4113
    %v4157 = vadd.f32 %v3798, %v4133
    %v4158 = vadd.f32 %v3799, %v4153
    %v4159 = vxor.u32 %v4155, 2147483648
    %v4160 = vmul.f32 %v4159, 1.442695
    %v4161 = vpow.pop %v4160
    %v4162 = vadd.f32 %v4161, 1.0
    %v4163 = vrcp.pop %v4162
    %v4164 = vmul.f32 %v4162, %v4163
    %v4165 = vsub.f32 1.0, %v4164
    %v4166 = vmul.f32 %v4163, %v4165
    %v4167 = vadd.f32 %v4163, %v4166
    %vm4168 = vweird.f32 %v4162
    %vm4169 = vweird.f32 %v4163
    %vm4170 = vmor %vm4168, %vm4169
    %v4171 = vsel %vm4170, %v4163, %v4167
    %v4172 = vand.u32 2147483647, %v4162
    %vm4173 = vcmp.eq.f32.partialorder %v4172, 8.507059e+37
    %v4174 = vand.u32 %v4162, 2147483648
    %v4175 = vor.u32 1.1754944e-38, %v4174
    %v4176 = vsel %vm4173, %v4175, %v4171
    %v4177 = vmul.f32 1.0, %v4176
    %v4178 = vxor.u32 %v4156, 2147483648
    %v4179 = vmul.f32 %v4178, 1.442695
    %v4180 = vpow.pop %v4179
    %v4181 = vadd.f32 %v4180, 1.0
    %v4182 = vrcp.pop %v4181
    %v4183 = vmul.f32 %v4181, %v4182
    %v4184 = vsub.f32 1.0, %v4183
    %v4185 = vmul.f32 %v4182, %v4184
    %v4186 = vadd.f32 %v4182, %v4185
    %vm4187 = vweird.f32 %v4181
    %vm4188 = vweird.f32 %v4182
    %vm4189 = vmor %vm4187, %vm4188
    %v4190 = vsel %vm4189, %v4182, %v4186
    %v4191 = vand.u32 2147483647, %v4181
    %vm4192 = vcmp.eq.f32.partialorder %v4191, 8.507059e+37
    %v4193 = vand.u32 %v4181, 2147483648
    %v4194 = vor.u32 1.1754944e-38, %v4193
    %v4195 = vsel %vm4192, %v4194, %v4190
    %v4196 = vmul.f32 1.0, %v4195
    %v4197 = vtanh.pop %v4157
    %v4198 = vxor.u32 %v4158, 2147483648
    %v4199 = vmul.f32 %v4198, 1.442695
    %v4200 = vpow.pop %v4199
    %v4201 = vadd.f32 %v4200, 1.0
    %v4202 = vrcp.pop %v4201
    %v4203 = vmul.f32 %v4201, %v4202
    %v4204 = vsub.f32 1.0, %v4203
    %v4205 = vmul.f32 %v4202, %v4204
    %v4206 = vadd.f32 %v4202, %v4205
    %vm4207 = vweird.f32 %v4201
    %vm4208 = vweird.f32 %v4202
    %vm4209 = vmor %vm4207, %vm4208
    %v4210 = vsel %vm4209, %v4202, %v4206
    %v4211 = vand.u32 2147483647, %v4201
    %vm4212 = vcmp.eq.f32.partialorder %v4211, 8.507059e+37
    %v4213 = vand.u32 %v4201, 2147483648
    %v4214 = vor.u32 1.1754944e-38, %v4213
    %v4215 = vsel %vm4212, %v4214, %v4210
    %v4216 = vmul.f32 1.0, %v4215
    %v4217 = vmul.f32 %v4196, %v3791
    %v4218 = vmul.f32 %v4177, %v4197
    %v4219 = vadd.f32 %v4217, %v4218
    %v4220 = vtanh.pop %v4219
    %v4221 = vmul.f32 %v4216, %v4220
    %v4222 = vmul.f32 %v1001, %v4010
    %s4223 = scalar_lea.vmem [#allocation3], 56
    %4224 = vst [vmem:[%s4223] sm:$0xff] %v4222
    %v4225 = vmul.f32 %v994, %v4221
    %4226 = vst [vmem:[#allocation4] sm:$0xff] %v4225
    %v4227 = vld [vmem:[#allocation3] sm:$0xff]
    %v4228 = vld [vmem:[#allocation3 + $0x8] sm:$0xff]
    %v4229 = vld [vmem:[#allocation3 + $0x10] sm:$0xff]
    %v4230 = vld [vmem:[#allocation3 + $0x18] sm:$0xff]
    %v4231 = vld [vmem:[#allocation3 + $0x20] sm:$0xff]
    %v4232 = vld [vmem:[#allocation3 + $0x28] sm:$0xff]
    %v4233 = vld [vmem:[#allocation3 + $0x30] sm:$0xff]
    %v4234 = vld [vmem:[#allocation3 + $0x38] sm:$0xff]
    %v4235 = vld [vmem:[#allocation4] sm:$0xff]
    %v4236 = vld [vmem:[#allocation4 + $0x8] sm:$0xff]
    %v4237 = vld [vmem:[#allocation4 + $0x10] sm:$0xff]
    %v4238 = vld [vmem:[#allocation4 + $0x18] sm:$0xff]
    %v4239 = vld [vmem:[#allocation4 + $0x20] sm:$0xff]
    %v4240 = vld [vmem:[#allocation4 + $0x28] sm:$0xff]
    %v4241 = vld [vmem:[#allocation4 + $0x30] sm:$0xff]
    %v4242 = vld [vmem:[#allocation4 + $0x38] sm:$0xff]
    %v4243 = vadd.f32 %v4227, %v4235
    %v4244 = vadd.f32 %v4228, %v4236
    %v4245 = vadd.f32 %v4229, %v4237
    %v4246 = vadd.f32 %v4230, %v4238
    %v4247 = vadd.f32 %v4231, %v4239
    %v4248 = vadd.f32 %v4232, %v4240
    %v4249 = vadd.f32 %v4233, %v4241
    %v4250 = vadd.f32 %v4234, %v4242
    %v4251 = vld [vmem:[%s6] sm:$0xff]
    %v4252 = vld [vmem:[%s6 + $0x8] sm:$0xff]
    %v4253 = vld [vmem:[%s6 + $0x10] sm:$0xff]
    %v4254 = vld [vmem:[%s6 + $0x18] sm:$0xff]
    %v4255 = vld [vmem:[%s6 + $0x20] sm:$0xff]
    %v4256 = vld [vmem:[%s6 + $0x28] sm:$0xff]
    %v4257 = vld [vmem:[%s6 + $0x30] sm:$0xff]
    %v4258 = vld [vmem:[%s6 + $0x38] sm:$0xff]
    %v4259 = vld [vmem:[%s6 + $0x40] sm:$0xff]
    %v4260 = vld [vmem:[%s6 + $0x48] sm:$0xff]
    %v4261 = vld [vmem:[%s6 + $0x50] sm:$0xff]
    %v4262 = vld [vmem:[%s6 + $0x58] sm:$0xff]
    %v4263 = vld [vmem:[%s6 + $0x60] sm:$0xff]
    %v4264 = vld [vmem:[%s6 + $0x68] sm:$0xff]
    %v4265 = vld [vmem:[%s6 + $0x70] sm:$0xff]
    %v4266 = vld [vmem:[%s6 + $0x78] sm:$0xff]
    %v4267 = vld [vmem:[%s7] sm:$0x1]
    %v4269 = vperm.slane %v4267, 0
    %4271 = vmatpush.msra.mxu0 %v4266
    %4272 = vmatpush.msra.mxu0 %v4265
    %4273 = vmatpush.msra.mxu0 %v4264
    %4274 = vmatpush.msra.mxu0 %v4263
    %4275 = vmatpush.msra.mxu0 %v4262
    %4276 = vmatpush.msra.mxu0 %v4261
    %4277 = vmatpush.msra.mxu0 %v4260
    %4278 = vmatpush.msra.mxu0 %v4259
    %4279 = vmatpush.msra.mxu0 %v4258
    %4280 = vmatpush.msra.mxu0 %v4257
    %4281 = vmatpush.msra.mxu0 %v4256
    %4282 = vmatpush.msra.mxu0 %v4255
    %4283 = vmatpush.msra.mxu0 %v4254
    %4284 = vmatpush.msra.mxu0 %v4253
    %4285 = vmatpush.msra.mxu0 %v4252
    %4286 = vmatpush.msra.mxu0 %v4251
    %4287 = vmatmul.f32.gmra.mxu0 %v4243
    %v4288 = vpop.f32.mrf.mxu0
    %v4289 = vadd.f32 %v4269, %v4288
    %4290 = vmatmul.f32.gmra.mxu0 %v4244
    %v4291 = vpop.f32.mrf.mxu0
    %v4292 = vadd.f32 %v4269, %v4291
    %4293 = vmatmul.f32.gmra.mxu0 %v4245
    %v4294 = vpop.f32.mrf.mxu0
    %v4295 = vadd.f32 %v4269, %v4294
    %4296 = vmatmul.f32.gmra.mxu0 %v4246
    %v4297 = vpop.f32.mrf.mxu0
    %v4298 = vadd.f32 %v4269, %v4297
    %4299 = vmatmul.f32.gmra.mxu0 %v4247
    %v4300 = vpop.f32.mrf.mxu0
    %v4301 = vadd.f32 %v4269, %v4300
    %4302 = vmatmul.f32.gmra.mxu0 %v4248
    %v4303 = vpop.f32.mrf.mxu0
    %v4304 = vadd.f32 %v4269, %v4303
    %4305 = vmatmul.f32.gmra.mxu0 %v4249
    %v4306 = vpop.f32.mrf.mxu0
    %v4307 = vadd.f32 %v4269, %v4306
    %4308 = vmatmul.f32.gmra.mxu0 %v4250
    %v4309 = vpop.f32.mrf.mxu0
    %v4310 = vadd.f32 %v4269, %v4309
    %4311 = vdwg.mxu0
    %v4312 = vmax.f32 %v4289, 0.0
    %v4313 = vmax.f32 %v4292, 0.0
    %v4314 = vmax.f32 %v4295, 0.0
    %v4315 = vmax.f32 %v4298, 0.0
    %v4316 = vmax.f32 %v4301, 0.0
    %v4317 = vmax.f32 %v4304, 0.0
    %v4318 = vmax.f32 %v4307, 0.0
    %v4319 = vmax.f32 %v4310, 0.0
    %v4320 = vld [vmem:[%s8] sm:$0x1]
    %v4322 = vperm.slane %v4320, 0
    %v4324 = vmul.f32 %v4312, %v4322
    %v4325 = vmul.f32 %v4313, %v4322
    %v4326 = vmul.f32 %v4314, %v4322
    %v4327 = vmul.f32 %v4315, %v4322
    %v4328 = vmul.f32 %v4316, %v4322
    %v4329 = vmul.f32 %v4317, %v4322
    %v4330 = vmul.f32 %v4318, %v4322
    %v4331 = vmul.f32 %v4319, %v4322
    %vm4332 = vcmask 523264
    %v4333 = vsel %vm4332, %v4324, 0.0
    %4334 = vadd.xlane.f32.xlu0 %v4333
    %v4335 = vpop.xlane.xlu0 %4334
    %v4336 = vsel %vm4332, %v4325, 0.0
    %4337 = vadd.xlane.f32.xlu0 %v4336
    %v4338 = vpop.xlane.xlu0 %4337
    %v4339 = vsel %vm4332, %v4326, 0.0
    %4340 = vadd.xlane.f32.xlu0 %v4339
    %v4341 = vpop.xlane.xlu0 %4340
    %v4342 = vsel %vm4332, %v4327, 0.0
    %4343 = vadd.xlane.f32.xlu0 %v4342
    %v4344 = vpop.xlane.xlu0 %4343
    %v4345 = vsel %vm4332, %v4328, 0.0
    %4346 = vadd.xlane.f32.xlu0 %v4345
    %v4347 = vpop.xlane.xlu0 %4346
    %v4348 = vsel %vm4332, %v4329, 0.0
    %4349 = vadd.xlane.f32.xlu0 %v4348
    %v4350 = vpop.xlane.xlu0 %4349
    %v4351 = vsel %vm4332, %v4330, 0.0
    %4352 = vadd.xlane.f32.xlu0 %v4351
    %v4353 = vpop.xlane.xlu0 %4352
    %v4354 = vsel %vm4332, %v4331, 0.0
    %4355 = vadd.xlane.f32.xlu0 %v4354
    %v4356 = vpop.xlane.xlu0 %4355
    %v4357 = vld [vmem:[#allocation5] sm:$0x1]
    %v4359 = vperm.slane %v4357, 0
    %v4361 = vadd.f32 %v4335, %v4359
    %v4362 = vadd.f32 %v4338, %v4359
    %v4363 = vadd.f32 %v4341, %v4359
    %v4364 = vadd.f32 %v4344, %v4359
    %v4365 = vadd.f32 %v4347, %v4359
    %v4366 = vadd.f32 %v4350, %v4359
    %v4367 = vadd.f32 %v4353, %v4359
    %v4368 = vadd.f32 %v4356, %v4359
    %vm4369 = vcmask 7168
    %v4370 = vsel %vm4369, %v4361, -inf
    %v4371 = vsel %vm4369, %v4362, -inf
    %v4372 = vsel %vm4369, %v4363, -inf
    %v4373 = vsel %vm4369, %v4364, -inf
    %v4374 = vsel %vm4369, %v4365, -inf
    %v4375 = vmax.f32 %v4370, %v4374
    %v4376 = vsel %vm4369, %v4366, -inf
    %v4377 = vmax.f32 %v4371, %v4376
    %v4378 = vsel %vm4369, %v4367, -inf
    %v4379 = vmax.f32 %v4372, %v4378
    %v4380 = vsel %vm4369, %v4368, -inf
    %v4381 = vmax.f32 %v4373, %v4380
    %v4382 = vmax.f32 %v4375, %v4377
    %v4383 = vmax.f32 %v4379, %v4381
    %v4384 = vmax.f32 %v4382, %v4383
    %v4385 = vsub.f32 %v4361, %v4384
    %v4386 = vsub.f32 %v4362, %v4384
    %v4387 = vsub.f32 %v4363, %v4384
    %v4388 = vsub.f32 %v4364, %v4384
    %v4389 = vsub.f32 %v4365, %v4384
    %v4390 = vsub.f32 %v4366, %v4384
    %v4391 = vsub.f32 %v4367, %v4384
    %v4392 = vsub.f32 %v4368, %v4384
    %v4393 = vmul.f32 %v4385, 1.442695
    %v4394 = vpow.pop %v4393
    %v4395 = vmul.f32 %v4386, 1.442695
    %v4396 = vpow.pop %v4395
    %v4397 = vmul.f32 %v4387, 1.442695
    %v4398 = vpow.pop %v4397
    %v4399 = vmul.f32 %v4388, 1.442695
    %v4400 = vpow.pop %v4399
    %v4401 = vmul.f32 %v4389, 1.442695
    %v4402 = vpow.pop %v4401
    %v4403 = vmul.f32 %v4390, 1.442695
    %v4404 = vpow.pop %v4403
    %v4405 = vmul.f32 %v4391, 1.442695
    %v4406 = vpow.pop %v4405
    %v4407 = vmul.f32 %v4392, 1.442695
    %v4408 = vpow.pop %v4407
    %v4409 = vsel %vm4369, %v4394, 0.0
    %v4410 = vsel %vm4369, %v4396, 0.0
    %v4411 = vadd.f32 %v4409, %v4410
    %v4412 = vsel %vm4369, %v4398, 0.0
    %v4413 = vadd.f32 %v4411, %v4412
    %v4414 = vsel %vm4369, %v4400, 0.0
    %v4415 = vadd.f32 %v4413, %v4414
    %v4416 = vsel %vm4369, %v4402, 0.0
    %v4417 = vadd.f32 %v4415, %v4416
    %v4418 = vsel %vm4369, %v4404, 0.0
    %v4419 = vadd.f32 %v4417, %v4418
    %v4420 = vsel %vm4369, %v4406, 0.0
    %v4421 = vadd.f32 %v4419, %v4420
    %v4422 = vsel %vm4369, %v4408, 0.0
    %v4423 = vadd.f32 %v4421, %v4422
    %v4424 = vrcp.pop %v4423
    %v4425 = vmul.f32 %v4423, %v4424
    %v4426 = vsub.f32 1.0, %v4425
    %v4427 = vmul.f32 %v4424, %v4426
    %v4428 = vadd.f32 %v4424, %v4427
    %vm4429 = vweird.f32 %v4423
    %vm4430 = vweird.f32 %v4424
    %vm4431 = vmor %vm4429, %vm4430
    %v4432 = vsel %vm4431, %v4424, %v4428
    %v4433 = vand.u32 2147483647, %v4423
    %vm4434 = vcmp.eq.f32.partialorder %v4433, 8.507059e+37
    %v4435 = vand.u32 %v4423, 2147483648
    %v4436 = vor.u32 1.1754944e-38, %v4435
    %v4437 = vsel %vm4434, %v4436, %v4432
    %v4438 = vmul.f32 %v4394, %v4437
    %v4439 = vmul.f32 %v4396, %v4437
    %v4440 = vmul.f32 %v4398, %v4437
    %v4441 = vmul.f32 %v4400, %v4437
    %v4442 = vmul.f32 %v4402, %v4437
    %v4443 = vmul.f32 %v4404, %v4437
    %v4444 = vmul.f32 %v4406, %v4437
    %v4445 = vmul.f32 %v4408, %v4437
    %4447 = vset.pattern.permute.xlu0 0
    %4448 = vperm.xlu0 %4447, %v4438
    %v4449 = vpop.permute.xlu0 %4448
    %4452 = vset.pattern.permute.xlu0 0
    %4453 = vperm.xlu0 %4452, %v4439
    %v4454 = vpop.permute.xlu0 %4453
    %4457 = vset.pattern.permute.xlu0 0
    %4458 = vperm.xlu0 %4457, %v4440
    %v4459 = vpop.permute.xlu0 %4458
    %4462 = vset.pattern.permute.xlu0 0
    %4463 = vperm.xlu0 %4462, %v4441
    %v4464 = vpop.permute.xlu0 %4463
    %4467 = vset.pattern.permute.xlu0 0
    %4468 = vperm.xlu0 %4467, %v4442
    %v4469 = vpop.permute.xlu0 %4468
    %4472 = vset.pattern.permute.xlu0 0
    %4473 = vperm.xlu0 %4472, %v4443
    %v4474 = vpop.permute.xlu0 %4473
    %4477 = vset.pattern.permute.xlu0 0
    %4478 = vperm.xlu0 %4477, %v4444
    %v4479 = vpop.permute.xlu0 %4478
    %4482 = vset.pattern.permute.xlu0 0
    %4483 = vperm.xlu0 %4482, %v4445
    %v4484 = vpop.permute.xlu0 %4483
    %v4486 = vmul.f32 %v4243, %v4449
    %v4487 = vmul.f32 %v4244, %v4454
    %v4488 = vmul.f32 %v4245, %v4459
    %v4489 = vmul.f32 %v4246, %v4464
    %v4490 = vmul.f32 %v4247, %v4469
    %v4491 = vmul.f32 %v4248, %v4474
    %v4492 = vmul.f32 %v4249, %v4479
    %v4493 = vmul.f32 %v4250, %v4484
    %v4494 = vadd.f32 %v4486, %v4487
    %v4495 = vadd.f32 %v4494, %v4488
    %v4496 = vadd.f32 %v4495, %v4489
    %v4497 = vadd.f32 %v4496, %v4490
    %v4498 = vadd.f32 %v4497, %v4491
    %v4499 = vadd.f32 %v4498, %v4492
    %v4500 = vadd.f32 %v4499, %v4493
    %v4501 = vld [vmem:[#allocation11] sm:$0xff]
    %v4502 = vld [vmem:[#allocation11 + $0x8] sm:$0xff]
    %v4503 = vld [vmem:[#allocation11 + $0x10] sm:$0xff]
    %v4504 = vld [vmem:[#allocation11 + $0x18] sm:$0xff]
    %v4505 = vld [vmem:[#allocation11 + $0x20] sm:$0xff]
    %v4506 = vld [vmem:[#allocation11 + $0x28] sm:$0xff]
    %v4507 = vld [vmem:[#allocation11 + $0x30] sm:$0xff]
    %v4508 = vld [vmem:[#allocation11 + $0x38] sm:$0xff]
    %v4509 = vld [vmem:[#allocation11 + $0x40] sm:$0xff]
    %v4510 = vld [vmem:[#allocation11 + $0x48] sm:$0xff]
    %v4511 = vld [vmem:[#allocation11 + $0x50] sm:$0xff]
    %v4512 = vld [vmem:[#allocation11 + $0x58] sm:$0xff]
    %v4513 = vld [vmem:[#allocation11 + $0x60] sm:$0xff]
    %v4514 = vld [vmem:[#allocation11 + $0x68] sm:$0xff]
    %v4515 = vld [vmem:[#allocation11 + $0x70] sm:$0xff]
    %v4516 = vld [vmem:[#allocation11 + $0x78] sm:$0xff]
    %v4517 = vld [vmem:[%s11] sm:$0x1]
    %v4519 = vperm.slane %v4517, 0
    %4521 = vmatpush.msra.mxu0 %v4516
    %4522 = vmatpush.msra.mxu0 %v4515
    %4523 = vmatpush.msra.mxu0 %v4514
    %4524 = vmatpush.msra.mxu0 %v4513
    %4525 = vmatpush.msra.mxu0 %v4512
    %4526 = vmatpush.msra.mxu0 %v4511
    %4527 = vmatpush.msra.mxu0 %v4510
    %4528 = vmatpush.msra.mxu0 %v4509
    %4529 = vmatpush.msra.mxu0 %v4508
    %4530 = vmatpush.msra.mxu0 %v4507
    %4531 = vmatpush.msra.mxu0 %v4506
    %4532 = vmatpush.msra.mxu0 %v4505
    %4533 = vmatpush.msra.mxu0 %v4504
    %4534 = vmatpush.msra.mxu0 %v4503
    %4535 = vmatpush.msra.mxu0 %v4502
    %4536 = vmatpush.msra.mxu0 %v4501
    %4537 = vmatmul.f32.gmra.mxu0 %v4500
    %v4538 = vpop.f32.mrf.mxu0
    %v4539 = vadd.f32 %v4519, %v4538
    %4540 = vdwg.mxu0
    %4541 = vst [vmem:[#allocation12] sm:$0xff] %v4539
    %4542 = vrot.lane.b32.xlu0 %v4439, 1
    %v4543 = vpop.permute.xlu0 %4542
    %4545 = vrot.lane.b32.xlu0 %v4440, 2
    %v4546 = vpop.permute.xlu0 %4545
    %4548 = vrot.lane.b32.xlu0 %v4441, 3
    %v4549 = vpop.permute.xlu0 %4548
    %4551 = vrot.lane.b32.xlu0 %v4442, 4
    %v4552 = vpop.permute.xlu0 %4551
    %4554 = vrot.lane.b32.xlu0 %v4443, 5
    %v4555 = vpop.permute.xlu0 %4554
    %4557 = vrot.lane.b32.xlu0 %v4444, 6
    %v4558 = vpop.permute.xlu0 %4557
    %4560 = vrot.lane.b32.xlu0 %v4445, 7
    %v4561 = vpop.permute.xlu0 %4560
    %v4563 = vsel %vm4369, %v4438, %v4543
    %vm4564 = vcmask 15360
    %v4565 = vsel %vm4564, %v4563, %v4546
    %vm4566 = vcmask 23552
    %v4567 = vsel %vm4566, %v4565, %v4549
    %vm4568 = vcmask 31744
    %v4569 = vsel %vm4568, %v4567, %v4552
    %vm4570 = vcmask 39936
    %v4571 = vsel %vm4570, %v4569, %v4555
    %vm4572 = vcmask 48128
    %v4573 = vsel %vm4572, %v4571, %v4558
    %vm4574 = vcmask 56320
    %v4575 = vsel %vm4574, %v4573, %v4561
    %vm4576 = vcmask 64512
    %4577 = vst.msk [vmem:[#allocation13] sm:$0xff] %vm4576, %v4575
    // Predicated region
    $region62: #{tpu_custom_call.1} parent=1 // pred_check
      _
    $region63: #{tpu_custom_call.1} parent=1 // pred_check_branch
      %4579 = sbr.rel (0) target = $region65
    $region64: #{tpu_custom_call.1} parent=1 // pred_region
      %4581 = vsyncadd [#allocation8], 0
      %s4583 = sshll.u32 [#allocation12], 4
      %s4584 = int_to_ptr.vmem [resolvable:$true] %s4583
      %s4585 = sshll.u32 %s12, 4
      %s4586 = int_to_ptr.hbm [resolvable:$true] %s4585
      %4588 = dma.vmem_to_hbm [thread:$0]  %s4584, 128, %s4586, [#allocation8]
    $region65: #{tpu_custom_call.1} parent=1 // pred_fallthru
      _
    // Predicated region
    $region66: #{tpu_custom_call.1} parent=1 // pred_check
      _
    $region67: #{tpu_custom_call.1} parent=1 // pred_check_branch
      %4590 = sbr.rel (0) target = $region69
    $region68: #{tpu_custom_call.1} parent=1 // pred_region
      %4592 = vsyncadd [#allocation14], 0
      %s4594 = sshll.u32 [#allocation13], 4
      %s4595 = int_to_ptr.vmem [resolvable:$true] %s4594
      %s4596 = sshll.u32 %s13, 4
      %s4597 = int_to_ptr.hbm [resolvable:$true] %s4596
      %4599 = dma.vmem_to_hbm [thread:$0]  %s4595, 128, %s4597, [#allocation14]
    $region69: #{tpu_custom_call.1} parent=1 // pred_fallthru
      _
    // Predicated region
    $region70: #{tpu_custom_call.1} parent=1 // pred_check
      _
    $region71: #{tpu_custom_call.1} parent=1 // pred_check_branch
      %4601 = sbr.rel (0) target = $region73
    $region72: #{tpu_custom_call.1} parent=1 // pred_region
      %4603 = dma.done [#allocation8], 128
    $region73: #{tpu_custom_call.1} parent=1 // pred_fallthru
      _
    // Predicated region
    $region74: #{tpu_custom_call.1} parent=1 // pred_check
      _
    $region75: #{tpu_custom_call.1} parent=1 // pred_check_branch
      %4605 = sbr.rel (0) target = $region77
    $region76: #{tpu_custom_call.1} parent=1 // pred_region
      %4607 = dma.done [#allocation14], 128
    $region77: #{tpu_custom_call.1} parent=1 // pred_fallthru
      _
    %4608 = vsyncpa [#allocation7], 1
    %4609 = vsyncpa [#allocation10], 1
    %4610 = vsyncpa [#allocation8], 1
    %4611 = vsyncpa [#allocation14], 1

</llo_original>
